<compile_context>
chip_gen: v6e
topology: v6e:2x2x1
jax: 0.10.0
libtpu: 0.0.40
codegen_flags: <defaults>
</compile_context>

<pallas_src>
import functools

import jax
import jax.numpy as jnp
from jax import lax
from jax.experimental import pallas as pl
from jax.experimental.pallas import tpu as pltpu


def rnn_vqa_kernel(tok_ref, embed_ref, img_ref, qlen_ref,
                   w_ih_ref, w_hh_ref, b_ref,
                   wc_img_ref, wc_h_ref, bc_ref,
                   wfc_ref, bfc_ref,
                   out_ref,
                   xproj_scr, hout_scr):
    T, Bp, H = hout_scr.shape
    L = w_ih_ref.shape[0]
    bf16 = jnp.bfloat16

    # ---- fused embedding gather --------------------------------------------
    # Token ids are scalars in SMEM; table rows are dynamic sublane-slice loads
    # from VMEM, written as full (Bp, H) tiles into the layer-I/O slab so the
    # layer-0 input needs no extra scratch or HBM round trip.
    for t in range(T):
        rows = [embed_ref[pl.ds(tok_ref[bi, t], 1), :] for bi in range(Bp)]
        hout_scr[t] = jnp.concatenate(rows, axis=0)

    # q_length is a 0-based time index (torch.gather convention); clamp defensively.
    qlen = jnp.clip(qlen_ref[...], 0, T - 1)              # (Bp, 1) int32, stays in vregs
    gathered = jnp.zeros((Bp, H), jnp.float32)            # torch.gather result (value carry)

    for l in range(L):                                    # static unroll over layers
        # ---- hoisted input projection for ALL timesteps of this layer ------
        # One big well-shaped MXU matmul (M = T*Bp) + bias fold, written once.
        src = hout_scr[...].reshape(T * Bp, H)
        xproj = (jnp.dot(src.astype(bf16), w_ih_ref[l],
                         preferred_element_type=jnp.float32)
                 + b_ref[l])                              # (T*Bp, 4H) f32, bias folded here
        xproj_scr[...] = xproj.reshape(T, Bp, 4 * H)

        last_layer = (l == L - 1)
        h0 = jnp.zeros((Bp, H), jnp.float32)
        c0 = jnp.zeros((Bp, H), jnp.float32)

        def lstm_cell(t, h, c):
            # single per-step matmul on the serial critical path
            gates = xproj_scr[t] + jnp.dot(h.astype(bf16), w_hh_ref[l],
                                           preferred_element_type=jnp.float32)
            i_g = jax.nn.sigmoid(gates[:, 0 * H:1 * H])
            f_g = jax.nn.sigmoid(gates[:, 1 * H:2 * H])
            g_g = jnp.tanh(gates[:, 2 * H:3 * H])
            o_g = jax.nn.sigmoid(gates[:, 3 * H:4 * H])
            c_new = f_g * c + i_g * g_g
            h_new = o_g * jnp.tanh(c_new)
            return h_new, c_new

        if last_layer:
            def step_top(t, carry):
                h, c, gath = carry
                h_new, c_new = lstm_cell(t, h, c)
                # torch.gather(out, 1, q_length...): keep h where t == q_length[b]
                gath = jnp.where(qlen == t, h_new, gath)
                return (h_new, c_new, gath)
            _, _, gathered = lax.fori_loop(0, T, step_top, (h0, c0, gathered),
                                           unroll=True)
        else:
            def step_mid(t, carry):
                h, c = carry
                h_new, c_new = lstm_cell(t, h, c)
                hout_scr[t] = h_new                       # feeds next layer's batched proj
                return (h_new, c_new)
            _ = lax.fori_loop(0, T, step_mid, (h0, c0), unroll=True)

    # concat = cat((image, gathered_hidden), 1); Linear applied as column blocks
    y = (jnp.dot(img_ref[...].astype(bf16), wc_img_ref[...],
                 preferred_element_type=jnp.float32)
         + jnp.dot(gathered.astype(bf16), wc_h_ref[...],
                   preferred_element_type=jnp.float32)
         + bc_ref[...])
    y = jnp.maximum(y, 0.0)                               # ReLU (f32)
    # Classifier is lane-padded to Cp>=128 -> unmasked, lane-dense store.
    out_ref[...] = (jnp.dot(y.astype(bf16), wfc_ref[...],
                            preferred_element_type=jnp.float32)
                    + bfc_ref[...])


def prepare_params(params):
    """One-time device prep: cache bf16 weight copies, lane-pad the classifier."""
    bf16 = jnp.bfloat16
    C = params["bfc"].shape[-1]
    Cp = max(128, ((C + 127) // 128) * 128)               # lane-dense output
    return dict(
        embed=params["embed"],                            # f32 gather table (25 KiB)
        w_ih=params["w_ih"].astype(bf16),
        w_hh=params["w_hh"].astype(bf16),
        b=params["b"],
        wc_img=params["wc_img"].astype(bf16),
        wc_h=params["wc_h"].astype(bf16),
        bc=params["bc"],
        wfc=jnp.pad(params["wfc"], ((0, 0), (0, Cp - C))).astype(bf16),
        bfc=jnp.pad(params["bfc"], ((0, 0), (0, Cp - C))),
    )


def _vmem_cap_bytes():
    try:
        cap = getattr(pltpu.get_tpu_info(), "vmem_capacity_bytes", None)
        if cap:
            return int(cap)
    except Exception:
        pass
    return 64 << 20                                       # conservative (v7x per-TC)


def rnn_forward(dp, x_tok, image, q_length, *, num_classes):
    """Glue: batch pad + one fused pallas_call (embedding gather is in-kernel)."""
    B, T = x_tok.shape
    _, E = dp["embed"].shape
    L, H = dp["w_hh"].shape[0], dp["w_hh"].shape[1]
    IMG = dp["wc_img"].shape[0]
    Cp = dp["bfc"].shape[-1]
    assert E == H, "kernel reuses the layer-I/O slab -> embed_size == hidden_size"

    # Pad batch to the f32 sublane tile so MXU M-rows are not mostly padding.
    Bp = ((B + 7) // 8) * 8
    pad = Bp - B
    x_tok_p = jnp.pad(x_tok.astype(jnp.int32), ((0, pad), (0, 0)))
    image_p = jnp.pad(image, ((0, pad), (0, 0)))
    qlen = jnp.pad(q_length.astype(jnp.int32), (0, pad)).reshape(Bp, 1)

    operands = (x_tok_p, dp["embed"], image_p, qlen,
                dp["w_ih"], dp["w_hh"], dp["b"],
                dp["wc_img"], dp["wc_h"], dp["bc"], dp["wfc"], dp["bfc"])

    scratch_bytes = (T * Bp * 4 * H + T * Bp * H) * 4
    resident = sum(int(a.size) * a.dtype.itemsize for a in operands) \
        + scratch_bytes + Bp * Cp * 4
    vmem_limit = int(min(max(2 * resident + (8 << 20), 32 << 20),
                         int(0.75 * _vmem_cap_bytes())))

    flops = (2 * L * T * Bp * (E + H) * 4 * H
             + 2 * Bp * (IMG * H + H * H + H * Cp))
    cost = pl.CostEstimate(flops=flops,
                           transcendentals=5 * L * T * Bp * H,
                           bytes_accessed=resident)

    vmem = pl.BlockSpec(memory_space=pltpu.MemorySpace.VMEM)
    smem = pl.BlockSpec(memory_space=pltpu.MemorySpace.SMEM)
    out = pl.pallas_call(
        rnn_vqa_kernel,
        out_shape=jax.ShapeDtypeStruct((Bp, Cp), jnp.float32),
        in_specs=[smem] + [vmem] * 11,
        out_specs=vmem,
        scratch_shapes=[
            pltpu.VMEM((T, Bp, 4 * H), jnp.float32),      # per-layer batched input proj
            pltpu.VMEM((T, Bp, H), jnp.float32),          # layer input/output slab (emb, then h)
        ],
        compiler_params=pltpu.CompilerParams(vmem_limit_bytes=vmem_limit),
        cost_estimate=cost,
    )(*operands)
    return out[:B, :num_classes]


def reference_forward(params, x_tok, image, q_length):
    """Pure-JAX reference mirroring the kernel math (same bf16 operand casts)."""
    bf16 = jnp.bfloat16
    emb = params["embed"][x_tok]                          # (B, T, E)
    B, T, E = emb.shape
    L = params["w_ih"].shape[0]
    H = params["w_hh"].shape[1]
    w_ih = params["w_ih"].astype(bf16)
    w_hh = params["w_hh"].astype(bf16)

    x_seq = jnp.transpose(emb, (1, 0, 2))                 # (T, B, E)
    for l in range(L):
        xproj = (jnp.dot(x_seq.reshape(T * B, -1).astype(bf16), w_ih[l],
                         preferred_element_type=jnp.float32)
                 + params["b"][l]).reshape(T, B, 4 * H)

        def step(carry, xp_t):
            h, c = carry
            gates = xp_t + jnp.dot(h.astype(bf16), w_hh[l],
                                   preferred_element_type=jnp.float32)
            i = jax.nn.sigmoid(gates[:, :H])
            f = jax.nn.sigmoid(gates[:, H:2 * H])
            g = jnp.tanh(gates[:, 2 * H:3 * H])
            o = jax.nn.sigmoid(gates[:, 3 * H:])
            c_new = f * c + i * g
            h_new = o * jnp.tanh(c_new)
            return (h_new, c_new), h_new

        init = (jnp.zeros((B, H), jnp.float32), jnp.zeros((B, H), jnp.float32))
        _, x_seq = lax.scan(step, init, xproj)            # (T, B, H)

    gathered = x_seq[q_length, jnp.arange(B)]             # (B, H)
    y = jax.nn.relu(
        jnp.dot(image.astype(bf16), params["wc_img"].astype(bf16),
                preferred_element_type=jnp.float32)
        + jnp.dot(gathered.astype(bf16), params["wc_h"].astype(bf16),
                  preferred_element_type=jnp.float32)
        + params["bc"])
    return (jnp.dot(y.astype(bf16), params["wfc"].astype(bf16),
                    preferred_element_type=jnp.float32)
            + params["bfc"])


def init_params(key, vocab, embed, img, hidden, layers, classes):
    assert embed == hidden, "kernel stacks per-layer LSTM weights -> embed_size == hidden_size"
    ks = jax.random.split(key, 9)
    s = 1.0 / float(hidden) ** 0.5
    u = lambda k, shape: jax.random.uniform(k, shape, jnp.float32, -s, s)
    return dict(
        embed=jax.random.normal(ks[0], (vocab, embed), jnp.float32) * 0.1,
        w_ih=u(ks[1], (layers, embed, 4 * hidden)),       # W_ih^T per layer
        w_hh=u(ks[2], (layers, hidden, 4 * hidden)),      # W_hh^T per layer
        b=u(ks[3], (layers, 1, 4 * hidden)),              # b_ih + b_hh combined
        wc_img=u(ks[4], (img, hidden)),                   # concat-Linear, image columns
        wc_h=u(ks[5], (hidden, hidden)),                  # concat-Linear, hidden columns
        bc=u(ks[6], (1, hidden)),
        wfc=u(ks[7], (hidden, classes)),
        bfc=u(ks[8], (1, classes)),
    )


if __name__ == "__main__":
    B, T = 2, 8
    VOCAB, EMBED, HIDDEN = 50, 128, 128
    IMG, LAYERS, CLASSES = 64, 2, 16

    key = jax.random.PRNGKey(0)
    kp, kx, kimg, kq = jax.random.split(key, 4)
    params = init_params(kp, VOCAB, EMBED, IMG, HIDDEN, LAYERS, CLASSES)
    x_tok = jax.random.randint(kx, (B, T), 0, VOCAB)               # token ids
    image = jax.random.normal(kimg, (B, IMG), jnp.float32)         # image features
    q_length = jax.random.randint(kq, (B,), 0, T)                  # gather time indices

    dev_params = prepare_params(params)                            # one-time bf16 weight cache
    fwd = jax.jit(functools.partial(rnn_forward, num_classes=CLASSES))
    out = jax.block_until_ready(fwd(dev_params, x_tok, image, q_length))
    ref = reference_forward(params, x_tok, image, q_length)

    assert out.shape == (B, CLASSES), out.shape
    err = float(jnp.max(jnp.abs(out - ref)))
    assert jnp.allclose(out, ref, atol=1e-3, rtol=1e-3), err
    print("KERNEL_OK")
</pallas_src>

<mosaic_0001>
module attributes {stable_mosaic.version = 11 : i64} {
  func.func @rnn_vqa_kernel(%arg0: memref<8x8xi32, #tpu.memory_space<smem>>, %arg1: memref<50x128xf32, #tpu.memory_space<vmem>>, %arg2: memref<8x64xf32, #tpu.memory_space<vmem>>, %arg3: memref<8x1xi32, #tpu.memory_space<vmem>>, %arg4: memref<2x128x512xbf16, #tpu.memory_space<vmem>>, %arg5: memref<2x128x512xbf16, #tpu.memory_space<vmem>>, %arg6: memref<2x1x512xf32, #tpu.memory_space<vmem>>, %arg7: memref<64x128xbf16, #tpu.memory_space<vmem>>, %arg8: memref<128x128xbf16, #tpu.memory_space<vmem>>, %arg9: memref<1x128xf32, #tpu.memory_space<vmem>>, %arg10: memref<128x128xbf16, #tpu.memory_space<vmem>>, %arg11: memref<1x128xf32, #tpu.memory_space<vmem>>, %arg12: memref<8x128xf32, #tpu.memory_space<vmem>>, %arg13: memref<8x8x512xf32, #tpu.memory_space<vmem>>, %arg14: memref<8x8x128xf32, #tpu.memory_space<vmem>>) attributes {dimension_semantics = [], scalar_prefetch = 0 : i64, scratch_operands = 2 : i64, tpu.core_type = #tpu.core_type<tc>} {
    %c0 = arith.constant 0 : index
    %c0_0 = arith.constant 0 : index
    %0 = memref.load %arg0[%c0, %c0_0] : memref<8x8xi32, #tpu.memory_space<smem>>
    %1 = arith.index_cast %0 : i32 to index
    %c0_1 = arith.constant 0 : index
    %2 = vector.load %arg1[%1, %c0_1] : memref<50x128xf32, #tpu.memory_space<vmem>>, vector<1x128xf32>
    %c1 = arith.constant 1 : index
    %c0_2 = arith.constant 0 : index
    %3 = memref.load %arg0[%c1, %c0_2] : memref<8x8xi32, #tpu.memory_space<smem>>
    %4 = arith.index_cast %3 : i32 to index
    %c0_3 = arith.constant 0 : index
    %5 = vector.load %arg1[%4, %c0_3] : memref<50x128xf32, #tpu.memory_space<vmem>>, vector<1x128xf32>
    %c2 = arith.constant 2 : index
    %c0_4 = arith.constant 0 : index
    %6 = memref.load %arg0[%c2, %c0_4] : memref<8x8xi32, #tpu.memory_space<smem>>
    %7 = arith.index_cast %6 : i32 to index
    %c0_5 = arith.constant 0 : index
    %8 = vector.load %arg1[%7, %c0_5] : memref<50x128xf32, #tpu.memory_space<vmem>>, vector<1x128xf32>
    %c3 = arith.constant 3 : index
    %c0_6 = arith.constant 0 : index
    %9 = memref.load %arg0[%c3, %c0_6] : memref<8x8xi32, #tpu.memory_space<smem>>
    %10 = arith.index_cast %9 : i32 to index
    %c0_7 = arith.constant 0 : index
    %11 = vector.load %arg1[%10, %c0_7] : memref<50x128xf32, #tpu.memory_space<vmem>>, vector<1x128xf32>
    %c4 = arith.constant 4 : index
    %c0_8 = arith.constant 0 : index
    %12 = memref.load %arg0[%c4, %c0_8] : memref<8x8xi32, #tpu.memory_space<smem>>
    %13 = arith.index_cast %12 : i32 to index
    %c0_9 = arith.constant 0 : index
    %14 = vector.load %arg1[%13, %c0_9] : memref<50x128xf32, #tpu.memory_space<vmem>>, vector<1x128xf32>
    %c5 = arith.constant 5 : index
    %c0_10 = arith.constant 0 : index
    %15 = memref.load %arg0[%c5, %c0_10] : memref<8x8xi32, #tpu.memory_space<smem>>
    %16 = arith.index_cast %15 : i32 to index
    %c0_11 = arith.constant 0 : index
    %17 = vector.load %arg1[%16, %c0_11] : memref<50x128xf32, #tpu.memory_space<vmem>>, vector<1x128xf32>
    %c6 = arith.constant 6 : index
    %c0_12 = arith.constant 0 : index
    %18 = memref.load %arg0[%c6, %c0_12] : memref<8x8xi32, #tpu.memory_space<smem>>
    %19 = arith.index_cast %18 : i32 to index
    %c0_13 = arith.constant 0 : index
    %20 = vector.load %arg1[%19, %c0_13] : memref<50x128xf32, #tpu.memory_space<vmem>>, vector<1x128xf32>
    %c7 = arith.constant 7 : index
    %c0_14 = arith.constant 0 : index
    %21 = memref.load %arg0[%c7, %c0_14] : memref<8x8xi32, #tpu.memory_space<smem>>
    %22 = arith.index_cast %21 : i32 to index
    %c0_15 = arith.constant 0 : index
    %23 = vector.load %arg1[%22, %c0_15] : memref<50x128xf32, #tpu.memory_space<vmem>>, vector<1x128xf32>
    %24 = tpu.concatenate %2, %5, %8, %11, %14, %17, %20, %23 in 0 : vector<1x128xf32>, vector<1x128xf32>, vector<1x128xf32>, vector<1x128xf32>, vector<1x128xf32>, vector<1x128xf32>, vector<1x128xf32>, vector<1x128xf32> -> vector<8x128xf32>
    %c0_16 = arith.constant 0 : index
    %c0_17 = arith.constant 0 : index
    %c0_18 = arith.constant 0 : index
    %25 = vector.load %arg14[%c0_16, %c0_17, %c0_18] : memref<8x8x128xf32, #tpu.memory_space<vmem>>, vector<1x8x128xf32>
    %26 = vector.shape_cast %25 : vector<1x8x128xf32> to vector<8x128xf32>
    %27 = vector.shape_cast %24 : vector<8x128xf32> to vector<1x8x128xf32>
    tpu.vector_store %arg14[%c0_16, %c0_17, %c0_18], %27 {strides = array<i32>} : memref<8x8x128xf32, #tpu.memory_space<vmem>>, vector<1x8x128xf32>,
    %c0_19 = arith.constant 0 : index
    %c1_20 = arith.constant 1 : index
    %28 = memref.load %arg0[%c0_19, %c1_20] : memref<8x8xi32, #tpu.memory_space<smem>>
    %29 = arith.index_cast %28 : i32 to index
    %c0_21 = arith.constant 0 : index
    %30 = vector.load %arg1[%29, %c0_21] : memref<50x128xf32, #tpu.memory_space<vmem>>, vector<1x128xf32>
    %c1_22 = arith.constant 1 : index
    %c1_23 = arith.constant 1 : index
    %31 = memref.load %arg0[%c1_22, %c1_23] : memref<8x8xi32, #tpu.memory_space<smem>>
    %32 = arith.index_cast %31 : i32 to index
    %c0_24 = arith.constant 0 : index
    %33 = vector.load %arg1[%32, %c0_24] : memref<50x128xf32, #tpu.memory_space<vmem>>, vector<1x128xf32>
    %c2_25 = arith.constant 2 : index
    %c1_26 = arith.constant 1 : index
    %34 = memref.load %arg0[%c2_25, %c1_26] : memref<8x8xi32, #tpu.memory_space<smem>>
    %35 = arith.index_cast %34 : i32 to index
    %c0_27 = arith.constant 0 : index
    %36 = vector.load %arg1[%35, %c0_27] : memref<50x128xf32, #tpu.memory_space<vmem>>, vector<1x128xf32>
    %c3_28 = arith.constant 3 : index
    %c1_29 = arith.constant 1 : index
    %37 = memref.load %arg0[%c3_28, %c1_29] : memref<8x8xi32, #tpu.memory_space<smem>>
    %38 = arith.index_cast %37 : i32 to index
    %c0_30 = arith.constant 0 : index
    %39 = vector.load %arg1[%38, %c0_30] : memref<50x128xf32, #tpu.memory_space<vmem>>, vector<1x128xf32>
    %c4_31 = arith.constant 4 : index
    %c1_32 = arith.constant 1 : index
    %40 = memref.load %arg0[%c4_31, %c1_32] : memref<8x8xi32, #tpu.memory_space<smem>>
    %41 = arith.index_cast %40 : i32 to index
    %c0_33 = arith.constant 0 : index
    %42 = vector.load %arg1[%41, %c0_33] : memref<50x128xf32, #tpu.memory_space<vmem>>, vector<1x128xf32>
    %c5_34 = arith.constant 5 : index
    %c1_35 = arith.constant 1 : index
    %43 = memref.load %arg0[%c5_34, %c1_35] : memref<8x8xi32, #tpu.memory_space<smem>>
    %44 = arith.index_cast %43 : i32 to index
    %c0_36 = arith.constant 0 : index
    %45 = vector.load %arg1[%44, %c0_36] : memref<50x128xf32, #tpu.memory_space<vmem>>, vector<1x128xf32>
    %c6_37 = arith.constant 6 : index
    %c1_38 = arith.constant 1 : index
    %46 = memref.load %arg0[%c6_37, %c1_38] : memref<8x8xi32, #tpu.memory_space<smem>>
    %47 = arith.index_cast %46 : i32 to index
    %c0_39 = arith.constant 0 : index
    %48 = vector.load %arg1[%47, %c0_39] : memref<50x128xf32, #tpu.memory_space<vmem>>, vector<1x128xf32>
    %c7_40 = arith.constant 7 : index
    %c1_41 = arith.constant 1 : index
    %49 = memref.load %arg0[%c7_40, %c1_41] : memref<8x8xi32, #tpu.memory_space<smem>>
    %50 = arith.index_cast %49 : i32 to index
    %c0_42 = arith.constant 0 : index
    %51 = vector.load %arg1[%50, %c0_42] : memref<50x128xf32, #tpu.memory_space<vmem>>, vector<1x128xf32>
    %52 = tpu.concatenate %30, %33, %36, %39, %42, %45, %48, %51 in 0 : vector<1x128xf32>, vector<1x128xf32>, vector<1x128xf32>, vector<1x128xf32>, vector<1x128xf32>, vector<1x128xf32>, vector<1x128xf32>, vector<1x128xf32> -> vector<8x128xf32>
    %c1_43 = arith.constant 1 : index
    %c0_44 = arith.constant 0 : index
    %c0_45 = arith.constant 0 : index
    %53 = vector.load %arg14[%c1_43, %c0_44, %c0_45] : memref<8x8x128xf32, #tpu.memory_space<vmem>>, vector<1x8x128xf32>
    %54 = vector.shape_cast %53 : vector<1x8x128xf32> to vector<8x128xf32>
    %55 = vector.shape_cast %52 : vector<8x128xf32> to vector<1x8x128xf32>
    tpu.vector_store %arg14[%c1_43, %c0_44, %c0_45], %55 {strides = array<i32>} : memref<8x8x128xf32, #tpu.memory_space<vmem>>, vector<1x8x128xf32>,
    %c0_46 = arith.constant 0 : index
    %c2_47 = arith.constant 2 : index
    %56 = memref.load %arg0[%c0_46, %c2_47] : memref<8x8xi32, #tpu.memory_space<smem>>
    %57 = arith.index_cast %56 : i32 to index
    %c0_48 = arith.constant 0 : index
    %58 = vector.load %arg1[%57, %c0_48] : memref<50x128xf32, #tpu.memory_space<vmem>>, vector<1x128xf32>
    %c1_49 = arith.constant 1 : index
    %c2_50 = arith.constant 2 : index
    %59 = memref.load %arg0[%c1_49, %c2_50] : memref<8x8xi32, #tpu.memory_space<smem>>
    %60 = arith.index_cast %59 : i32 to index
    %c0_51 = arith.constant 0 : index
    %61 = vector.load %arg1[%60, %c0_51] : memref<50x128xf32, #tpu.memory_space<vmem>>, vector<1x128xf32>
    %c2_52 = arith.constant 2 : index
    %c2_53 = arith.constant 2 : index
    %62 = memref.load %arg0[%c2_52, %c2_53] : memref<8x8xi32, #tpu.memory_space<smem>>
    %63 = arith.index_cast %62 : i32 to index
    %c0_54 = arith.constant 0 : index
    %64 = vector.load %arg1[%63, %c0_54] : memref<50x128xf32, #tpu.memory_space<vmem>>, vector<1x128xf32>
    %c3_55 = arith.constant 3 : index
    %c2_56 = arith.constant 2 : index
    %65 = memref.load %arg0[%c3_55, %c2_56] : memref<8x8xi32, #tpu.memory_space<smem>>
    %66 = arith.index_cast %65 : i32 to index
    %c0_57 = arith.constant 0 : index
    %67 = vector.load %arg1[%66, %c0_57] : memref<50x128xf32, #tpu.memory_space<vmem>>, vector<1x128xf32>
    %c4_58 = arith.constant 4 : index
    %c2_59 = arith.constant 2 : index
    %68 = memref.load %arg0[%c4_58, %c2_59] : memref<8x8xi32, #tpu.memory_space<smem>>
    %69 = arith.index_cast %68 : i32 to index
    %c0_60 = arith.constant 0 : index
    %70 = vector.load %arg1[%69, %c0_60] : memref<50x128xf32, #tpu.memory_space<vmem>>, vector<1x128xf32>
    %c5_61 = arith.constant 5 : index
    %c2_62 = arith.constant 2 : index
    %71 = memref.load %arg0[%c5_61, %c2_62] : memref<8x8xi32, #tpu.memory_space<smem>>
    %72 = arith.index_cast %71 : i32 to index
    %c0_63 = arith.constant 0 : index
    %73 = vector.load %arg1[%72, %c0_63] : memref<50x128xf32, #tpu.memory_space<vmem>>, vector<1x128xf32>
    %c6_64 = arith.constant 6 : index
    %c2_65 = arith.constant 2 : index
    %74 = memref.load %arg0[%c6_64, %c2_65] : memref<8x8xi32, #tpu.memory_space<smem>>
    %75 = arith.index_cast %74 : i32 to index
    %c0_66 = arith.constant 0 : index
    %76 = vector.load %arg1[%75, %c0_66] : memref<50x128xf32, #tpu.memory_space<vmem>>, vector<1x128xf32>
    %c7_67 = arith.constant 7 : index
    %c2_68 = arith.constant 2 : index
    %77 = memref.load %arg0[%c7_67, %c2_68] : memref<8x8xi32, #tpu.memory_space<smem>>
    %78 = arith.index_cast %77 : i32 to index
    %c0_69 = arith.constant 0 : index
    %79 = vector.load %arg1[%78, %c0_69] : memref<50x128xf32, #tpu.memory_space<vmem>>, vector<1x128xf32>
    %80 = tpu.concatenate %58, %61, %64, %67, %70, %73, %76, %79 in 0 : vector<1x128xf32>, vector<1x128xf32>, vector<1x128xf32>, vector<1x128xf32>, vector<1x128xf32>, vector<1x128xf32>, vector<1x128xf32>, vector<1x128xf32> -> vector<8x128xf32>
    %c2_70 = arith.constant 2 : index
    %c0_71 = arith.constant 0 : index
    %c0_72 = arith.constant 0 : index
    %81 = vector.load %arg14[%c2_70, %c0_71, %c0_72] : memref<8x8x128xf32, #tpu.memory_space<vmem>>, vector<1x8x128xf32>
    %82 = vector.shape_cast %81 : vector<1x8x128xf32> to vector<8x128xf32>
    %83 = vector.shape_cast %80 : vector<8x128xf32> to vector<1x8x128xf32>
    tpu.vector_store %arg14[%c2_70, %c0_71, %c0_72], %83 {strides = array<i32>} : memref<8x8x128xf32, #tpu.memory_space<vmem>>, vector<1x8x128xf32>,
    %c0_73 = arith.constant 0 : index
    %c3_74 = arith.constant 3 : index
    %84 = memref.load %arg0[%c0_73, %c3_74] : memref<8x8xi32, #tpu.memory_space<smem>>
    %85 = arith.index_cast %84 : i32 to index
    %c0_75 = arith.constant 0 : index
    %86 = vector.load %arg1[%85, %c0_75] : memref<50x128xf32, #tpu.memory_space<vmem>>, vector<1x128xf32>
    %c1_76 = arith.constant 1 : index
    %c3_77 = arith.constant 3 : index
    %87 = memref.load %arg0[%c1_76, %c3_77] : memref<8x8xi32, #tpu.memory_space<smem>>
    %88 = arith.index_cast %87 : i32 to index
    %c0_78 = arith.constant 0 : index
    %89 = vector.load %arg1[%88, %c0_78] : memref<50x128xf32, #tpu.memory_space<vmem>>, vector<1x128xf32>
    %c2_79 = arith.constant 2 : index
    %c3_80 = arith.constant 3 : index
    %90 = memref.load %arg0[%c2_79, %c3_80] : memref<8x8xi32, #tpu.memory_space<smem>>
    %91 = arith.index_cast %90 : i32 to index
    %c0_81 = arith.constant 0 : index
    %92 = vector.load %arg1[%91, %c0_81] : memref<50x128xf32, #tpu.memory_space<vmem>>, vector<1x128xf32>
    %c3_82 = arith.constant 3 : index
    %c3_83 = arith.constant 3 : index
    %93 = memref.load %arg0[%c3_82, %c3_83] : memref<8x8xi32, #tpu.memory_space<smem>>
    %94 = arith.index_cast %93 : i32 to index
    %c0_84 = arith.constant 0 : index
    %95 = vector.load %arg1[%94, %c0_84] : memref<50x128xf32, #tpu.memory_space<vmem>>, vector<1x128xf32>
    %c4_85 = arith.constant 4 : index
    %c3_86 = arith.constant 3 : index
    %96 = memref.load %arg0[%c4_85, %c3_86] : memref<8x8xi32, #tpu.memory_space<smem>>
    %97 = arith.index_cast %96 : i32 to index
    %c0_87 = arith.constant 0 : index
    %98 = vector.load %arg1[%97, %c0_87] : memref<50x128xf32, #tpu.memory_space<vmem>>, vector<1x128xf32>
    %c5_88 = arith.constant 5 : index
    %c3_89 = arith.constant 3 : index
    %99 = memref.load %arg0[%c5_88, %c3_89] : memref<8x8xi32, #tpu.memory_space<smem>>
    %100 = arith.index_cast %99 : i32 to index
    %c0_90 = arith.constant 0 : index
    %101 = vector.load %arg1[%100, %c0_90] : memref<50x128xf32, #tpu.memory_space<vmem>>, vector<1x128xf32>
    %c6_91 = arith.constant 6 : index
    %c3_92 = arith.constant 3 : index
    %102 = memref.load %arg0[%c6_91, %c3_92] : memref<8x8xi32, #tpu.memory_space<smem>>
    %103 = arith.index_cast %102 : i32 to index
    %c0_93 = arith.constant 0 : index
    %104 = vector.load %arg1[%103, %c0_93] : memref<50x128xf32, #tpu.memory_space<vmem>>, vector<1x128xf32>
    %c7_94 = arith.constant 7 : index
    %c3_95 = arith.constant 3 : index
    %105 = memref.load %arg0[%c7_94, %c3_95] : memref<8x8xi32, #tpu.memory_space<smem>>
    %106 = arith.index_cast %105 : i32 to index
    %c0_96 = arith.constant 0 : index
    %107 = vector.load %arg1[%106, %c0_96] : memref<50x128xf32, #tpu.memory_space<vmem>>, vector<1x128xf32>
    %108 = tpu.concatenate %86, %89, %92, %95, %98, %101, %104, %107 in 0 : vector<1x128xf32>, vector<1x128xf32>, vector<1x128xf32>, vector<1x128xf32>, vector<1x128xf32>, vector<1x128xf32>, vector<1x128xf32>, vector<1x128xf32> -> vector<8x128xf32>
    %c3_97 = arith.constant 3 : index
    %c0_98 = arith.constant 0 : index
    %c0_99 = arith.constant 0 : index
    %109 = vector.load %arg14[%c3_97, %c0_98, %c0_99] : memref<8x8x128xf32, #tpu.memory_space<vmem>>, vector<1x8x128xf32>
    %110 = vector.shape_cast %109 : vector<1x8x128xf32> to vector<8x128xf32>
    %111 = vector.shape_cast %108 : vector<8x128xf32> to vector<1x8x128xf32>
    tpu.vector_store %arg14[%c3_97, %c0_98, %c0_99], %111 {strides = array<i32>} : memref<8x8x128xf32, #tpu.memory_space<vmem>>, vector<1x8x128xf32>,
    %c0_100 = arith.constant 0 : index
    %c4_101 = arith.constant 4 : index
    %112 = memref.load %arg0[%c0_100, %c4_101] : memref<8x8xi32, #tpu.memory_space<smem>>
    %113 = arith.index_cast %112 : i32 to index
    %c0_102 = arith.constant 0 : index
    %114 = vector.load %arg1[%113, %c0_102] : memref<50x128xf32, #tpu.memory_space<vmem>>, vector<1x128xf32>
    %c1_103 = arith.constant 1 : index
    %c4_104 = arith.constant 4 : index
    %115 = memref.load %arg0[%c1_103, %c4_104] : memref<8x8xi32, #tpu.memory_space<smem>>
    %116 = arith.index_cast %115 : i32 to index
    %c0_105 = arith.constant 0 : index
    %117 = vector.load %arg1[%116, %c0_105] : memref<50x128xf32, #tpu.memory_space<vmem>>, vector<1x128xf32>
    %c2_106 = arith.constant 2 : index
    %c4_107 = arith.constant 4 : index
    %118 = memref.load %arg0[%c2_106, %c4_107] : memref<8x8xi32, #tpu.memory_space<smem>>
    %119 = arith.index_cast %118 : i32 to index
    %c0_108 = arith.constant 0 : index
    %120 = vector.load %arg1[%119, %c0_108] : memref<50x128xf32, #tpu.memory_space<vmem>>, vector<1x128xf32>
    %c3_109 = arith.constant 3 : index
    %c4_110 = arith.constant 4 : index
    %121 = memref.load %arg0[%c3_109, %c4_110] : memref<8x8xi32, #tpu.memory_space<smem>>
    %122 = arith.index_cast %121 : i32 to index
    %c0_111 = arith.constant 0 : index
    %123 = vector.load %arg1[%122, %c0_111] : memref<50x128xf32, #tpu.memory_space<vmem>>, vector<1x128xf32>
    %c4_112 = arith.constant 4 : index
    %c4_113 = arith.constant 4 : index
    %124 = memref.load %arg0[%c4_112, %c4_113] : memref<8x8xi32, #tpu.memory_space<smem>>
    %125 = arith.index_cast %124 : i32 to index
    %c0_114 = arith.constant 0 : index
    %126 = vector.load %arg1[%125, %c0_114] : memref<50x128xf32, #tpu.memory_space<vmem>>, vector<1x128xf32>
    %c5_115 = arith.constant 5 : index
    %c4_116 = arith.constant 4 : index
    %127 = memref.load %arg0[%c5_115, %c4_116] : memref<8x8xi32, #tpu.memory_space<smem>>
    %128 = arith.index_cast %127 : i32 to index
    %c0_117 = arith.constant 0 : index
    %129 = vector.load %arg1[%128, %c0_117] : memref<50x128xf32, #tpu.memory_space<vmem>>, vector<1x128xf32>
    %c6_118 = arith.constant 6 : index
    %c4_119 = arith.constant 4 : index
    %130 = memref.load %arg0[%c6_118, %c4_119] : memref<8x8xi32, #tpu.memory_space<smem>>
    %131 = arith.index_cast %130 : i32 to index
    %c0_120 = arith.constant 0 : index
    %132 = vector.load %arg1[%131, %c0_120] : memref<50x128xf32, #tpu.memory_space<vmem>>, vector<1x128xf32>
    %c7_121 = arith.constant 7 : index
    %c4_122 = arith.constant 4 : index
    %133 = memref.load %arg0[%c7_121, %c4_122] : memref<8x8xi32, #tpu.memory_space<smem>>
    %134 = arith.index_cast %133 : i32 to index
    %c0_123 = arith.constant 0 : index
    %135 = vector.load %arg1[%134, %c0_123] : memref<50x128xf32, #tpu.memory_space<vmem>>, vector<1x128xf32>
    %136 = tpu.concatenate %114, %117, %120, %123, %126, %129, %132, %135 in 0 : vector<1x128xf32>, vector<1x128xf32>, vector<1x128xf32>, vector<1x128xf32>, vector<1x128xf32>, vector<1x128xf32>, vector<1x128xf32>, vector<1x128xf32> -> vector<8x128xf32>
    %c4_124 = arith.constant 4 : index
    %c0_125 = arith.constant 0 : index
    %c0_126 = arith.constant 0 : index
    %137 = vector.load %arg14[%c4_124, %c0_125, %c0_126] : memref<8x8x128xf32, #tpu.memory_space<vmem>>, vector<1x8x128xf32>
    %138 = vector.shape_cast %137 : vector<1x8x128xf32> to vector<8x128xf32>
    %139 = vector.shape_cast %136 : vector<8x128xf32> to vector<1x8x128xf32>
    tpu.vector_store %arg14[%c4_124, %c0_125, %c0_126], %139 {strides = array<i32>} : memref<8x8x128xf32, #tpu.memory_space<vmem>>, vector<1x8x128xf32>,
    %c0_127 = arith.constant 0 : index
    %c5_128 = arith.constant 5 : index
    %140 = memref.load %arg0[%c0_127, %c5_128] : memref<8x8xi32, #tpu.memory_space<smem>>
    %141 = arith.index_cast %140 : i32 to index
    %c0_129 = arith.constant 0 : index
    %142 = vector.load %arg1[%141, %c0_129] : memref<50x128xf32, #tpu.memory_space<vmem>>, vector<1x128xf32>
    %c1_130 = arith.constant 1 : index
    %c5_131 = arith.constant 5 : index
    %143 = memref.load %arg0[%c1_130, %c5_131] : memref<8x8xi32, #tpu.memory_space<smem>>
    %144 = arith.index_cast %143 : i32 to index
    %c0_132 = arith.constant 0 : index
    %145 = vector.load %arg1[%144, %c0_132] : memref<50x128xf32, #tpu.memory_space<vmem>>, vector<1x128xf32>
    %c2_133 = arith.constant 2 : index
    %c5_134 = arith.constant 5 : index
    %146 = memref.load %arg0[%c2_133, %c5_134] : memref<8x8xi32, #tpu.memory_space<smem>>
    %147 = arith.index_cast %146 : i32 to index
    %c0_135 = arith.constant 0 : index
    %148 = vector.load %arg1[%147, %c0_135] : memref<50x128xf32, #tpu.memory_space<vmem>>, vector<1x128xf32>
    %c3_136 = arith.constant 3 : index
    %c5_137 = arith.constant 5 : index
    %149 = memref.load %arg0[%c3_136, %c5_137] : memref<8x8xi32, #tpu.memory_space<smem>>
    %150 = arith.index_cast %149 : i32 to index
    %c0_138 = arith.constant 0 : index
    %151 = vector.load %arg1[%150, %c0_138] : memref<50x128xf32, #tpu.memory_space<vmem>>, vector<1x128xf32>
    %c4_139 = arith.constant 4 : index
    %c5_140 = arith.constant 5 : index
    %152 = memref.load %arg0[%c4_139, %c5_140] : memref<8x8xi32, #tpu.memory_space<smem>>
    %153 = arith.index_cast %152 : i32 to index
    %c0_141 = arith.constant 0 : index
    %154 = vector.load %arg1[%153, %c0_141] : memref<50x128xf32, #tpu.memory_space<vmem>>, vector<1x128xf32>
    %c5_142 = arith.constant 5 : index
    %c5_143 = arith.constant 5 : index
    %155 = memref.load %arg0[%c5_142, %c5_143] : memref<8x8xi32, #tpu.memory_space<smem>>
    %156 = arith.index_cast %155 : i32 to index
    %c0_144 = arith.constant 0 : index
    %157 = vector.load %arg1[%156, %c0_144] : memref<50x128xf32, #tpu.memory_space<vmem>>, vector<1x128xf32>
    %c6_145 = arith.constant 6 : index
    %c5_146 = arith.constant 5 : index
    %158 = memref.load %arg0[%c6_145, %c5_146] : memref<8x8xi32, #tpu.memory_space<smem>>
    %159 = arith.index_cast %158 : i32 to index
    %c0_147 = arith.constant 0 : index
    %160 = vector.load %arg1[%159, %c0_147] : memref<50x128xf32, #tpu.memory_space<vmem>>, vector<1x128xf32>
    %c7_148 = arith.constant 7 : index
    %c5_149 = arith.constant 5 : index
    %161 = memref.load %arg0[%c7_148, %c5_149] : memref<8x8xi32, #tpu.memory_space<smem>>
    %162 = arith.index_cast %161 : i32 to index
    %c0_150 = arith.constant 0 : index
    %163 = vector.load %arg1[%162, %c0_150] : memref<50x128xf32, #tpu.memory_space<vmem>>, vector<1x128xf32>
    %164 = tpu.concatenate %142, %145, %148, %151, %154, %157, %160, %163 in 0 : vector<1x128xf32>, vector<1x128xf32>, vector<1x128xf32>, vector<1x128xf32>, vector<1x128xf32>, vector<1x128xf32>, vector<1x128xf32>, vector<1x128xf32> -> vector<8x128xf32>
    %c5_151 = arith.constant 5 : index
    %c0_152 = arith.constant 0 : index
    %c0_153 = arith.constant 0 : index
    %165 = vector.load %arg14[%c5_151, %c0_152, %c0_153] : memref<8x8x128xf32, #tpu.memory_space<vmem>>, vector<1x8x128xf32>
    %166 = vector.shape_cast %165 : vector<1x8x128xf32> to vector<8x128xf32>
    %167 = vector.shape_cast %164 : vector<8x128xf32> to vector<1x8x128xf32>
    tpu.vector_store %arg14[%c5_151, %c0_152, %c0_153], %167 {strides = array<i32>} : memref<8x8x128xf32, #tpu.memory_space<vmem>>, vector<1x8x128xf32>,
    %c0_154 = arith.constant 0 : index
    %c6_155 = arith.constant 6 : index
    %168 = memref.load %arg0[%c0_154, %c6_155] : memref<8x8xi32, #tpu.memory_space<smem>>
    %169 = arith.index_cast %168 : i32 to index
    %c0_156 = arith.constant 0 : index
    %170 = vector.load %arg1[%169, %c0_156] : memref<50x128xf32, #tpu.memory_space<vmem>>, vector<1x128xf32>
    %c1_157 = arith.constant 1 : index
    %c6_158 = arith.constant 6 : index
    %171 = memref.load %arg0[%c1_157, %c6_158] : memref<8x8xi32, #tpu.memory_space<smem>>
    %172 = arith.index_cast %171 : i32 to index
    %c0_159 = arith.constant 0 : index
    %173 = vector.load %arg1[%172, %c0_159] : memref<50x128xf32, #tpu.memory_space<vmem>>, vector<1x128xf32>
    %c2_160 = arith.constant 2 : index
    %c6_161 = arith.constant 6 : index
    %174 = memref.load %arg0[%c2_160, %c6_161] : memref<8x8xi32, #tpu.memory_space<smem>>
    %175 = arith.index_cast %174 : i32 to index
    %c0_162 = arith.constant 0 : index
    %176 = vector.load %arg1[%175, %c0_162] : memref<50x128xf32, #tpu.memory_space<vmem>>, vector<1x128xf32>
    %c3_163 = arith.constant 3 : index
    %c6_164 = arith.constant 6 : index
    %177 = memref.load %arg0[%c3_163, %c6_164] : memref<8x8xi32, #tpu.memory_space<smem>>
    %178 = arith.index_cast %177 : i32 to index
    %c0_165 = arith.constant 0 : index
    %179 = vector.load %arg1[%178, %c0_165] : memref<50x128xf32, #tpu.memory_space<vmem>>, vector<1x128xf32>
    %c4_166 = arith.constant 4 : index
    %c6_167 = arith.constant 6 : index
    %180 = memref.load %arg0[%c4_166, %c6_167] : memref<8x8xi32, #tpu.memory_space<smem>>
    %181 = arith.index_cast %180 : i32 to index
    %c0_168 = arith.constant 0 : index
    %182 = vector.load %arg1[%181, %c0_168] : memref<50x128xf32, #tpu.memory_space<vmem>>, vector<1x128xf32>
    %c5_169 = arith.constant 5 : index
    %c6_170 = arith.constant 6 : index
    %183 = memref.load %arg0[%c5_169, %c6_170] : memref<8x8xi32, #tpu.memory_space<smem>>
    %184 = arith.index_cast %183 : i32 to index
    %c0_171 = arith.constant 0 : index
    %185 = vector.load %arg1[%184, %c0_171] : memref<50x128xf32, #tpu.memory_space<vmem>>, vector<1x128xf32>
    %c6_172 = arith.constant 6 : index
    %c6_173 = arith.constant 6 : index
    %186 = memref.load %arg0[%c6_172, %c6_173] : memref<8x8xi32, #tpu.memory_space<smem>>
    %187 = arith.index_cast %186 : i32 to index
    %c0_174 = arith.constant 0 : index
    %188 = vector.load %arg1[%187, %c0_174] : memref<50x128xf32, #tpu.memory_space<vmem>>, vector<1x128xf32>
    %c7_175 = arith.constant 7 : index
    %c6_176 = arith.constant 6 : index
    %189 = memref.load %arg0[%c7_175, %c6_176] : memref<8x8xi32, #tpu.memory_space<smem>>
    %190 = arith.index_cast %189 : i32 to index
    %c0_177 = arith.constant 0 : index
    %191 = vector.load %arg1[%190, %c0_177] : memref<50x128xf32, #tpu.memory_space<vmem>>, vector<1x128xf32>
    %192 = tpu.concatenate %170, %173, %176, %179, %182, %185, %188, %191 in 0 : vector<1x128xf32>, vector<1x128xf32>, vector<1x128xf32>, vector<1x128xf32>, vector<1x128xf32>, vector<1x128xf32>, vector<1x128xf32>, vector<1x128xf32> -> vector<8x128xf32>
    %c6_178 = arith.constant 6 : index
    %c0_179 = arith.constant 0 : index
    %c0_180 = arith.constant 0 : index
    %193 = vector.load %arg14[%c6_178, %c0_179, %c0_180] : memref<8x8x128xf32, #tpu.memory_space<vmem>>, vector<1x8x128xf32>
    %194 = vector.shape_cast %193 : vector<1x8x128xf32> to vector<8x128xf32>
    %195 = vector.shape_cast %192 : vector<8x128xf32> to vector<1x8x128xf32>
    tpu.vector_store %arg14[%c6_178, %c0_179, %c0_180], %195 {strides = array<i32>} : memref<8x8x128xf32, #tpu.memory_space<vmem>>, vector<1x8x128xf32>,
    %c0_181 = arith.constant 0 : index
    %c7_182 = arith.constant 7 : index
    %196 = memref.load %arg0[%c0_181, %c7_182] : memref<8x8xi32, #tpu.memory_space<smem>>
    %197 = arith.index_cast %196 : i32 to index
    %c0_183 = arith.constant 0 : index
    %198 = vector.load %arg1[%197, %c0_183] : memref<50x128xf32, #tpu.memory_space<vmem>>, vector<1x128xf32>
    %c1_184 = arith.constant 1 : index
    %c7_185 = arith.constant 7 : index
    %199 = memref.load %arg0[%c1_184, %c7_185] : memref<8x8xi32, #tpu.memory_space<smem>>
    %200 = arith.index_cast %199 : i32 to index
    %c0_186 = arith.constant 0 : index
    %201 = vector.load %arg1[%200, %c0_186] : memref<50x128xf32, #tpu.memory_space<vmem>>, vector<1x128xf32>
    %c2_187 = arith.constant 2 : index
    %c7_188 = arith.constant 7 : index
    %202 = memref.load %arg0[%c2_187, %c7_188] : memref<8x8xi32, #tpu.memory_space<smem>>
    %203 = arith.index_cast %202 : i32 to index
    %c0_189 = arith.constant 0 : index
    %204 = vector.load %arg1[%203, %c0_189] : memref<50x128xf32, #tpu.memory_space<vmem>>, vector<1x128xf32>
    %c3_190 = arith.constant 3 : index
    %c7_191 = arith.constant 7 : index
    %205 = memref.load %arg0[%c3_190, %c7_191] : memref<8x8xi32, #tpu.memory_space<smem>>
    %206 = arith.index_cast %205 : i32 to index
    %c0_192 = arith.constant 0 : index
    %207 = vector.load %arg1[%206, %c0_192] : memref<50x128xf32, #tpu.memory_space<vmem>>, vector<1x128xf32>
    %c4_193 = arith.constant 4 : index
    %c7_194 = arith.constant 7 : index
    %208 = memref.load %arg0[%c4_193, %c7_194] : memref<8x8xi32, #tpu.memory_space<smem>>
    %209 = arith.index_cast %208 : i32 to index
    %c0_195 = arith.constant 0 : index
    %210 = vector.load %arg1[%209, %c0_195] : memref<50x128xf32, #tpu.memory_space<vmem>>, vector<1x128xf32>
    %c5_196 = arith.constant 5 : index
    %c7_197 = arith.constant 7 : index
    %211 = memref.load %arg0[%c5_196, %c7_197] : memref<8x8xi32, #tpu.memory_space<smem>>
    %212 = arith.index_cast %211 : i32 to index
    %c0_198 = arith.constant 0 : index
    %213 = vector.load %arg1[%212, %c0_198] : memref<50x128xf32, #tpu.memory_space<vmem>>, vector<1x128xf32>
    %c6_199 = arith.constant 6 : index
    %c7_200 = arith.constant 7 : index
    %214 = memref.load %arg0[%c6_199, %c7_200] : memref<8x8xi32, #tpu.memory_space<smem>>
    %215 = arith.index_cast %214 : i32 to index
    %c0_201 = arith.constant 0 : index
    %216 = vector.load %arg1[%215, %c0_201] : memref<50x128xf32, #tpu.memory_space<vmem>>, vector<1x128xf32>
    %c7_202 = arith.constant 7 : index
    %c7_203 = arith.constant 7 : index
    %217 = memref.load %arg0[%c7_202, %c7_203] : memref<8x8xi32, #tpu.memory_space<smem>>
    %218 = arith.index_cast %217 : i32 to index
    %c0_204 = arith.constant 0 : index
    %219 = vector.load %arg1[%218, %c0_204] : memref<50x128xf32, #tpu.memory_space<vmem>>, vector<1x128xf32>
    %220 = tpu.concatenate %198, %201, %204, %207, %210, %213, %216, %219 in 0 : vector<1x128xf32>, vector<1x128xf32>, vector<1x128xf32>, vector<1x128xf32>, vector<1x128xf32>, vector<1x128xf32>, vector<1x128xf32>, vector<1x128xf32> -> vector<8x128xf32>
    %c7_205 = arith.constant 7 : index
    %c0_206 = arith.constant 0 : index
    %c0_207 = arith.constant 0 : index
    %221 = vector.load %arg14[%c7_205, %c0_206, %c0_207] : memref<8x8x128xf32, #tpu.memory_space<vmem>>, vector<1x8x128xf32>
    %222 = vector.shape_cast %221 : vector<1x8x128xf32> to vector<8x128xf32>
    %223 = vector.shape_cast %220 : vector<8x128xf32> to vector<1x8x128xf32>
    tpu.vector_store %arg14[%c7_205, %c0_206, %c0_207], %223 {strides = array<i32>} : memref<8x8x128xf32, #tpu.memory_space<vmem>>, vector<1x8x128xf32>,
    %c0_208 = arith.constant 0 : index
    %c0_209 = arith.constant 0 : index
    %224 = vector.load %arg3[%c0_208, %c0_209] : memref<8x1xi32, #tpu.memory_space<vmem>>, vector<8x1xi32>
    %c0_i32 = arith.constant 0 : i32
    %c7_i32 = arith.constant 7 : i32
    %225 = vector.broadcast %c0_i32 : i32 to vector<8x1xi32>
    %226 = arith.maxsi %225, %224 : vector<8x1xi32>
    %227 = vector.broadcast %c7_i32 : i32 to vector<8x1xi32>
    %228 = arith.minsi %227, %226 : vector<8x1xi32>
    %cst = arith.constant 0.000000e+00 : f32
    %229 = vector.broadcast %cst : f32 to vector<8x128xf32>
    %c0_210 = arith.constant 0 : index
    %c0_211 = arith.constant 0 : index
    %c0_212 = arith.constant 0 : index
    %230 = vector.load %arg14[%c0_210, %c0_211, %c0_212] : memref<8x8x128xf32, #tpu.memory_space<vmem>>, vector<8x8x128xf32>
    %231 = vector.shape_cast %230 : vector<8x8x128xf32> to vector<64x128xf32>
    %232 = arith.truncf %231 : vector<64x128xf32> to vector<64x128xbf16>
    %c0_213 = arith.constant 0 : index
    %c0_214 = arith.constant 0 : index
    %c0_215 = arith.constant 0 : index
    %233 = vector.load %arg4[%c0_213, %c0_214, %c0_215] : memref<2x128x512xbf16, #tpu.memory_space<vmem>>, vector<1x128x512xbf16>
    %234 = vector.shape_cast %233 : vector<1x128x512xbf16> to vector<128x512xbf16>
    %cst_216 = arith.constant dense<0.000000e+00> : vector<64x512xf32>
    %235 = tpu.matmul %232, %234, %cst_216 {dimension_numbers = #tpu.dot_dimension_numbers<[1], [0], [0], [1], [0, 0, 1, 1], [], []>} : vector<64x128xbf16>, vector<128x512xbf16>, vector<64x512xf32> -> vector<64x512xf32>
    %c0_217 = arith.constant 0 : index
    %c0_218 = arith.constant 0 : index
    %c0_219 = arith.constant 0 : index
    %236 = vector.load %arg6[%c0_217, %c0_218, %c0_219] : memref<2x1x512xf32, #tpu.memory_space<vmem>>, vector<1x1x512xf32>
    %237 = vector.shape_cast %236 : vector<1x1x512xf32> to vector<1x512xf32>
    %238 = vector.broadcast %237 : vector<1x512xf32> to vector<64x512xf32>
    %239 = arith.addf %235, %238 : vector<64x512xf32>
    %240 = vector.shape_cast %239 : vector<64x512xf32> to vector<8x8x512xf32>
    %c0_220 = arith.constant 0 : index
    %c0_221 = arith.constant 0 : index
    %c0_222 = arith.constant 0 : index
    %241 = vector.load %arg13[%c0_220, %c0_221, %c0_222] : memref<8x8x512xf32, #tpu.memory_space<vmem>>, vector<8x8x512xf32>
    tpu.vector_store %arg13[%c0_220, %c0_221, %c0_222], %240 {strides = array<i32>} : memref<8x8x512xf32, #tpu.memory_space<vmem>>, vector<8x8x512xf32>,
    %cst_223 = arith.constant 0.000000e+00 : f32
    %242 = vector.broadcast %cst_223 : f32 to vector<8x128xf32>
    %cst_224 = arith.constant 0.000000e+00 : f32
    %243 = vector.broadcast %cst_224 : f32 to vector<8x128xf32>
    %c0_i32_225 = arith.constant 0 : i32
    %244 = arith.index_cast %c0_i32_225 : i32 to index
    %c0_226 = arith.constant 0 : index
    %c0_227 = arith.constant 0 : index
    %245 = vector.load %arg13[%244, %c0_226, %c0_227] : memref<8x8x512xf32, #tpu.memory_space<vmem>>, vector<1x8x512xf32>
    %246 = vector.shape_cast %245 : vector<1x8x512xf32> to vector<8x512xf32>
    %247 = arith.truncf %242 : vector<8x128xf32> to vector<8x128xbf16>
    %c0_228 = arith.constant 0 : index
    %c0_229 = arith.constant 0 : index
    %c0_230 = arith.constant 0 : index
    %248 = vector.load %arg5[%c0_228, %c0_229, %c0_230] : memref<2x128x512xbf16, #tpu.memory_space<vmem>>, vector<1x128x512xbf16>
    %249 = vector.shape_cast %248 : vector<1x128x512xbf16> to vector<128x512xbf16>
    %cst_231 = arith.constant dense<0.000000e+00> : vector<8x512xf32>
    %250 = tpu.matmul %247, %249, %cst_231 {dimension_numbers = #tpu.dot_dimension_numbers<[1], [0], [0], [1], [0, 0, 1, 1], [], []>} : vector<8x128xbf16>, vector<128x512xbf16>, vector<8x512xf32> -> vector<8x512xf32>
    %251 = arith.addf %246, %250 : vector<8x512xf32>
    %252 = vector.extract_strided_slice %251 {offsets = [0, 0], sizes = [8, 128], strides = [1, 1]} : vector<8x512xf32> to vector<8x128xf32>
    %253 = arith.negf %252 : vector<8x128xf32>
    %254 = math.exp %253 : vector<8x128xf32>
    %cst_232 = arith.constant 1.000000e+00 : f32
    %255 = vector.broadcast %cst_232 : f32 to vector<8x128xf32>
    %256 = arith.addf %255, %254 : vector<8x128xf32>
    %257 = arith.divf %255, %256 : vector<8x128xf32>
    %258 = vector.extract_strided_slice %251 {offsets = [0, 128], sizes = [8, 128], strides = [1, 1]} : vector<8x512xf32> to vector<8x128xf32>
    %259 = arith.negf %258 : vector<8x128xf32>
    %260 = math.exp %259 : vector<8x128xf32>
    %cst_233 = arith.constant 1.000000e+00 : f32
    %261 = vector.broadcast %cst_233 : f32 to vector<8x128xf32>
    %262 = arith.addf %261, %260 : vector<8x128xf32>
    %263 = arith.divf %261, %262 : vector<8x128xf32>
    %264 = vector.extract_strided_slice %251 {offsets = [0, 256], sizes = [8, 128], strides = [1, 1]} : vector<8x512xf32> to vector<8x128xf32>
    %265 = math.tanh %264 : vector<8x128xf32>
    %266 = vector.extract_strided_slice %251 {offsets = [0, 384], sizes = [8, 128], strides = [1, 1]} : vector<8x512xf32> to vector<8x128xf32>
    %267 = arith.negf %266 : vector<8x128xf32>
    %268 = math.exp %267 : vector<8x128xf32>
    %cst_234 = arith.constant 1.000000e+00 : f32
    %269 = vector.broadcast %cst_234 : f32 to vector<8x128xf32>
    %270 = arith.addf %269, %268 : vector<8x128xf32>
    %271 = arith.divf %269, %270 : vector<8x128xf32>
    %272 = arith.mulf %263, %243 : vector<8x128xf32>
    %273 = arith.mulf %257, %265 : vector<8x128xf32>
    %274 = arith.addf %272, %273 : vector<8x128xf32>
    %275 = math.tanh %274 : vector<8x128xf32>
    %276 = arith.mulf %271, %275 : vector<8x128xf32>
    %277 = arith.index_cast %c0_i32_225 : i32 to index
    %c0_235 = arith.constant 0 : index
    %c0_236 = arith.constant 0 : index
    %278 = vector.load %arg14[%277, %c0_235, %c0_236] : memref<8x8x128xf32, #tpu.memory_space<vmem>>, vector<1x8x128xf32>
    %279 = vector.shape_cast %278 : vector<1x8x128xf32> to vector<8x128xf32>
    %280 = vector.shape_cast %276 : vector<8x128xf32> to vector<1x8x128xf32>
    tpu.vector_store %arg14[%277, %c0_235, %c0_236], %280 {strides = array<i32>} : memref<8x8x128xf32, #tpu.memory_space<vmem>>, vector<1x8x128xf32>,
    %c1_i32 = arith.constant 1 : i32
    %281 = arith.index_cast %c1_i32 : i32 to index
    %c0_237 = arith.constant 0 : index
    %c0_238 = arith.constant 0 : index
    %282 = vector.load %arg13[%281, %c0_237, %c0_238] : memref<8x8x512xf32, #tpu.memory_space<vmem>>, vector<1x8x512xf32>
    %283 = vector.shape_cast %282 : vector<1x8x512xf32> to vector<8x512xf32>
    %284 = arith.truncf %276 : vector<8x128xf32> to vector<8x128xbf16>
    %c0_239 = arith.constant 0 : index
    %c0_240 = arith.constant 0 : index
    %c0_241 = arith.constant 0 : index
    %285 = vector.load %arg5[%c0_239, %c0_240, %c0_241] : memref<2x128x512xbf16, #tpu.memory_space<vmem>>, vector<1x128x512xbf16>
    %286 = vector.shape_cast %285 : vector<1x128x512xbf16> to vector<128x512xbf16>
    %cst_242 = arith.constant dense<0.000000e+00> : vector<8x512xf32>
    %287 = tpu.matmul %284, %286, %cst_242 {dimension_numbers = #tpu.dot_dimension_numbers<[1], [0], [0], [1], [0, 0, 1, 1], [], []>} : vector<8x128xbf16>, vector<128x512xbf16>, vector<8x512xf32> -> vector<8x512xf32>
    %288 = arith.addf %283, %287 : vector<8x512xf32>
    %289 = vector.extract_strided_slice %288 {offsets = [0, 0], sizes = [8, 128], strides = [1, 1]} : vector<8x512xf32> to vector<8x128xf32>
    %290 = arith.negf %289 : vector<8x128xf32>
    %291 = math.exp %290 : vector<8x128xf32>
    %cst_243 = arith.constant 1.000000e+00 : f32
    %292 = vector.broadcast %cst_243 : f32 to vector<8x128xf32>
    %293 = arith.addf %292, %291 : vector<8x128xf32>
    %294 = arith.divf %292, %293 : vector<8x128xf32>
    %295 = vector.extract_strided_slice %288 {offsets = [0, 128], sizes = [8, 128], strides = [1, 1]} : vector<8x512xf32> to vector<8x128xf32>
    %296 = arith.negf %295 : vector<8x128xf32>
    %297 = math.exp %296 : vector<8x128xf32>
    %cst_244 = arith.constant 1.000000e+00 : f32
    %298 = vector.broadcast %cst_244 : f32 to vector<8x128xf32>
    %299 = arith.addf %298, %297 : vector<8x128xf32>
    %300 = arith.divf %298, %299 : vector<8x128xf32>
    %301 = vector.extract_strided_slice %288 {offsets = [0, 256], sizes = [8, 128], strides = [1, 1]} : vector<8x512xf32> to vector<8x128xf32>
    %302 = math.tanh %301 : vector<8x128xf32>
    %303 = vector.extract_strided_slice %288 {offsets = [0, 384], sizes = [8, 128], strides = [1, 1]} : vector<8x512xf32> to vector<8x128xf32>
    %304 = arith.negf %303 : vector<8x128xf32>
    %305 = math.exp %304 : vector<8x128xf32>
    %cst_245 = arith.constant 1.000000e+00 : f32
    %306 = vector.broadcast %cst_245 : f32 to vector<8x128xf32>
    %307 = arith.addf %306, %305 : vector<8x128xf32>
    %308 = arith.divf %306, %307 : vector<8x128xf32>
    %309 = arith.mulf %300, %274 : vector<8x128xf32>
    %310 = arith.mulf %294, %302 : vector<8x128xf32>
    %311 = arith.addf %309, %310 : vector<8x128xf32>
    %312 = math.tanh %311 : vector<8x128xf32>
    %313 = arith.mulf %308, %312 : vector<8x128xf32>
    %314 = arith.index_cast %c1_i32 : i32 to index
    %c0_246 = arith.constant 0 : index
    %c0_247 = arith.constant 0 : index
    %315 = vector.load %arg14[%314, %c0_246, %c0_247] : memref<8x8x128xf32, #tpu.memory_space<vmem>>, vector<1x8x128xf32>
    %316 = vector.shape_cast %315 : vector<1x8x128xf32> to vector<8x128xf32>
    %317 = vector.shape_cast %313 : vector<8x128xf32> to vector<1x8x128xf32>
    tpu.vector_store %arg14[%314, %c0_246, %c0_247], %317 {strides = array<i32>} : memref<8x8x128xf32, #tpu.memory_space<vmem>>, vector<1x8x128xf32>,
    %c2_i32 = arith.constant 2 : i32
    %318 = arith.index_cast %c2_i32 : i32 to index
    %c0_248 = arith.constant 0 : index
    %c0_249 = arith.constant 0 : index
    %319 = vector.load %arg13[%318, %c0_248, %c0_249] : memref<8x8x512xf32, #tpu.memory_space<vmem>>, vector<1x8x512xf32>
    %320 = vector.shape_cast %319 : vector<1x8x512xf32> to vector<8x512xf32>
    %321 = arith.truncf %313 : vector<8x128xf32> to vector<8x128xbf16>
    %c0_250 = arith.constant 0 : index
    %c0_251 = arith.constant 0 : index
    %c0_252 = arith.constant 0 : index
    %322 = vector.load %arg5[%c0_250, %c0_251, %c0_252] : memref<2x128x512xbf16, #tpu.memory_space<vmem>>, vector<1x128x512xbf16>
    %323 = vector.shape_cast %322 : vector<1x128x512xbf16> to vector<128x512xbf16>
    %cst_253 = arith.constant dense<0.000000e+00> : vector<8x512xf32>
    %324 = tpu.matmul %321, %323, %cst_253 {dimension_numbers = #tpu.dot_dimension_numbers<[1], [0], [0], [1], [0, 0, 1, 1], [], []>} : vector<8x128xbf16>, vector<128x512xbf16>, vector<8x512xf32> -> vector<8x512xf32>
    %325 = arith.addf %320, %324 : vector<8x512xf32>
    %326 = vector.extract_strided_slice %325 {offsets = [0, 0], sizes = [8, 128], strides = [1, 1]} : vector<8x512xf32> to vector<8x128xf32>
    %327 = arith.negf %326 : vector<8x128xf32>
    %328 = math.exp %327 : vector<8x128xf32>
    %cst_254 = arith.constant 1.000000e+00 : f32
    %329 = vector.broadcast %cst_254 : f32 to vector<8x128xf32>
    %330 = arith.addf %329, %328 : vector<8x128xf32>
    %331 = arith.divf %329, %330 : vector<8x128xf32>
    %332 = vector.extract_strided_slice %325 {offsets = [0, 128], sizes = [8, 128], strides = [1, 1]} : vector<8x512xf32> to vector<8x128xf32>
    %333 = arith.negf %332 : vector<8x128xf32>
    %334 = math.exp %333 : vector<8x128xf32>
    %cst_255 = arith.constant 1.000000e+00 : f32
    %335 = vector.broadcast %cst_255 : f32 to vector<8x128xf32>
    %336 = arith.addf %335, %334 : vector<8x128xf32>
    %337 = arith.divf %335, %336 : vector<8x128xf32>
    %338 = vector.extract_strided_slice %325 {offsets = [0, 256], sizes = [8, 128], strides = [1, 1]} : vector<8x512xf32> to vector<8x128xf32>
    %339 = math.tanh %338 : vector<8x128xf32>
    %340 = vector.extract_strided_slice %325 {offsets = [0, 384], sizes = [8, 128], strides = [1, 1]} : vector<8x512xf32> to vector<8x128xf32>
    %341 = arith.negf %340 : vector<8x128xf32>
    %342 = math.exp %341 : vector<8x128xf32>
    %cst_256 = arith.constant 1.000000e+00 : f32
    %343 = vector.broadcast %cst_256 : f32 to vector<8x128xf32>
    %344 = arith.addf %343, %342 : vector<8x128xf32>
    %345 = arith.divf %343, %344 : vector<8x128xf32>
    %346 = arith.mulf %337, %311 : vector<8x128xf32>
    %347 = arith.mulf %331, %339 : vector<8x128xf32>
    %348 = arith.addf %346, %347 : vector<8x128xf32>
    %349 = math.tanh %348 : vector<8x128xf32>
    %350 = arith.mulf %345, %349 : vector<8x128xf32>
    %351 = arith.index_cast %c2_i32 : i32 to index
    %c0_257 = arith.constant 0 : index
    %c0_258 = arith.constant 0 : index
    %352 = vector.load %arg14[%351, %c0_257, %c0_258] : memref<8x8x128xf32, #tpu.memory_space<vmem>>, vector<1x8x128xf32>
    %353 = vector.shape_cast %352 : vector<1x8x128xf32> to vector<8x128xf32>
    %354 = vector.shape_cast %350 : vector<8x128xf32> to vector<1x8x128xf32>
    tpu.vector_store %arg14[%351, %c0_257, %c0_258], %354 {strides = array<i32>} : memref<8x8x128xf32, #tpu.memory_space<vmem>>, vector<1x8x128xf32>,
    %c3_i32 = arith.constant 3 : i32
    %355 = arith.index_cast %c3_i32 : i32 to index
    %c0_259 = arith.constant 0 : index
    %c0_260 = arith.constant 0 : index
    %356 = vector.load %arg13[%355, %c0_259, %c0_260] : memref<8x8x512xf32, #tpu.memory_space<vmem>>, vector<1x8x512xf32>
    %357 = vector.shape_cast %356 : vector<1x8x512xf32> to vector<8x512xf32>
    %358 = arith.truncf %350 : vector<8x128xf32> to vector<8x128xbf16>
    %c0_261 = arith.constant 0 : index
    %c0_262 = arith.constant 0 : index
    %c0_263 = arith.constant 0 : index
    %359 = vector.load %arg5[%c0_261, %c0_262, %c0_263] : memref<2x128x512xbf16, #tpu.memory_space<vmem>>, vector<1x128x512xbf16>
    %360 = vector.shape_cast %359 : vector<1x128x512xbf16> to vector<128x512xbf16>
    %cst_264 = arith.constant dense<0.000000e+00> : vector<8x512xf32>
    %361 = tpu.matmul %358, %360, %cst_264 {dimension_numbers = #tpu.dot_dimension_numbers<[1], [0], [0], [1], [0, 0, 1, 1], [], []>} : vector<8x128xbf16>, vector<128x512xbf16>, vector<8x512xf32> -> vector<8x512xf32>
    %362 = arith.addf %357, %361 : vector<8x512xf32>
    %363 = vector.extract_strided_slice %362 {offsets = [0, 0], sizes = [8, 128], strides = [1, 1]} : vector<8x512xf32> to vector<8x128xf32>
    %364 = arith.negf %363 : vector<8x128xf32>
    %365 = math.exp %364 : vector<8x128xf32>
    %cst_265 = arith.constant 1.000000e+00 : f32
    %366 = vector.broadcast %cst_265 : f32 to vector<8x128xf32>
    %367 = arith.addf %366, %365 : vector<8x128xf32>
    %368 = arith.divf %366, %367 : vector<8x128xf32>
    %369 = vector.extract_strided_slice %362 {offsets = [0, 128], sizes = [8, 128], strides = [1, 1]} : vector<8x512xf32> to vector<8x128xf32>
    %370 = arith.negf %369 : vector<8x128xf32>
    %371 = math.exp %370 : vector<8x128xf32>
    %cst_266 = arith.constant 1.000000e+00 : f32
    %372 = vector.broadcast %cst_266 : f32 to vector<8x128xf32>
    %373 = arith.addf %372, %371 : vector<8x128xf32>
    %374 = arith.divf %372, %373 : vector<8x128xf32>
    %375 = vector.extract_strided_slice %362 {offsets = [0, 256], sizes = [8, 128], strides = [1, 1]} : vector<8x512xf32> to vector<8x128xf32>
    %376 = math.tanh %375 : vector<8x128xf32>
    %377 = vector.extract_strided_slice %362 {offsets = [0, 384], sizes = [8, 128], strides = [1, 1]} : vector<8x512xf32> to vector<8x128xf32>
    %378 = arith.negf %377 : vector<8x128xf32>
    %379 = math.exp %378 : vector<8x128xf32>
    %cst_267 = arith.constant 1.000000e+00 : f32
    %380 = vector.broadcast %cst_267 : f32 to vector<8x128xf32>
    %381 = arith.addf %380, %379 : vector<8x128xf32>
    %382 = arith.divf %380, %381 : vector<8x128xf32>
    %383 = arith.mulf %374, %348 : vector<8x128xf32>
    %384 = arith.mulf %368, %376 : vector<8x128xf32>
    %385 = arith.addf %383, %384 : vector<8x128xf32>
    %386 = math.tanh %385 : vector<8x128xf32>
    %387 = arith.mulf %382, %386 : vector<8x128xf32>
    %388 = arith.index_cast %c3_i32 : i32 to index
    %c0_268 = arith.constant 0 : index
    %c0_269 = arith.constant 0 : index
    %389 = vector.load %arg14[%388, %c0_268, %c0_269] : memref<8x8x128xf32, #tpu.memory_space<vmem>>, vector<1x8x128xf32>
    %390 = vector.shape_cast %389 : vector<1x8x128xf32> to vector<8x128xf32>
    %391 = vector.shape_cast %387 : vector<8x128xf32> to vector<1x8x128xf32>
    tpu.vector_store %arg14[%388, %c0_268, %c0_269], %391 {strides = array<i32>} : memref<8x8x128xf32, #tpu.memory_space<vmem>>, vector<1x8x128xf32>,
    %c4_i32 = arith.constant 4 : i32
    %392 = arith.index_cast %c4_i32 : i32 to index
    %c0_270 = arith.constant 0 : index
    %c0_271 = arith.constant 0 : index
    %393 = vector.load %arg13[%392, %c0_270, %c0_271] : memref<8x8x512xf32, #tpu.memory_space<vmem>>, vector<1x8x512xf32>
    %394 = vector.shape_cast %393 : vector<1x8x512xf32> to vector<8x512xf32>
    %395 = arith.truncf %387 : vector<8x128xf32> to vector<8x128xbf16>
    %c0_272 = arith.constant 0 : index
    %c0_273 = arith.constant 0 : index
    %c0_274 = arith.constant 0 : index
    %396 = vector.load %arg5[%c0_272, %c0_273, %c0_274] : memref<2x128x512xbf16, #tpu.memory_space<vmem>>, vector<1x128x512xbf16>
    %397 = vector.shape_cast %396 : vector<1x128x512xbf16> to vector<128x512xbf16>
    %cst_275 = arith.constant dense<0.000000e+00> : vector<8x512xf32>
    %398 = tpu.matmul %395, %397, %cst_275 {dimension_numbers = #tpu.dot_dimension_numbers<[1], [0], [0], [1], [0, 0, 1, 1], [], []>} : vector<8x128xbf16>, vector<128x512xbf16>, vector<8x512xf32> -> vector<8x512xf32>
    %399 = arith.addf %394, %398 : vector<8x512xf32>
    %400 = vector.extract_strided_slice %399 {offsets = [0, 0], sizes = [8, 128], strides = [1, 1]} : vector<8x512xf32> to vector<8x128xf32>
    %401 = arith.negf %400 : vector<8x128xf32>
    %402 = math.exp %401 : vector<8x128xf32>
    %cst_276 = arith.constant 1.000000e+00 : f32
    %403 = vector.broadcast %cst_276 : f32 to vector<8x128xf32>
    %404 = arith.addf %403, %402 : vector<8x128xf32>
    %405 = arith.divf %403, %404 : vector<8x128xf32>
    %406 = vector.extract_strided_slice %399 {offsets = [0, 128], sizes = [8, 128], strides = [1, 1]} : vector<8x512xf32> to vector<8x128xf32>
    %407 = arith.negf %406 : vector<8x128xf32>
    %408 = math.exp %407 : vector<8x128xf32>
    %cst_277 = arith.constant 1.000000e+00 : f32
    %409 = vector.broadcast %cst_277 : f32 to vector<8x128xf32>
    %410 = arith.addf %409, %408 : vector<8x128xf32>
    %411 = arith.divf %409, %410 : vector<8x128xf32>
    %412 = vector.extract_strided_slice %399 {offsets = [0, 256], sizes = [8, 128], strides = [1, 1]} : vector<8x512xf32> to vector<8x128xf32>
    %413 = math.tanh %412 : vector<8x128xf32>
    %414 = vector.extract_strided_slice %399 {offsets = [0, 384], sizes = [8, 128], strides = [1, 1]} : vector<8x512xf32> to vector<8x128xf32>
    %415 = arith.negf %414 : vector<8x128xf32>
    %416 = math.exp %415 : vector<8x128xf32>
    %cst_278 = arith.constant 1.000000e+00 : f32
    %417 = vector.broadcast %cst_278 : f32 to vector<8x128xf32>
    %418 = arith.addf %417, %416 : vector<8x128xf32>
    %419 = arith.divf %417, %418 : vector<8x128xf32>
    %420 = arith.mulf %411, %385 : vector<8x128xf32>
    %421 = arith.mulf %405, %413 : vector<8x128xf32>
    %422 = arith.addf %420, %421 : vector<8x128xf32>
    %423 = math.tanh %422 : vector<8x128xf32>
    %424 = arith.mulf %419, %423 : vector<8x128xf32>
    %425 = arith.index_cast %c4_i32 : i32 to index
    %c0_279 = arith.constant 0 : index
    %c0_280 = arith.constant 0 : index
    %426 = vector.load %arg14[%425, %c0_279, %c0_280] : memref<8x8x128xf32, #tpu.memory_space<vmem>>, vector<1x8x128xf32>
    %427 = vector.shape_cast %426 : vector<1x8x128xf32> to vector<8x128xf32>
    %428 = vector.shape_cast %424 : vector<8x128xf32> to vector<1x8x128xf32>
    tpu.vector_store %arg14[%425, %c0_279, %c0_280], %428 {strides = array<i32>} : memref<8x8x128xf32, #tpu.memory_space<vmem>>, vector<1x8x128xf32>,
    %c5_i32 = arith.constant 5 : i32
    %429 = arith.index_cast %c5_i32 : i32 to index
    %c0_281 = arith.constant 0 : index
    %c0_282 = arith.constant 0 : index
    %430 = vector.load %arg13[%429, %c0_281, %c0_282] : memref<8x8x512xf32, #tpu.memory_space<vmem>>, vector<1x8x512xf32>
    %431 = vector.shape_cast %430 : vector<1x8x512xf32> to vector<8x512xf32>
    %432 = arith.truncf %424 : vector<8x128xf32> to vector<8x128xbf16>
    %c0_283 = arith.constant 0 : index
    %c0_284 = arith.constant 0 : index
    %c0_285 = arith.constant 0 : index
    %433 = vector.load %arg5[%c0_283, %c0_284, %c0_285] : memref<2x128x512xbf16, #tpu.memory_space<vmem>>, vector<1x128x512xbf16>
    %434 = vector.shape_cast %433 : vector<1x128x512xbf16> to vector<128x512xbf16>
    %cst_286 = arith.constant dense<0.000000e+00> : vector<8x512xf32>
    %435 = tpu.matmul %432, %434, %cst_286 {dimension_numbers = #tpu.dot_dimension_numbers<[1], [0], [0], [1], [0, 0, 1, 1], [], []>} : vector<8x128xbf16>, vector<128x512xbf16>, vector<8x512xf32> -> vector<8x512xf32>
    %436 = arith.addf %431, %435 : vector<8x512xf32>
    %437 = vector.extract_strided_slice %436 {offsets = [0, 0], sizes = [8, 128], strides = [1, 1]} : vector<8x512xf32> to vector<8x128xf32>
    %438 = arith.negf %437 : vector<8x128xf32>
    %439 = math.exp %438 : vector<8x128xf32>
    %cst_287 = arith.constant 1.000000e+00 : f32
    %440 = vector.broadcast %cst_287 : f32 to vector<8x128xf32>
    %441 = arith.addf %440, %439 : vector<8x128xf32>
    %442 = arith.divf %440, %441 : vector<8x128xf32>
    %443 = vector.extract_strided_slice %436 {offsets = [0, 128], sizes = [8, 128], strides = [1, 1]} : vector<8x512xf32> to vector<8x128xf32>
    %444 = arith.negf %443 : vector<8x128xf32>
    %445 = math.exp %444 : vector<8x128xf32>
    %cst_288 = arith.constant 1.000000e+00 : f32
    %446 = vector.broadcast %cst_288 : f32 to vector<8x128xf32>
    %447 = arith.addf %446, %445 : vector<8x128xf32>
    %448 = arith.divf %446, %447 : vector<8x128xf32>
    %449 = vector.extract_strided_slice %436 {offsets = [0, 256], sizes = [8, 128], strides = [1, 1]} : vector<8x512xf32> to vector<8x128xf32>
    %450 = math.tanh %449 : vector<8x128xf32>
    %451 = vector.extract_strided_slice %436 {offsets = [0, 384], sizes = [8, 128], strides = [1, 1]} : vector<8x512xf32> to vector<8x128xf32>
    %452 = arith.negf %451 : vector<8x128xf32>
    %453 = math.exp %452 : vector<8x128xf32>
    %cst_289 = arith.constant 1.000000e+00 : f32
    %454 = vector.broadcast %cst_289 : f32 to vector<8x128xf32>
    %455 = arith.addf %454, %453 : vector<8x128xf32>
    %456 = arith.divf %454, %455 : vector<8x128xf32>
    %457 = arith.mulf %448, %422 : vector<8x128xf32>
    %458 = arith.mulf %442, %450 : vector<8x128xf32>
    %459 = arith.addf %457, %458 : vector<8x128xf32>
    %460 = math.tanh %459 : vector<8x128xf32>
    %461 = arith.mulf %456, %460 : vector<8x128xf32>
    %462 = arith.index_cast %c5_i32 : i32 to index
    %c0_290 = arith.constant 0 : index
    %c0_291 = arith.constant 0 : index
    %463 = vector.load %arg14[%462, %c0_290, %c0_291] : memref<8x8x128xf32, #tpu.memory_space<vmem>>, vector<1x8x128xf32>
    %464 = vector.shape_cast %463 : vector<1x8x128xf32> to vector<8x128xf32>
    %465 = vector.shape_cast %461 : vector<8x128xf32> to vector<1x8x128xf32>
    tpu.vector_store %arg14[%462, %c0_290, %c0_291], %465 {strides = array<i32>} : memref<8x8x128xf32, #tpu.memory_space<vmem>>, vector<1x8x128xf32>,
    %c6_i32 = arith.constant 6 : i32
    %466 = arith.index_cast %c6_i32 : i32 to index
    %c0_292 = arith.constant 0 : index
    %c0_293 = arith.constant 0 : index
    %467 = vector.load %arg13[%466, %c0_292, %c0_293] : memref<8x8x512xf32, #tpu.memory_space<vmem>>, vector<1x8x512xf32>
    %468 = vector.shape_cast %467 : vector<1x8x512xf32> to vector<8x512xf32>
    %469 = arith.truncf %461 : vector<8x128xf32> to vector<8x128xbf16>
    %c0_294 = arith.constant 0 : index
    %c0_295 = arith.constant 0 : index
    %c0_296 = arith.constant 0 : index
    %470 = vector.load %arg5[%c0_294, %c0_295, %c0_296] : memref<2x128x512xbf16, #tpu.memory_space<vmem>>, vector<1x128x512xbf16>
    %471 = vector.shape_cast %470 : vector<1x128x512xbf16> to vector<128x512xbf16>
    %cst_297 = arith.constant dense<0.000000e+00> : vector<8x512xf32>
    %472 = tpu.matmul %469, %471, %cst_297 {dimension_numbers = #tpu.dot_dimension_numbers<[1], [0], [0], [1], [0, 0, 1, 1], [], []>} : vector<8x128xbf16>, vector<128x512xbf16>, vector<8x512xf32> -> vector<8x512xf32>
    %473 = arith.addf %468, %472 : vector<8x512xf32>
    %474 = vector.extract_strided_slice %473 {offsets = [0, 0], sizes = [8, 128], strides = [1, 1]} : vector<8x512xf32> to vector<8x128xf32>
    %475 = arith.negf %474 : vector<8x128xf32>
    %476 = math.exp %475 : vector<8x128xf32>
    %cst_298 = arith.constant 1.000000e+00 : f32
    %477 = vector.broadcast %cst_298 : f32 to vector<8x128xf32>
    %478 = arith.addf %477, %476 : vector<8x128xf32>
    %479 = arith.divf %477, %478 : vector<8x128xf32>
    %480 = vector.extract_strided_slice %473 {offsets = [0, 128], sizes = [8, 128], strides = [1, 1]} : vector<8x512xf32> to vector<8x128xf32>
    %481 = arith.negf %480 : vector<8x128xf32>
    %482 = math.exp %481 : vector<8x128xf32>
    %cst_299 = arith.constant 1.000000e+00 : f32
    %483 = vector.broadcast %cst_299 : f32 to vector<8x128xf32>
    %484 = arith.addf %483, %482 : vector<8x128xf32>
    %485 = arith.divf %483, %484 : vector<8x128xf32>
    %486 = vector.extract_strided_slice %473 {offsets = [0, 256], sizes = [8, 128], strides = [1, 1]} : vector<8x512xf32> to vector<8x128xf32>
    %487 = math.tanh %486 : vector<8x128xf32>
    %488 = vector.extract_strided_slice %473 {offsets = [0, 384], sizes = [8, 128], strides = [1, 1]} : vector<8x512xf32> to vector<8x128xf32>
    %489 = arith.negf %488 : vector<8x128xf32>
    %490 = math.exp %489 : vector<8x128xf32>
    %cst_300 = arith.constant 1.000000e+00 : f32
    %491 = vector.broadcast %cst_300 : f32 to vector<8x128xf32>
    %492 = arith.addf %491, %490 : vector<8x128xf32>
    %493 = arith.divf %491, %492 : vector<8x128xf32>
    %494 = arith.mulf %485, %459 : vector<8x128xf32>
    %495 = arith.mulf %479, %487 : vector<8x128xf32>
    %496 = arith.addf %494, %495 : vector<8x128xf32>
    %497 = math.tanh %496 : vector<8x128xf32>
    %498 = arith.mulf %493, %497 : vector<8x128xf32>
    %499 = arith.index_cast %c6_i32 : i32 to index
    %c0_301 = arith.constant 0 : index
    %c0_302 = arith.constant 0 : index
    %500 = vector.load %arg14[%499, %c0_301, %c0_302] : memref<8x8x128xf32, #tpu.memory_space<vmem>>, vector<1x8x128xf32>
    %501 = vector.shape_cast %500 : vector<1x8x128xf32> to vector<8x128xf32>
    %502 = vector.shape_cast %498 : vector<8x128xf32> to vector<1x8x128xf32>
    tpu.vector_store %arg14[%499, %c0_301, %c0_302], %502 {strides = array<i32>} : memref<8x8x128xf32, #tpu.memory_space<vmem>>, vector<1x8x128xf32>,
    %c7_i32_303 = arith.constant 7 : i32
    %503 = arith.index_cast %c7_i32_303 : i32 to index
    %c0_304 = arith.constant 0 : index
    %c0_305 = arith.constant 0 : index
    %504 = vector.load %arg13[%503, %c0_304, %c0_305] : memref<8x8x512xf32, #tpu.memory_space<vmem>>, vector<1x8x512xf32>
    %505 = vector.shape_cast %504 : vector<1x8x512xf32> to vector<8x512xf32>
    %506 = arith.truncf %498 : vector<8x128xf32> to vector<8x128xbf16>
    %c0_306 = arith.constant 0 : index
    %c0_307 = arith.constant 0 : index
    %c0_308 = arith.constant 0 : index
    %507 = vector.load %arg5[%c0_306, %c0_307, %c0_308] : memref<2x128x512xbf16, #tpu.memory_space<vmem>>, vector<1x128x512xbf16>
    %508 = vector.shape_cast %507 : vector<1x128x512xbf16> to vector<128x512xbf16>
    %cst_309 = arith.constant dense<0.000000e+00> : vector<8x512xf32>
    %509 = tpu.matmul %506, %508, %cst_309 {dimension_numbers = #tpu.dot_dimension_numbers<[1], [0], [0], [1], [0, 0, 1, 1], [], []>} : vector<8x128xbf16>, vector<128x512xbf16>, vector<8x512xf32> -> vector<8x512xf32>
    %510 = arith.addf %505, %509 : vector<8x512xf32>
    %511 = vector.extract_strided_slice %510 {offsets = [0, 0], sizes = [8, 128], strides = [1, 1]} : vector<8x512xf32> to vector<8x128xf32>
    %512 = arith.negf %511 : vector<8x128xf32>
    %513 = math.exp %512 : vector<8x128xf32>
    %cst_310 = arith.constant 1.000000e+00 : f32
    %514 = vector.broadcast %cst_310 : f32 to vector<8x128xf32>
    %515 = arith.addf %514, %513 : vector<8x128xf32>
    %516 = arith.divf %514, %515 : vector<8x128xf32>
    %517 = vector.extract_strided_slice %510 {offsets = [0, 128], sizes = [8, 128], strides = [1, 1]} : vector<8x512xf32> to vector<8x128xf32>
    %518 = arith.negf %517 : vector<8x128xf32>
    %519 = math.exp %518 : vector<8x128xf32>
    %cst_311 = arith.constant 1.000000e+00 : f32
    %520 = vector.broadcast %cst_311 : f32 to vector<8x128xf32>
    %521 = arith.addf %520, %519 : vector<8x128xf32>
    %522 = arith.divf %520, %521 : vector<8x128xf32>
    %523 = vector.extract_strided_slice %510 {offsets = [0, 256], sizes = [8, 128], strides = [1, 1]} : vector<8x512xf32> to vector<8x128xf32>
    %524 = math.tanh %523 : vector<8x128xf32>
    %525 = vector.extract_strided_slice %510 {offsets = [0, 384], sizes = [8, 128], strides = [1, 1]} : vector<8x512xf32> to vector<8x128xf32>
    %526 = arith.negf %525 : vector<8x128xf32>
    %527 = math.exp %526 : vector<8x128xf32>
    %cst_312 = arith.constant 1.000000e+00 : f32
    %528 = vector.broadcast %cst_312 : f32 to vector<8x128xf32>
    %529 = arith.addf %528, %527 : vector<8x128xf32>
    %530 = arith.divf %528, %529 : vector<8x128xf32>
    %531 = arith.mulf %522, %496 : vector<8x128xf32>
    %532 = arith.mulf %516, %524 : vector<8x128xf32>
    %533 = arith.addf %531, %532 : vector<8x128xf32>
    %534 = math.tanh %533 : vector<8x128xf32>
    %535 = arith.mulf %530, %534 : vector<8x128xf32>
    %536 = arith.index_cast %c7_i32_303 : i32 to index
    %c0_313 = arith.constant 0 : index
    %c0_314 = arith.constant 0 : index
    %537 = vector.load %arg14[%536, %c0_313, %c0_314] : memref<8x8x128xf32, #tpu.memory_space<vmem>>, vector<1x8x128xf32>
    %538 = vector.shape_cast %537 : vector<1x8x128xf32> to vector<8x128xf32>
    %539 = vector.shape_cast %535 : vector<8x128xf32> to vector<1x8x128xf32>
    tpu.vector_store %arg14[%536, %c0_313, %c0_314], %539 {strides = array<i32>} : memref<8x8x128xf32, #tpu.memory_space<vmem>>, vector<1x8x128xf32>,
    %c8_i32 = arith.constant 8 : i32
    %c0_315 = arith.constant 0 : index
    %c0_316 = arith.constant 0 : index
    %c0_317 = arith.constant 0 : index
    %540 = vector.load %arg14[%c0_315, %c0_316, %c0_317] : memref<8x8x128xf32, #tpu.memory_space<vmem>>, vector<8x8x128xf32>
    %541 = vector.shape_cast %540 : vector<8x8x128xf32> to vector<64x128xf32>
    %542 = arith.truncf %541 : vector<64x128xf32> to vector<64x128xbf16>
    %c1_318 = arith.constant 1 : index
    %c0_319 = arith.constant 0 : index
    %c0_320 = arith.constant 0 : index
    %543 = vector.load %arg4[%c1_318, %c0_319, %c0_320] : memref<2x128x512xbf16, #tpu.memory_space<vmem>>, vector<1x128x512xbf16>
    %544 = vector.shape_cast %543 : vector<1x128x512xbf16> to vector<128x512xbf16>
    %cst_321 = arith.constant dense<0.000000e+00> : vector<64x512xf32>
    %545 = tpu.matmul %542, %544, %cst_321 {dimension_numbers = #tpu.dot_dimension_numbers<[1], [0], [0], [1], [0, 0, 1, 1], [], []>} : vector<64x128xbf16>, vector<128x512xbf16>, vector<64x512xf32> -> vector<64x512xf32>
    %c1_322 = arith.constant 1 : index
    %c0_323 = arith.constant 0 : index
    %c0_324 = arith.constant 0 : index
    %546 = vector.load %arg6[%c1_322, %c0_323, %c0_324] : memref<2x1x512xf32, #tpu.memory_space<vmem>>, vector<1x1x512xf32>
    %547 = vector.shape_cast %546 : vector<1x1x512xf32> to vector<1x512xf32>
    %548 = vector.broadcast %547 : vector<1x512xf32> to vector<64x512xf32>
    %549 = arith.addf %545, %548 : vector<64x512xf32>
    %550 = vector.shape_cast %549 : vector<64x512xf32> to vector<8x8x512xf32>
    %c0_325 = arith.constant 0 : index
    %c0_326 = arith.constant 0 : index
    %c0_327 = arith.constant 0 : index
    %551 = vector.load %arg13[%c0_325, %c0_326, %c0_327] : memref<8x8x512xf32, #tpu.memory_space<vmem>>, vector<8x8x512xf32>
    tpu.vector_store %arg13[%c0_325, %c0_326, %c0_327], %550 {strides = array<i32>} : memref<8x8x512xf32, #tpu.memory_space<vmem>>, vector<8x8x512xf32>,
    %cst_328 = arith.constant 0.000000e+00 : f32
    %552 = vector.broadcast %cst_328 : f32 to vector<8x128xf32>
    %cst_329 = arith.constant 0.000000e+00 : f32
    %553 = vector.broadcast %cst_329 : f32 to vector<8x128xf32>
    %c0_i32_330 = arith.constant 0 : i32
    %554 = arith.index_cast %c0_i32_330 : i32 to index
    %c0_331 = arith.constant 0 : index
    %c0_332 = arith.constant 0 : index
    %555 = vector.load %arg13[%554, %c0_331, %c0_332] : memref<8x8x512xf32, #tpu.memory_space<vmem>>, vector<1x8x512xf32>
    %556 = vector.shape_cast %555 : vector<1x8x512xf32> to vector<8x512xf32>
    %557 = arith.truncf %552 : vector<8x128xf32> to vector<8x128xbf16>
    %c1_333 = arith.constant 1 : index
    %c0_334 = arith.constant 0 : index
    %c0_335 = arith.constant 0 : index
    %558 = vector.load %arg5[%c1_333, %c0_334, %c0_335] : memref<2x128x512xbf16, #tpu.memory_space<vmem>>, vector<1x128x512xbf16>
    %559 = vector.shape_cast %558 : vector<1x128x512xbf16> to vector<128x512xbf16>
    %cst_336 = arith.constant dense<0.000000e+00> : vector<8x512xf32>
    %560 = tpu.matmul %557, %559, %cst_336 {dimension_numbers = #tpu.dot_dimension_numbers<[1], [0], [0], [1], [0, 0, 1, 1], [], []>} : vector<8x128xbf16>, vector<128x512xbf16>, vector<8x512xf32> -> vector<8x512xf32>
    %561 = arith.addf %556, %560 : vector<8x512xf32>
    %562 = vector.extract_strided_slice %561 {offsets = [0, 0], sizes = [8, 128], strides = [1, 1]} : vector<8x512xf32> to vector<8x128xf32>
    %563 = arith.negf %562 : vector<8x128xf32>
    %564 = math.exp %563 : vector<8x128xf32>
    %cst_337 = arith.constant 1.000000e+00 : f32
    %565 = vector.broadcast %cst_337 : f32 to vector<8x128xf32>
    %566 = arith.addf %565, %564 : vector<8x128xf32>
    %567 = arith.divf %565, %566 : vector<8x128xf32>
    %568 = vector.extract_strided_slice %561 {offsets = [0, 128], sizes = [8, 128], strides = [1, 1]} : vector<8x512xf32> to vector<8x128xf32>
    %569 = arith.negf %568 : vector<8x128xf32>
    %570 = math.exp %569 : vector<8x128xf32>
    %cst_338 = arith.constant 1.000000e+00 : f32
    %571 = vector.broadcast %cst_338 : f32 to vector<8x128xf32>
    %572 = arith.addf %571, %570 : vector<8x128xf32>
    %573 = arith.divf %571, %572 : vector<8x128xf32>
    %574 = vector.extract_strided_slice %561 {offsets = [0, 256], sizes = [8, 128], strides = [1, 1]} : vector<8x512xf32> to vector<8x128xf32>
    %575 = math.tanh %574 : vector<8x128xf32>
    %576 = vector.extract_strided_slice %561 {offsets = [0, 384], sizes = [8, 128], strides = [1, 1]} : vector<8x512xf32> to vector<8x128xf32>
    %577 = arith.negf %576 : vector<8x128xf32>
    %578 = math.exp %577 : vector<8x128xf32>
    %cst_339 = arith.constant 1.000000e+00 : f32
    %579 = vector.broadcast %cst_339 : f32 to vector<8x128xf32>
    %580 = arith.addf %579, %578 : vector<8x128xf32>
    %581 = arith.divf %579, %580 : vector<8x128xf32>
    %582 = arith.mulf %573, %553 : vector<8x128xf32>
    %583 = arith.mulf %567, %575 : vector<8x128xf32>
    %584 = arith.addf %582, %583 : vector<8x128xf32>
    %585 = math.tanh %584 : vector<8x128xf32>
    %586 = arith.mulf %581, %585 : vector<8x128xf32>
    %587 = vector.broadcast %c0_i32_330 : i32 to vector<8x1xi32>
    %588 = arith.cmpi eq, %228, %587 : vector<8x1xi32>
    %589 = vector.shape_cast %588 : vector<8x1xi1> to vector<8x1xi1>
    %590 = vector.broadcast %589 : vector<8x1xi1> to vector<8x128xi1>
    %591 = arith.select %590, %586, %229 : vector<8x128xi1>, vector<8x128xf32>
    %c1_i32_340 = arith.constant 1 : i32
    %592 = arith.index_cast %c1_i32_340 : i32 to index
    %c0_341 = arith.constant 0 : index
    %c0_342 = arith.constant 0 : index
    %593 = vector.load %arg13[%592, %c0_341, %c0_342] : memref<8x8x512xf32, #tpu.memory_space<vmem>>, vector<1x8x512xf32>
    %594 = vector.shape_cast %593 : vector<1x8x512xf32> to vector<8x512xf32>
    %595 = arith.truncf %586 : vector<8x128xf32> to vector<8x128xbf16>
    %c1_343 = arith.constant 1 : index
    %c0_344 = arith.constant 0 : index
    %c0_345 = arith.constant 0 : index
    %596 = vector.load %arg5[%c1_343, %c0_344, %c0_345] : memref<2x128x512xbf16, #tpu.memory_space<vmem>>, vector<1x128x512xbf16>
    %597 = vector.shape_cast %596 : vector<1x128x512xbf16> to vector<128x512xbf16>
    %cst_346 = arith.constant dense<0.000000e+00> : vector<8x512xf32>
    %598 = tpu.matmul %595, %597, %cst_346 {dimension_numbers = #tpu.dot_dimension_numbers<[1], [0], [0], [1], [0, 0, 1, 1], [], []>} : vector<8x128xbf16>, vector<128x512xbf16>, vector<8x512xf32> -> vector<8x512xf32>
    %599 = arith.addf %594, %598 : vector<8x512xf32>
    %600 = vector.extract_strided_slice %599 {offsets = [0, 0], sizes = [8, 128], strides = [1, 1]} : vector<8x512xf32> to vector<8x128xf32>
    %601 = arith.negf %600 : vector<8x128xf32>
    %602 = math.exp %601 : vector<8x128xf32>
    %cst_347 = arith.constant 1.000000e+00 : f32
    %603 = vector.broadcast %cst_347 : f32 to vector<8x128xf32>
    %604 = arith.addf %603, %602 : vector<8x128xf32>
    %605 = arith.divf %603, %604 : vector<8x128xf32>
    %606 = vector.extract_strided_slice %599 {offsets = [0, 128], sizes = [8, 128], strides = [1, 1]} : vector<8x512xf32> to vector<8x128xf32>
    %607 = arith.negf %606 : vector<8x128xf32>
    %608 = math.exp %607 : vector<8x128xf32>
    %cst_348 = arith.constant 1.000000e+00 : f32
    %609 = vector.broadcast %cst_348 : f32 to vector<8x128xf32>
    %610 = arith.addf %609, %608 : vector<8x128xf32>
    %611 = arith.divf %609, %610 : vector<8x128xf32>
    %612 = vector.extract_strided_slice %599 {offsets = [0, 256], sizes = [8, 128], strides = [1, 1]} : vector<8x512xf32> to vector<8x128xf32>
    %613 = math.tanh %612 : vector<8x128xf32>
    %614 = vector.extract_strided_slice %599 {offsets = [0, 384], sizes = [8, 128], strides = [1, 1]} : vector<8x512xf32> to vector<8x128xf32>
    %615 = arith.negf %614 : vector<8x128xf32>
    %616 = math.exp %615 : vector<8x128xf32>
    %cst_349 = arith.constant 1.000000e+00 : f32
    %617 = vector.broadcast %cst_349 : f32 to vector<8x128xf32>
    %618 = arith.addf %617, %616 : vector<8x128xf32>
    %619 = arith.divf %617, %618 : vector<8x128xf32>
    %620 = arith.mulf %611, %584 : vector<8x128xf32>
    %621 = arith.mulf %605, %613 : vector<8x128xf32>
    %622 = arith.addf %620, %621 : vector<8x128xf32>
    %623 = math.tanh %622 : vector<8x128xf32>
    %624 = arith.mulf %619, %623 : vector<8x128xf32>
    %625 = vector.broadcast %c1_i32_340 : i32 to vector<8x1xi32>
    %626 = arith.cmpi eq, %228, %625 : vector<8x1xi32>
    %627 = vector.shape_cast %626 : vector<8x1xi1> to vector<8x1xi1>
    %628 = vector.broadcast %627 : vector<8x1xi1> to vector<8x128xi1>
    %629 = arith.select %628, %624, %591 : vector<8x128xi1>, vector<8x128xf32>
    %c2_i32_350 = arith.constant 2 : i32
    %630 = arith.index_cast %c2_i32_350 : i32 to index
    %c0_351 = arith.constant 0 : index
    %c0_352 = arith.constant 0 : index
    %631 = vector.load %arg13[%630, %c0_351, %c0_352] : memref<8x8x512xf32, #tpu.memory_space<vmem>>, vector<1x8x512xf32>
    %632 = vector.shape_cast %631 : vector<1x8x512xf32> to vector<8x512xf32>
    %633 = arith.truncf %624 : vector<8x128xf32> to vector<8x128xbf16>
    %c1_353 = arith.constant 1 : index
    %c0_354 = arith.constant 0 : index
    %c0_355 = arith.constant 0 : index
    %634 = vector.load %arg5[%c1_353, %c0_354, %c0_355] : memref<2x128x512xbf16, #tpu.memory_space<vmem>>, vector<1x128x512xbf16>
    %635 = vector.shape_cast %634 : vector<1x128x512xbf16> to vector<128x512xbf16>
    %cst_356 = arith.constant dense<0.000000e+00> : vector<8x512xf32>
    %636 = tpu.matmul %633, %635, %cst_356 {dimension_numbers = #tpu.dot_dimension_numbers<[1], [0], [0], [1], [0, 0, 1, 1], [], []>} : vector<8x128xbf16>, vector<128x512xbf16>, vector<8x512xf32> -> vector<8x512xf32>
    %637 = arith.addf %632, %636 : vector<8x512xf32>
    %638 = vector.extract_strided_slice %637 {offsets = [0, 0], sizes = [8, 128], strides = [1, 1]} : vector<8x512xf32> to vector<8x128xf32>
    %639 = arith.negf %638 : vector<8x128xf32>
    %640 = math.exp %639 : vector<8x128xf32>
    %cst_357 = arith.constant 1.000000e+00 : f32
    %641 = vector.broadcast %cst_357 : f32 to vector<8x128xf32>
    %642 = arith.addf %641, %640 : vector<8x128xf32>
    %643 = arith.divf %641, %642 : vector<8x128xf32>
    %644 = vector.extract_strided_slice %637 {offsets = [0, 128], sizes = [8, 128], strides = [1, 1]} : vector<8x512xf32> to vector<8x128xf32>
    %645 = arith.negf %644 : vector<8x128xf32>
    %646 = math.exp %645 : vector<8x128xf32>
    %cst_358 = arith.constant 1.000000e+00 : f32
    %647 = vector.broadcast %cst_358 : f32 to vector<8x128xf32>
    %648 = arith.addf %647, %646 : vector<8x128xf32>
    %649 = arith.divf %647, %648 : vector<8x128xf32>
    %650 = vector.extract_strided_slice %637 {offsets = [0, 256], sizes = [8, 128], strides = [1, 1]} : vector<8x512xf32> to vector<8x128xf32>
    %651 = math.tanh %650 : vector<8x128xf32>
    %652 = vector.extract_strided_slice %637 {offsets = [0, 384], sizes = [8, 128], strides = [1, 1]} : vector<8x512xf32> to vector<8x128xf32>
    %653 = arith.negf %652 : vector<8x128xf32>
    %654 = math.exp %653 : vector<8x128xf32>
    %cst_359 = arith.constant 1.000000e+00 : f32
    %655 = vector.broadcast %cst_359 : f32 to vector<8x128xf32>
    %656 = arith.addf %655, %654 : vector<8x128xf32>
    %657 = arith.divf %655, %656 : vector<8x128xf32>
    %658 = arith.mulf %649, %622 : vector<8x128xf32>
    %659 = arith.mulf %643, %651 : vector<8x128xf32>
    %660 = arith.addf %658, %659 : vector<8x128xf32>
    %661 = math.tanh %660 : vector<8x128xf32>
    %662 = arith.mulf %657, %661 : vector<8x128xf32>
    %663 = vector.broadcast %c2_i32_350 : i32 to vector<8x1xi32>
    %664 = arith.cmpi eq, %228, %663 : vector<8x1xi32>
    %665 = vector.shape_cast %664 : vector<8x1xi1> to vector<8x1xi1>
    %666 = vector.broadcast %665 : vector<8x1xi1> to vector<8x128xi1>
    %667 = arith.select %666, %662, %629 : vector<8x128xi1>, vector<8x128xf32>
    %c3_i32_360 = arith.constant 3 : i32
    %668 = arith.index_cast %c3_i32_360 : i32 to index
    %c0_361 = arith.constant 0 : index
    %c0_362 = arith.constant 0 : index
    %669 = vector.load %arg13[%668, %c0_361, %c0_362] : memref<8x8x512xf32, #tpu.memory_space<vmem>>, vector<1x8x512xf32>
    %670 = vector.shape_cast %669 : vector<1x8x512xf32> to vector<8x512xf32>
    %671 = arith.truncf %662 : vector<8x128xf32> to vector<8x128xbf16>
    %c1_363 = arith.constant 1 : index
    %c0_364 = arith.constant 0 : index
    %c0_365 = arith.constant 0 : index
    %672 = vector.load %arg5[%c1_363, %c0_364, %c0_365] : memref<2x128x512xbf16, #tpu.memory_space<vmem>>, vector<1x128x512xbf16>
    %673 = vector.shape_cast %672 : vector<1x128x512xbf16> to vector<128x512xbf16>
    %cst_366 = arith.constant dense<0.000000e+00> : vector<8x512xf32>
    %674 = tpu.matmul %671, %673, %cst_366 {dimension_numbers = #tpu.dot_dimension_numbers<[1], [0], [0], [1], [0, 0, 1, 1], [], []>} : vector<8x128xbf16>, vector<128x512xbf16>, vector<8x512xf32> -> vector<8x512xf32>
    %675 = arith.addf %670, %674 : vector<8x512xf32>
    %676 = vector.extract_strided_slice %675 {offsets = [0, 0], sizes = [8, 128], strides = [1, 1]} : vector<8x512xf32> to vector<8x128xf32>
    %677 = arith.negf %676 : vector<8x128xf32>
    %678 = math.exp %677 : vector<8x128xf32>
    %cst_367 = arith.constant 1.000000e+00 : f32
    %679 = vector.broadcast %cst_367 : f32 to vector<8x128xf32>
    %680 = arith.addf %679, %678 : vector<8x128xf32>
    %681 = arith.divf %679, %680 : vector<8x128xf32>
    %682 = vector.extract_strided_slice %675 {offsets = [0, 128], sizes = [8, 128], strides = [1, 1]} : vector<8x512xf32> to vector<8x128xf32>
    %683 = arith.negf %682 : vector<8x128xf32>
    %684 = math.exp %683 : vector<8x128xf32>
    %cst_368 = arith.constant 1.000000e+00 : f32
    %685 = vector.broadcast %cst_368 : f32 to vector<8x128xf32>
    %686 = arith.addf %685, %684 : vector<8x128xf32>
    %687 = arith.divf %685, %686 : vector<8x128xf32>
    %688 = vector.extract_strided_slice %675 {offsets = [0, 256], sizes = [8, 128], strides = [1, 1]} : vector<8x512xf32> to vector<8x128xf32>
    %689 = math.tanh %688 : vector<8x128xf32>
    %690 = vector.extract_strided_slice %675 {offsets = [0, 384], sizes = [8, 128], strides = [1, 1]} : vector<8x512xf32> to vector<8x128xf32>
    %691 = arith.negf %690 : vector<8x128xf32>
    %692 = math.exp %691 : vector<8x128xf32>
    %cst_369 = arith.constant 1.000000e+00 : f32
    %693 = vector.broadcast %cst_369 : f32 to vector<8x128xf32>
    %694 = arith.addf %693, %692 : vector<8x128xf32>
    %695 = arith.divf %693, %694 : vector<8x128xf32>
    %696 = arith.mulf %687, %660 : vector<8x128xf32>
    %697 = arith.mulf %681, %689 : vector<8x128xf32>
    %698 = arith.addf %696, %697 : vector<8x128xf32>
    %699 = math.tanh %698 : vector<8x128xf32>
    %700 = arith.mulf %695, %699 : vector<8x128xf32>
    %701 = vector.broadcast %c3_i32_360 : i32 to vector<8x1xi32>
    %702 = arith.cmpi eq, %228, %701 : vector<8x1xi32>
    %703 = vector.shape_cast %702 : vector<8x1xi1> to vector<8x1xi1>
    %704 = vector.broadcast %703 : vector<8x1xi1> to vector<8x128xi1>
    %705 = arith.select %704, %700, %667 : vector<8x128xi1>, vector<8x128xf32>
    %c4_i32_370 = arith.constant 4 : i32
    %706 = arith.index_cast %c4_i32_370 : i32 to index
    %c0_371 = arith.constant 0 : index
    %c0_372 = arith.constant 0 : index
    %707 = vector.load %arg13[%706, %c0_371, %c0_372] : memref<8x8x512xf32, #tpu.memory_space<vmem>>, vector<1x8x512xf32>
    %708 = vector.shape_cast %707 : vector<1x8x512xf32> to vector<8x512xf32>
    %709 = arith.truncf %700 : vector<8x128xf32> to vector<8x128xbf16>
    %c1_373 = arith.constant 1 : index
    %c0_374 = arith.constant 0 : index
    %c0_375 = arith.constant 0 : index
    %710 = vector.load %arg5[%c1_373, %c0_374, %c0_375] : memref<2x128x512xbf16, #tpu.memory_space<vmem>>, vector<1x128x512xbf16>
    %711 = vector.shape_cast %710 : vector<1x128x512xbf16> to vector<128x512xbf16>
    %cst_376 = arith.constant dense<0.000000e+00> : vector<8x512xf32>
    %712 = tpu.matmul %709, %711, %cst_376 {dimension_numbers = #tpu.dot_dimension_numbers<[1], [0], [0], [1], [0, 0, 1, 1], [], []>} : vector<8x128xbf16>, vector<128x512xbf16>, vector<8x512xf32> -> vector<8x512xf32>
    %713 = arith.addf %708, %712 : vector<8x512xf32>
    %714 = vector.extract_strided_slice %713 {offsets = [0, 0], sizes = [8, 128], strides = [1, 1]} : vector<8x512xf32> to vector<8x128xf32>
    %715 = arith.negf %714 : vector<8x128xf32>
    %716 = math.exp %715 : vector<8x128xf32>
    %cst_377 = arith.constant 1.000000e+00 : f32
    %717 = vector.broadcast %cst_377 : f32 to vector<8x128xf32>
    %718 = arith.addf %717, %716 : vector<8x128xf32>
    %719 = arith.divf %717, %718 : vector<8x128xf32>
    %720 = vector.extract_strided_slice %713 {offsets = [0, 128], sizes = [8, 128], strides = [1, 1]} : vector<8x512xf32> to vector<8x128xf32>
    %721 = arith.negf %720 : vector<8x128xf32>
    %722 = math.exp %721 : vector<8x128xf32>
    %cst_378 = arith.constant 1.000000e+00 : f32
    %723 = vector.broadcast %cst_378 : f32 to vector<8x128xf32>
    %724 = arith.addf %723, %722 : vector<8x128xf32>
    %725 = arith.divf %723, %724 : vector<8x128xf32>
    %726 = vector.extract_strided_slice %713 {offsets = [0, 256], sizes = [8, 128], strides = [1, 1]} : vector<8x512xf32> to vector<8x128xf32>
    %727 = math.tanh %726 : vector<8x128xf32>
    %728 = vector.extract_strided_slice %713 {offsets = [0, 384], sizes = [8, 128], strides = [1, 1]} : vector<8x512xf32> to vector<8x128xf32>
    %729 = arith.negf %728 : vector<8x128xf32>
    %730 = math.exp %729 : vector<8x128xf32>
    %cst_379 = arith.constant 1.000000e+00 : f32
    %731 = vector.broadcast %cst_379 : f32 to vector<8x128xf32>
    %732 = arith.addf %731, %730 : vector<8x128xf32>
    %733 = arith.divf %731, %732 : vector<8x128xf32>
    %734 = arith.mulf %725, %698 : vector<8x128xf32>
    %735 = arith.mulf %719, %727 : vector<8x128xf32>
    %736 = arith.addf %734, %735 : vector<8x128xf32>
    %737 = math.tanh %736 : vector<8x128xf32>
    %738 = arith.mulf %733, %737 : vector<8x128xf32>
    %739 = vector.broadcast %c4_i32_370 : i32 to vector<8x1xi32>
    %740 = arith.cmpi eq, %228, %739 : vector<8x1xi32>
    %741 = vector.shape_cast %740 : vector<8x1xi1> to vector<8x1xi1>
    %742 = vector.broadcast %741 : vector<8x1xi1> to vector<8x128xi1>
    %743 = arith.select %742, %738, %705 : vector<8x128xi1>, vector<8x128xf32>
    %c5_i32_380 = arith.constant 5 : i32
    %744 = arith.index_cast %c5_i32_380 : i32 to index
    %c0_381 = arith.constant 0 : index
    %c0_382 = arith.constant 0 : index
    %745 = vector.load %arg13[%744, %c0_381, %c0_382] : memref<8x8x512xf32, #tpu.memory_space<vmem>>, vector<1x8x512xf32>
    %746 = vector.shape_cast %745 : vector<1x8x512xf32> to vector<8x512xf32>
    %747 = arith.truncf %738 : vector<8x128xf32> to vector<8x128xbf16>
    %c1_383 = arith.constant 1 : index
    %c0_384 = arith.constant 0 : index
    %c0_385 = arith.constant 0 : index
    %748 = vector.load %arg5[%c1_383, %c0_384, %c0_385] : memref<2x128x512xbf16, #tpu.memory_space<vmem>>, vector<1x128x512xbf16>
    %749 = vector.shape_cast %748 : vector<1x128x512xbf16> to vector<128x512xbf16>
    %cst_386 = arith.constant dense<0.000000e+00> : vector<8x512xf32>
    %750 = tpu.matmul %747, %749, %cst_386 {dimension_numbers = #tpu.dot_dimension_numbers<[1], [0], [0], [1], [0, 0, 1, 1], [], []>} : vector<8x128xbf16>, vector<128x512xbf16>, vector<8x512xf32> -> vector<8x512xf32>
    %751 = arith.addf %746, %750 : vector<8x512xf32>
    %752 = vector.extract_strided_slice %751 {offsets = [0, 0], sizes = [8, 128], strides = [1, 1]} : vector<8x512xf32> to vector<8x128xf32>
    %753 = arith.negf %752 : vector<8x128xf32>
    %754 = math.exp %753 : vector<8x128xf32>
    %cst_387 = arith.constant 1.000000e+00 : f32
    %755 = vector.broadcast %cst_387 : f32 to vector<8x128xf32>
    %756 = arith.addf %755, %754 : vector<8x128xf32>
    %757 = arith.divf %755, %756 : vector<8x128xf32>
    %758 = vector.extract_strided_slice %751 {offsets = [0, 128], sizes = [8, 128], strides = [1, 1]} : vector<8x512xf32> to vector<8x128xf32>
    %759 = arith.negf %758 : vector<8x128xf32>
    %760 = math.exp %759 : vector<8x128xf32>
    %cst_388 = arith.constant 1.000000e+00 : f32
    %761 = vector.broadcast %cst_388 : f32 to vector<8x128xf32>
    %762 = arith.addf %761, %760 : vector<8x128xf32>
    %763 = arith.divf %761, %762 : vector<8x128xf32>
    %764 = vector.extract_strided_slice %751 {offsets = [0, 256], sizes = [8, 128], strides = [1, 1]} : vector<8x512xf32> to vector<8x128xf32>
    %765 = math.tanh %764 : vector<8x128xf32>
    %766 = vector.extract_strided_slice %751 {offsets = [0, 384], sizes = [8, 128], strides = [1, 1]} : vector<8x512xf32> to vector<8x128xf32>
    %767 = arith.negf %766 : vector<8x128xf32>
    %768 = math.exp %767 : vector<8x128xf32>
    %cst_389 = arith.constant 1.000000e+00 : f32
    %769 = vector.broadcast %cst_389 : f32 to vector<8x128xf32>
    %770 = arith.addf %769, %768 : vector<8x128xf32>
    %771 = arith.divf %769, %770 : vector<8x128xf32>
    %772 = arith.mulf %763, %736 : vector<8x128xf32>
    %773 = arith.mulf %757, %765 : vector<8x128xf32>
    %774 = arith.addf %772, %773 : vector<8x128xf32>
    %775 = math.tanh %774 : vector<8x128xf32>
    %776 = arith.mulf %771, %775 : vector<8x128xf32>
    %777 = vector.broadcast %c5_i32_380 : i32 to vector<8x1xi32>
    %778 = arith.cmpi eq, %228, %777 : vector<8x1xi32>
    %779 = vector.shape_cast %778 : vector<8x1xi1> to vector<8x1xi1>
    %780 = vector.broadcast %779 : vector<8x1xi1> to vector<8x128xi1>
    %781 = arith.select %780, %776, %743 : vector<8x128xi1>, vector<8x128xf32>
    %c6_i32_390 = arith.constant 6 : i32
    %782 = arith.index_cast %c6_i32_390 : i32 to index
    %c0_391 = arith.constant 0 : index
    %c0_392 = arith.constant 0 : index
    %783 = vector.load %arg13[%782, %c0_391, %c0_392] : memref<8x8x512xf32, #tpu.memory_space<vmem>>, vector<1x8x512xf32>
    %784 = vector.shape_cast %783 : vector<1x8x512xf32> to vector<8x512xf32>
    %785 = arith.truncf %776 : vector<8x128xf32> to vector<8x128xbf16>
    %c1_393 = arith.constant 1 : index
    %c0_394 = arith.constant 0 : index
    %c0_395 = arith.constant 0 : index
    %786 = vector.load %arg5[%c1_393, %c0_394, %c0_395] : memref<2x128x512xbf16, #tpu.memory_space<vmem>>, vector<1x128x512xbf16>
    %787 = vector.shape_cast %786 : vector<1x128x512xbf16> to vector<128x512xbf16>
    %cst_396 = arith.constant dense<0.000000e+00> : vector<8x512xf32>
    %788 = tpu.matmul %785, %787, %cst_396 {dimension_numbers = #tpu.dot_dimension_numbers<[1], [0], [0], [1], [0, 0, 1, 1], [], []>} : vector<8x128xbf16>, vector<128x512xbf16>, vector<8x512xf32> -> vector<8x512xf32>
    %789 = arith.addf %784, %788 : vector<8x512xf32>
    %790 = vector.extract_strided_slice %789 {offsets = [0, 0], sizes = [8, 128], strides = [1, 1]} : vector<8x512xf32> to vector<8x128xf32>
    %791 = arith.negf %790 : vector<8x128xf32>
    %792 = math.exp %791 : vector<8x128xf32>
    %cst_397 = arith.constant 1.000000e+00 : f32
    %793 = vector.broadcast %cst_397 : f32 to vector<8x128xf32>
    %794 = arith.addf %793, %792 : vector<8x128xf32>
    %795 = arith.divf %793, %794 : vector<8x128xf32>
    %796 = vector.extract_strided_slice %789 {offsets = [0, 128], sizes = [8, 128], strides = [1, 1]} : vector<8x512xf32> to vector<8x128xf32>
    %797 = arith.negf %796 : vector<8x128xf32>
    %798 = math.exp %797 : vector<8x128xf32>
    %cst_398 = arith.constant 1.000000e+00 : f32
    %799 = vector.broadcast %cst_398 : f32 to vector<8x128xf32>
    %800 = arith.addf %799, %798 : vector<8x128xf32>
    %801 = arith.divf %799, %800 : vector<8x128xf32>
    %802 = vector.extract_strided_slice %789 {offsets = [0, 256], sizes = [8, 128], strides = [1, 1]} : vector<8x512xf32> to vector<8x128xf32>
    %803 = math.tanh %802 : vector<8x128xf32>
    %804 = vector.extract_strided_slice %789 {offsets = [0, 384], sizes = [8, 128], strides = [1, 1]} : vector<8x512xf32> to vector<8x128xf32>
    %805 = arith.negf %804 : vector<8x128xf32>
    %806 = math.exp %805 : vector<8x128xf32>
    %cst_399 = arith.constant 1.000000e+00 : f32
    %807 = vector.broadcast %cst_399 : f32 to vector<8x128xf32>
    %808 = arith.addf %807, %806 : vector<8x128xf32>
    %809 = arith.divf %807, %808 : vector<8x128xf32>
    %810 = arith.mulf %801, %774 : vector<8x128xf32>
    %811 = arith.mulf %795, %803 : vector<8x128xf32>
    %812 = arith.addf %810, %811 : vector<8x128xf32>
    %813 = math.tanh %812 : vector<8x128xf32>
    %814 = arith.mulf %809, %813 : vector<8x128xf32>
    %815 = vector.broadcast %c6_i32_390 : i32 to vector<8x1xi32>
    %816 = arith.cmpi eq, %228, %815 : vector<8x1xi32>
    %817 = vector.shape_cast %816 : vector<8x1xi1> to vector<8x1xi1>
    %818 = vector.broadcast %817 : vector<8x1xi1> to vector<8x128xi1>
    %819 = arith.select %818, %814, %781 : vector<8x128xi1>, vector<8x128xf32>
    %c7_i32_400 = arith.constant 7 : i32
    %820 = arith.index_cast %c7_i32_400 : i32 to index
    %c0_401 = arith.constant 0 : index
    %c0_402 = arith.constant 0 : index
    %821 = vector.load %arg13[%820, %c0_401, %c0_402] : memref<8x8x512xf32, #tpu.memory_space<vmem>>, vector<1x8x512xf32>
    %822 = vector.shape_cast %821 : vector<1x8x512xf32> to vector<8x512xf32>
    %823 = arith.truncf %814 : vector<8x128xf32> to vector<8x128xbf16>
    %c1_403 = arith.constant 1 : index
    %c0_404 = arith.constant 0 : index
    %c0_405 = arith.constant 0 : index
    %824 = vector.load %arg5[%c1_403, %c0_404, %c0_405] : memref<2x128x512xbf16, #tpu.memory_space<vmem>>, vector<1x128x512xbf16>
    %825 = vector.shape_cast %824 : vector<1x128x512xbf16> to vector<128x512xbf16>
    %cst_406 = arith.constant dense<0.000000e+00> : vector<8x512xf32>
    %826 = tpu.matmul %823, %825, %cst_406 {dimension_numbers = #tpu.dot_dimension_numbers<[1], [0], [0], [1], [0, 0, 1, 1], [], []>} : vector<8x128xbf16>, vector<128x512xbf16>, vector<8x512xf32> -> vector<8x512xf32>
    %827 = arith.addf %822, %826 : vector<8x512xf32>
    %828 = vector.extract_strided_slice %827 {offsets = [0, 0], sizes = [8, 128], strides = [1, 1]} : vector<8x512xf32> to vector<8x128xf32>
    %829 = arith.negf %828 : vector<8x128xf32>
    %830 = math.exp %829 : vector<8x128xf32>
    %cst_407 = arith.constant 1.000000e+00 : f32
    %831 = vector.broadcast %cst_407 : f32 to vector<8x128xf32>
    %832 = arith.addf %831, %830 : vector<8x128xf32>
    %833 = arith.divf %831, %832 : vector<8x128xf32>
    %834 = vector.extract_strided_slice %827 {offsets = [0, 128], sizes = [8, 128], strides = [1, 1]} : vector<8x512xf32> to vector<8x128xf32>
    %835 = arith.negf %834 : vector<8x128xf32>
    %836 = math.exp %835 : vector<8x128xf32>
    %cst_408 = arith.constant 1.000000e+00 : f32
    %837 = vector.broadcast %cst_408 : f32 to vector<8x128xf32>
    %838 = arith.addf %837, %836 : vector<8x128xf32>
    %839 = arith.divf %837, %838 : vector<8x128xf32>
    %840 = vector.extract_strided_slice %827 {offsets = [0, 256], sizes = [8, 128], strides = [1, 1]} : vector<8x512xf32> to vector<8x128xf32>
    %841 = math.tanh %840 : vector<8x128xf32>
    %842 = vector.extract_strided_slice %827 {offsets = [0, 384], sizes = [8, 128], strides = [1, 1]} : vector<8x512xf32> to vector<8x128xf32>
    %843 = arith.negf %842 : vector<8x128xf32>
    %844 = math.exp %843 : vector<8x128xf32>
    %cst_409 = arith.constant 1.000000e+00 : f32
    %845 = vector.broadcast %cst_409 : f32 to vector<8x128xf32>
    %846 = arith.addf %845, %844 : vector<8x128xf32>
    %847 = arith.divf %845, %846 : vector<8x128xf32>
    %848 = arith.mulf %839, %812 : vector<8x128xf32>
    %849 = arith.mulf %833, %841 : vector<8x128xf32>
    %850 = arith.addf %848, %849 : vector<8x128xf32>
    %851 = math.tanh %850 : vector<8x128xf32>
    %852 = arith.mulf %847, %851 : vector<8x128xf32>
    %853 = vector.broadcast %c7_i32_400 : i32 to vector<8x1xi32>
    %854 = arith.cmpi eq, %228, %853 : vector<8x1xi32>
    %855 = vector.shape_cast %854 : vector<8x1xi1> to vector<8x1xi1>
    %856 = vector.broadcast %855 : vector<8x1xi1> to vector<8x128xi1>
    %857 = arith.select %856, %852, %819 : vector<8x128xi1>, vector<8x128xf32>
    %c8_i32_410 = arith.constant 8 : i32
    %c0_411 = arith.constant 0 : index
    %c0_412 = arith.constant 0 : index
    %858 = vector.load %arg2[%c0_411, %c0_412] : memref<8x64xf32, #tpu.memory_space<vmem>>, vector<8x64xf32>
    %859 = arith.truncf %858 : vector<8x64xf32> to vector<8x64xbf16>
    %c0_413 = arith.constant 0 : index
    %c0_414 = arith.constant 0 : index
    %860 = vector.load %arg7[%c0_413, %c0_414] : memref<64x128xbf16, #tpu.memory_space<vmem>>, vector<64x128xbf16>
    %cst_415 = arith.constant dense<0.000000e+00> : vector<8x128xf32>
    %861 = tpu.matmul %859, %860, %cst_415 {dimension_numbers = #tpu.dot_dimension_numbers<[1], [0], [0], [1], [0, 0, 1, 1], [], []>} : vector<8x64xbf16>, vector<64x128xbf16>, vector<8x128xf32> -> vector<8x128xf32>
    %862 = arith.truncf %857 : vector<8x128xf32> to vector<8x128xbf16>
    %c0_416 = arith.constant 0 : index
    %c0_417 = arith.constant 0 : index
    %863 = vector.load %arg8[%c0_416, %c0_417] : memref<128x128xbf16, #tpu.memory_space<vmem>>, vector<128x128xbf16>
    %cst_418 = arith.constant dense<0.000000e+00> : vector<8x128xf32>
    %864 = tpu.matmul %862, %863, %cst_418 {dimension_numbers = #tpu.dot_dimension_numbers<[1], [0], [0], [1], [0, 0, 1, 1], [], []>} : vector<8x128xbf16>, vector<128x128xbf16>, vector<8x128xf32> -> vector<8x128xf32>
    %865 = arith.addf %861, %864 : vector<8x128xf32>
    %c0_419 = arith.constant 0 : index
    %c0_420 = arith.constant 0 : index
    %866 = vector.load %arg9[%c0_419, %c0_420] : memref<1x128xf32, #tpu.memory_space<vmem>>, vector<1x128xf32>
    %867 = vector.broadcast %866 : vector<1x128xf32> to vector<8x128xf32>
    %868 = arith.addf %865, %867 : vector<8x128xf32>
    %cst_421 = arith.constant 0.000000e+00 : f32
    %869 = vector.broadcast %cst_421 : f32 to vector<8x128xf32>
    %870 = arith.maximumf %868, %869 : vector<8x128xf32>
    %871 = arith.truncf %870 : vector<8x128xf32> to vector<8x128xbf16>
    %c0_422 = arith.constant 0 : index
    %c0_423 = arith.constant 0 : index
    %872 = vector.load %arg10[%c0_422, %c0_423] : memref<128x128xbf16, #tpu.memory_space<vmem>>, vector<128x128xbf16>
    %cst_424 = arith.constant dense<0.000000e+00> : vector<8x128xf32>
    %873 = tpu.matmul %871, %872, %cst_424 {dimension_numbers = #tpu.dot_dimension_numbers<[1], [0], [0], [1], [0, 0, 1, 1], [], []>} : vector<8x128xbf16>, vector<128x128xbf16>, vector<8x128xf32> -> vector<8x128xf32>
    %c0_425 = arith.constant 0 : index
    %c0_426 = arith.constant 0 : index
    %874 = vector.load %arg11[%c0_425, %c0_426] : memref<1x128xf32, #tpu.memory_space<vmem>>, vector<1x128xf32>
    %875 = vector.broadcast %874 : vector<1x128xf32> to vector<8x128xf32>
    %876 = arith.addf %873, %875 : vector<8x128xf32>
    %c0_427 = arith.constant 0 : index
    %c0_428 = arith.constant 0 : index
    %877 = vector.load %arg12[%c0_427, %c0_428] : memref<8x128xf32, #tpu.memory_space<vmem>>, vector<8x128xf32>
    tpu.vector_store %arg12[%c0_427, %c0_428], %876 {strides = array<i32>} : memref<8x128xf32, #tpu.memory_space<vmem>>, vector<8x128xf32>,
    return
  }
}

</mosaic_0001>

<llo_original>
// kernel: rnn_forward.1
$region0: #{rnn_forward.1}
  #allocation0 [shape = 'u32[]', space=smem, size = 0x4, offset = 0x4, fixed_abs, tag = 'smem constant byte address 0x4 - core index']
  #allocation1 [shape = 'u32[144,128]{1,0:T(1,128)}', space=vmem, size = 0x12000, scoped, tag = 'internal scratch']
  #allocation2 [shape = 'f32[8,8,512]{2,1,0:T(8,128)}', space=vmem, size = 0x20000, scoped, tag = 'scratch operand']
  #allocation3 [shape = 'f32[8,8,128]{2,1,0:T(8,128)}', space=vmem, size = 0x8000, scoped, tag = 'scratch operand']
  %s0 = inlined_call_operand.vmem [shape: s32[8,8], index: 0, kind: input, shape index: {}]
  %s1 = inlined_call_operand.hbm [shape: f32[50,128], index: 1, kind: input, shape index: {}]
  %s2 = inlined_call_operand.vmem [shape: f32[8,64], index: 2, kind: input, shape index: {}]
  %s3 = inlined_call_operand.vmem [shape: s32[8,1], index: 3, kind: input, shape index: {}]
  %s4 = inlined_call_operand.hbm [shape: bf16[2,128,512], index: 4, kind: input, shape index: {}]
  %s5 = inlined_call_operand.hbm [shape: bf16[2,128,512], index: 5, kind: input, shape index: {}]
  %s6 = inlined_call_operand.vmem [shape: f32[2,1,512], index: 6, kind: input, shape index: {}]
  %s7 = inlined_call_operand.vmem [shape: bf16[64,128], index: 7, kind: input, shape index: {}]
  %s8 = inlined_call_operand.hbm [shape: bf16[128,128], index: 8, kind: input, shape index: {}]
  %s9 = inlined_call_operand.vmem [shape: f32[1,128], index: 9, kind: input, shape index: {}]
  %s10 = inlined_call_operand.hbm [shape: bf16[128,128], index: 10, kind: input, shape index: {}]
  %s11 = inlined_call_operand.vmem [shape: f32[1,128], index: 11, kind: input, shape index: {}]
  %s12 = inlined_call_operand.vmem [shape: f32[8,128], index: 12, kind: output, shape index: {}]
  %s13 = sld [smem:[#allocation0]]
  $region82: #{rnn_forward.1} parent=0
    _
  %s15 = ssub.s32 1, %s13
  %s16 = scalar_select 0, %s15, %s13
  $region1: #{rnn_forward.1} parent=0
    #allocation4 [shape = 'u8[4096]{0}', space=smem, size = 0x1000, scoped, tag = 'input window, operand 0, single buffered']
    #allocation5 [shape = 's32[1]{0}', space=sflag, size = 0x4, scoped, tag = 'scoped memory for rnn_forward.1']
    #allocation6 [shape = 's32[1]{0}', space=sflag, size = 0x4, scoped, tag = 'scoped memory for rnn_forward.1']
    #allocation7 [shape = 'u8[28672]{0}', space=vmem, size = 0x7000, scoped, tag = 'input window, operand 1, single buffered']
    #allocation8 [shape = 'u8[262144]{0}', space=vmem, size = 0x40000, scoped, tag = 'input window, operand 4, single buffered']
    #allocation9 [shape = 's32[1]{0}', space=sflag, size = 0x4, scoped, tag = 'scoped memory for rnn_forward.1']
    #allocation10 [shape = 'u8[262144]{0}', space=vmem, size = 0x40000, scoped, tag = 'input window, operand 5, single buffered']
    #allocation11 [shape = 'u8[32768]{0}', space=vmem, size = 0x8000, scoped, tag = 'input window, operand 8, single buffered']
    #allocation12 [shape = 's32[1]{0}', space=sflag, size = 0x4, scoped, tag = 'scoped memory for rnn_forward.1']
    #allocation13 [shape = 'u8[32768]{0}', space=vmem, size = 0x8000, scoped, tag = 'input window, operand 10, single buffered']
    %17 = vsyncpa [#allocation6], 0
    %18 = vsyncpa [#allocation5], 0
    %19 = vsyncpa [#allocation9], 0
    %20 = vsyncpa [#allocation12], 0
    // Predicated region
    $region2: #{rnn_forward.1} parent=1 // pred_check
      _
    $region3: #{rnn_forward.1} parent=1 // pred_check_branch
      %22 = sbr.rel (0) target = $region5
    $region4: #{rnn_forward.1} parent=1 // pred_region
      %s24 = ssub.s32 128, 128
      %25 = vsyncadd [#allocation6], %s24
      %s27 = sshll.u32 %s0, 4
      %s28 = int_to_ptr.vmem [resolvable:$true] %s27
      %30 = dma.vmem_to_smem %s28, 128, [#allocation4], [#allocation6]
    $region5: #{rnn_forward.1} parent=1 // pred_fallthru
      _
    // Predicated region
    $region6: #{rnn_forward.1} parent=1 // pred_check
      _
    $region7: #{rnn_forward.1} parent=1 // pred_check_branch
      %32 = sbr.rel (0) target = $region9
    $region8: #{rnn_forward.1} parent=1 // pred_region
      %s34 = ssub.s32 896, 896
      %35 = vsyncadd [#allocation5], %s34
      %s36 = sshll.u32 [#allocation7], 4
      %s37 = int_to_ptr.vmem [resolvable:$true] %s36
      %42 = dma.hbm_to_vmem [thread:$0]  %s1, 896, %s37, [#allocation5], 128, 128, 8
    $region9: #{rnn_forward.1} parent=1 // pred_fallthru
      _
    // Predicated region
    $region10: #{rnn_forward.1} parent=1 // pred_check
      _
    $region11: #{rnn_forward.1} parent=1 // pred_check_branch
      %44 = sbr.rel (0) target = $region13
    $region12: #{rnn_forward.1} parent=1 // pred_region
      _
    $region13: #{rnn_forward.1} parent=1 // pred_fallthru
      _
    // Predicated region
    $region14: #{rnn_forward.1} parent=1 // pred_check
      _
    $region15: #{rnn_forward.1} parent=1 // pred_check_branch
      %46 = sbr.rel (0) target = $region17
    $region16: #{rnn_forward.1} parent=1 // pred_region
      _
    $region17: #{rnn_forward.1} parent=1 // pred_fallthru
      _
    // Predicated region
    $region18: #{rnn_forward.1} parent=1 // pred_check
      _
    $region19: #{rnn_forward.1} parent=1 // pred_check_branch
      %48 = sbr.rel (0) target = $region21
    $region20: #{rnn_forward.1} parent=1 // pred_region
      %s50 = ssub.s32 8192, 8192
      %51 = vsyncadd [#allocation9], %s50
      %s52 = sshll.u32 [#allocation8], 4
      %s53 = int_to_ptr.vmem [resolvable:$true] %s52
      %58 = dma.hbm_to_vmem [thread:$0]  %s4, 8192, %s53, [#allocation9], 256, 256, 16
    $region21: #{rnn_forward.1} parent=1 // pred_fallthru
      _
    // Predicated region
    $region22: #{rnn_forward.1} parent=1 // pred_check
      _
    $region23: #{rnn_forward.1} parent=1 // pred_check_branch
      %60 = sbr.rel (0) target = $region25
    $region24: #{rnn_forward.1} parent=1 // pred_region
      %s62 = ssub.s32 8192, 8192
      %63 = vsyncadd [#allocation9], %s62
      %s64 = sshll.u32 [#allocation10], 4
      %s65 = int_to_ptr.vmem [resolvable:$true] %s64
      %70 = dma.hbm_to_vmem [thread:$0]  %s5, 8192, %s65, [#allocation9], 256, 256, 16
    $region25: #{rnn_forward.1} parent=1 // pred_fallthru
      _
    // Predicated region
    $region26: #{rnn_forward.1} parent=1 // pred_check
      _
    $region27: #{rnn_forward.1} parent=1 // pred_check_branch
      %72 = sbr.rel (0) target = $region29
    $region28: #{rnn_forward.1} parent=1 // pred_region
      _
    $region29: #{rnn_forward.1} parent=1 // pred_fallthru
      _
    // Predicated region
    $region30: #{rnn_forward.1} parent=1 // pred_check
      _
    $region31: #{rnn_forward.1} parent=1 // pred_check_branch
      %74 = sbr.rel (0) target = $region33
    $region32: #{rnn_forward.1} parent=1 // pred_region
      _
    $region33: #{rnn_forward.1} parent=1 // pred_fallthru
      _
    // Predicated region
    $region34: #{rnn_forward.1} parent=1 // pred_check
      _
    $region35: #{rnn_forward.1} parent=1 // pred_check_branch
      %76 = sbr.rel (0) target = $region37
    $region36: #{rnn_forward.1} parent=1 // pred_region
      %s78 = ssub.s32 1024, 1024
      %79 = vsyncadd [#allocation12], %s78
      %s80 = sshll.u32 [#allocation11], 4
      %s81 = int_to_ptr.vmem [resolvable:$true] %s80
      %86 = dma.hbm_to_vmem [thread:$0]  %s8, 1024, %s81, [#allocation12], 64, 64, 4
    $region37: #{rnn_forward.1} parent=1 // pred_fallthru
      _
    // Predicated region
    $region38: #{rnn_forward.1} parent=1 // pred_check
      _
    $region39: #{rnn_forward.1} parent=1 // pred_check_branch
      %88 = sbr.rel (0) target = $region41
    $region40: #{rnn_forward.1} parent=1 // pred_region
      _
    $region41: #{rnn_forward.1} parent=1 // pred_fallthru
      _
    // Predicated region
    $region42: #{rnn_forward.1} parent=1 // pred_check
      _
    $region43: #{rnn_forward.1} parent=1 // pred_check_branch
      %90 = sbr.rel (0) target = $region45
    $region44: #{rnn_forward.1} parent=1 // pred_region
      %s92 = ssub.s32 1024, 1024
      %93 = vsyncadd [#allocation12], %s92
      %s94 = sshll.u32 [#allocation13], 4
      %s95 = int_to_ptr.vmem [resolvable:$true] %s94
      %100 = dma.hbm_to_vmem [thread:$0]  %s10, 1024, %s95, [#allocation12], 64, 64, 4
    $region45: #{rnn_forward.1} parent=1 // pred_fallthru
      _
    // Predicated region
    $region46: #{rnn_forward.1} parent=1 // pred_check
      _
    $region47: #{rnn_forward.1} parent=1 // pred_check_branch
      %102 = sbr.rel (0) target = $region49
    $region48: #{rnn_forward.1} parent=1 // pred_region
      _
    $region49: #{rnn_forward.1} parent=1 // pred_fallthru
      _
    // Predicated region
    $region50: #{rnn_forward.1} parent=1 // pred_check
      _
    $region51: #{rnn_forward.1} parent=1 // pred_check_branch
      %104 = sbr.rel (0) target = $region53
    $region52: #{rnn_forward.1} parent=1 // pred_region
      %105 = dma.done [#allocation6], 128
    $region53: #{rnn_forward.1} parent=1 // pred_fallthru
      _
    // Predicated region
    $region54: #{rnn_forward.1} parent=1 // pred_check
      _
    $region55: #{rnn_forward.1} parent=1 // pred_check_branch
      %107 = sbr.rel (0) target = $region57
    $region56: #{rnn_forward.1} parent=1 // pred_region
      %108 = dma.done [#allocation5], 896
    $region57: #{rnn_forward.1} parent=1 // pred_fallthru
      _
    // Predicated region
    $region58: #{rnn_forward.1} parent=1 // pred_check
      _
    $region59: #{rnn_forward.1} parent=1 // pred_check_branch
      %110 = sbr.rel (0) target = $region61
    $region60: #{rnn_forward.1} parent=1 // pred_region
      %111 = dma.done [#allocation9], 8192
    $region61: #{rnn_forward.1} parent=1 // pred_fallthru
      _
    // Predicated region
    $region62: #{rnn_forward.1} parent=1 // pred_check
      _
    $region63: #{rnn_forward.1} parent=1 // pred_check_branch
      %113 = sbr.rel (0) target = $region65
    $region64: #{rnn_forward.1} parent=1 // pred_region
      %114 = dma.done [#allocation9], 8192
    $region65: #{rnn_forward.1} parent=1 // pred_fallthru
      _
    // Predicated region
    $region66: #{rnn_forward.1} parent=1 // pred_check
      _
    $region67: #{rnn_forward.1} parent=1 // pred_check_branch
      %116 = sbr.rel (0) target = $region69
    $region68: #{rnn_forward.1} parent=1 // pred_region
      %117 = dma.done [#allocation12], 1024
    $region69: #{rnn_forward.1} parent=1 // pred_fallthru
      _
    // Predicated region
    $region70: #{rnn_forward.1} parent=1 // pred_check
      _
    $region71: #{rnn_forward.1} parent=1 // pred_check_branch
      %119 = sbr.rel (0) target = $region73
    $region72: #{rnn_forward.1} parent=1 // pred_region
      %120 = dma.done [#allocation12], 1024
    $region73: #{rnn_forward.1} parent=1 // pred_fallthru
      _
    %121 = sfence
    %s123 = sld [smem:[#allocation4]]
    %s124 = scalar_lea.vmem [#allocation7], %s123
    %v125 = vld [vmem:[%s124] sm:$0x1]
    %s126 = sld [smem:[#allocation4 + $0x80]]
    %s127 = scalar_lea.vmem [#allocation7], %s126
    %v128 = vld [vmem:[%s127] sm:$0x1]
    %s129 = sld [smem:[#allocation4 + $0x100]]
    %s130 = scalar_lea.vmem [#allocation7], %s129
    %v131 = vld [vmem:[%s130] sm:$0x1]
    %s132 = sld [smem:[#allocation4 + $0x180]]
    %s133 = scalar_lea.vmem [#allocation7], %s132
    %v134 = vld [vmem:[%s133] sm:$0x1]
    %s135 = sld [smem:[#allocation4 + $0x200]]
    %s136 = scalar_lea.vmem [#allocation7], %s135
    %v137 = vld [vmem:[%s136] sm:$0x1]
    %s138 = sld [smem:[#allocation4 + $0x280]]
    %s139 = scalar_lea.vmem [#allocation7], %s138
    %v140 = vld [vmem:[%s139] sm:$0x1]
    %s141 = sld [smem:[#allocation4 + $0x300]]
    %s142 = scalar_lea.vmem [#allocation7], %s141
    %v143 = vld [vmem:[%s142] sm:$0x1]
    %s144 = sld [smem:[#allocation4 + $0x380]]
    %s145 = scalar_lea.vmem [#allocation7], %s144
    %v146 = vld [vmem:[%s145] sm:$0x1]
    %v148 = vrot.slane %v128, 7
    %v151 = vrot.slane %v131, 6
    %v154 = vrot.slane %v134, 5
    %v157 = vrot.slane %v137, 4
    %v160 = vrot.slane %v140, 3
    %v163 = vrot.slane %v143, 2
    %v166 = vrot.slane %v146, 1
    %vm168 = vcmask 1040384
    %v169 = vsel %vm168, %v125, %v148
    %vm170 = vcmask 1041408
    %v171 = vsel %vm170, %v169, %v151
    %vm172 = vcmask 1042432
    %v173 = vsel %vm172, %v171, %v154
    %vm174 = vcmask 1043456
    %v175 = vsel %vm174, %v173, %v157
    %vm176 = vcmask 1044480
    %v177 = vsel %vm176, %v175, %v160
    %vm178 = vcmask 1045504
    %v179 = vsel %vm178, %v177, %v163
    %vm180 = vcmask 1046528
    %v181 = vsel %vm180, %v179, %v166
    %182 = vst [vmem:[#allocation3] sm:$0xff] %v181
    %s183 = sld [smem:[#allocation4 + $0x1]]
    %s184 = scalar_lea.vmem [#allocation7], %s183
    %v185 = vld [vmem:[%s184] sm:$0x1]
    %s186 = sld [smem:[#allocation4 + $0x81]]
    %s187 = scalar_lea.vmem [#allocation7], %s186
    %v188 = vld [vmem:[%s187] sm:$0x1]
    %s189 = sld [smem:[#allocation4 + $0x101]]
    %s190 = scalar_lea.vmem [#allocation7], %s189
    %v191 = vld [vmem:[%s190] sm:$0x1]
    %s192 = sld [smem:[#allocation4 + $0x181]]
    %s193 = scalar_lea.vmem [#allocation7], %s192
    %v194 = vld [vmem:[%s193] sm:$0x1]
    %s195 = sld [smem:[#allocation4 + $0x201]]
    %s196 = scalar_lea.vmem [#allocation7], %s195
    %v197 = vld [vmem:[%s196] sm:$0x1]
    %s198 = sld [smem:[#allocation4 + $0x281]]
    %s199 = scalar_lea.vmem [#allocation7], %s198
    %v200 = vld [vmem:[%s199] sm:$0x1]
    %s201 = sld [smem:[#allocation4 + $0x301]]
    %s202 = scalar_lea.vmem [#allocation7], %s201
    %v203 = vld [vmem:[%s202] sm:$0x1]
    %s204 = sld [smem:[#allocation4 + $0x381]]
    %s205 = scalar_lea.vmem [#allocation7], %s204
    %v206 = vld [vmem:[%s205] sm:$0x1]
    %v208 = vrot.slane %v188, 7
    %v211 = vrot.slane %v191, 6
    %v214 = vrot.slane %v194, 5
    %v217 = vrot.slane %v197, 4
    %v220 = vrot.slane %v200, 3
    %v223 = vrot.slane %v203, 2
    %v226 = vrot.slane %v206, 1
    %v228 = vsel %vm168, %v185, %v208
    %v229 = vsel %vm170, %v228, %v211
    %v230 = vsel %vm172, %v229, %v214
    %v231 = vsel %vm174, %v230, %v217
    %v232 = vsel %vm176, %v231, %v220
    %v233 = vsel %vm178, %v232, %v223
    %v234 = vsel %vm180, %v233, %v226
    %s235 = scalar_lea.vmem [#allocation3], 8
    %236 = vst [vmem:[%s235] sm:$0xff] %v234
    %s237 = sld [smem:[#allocation4 + $0x2]]
    %s238 = scalar_lea.vmem [#allocation7], %s237
    %v239 = vld [vmem:[%s238] sm:$0x1]
    %s240 = sld [smem:[#allocation4 + $0x82]]
    %s241 = scalar_lea.vmem [#allocation7], %s240
    %v242 = vld [vmem:[%s241] sm:$0x1]
    %s243 = sld [smem:[#allocation4 + $0x102]]
    %s244 = scalar_lea.vmem [#allocation7], %s243
    %v245 = vld [vmem:[%s244] sm:$0x1]
    %s246 = sld [smem:[#allocation4 + $0x182]]
    %s247 = scalar_lea.vmem [#allocation7], %s246
    %v248 = vld [vmem:[%s247] sm:$0x1]
    %s249 = sld [smem:[#allocation4 + $0x202]]
    %s250 = scalar_lea.vmem [#allocation7], %s249
    %v251 = vld [vmem:[%s250] sm:$0x1]
    %s252 = sld [smem:[#allocation4 + $0x282]]
    %s253 = scalar_lea.vmem [#allocation7], %s252
    %v254 = vld [vmem:[%s253] sm:$0x1]
    %s255 = sld [smem:[#allocation4 + $0x302]]
    %s256 = scalar_lea.vmem [#allocation7], %s255
    %v257 = vld [vmem:[%s256] sm:$0x1]
    %s258 = sld [smem:[#allocation4 + $0x382]]
    %s259 = scalar_lea.vmem [#allocation7], %s258
    %v260 = vld [vmem:[%s259] sm:$0x1]
    %v262 = vrot.slane %v242, 7
    %v265 = vrot.slane %v245, 6
    %v268 = vrot.slane %v248, 5
    %v271 = vrot.slane %v251, 4
    %v274 = vrot.slane %v254, 3
    %v277 = vrot.slane %v257, 2
    %v280 = vrot.slane %v260, 1
    %v282 = vsel %vm168, %v239, %v262
    %v283 = vsel %vm170, %v282, %v265
    %v284 = vsel %vm172, %v283, %v268
    %v285 = vsel %vm174, %v284, %v271
    %v286 = vsel %vm176, %v285, %v274
    %v287 = vsel %vm178, %v286, %v277
    %v288 = vsel %vm180, %v287, %v280
    %s289 = scalar_lea.vmem [#allocation3], 16
    %290 = vst [vmem:[%s289] sm:$0xff] %v288
    %s291 = sld [smem:[#allocation4 + $0x3]]
    %s292 = scalar_lea.vmem [#allocation7], %s291
    %v293 = vld [vmem:[%s292] sm:$0x1]
    %s294 = sld [smem:[#allocation4 + $0x83]]
    %s295 = scalar_lea.vmem [#allocation7], %s294
    %v296 = vld [vmem:[%s295] sm:$0x1]
    %s297 = sld [smem:[#allocation4 + $0x103]]
    %s298 = scalar_lea.vmem [#allocation7], %s297
    %v299 = vld [vmem:[%s298] sm:$0x1]
    %s300 = sld [smem:[#allocation4 + $0x183]]
    %s301 = scalar_lea.vmem [#allocation7], %s300
    %v302 = vld [vmem:[%s301] sm:$0x1]
    %s303 = sld [smem:[#allocation4 + $0x203]]
    %s304 = scalar_lea.vmem [#allocation7], %s303
    %v305 = vld [vmem:[%s304] sm:$0x1]
    %s306 = sld [smem:[#allocation4 + $0x283]]
    %s307 = scalar_lea.vmem [#allocation7], %s306
    %v308 = vld [vmem:[%s307] sm:$0x1]
    %s309 = sld [smem:[#allocation4 + $0x303]]
    %s310 = scalar_lea.vmem [#allocation7], %s309
    %v311 = vld [vmem:[%s310] sm:$0x1]
    %s312 = sld [smem:[#allocation4 + $0x383]]
    %s313 = scalar_lea.vmem [#allocation7], %s312
    %v314 = vld [vmem:[%s313] sm:$0x1]
    %v316 = vrot.slane %v296, 7
    %v319 = vrot.slane %v299, 6
    %v322 = vrot.slane %v302, 5
    %v325 = vrot.slane %v305, 4
    %v328 = vrot.slane %v308, 3
    %v331 = vrot.slane %v311, 2
    %v334 = vrot.slane %v314, 1
    %v336 = vsel %vm168, %v293, %v316
    %v337 = vsel %vm170, %v336, %v319
    %v338 = vsel %vm172, %v337, %v322
    %v339 = vsel %vm174, %v338, %v325
    %v340 = vsel %vm176, %v339, %v328
    %v341 = vsel %vm178, %v340, %v331
    %v342 = vsel %vm180, %v341, %v334
    %s343 = scalar_lea.vmem [#allocation3], 24
    %344 = vst [vmem:[%s343] sm:$0xff] %v342
    %s345 = sld [smem:[#allocation4 + $0x4]]
    %s346 = scalar_lea.vmem [#allocation7], %s345
    %v347 = vld [vmem:[%s346] sm:$0x1]
    %s348 = sld [smem:[#allocation4 + $0x84]]
    %s349 = scalar_lea.vmem [#allocation7], %s348
    %v350 = vld [vmem:[%s349] sm:$0x1]
    %s351 = sld [smem:[#allocation4 + $0x104]]
    %s352 = scalar_lea.vmem [#allocation7], %s351
    %v353 = vld [vmem:[%s352] sm:$0x1]
    %s354 = sld [smem:[#allocation4 + $0x184]]
    %s355 = scalar_lea.vmem [#allocation7], %s354
    %v356 = vld [vmem:[%s355] sm:$0x1]
    %s357 = sld [smem:[#allocation4 + $0x204]]
    %s358 = scalar_lea.vmem [#allocation7], %s357
    %v359 = vld [vmem:[%s358] sm:$0x1]
    %s360 = sld [smem:[#allocation4 + $0x284]]
    %s361 = scalar_lea.vmem [#allocation7], %s360
    %v362 = vld [vmem:[%s361] sm:$0x1]
    %s363 = sld [smem:[#allocation4 + $0x304]]
    %s364 = scalar_lea.vmem [#allocation7], %s363
    %v365 = vld [vmem:[%s364] sm:$0x1]
    %s366 = sld [smem:[#allocation4 + $0x384]]
    %s367 = scalar_lea.vmem [#allocation7], %s366
    %v368 = vld [vmem:[%s367] sm:$0x1]
    %v370 = vrot.slane %v350, 7
    %v373 = vrot.slane %v353, 6
    %v376 = vrot.slane %v356, 5
    %v379 = vrot.slane %v359, 4
    %v382 = vrot.slane %v362, 3
    %v385 = vrot.slane %v365, 2
    %v388 = vrot.slane %v368, 1
    %v390 = vsel %vm168, %v347, %v370
    %v391 = vsel %vm170, %v390, %v373
    %v392 = vsel %vm172, %v391, %v376
    %v393 = vsel %vm174, %v392, %v379
    %v394 = vsel %vm176, %v393, %v382
    %v395 = vsel %vm178, %v394, %v385
    %v396 = vsel %vm180, %v395, %v388
    %s397 = scalar_lea.vmem [#allocation3], 32
    %398 = vst [vmem:[%s397] sm:$0xff] %v396
    %s399 = sld [smem:[#allocation4 + $0x5]]
    %s400 = scalar_lea.vmem [#allocation7], %s399
    %v401 = vld [vmem:[%s400] sm:$0x1]
    %s402 = sld [smem:[#allocation4 + $0x85]]
    %s403 = scalar_lea.vmem [#allocation7], %s402
    %v404 = vld [vmem:[%s403] sm:$0x1]
    %s405 = sld [smem:[#allocation4 + $0x105]]
    %s406 = scalar_lea.vmem [#allocation7], %s405
    %v407 = vld [vmem:[%s406] sm:$0x1]
    %s408 = sld [smem:[#allocation4 + $0x185]]
    %s409 = scalar_lea.vmem [#allocation7], %s408
    %v410 = vld [vmem:[%s409] sm:$0x1]
    %s411 = sld [smem:[#allocation4 + $0x205]]
    %s412 = scalar_lea.vmem [#allocation7], %s411
    %v413 = vld [vmem:[%s412] sm:$0x1]
    %s414 = sld [smem:[#allocation4 + $0x285]]
    %s415 = scalar_lea.vmem [#allocation7], %s414
    %v416 = vld [vmem:[%s415] sm:$0x1]
    %s417 = sld [smem:[#allocation4 + $0x305]]
    %s418 = scalar_lea.vmem [#allocation7], %s417
    %v419 = vld [vmem:[%s418] sm:$0x1]
    %s420 = sld [smem:[#allocation4 + $0x385]]
    %s421 = scalar_lea.vmem [#allocation7], %s420
    %v422 = vld [vmem:[%s421] sm:$0x1]
    %v424 = vrot.slane %v404, 7
    %v427 = vrot.slane %v407, 6
    %v430 = vrot.slane %v410, 5
    %v433 = vrot.slane %v413, 4
    %v436 = vrot.slane %v416, 3
    %v439 = vrot.slane %v419, 2
    %v442 = vrot.slane %v422, 1
    %v444 = vsel %vm168, %v401, %v424
    %v445 = vsel %vm170, %v444, %v427
    %v446 = vsel %vm172, %v445, %v430
    %v447 = vsel %vm174, %v446, %v433
    %v448 = vsel %vm176, %v447, %v436
    %v449 = vsel %vm178, %v448, %v439
    %v450 = vsel %vm180, %v449, %v442
    %s451 = scalar_lea.vmem [#allocation3], 40
    %452 = vst [vmem:[%s451] sm:$0xff] %v450
    %s453 = sld [smem:[#allocation4 + $0x6]]
    %s454 = scalar_lea.vmem [#allocation7], %s453
    %v455 = vld [vmem:[%s454] sm:$0x1]
    %s456 = sld [smem:[#allocation4 + $0x86]]
    %s457 = scalar_lea.vmem [#allocation7], %s456
    %v458 = vld [vmem:[%s457] sm:$0x1]
    %s459 = sld [smem:[#allocation4 + $0x106]]
    %s460 = scalar_lea.vmem [#allocation7], %s459
    %v461 = vld [vmem:[%s460] sm:$0x1]
    %s462 = sld [smem:[#allocation4 + $0x186]]
    %s463 = scalar_lea.vmem [#allocation7], %s462
    %v464 = vld [vmem:[%s463] sm:$0x1]
    %s465 = sld [smem:[#allocation4 + $0x206]]
    %s466 = scalar_lea.vmem [#allocation7], %s465
    %v467 = vld [vmem:[%s466] sm:$0x1]
    %s468 = sld [smem:[#allocation4 + $0x286]]
    %s469 = scalar_lea.vmem [#allocation7], %s468
    %v470 = vld [vmem:[%s469] sm:$0x1]
    %s471 = sld [smem:[#allocation4 + $0x306]]
    %s472 = scalar_lea.vmem [#allocation7], %s471
    %v473 = vld [vmem:[%s472] sm:$0x1]
    %s474 = sld [smem:[#allocation4 + $0x386]]
    %s475 = scalar_lea.vmem [#allocation7], %s474
    %v476 = vld [vmem:[%s475] sm:$0x1]
    %v478 = vrot.slane %v458, 7
    %v481 = vrot.slane %v461, 6
    %v484 = vrot.slane %v464, 5
    %v487 = vrot.slane %v467, 4
    %v490 = vrot.slane %v470, 3
    %v493 = vrot.slane %v473, 2
    %v496 = vrot.slane %v476, 1
    %v498 = vsel %vm168, %v455, %v478
    %v499 = vsel %vm170, %v498, %v481
    %v500 = vsel %vm172, %v499, %v484
    %v501 = vsel %vm174, %v500, %v487
    %v502 = vsel %vm176, %v501, %v490
    %v503 = vsel %vm178, %v502, %v493
    %v504 = vsel %vm180, %v503, %v496
    %s505 = scalar_lea.vmem [#allocation3], 48
    %506 = vst [vmem:[%s505] sm:$0xff] %v504
    %s507 = sld [smem:[#allocation4 + $0x7]]
    %s508 = scalar_lea.vmem [#allocation7], %s507
    %v509 = vld [vmem:[%s508] sm:$0x1]
    %s510 = sld [smem:[#allocation4 + $0x87]]
    %s511 = scalar_lea.vmem [#allocation7], %s510
    %v512 = vld [vmem:[%s511] sm:$0x1]
    %s513 = sld [smem:[#allocation4 + $0x107]]
    %s514 = scalar_lea.vmem [#allocation7], %s513
    %v515 = vld [vmem:[%s514] sm:$0x1]
    %s516 = sld [smem:[#allocation4 + $0x187]]
    %s517 = scalar_lea.vmem [#allocation7], %s516
    %v518 = vld [vmem:[%s517] sm:$0x1]
    %s519 = sld [smem:[#allocation4 + $0x207]]
    %s520 = scalar_lea.vmem [#allocation7], %s519
    %v521 = vld [vmem:[%s520] sm:$0x1]
    %s522 = sld [smem:[#allocation4 + $0x287]]
    %s523 = scalar_lea.vmem [#allocation7], %s522
    %v524 = vld [vmem:[%s523] sm:$0x1]
    %s525 = sld [smem:[#allocation4 + $0x307]]
    %s526 = scalar_lea.vmem [#allocation7], %s525
    %v527 = vld [vmem:[%s526] sm:$0x1]
    %s528 = sld [smem:[#allocation4 + $0x387]]
    %s529 = scalar_lea.vmem [#allocation7], %s528
    %v530 = vld [vmem:[%s529] sm:$0x1]
    %v532 = vrot.slane %v512, 7
    %v535 = vrot.slane %v515, 6
    %v538 = vrot.slane %v518, 5
    %v541 = vrot.slane %v521, 4
    %v544 = vrot.slane %v524, 3
    %v547 = vrot.slane %v527, 2
    %v550 = vrot.slane %v530, 1
    %v552 = vsel %vm168, %v509, %v532
    %v553 = vsel %vm170, %v552, %v535
    %v554 = vsel %vm172, %v553, %v538
    %v555 = vsel %vm174, %v554, %v541
    %v556 = vsel %vm176, %v555, %v544
    %v557 = vsel %vm178, %v556, %v547
    %v558 = vsel %vm180, %v557, %v550
    %s559 = scalar_lea.vmem [#allocation3], 56
    %560 = vst [vmem:[%s559] sm:$0xff] %v558
    %v561 = vld [vmem:[%s3] sm:$0xff]
    %vm562 = vcmp.gt.s32.totalorder %v561, 0
    %v563 = vsel %vm562, %v561, 0
    %vm564 = vcmp.lt.s32.totalorder %v563, 7
    %v565 = vsel %vm564, %v563, 7
    %v566 = vld [vmem:[#allocation3] sm:$0xff]
    %v567 = vld [vmem:[#allocation3 + $0x8] sm:$0xff]
    %v568 = vld [vmem:[#allocation3 + $0x10] sm:$0xff]
    %v569 = vld [vmem:[#allocation3 + $0x18] sm:$0xff]
    %v570 = vld [vmem:[#allocation3 + $0x20] sm:$0xff]
    %v571 = vld [vmem:[#allocation3 + $0x28] sm:$0xff]
    %v572 = vld [vmem:[#allocation3 + $0x30] sm:$0xff]
    %v573 = vld [vmem:[#allocation3 + $0x38] sm:$0xff]
    %v574 = vpack.c.bf16 %v567, %v566
    %v575 = vpack.c.bf16 %v569, %v568
    %v576 = vpack.c.bf16 %v571, %v570
    %v577 = vpack.c.bf16 %v573, %v572
    %v578 = vld [vmem:[#allocation8] sm:$0xff]
    %v579 = vld [vmem:[#allocation8 + $0x8] sm:$0xff]
    %v580 = vld [vmem:[#allocation8 + $0x10] sm:$0xff]
    %v581 = vld [vmem:[#allocation8 + $0x18] sm:$0xff]
    %v582 = vld [vmem:[#allocation8 + $0x20] sm:$0xff]
    %v583 = vld [vmem:[#allocation8 + $0x28] sm:$0xff]
    %v584 = vld [vmem:[#allocation8 + $0x30] sm:$0xff]
    %v585 = vld [vmem:[#allocation8 + $0x38] sm:$0xff]
    %v586 = vld [vmem:[#allocation8 + $0x40] sm:$0xff]
    %v587 = vld [vmem:[#allocation8 + $0x48] sm:$0xff]
    %v588 = vld [vmem:[#allocation8 + $0x50] sm:$0xff]
    %v589 = vld [vmem:[#allocation8 + $0x58] sm:$0xff]
    %v590 = vld [vmem:[#allocation8 + $0x60] sm:$0xff]
    %v591 = vld [vmem:[#allocation8 + $0x68] sm:$0xff]
    %v592 = vld [vmem:[#allocation8 + $0x70] sm:$0xff]
    %v593 = vld [vmem:[#allocation8 + $0x78] sm:$0xff]
    %v594 = vld [vmem:[#allocation8 + $0x80] sm:$0xff]
    %v595 = vld [vmem:[#allocation8 + $0x88] sm:$0xff]
    %v596 = vld [vmem:[#allocation8 + $0x90] sm:$0xff]
    %v597 = vld [vmem:[#allocation8 + $0x98] sm:$0xff]
    %v598 = vld [vmem:[#allocation8 + $0xa0] sm:$0xff]
    %v599 = vld [vmem:[#allocation8 + $0xa8] sm:$0xff]
    %v600 = vld [vmem:[#allocation8 + $0xb0] sm:$0xff]
    %v601 = vld [vmem:[#allocation8 + $0xb8] sm:$0xff]
    %v602 = vld [vmem:[#allocation8 + $0xc0] sm:$0xff]
    %v603 = vld [vmem:[#allocation8 + $0xc8] sm:$0xff]
    %v604 = vld [vmem:[#allocation8 + $0xd0] sm:$0xff]
    %v605 = vld [vmem:[#allocation8 + $0xd8] sm:$0xff]
    %v606 = vld [vmem:[#allocation8 + $0xe0] sm:$0xff]
    %v607 = vld [vmem:[#allocation8 + $0xe8] sm:$0xff]
    %v608 = vld [vmem:[#allocation8 + $0xf0] sm:$0xff]
    %v609 = vld [vmem:[#allocation8 + $0xf8] sm:$0xff]
    %v610 = vld [vmem:[%s6] sm:$0xf]
    %v612 = vlaneseq
    %v613 = vshrl.u32 %v612, 7
    %v614 = vsub.s32 0, %v613
    %v615 = vrot.slane %v610, %v614
    %v616 = vlaneseq
    %v617 = vshrl.u32 %v616, 7
    %v618 = vsub.s32 1, %v617
    %v619 = vrot.slane %v610, %v618
    %v620 = vlaneseq
    %v621 = vshrl.u32 %v620, 7
    %v622 = vsub.s32 2, %v621
    %v623 = vrot.slane %v610, %v622
    %v624 = vlaneseq
    %v625 = vshrl.u32 %v624, 7
    %v626 = vsub.s32 3, %v625
    %v627 = vrot.slane %v610, %v626
    %v664 = vunpack.c.l.b16 %v578
    %v665 = vunpack.c.h.b16 %v578
    %v666 = vunpack.c.l.b16 %v579
    %v667 = vunpack.c.h.b16 %v579
    %v668 = vunpack.c.l.b16 %v580
    %v669 = vunpack.c.h.b16 %v580
    %v670 = vunpack.c.l.b16 %v581
    %v671 = vunpack.c.h.b16 %v581
    %v672 = vunpack.c.l.b16 %v582
    %v673 = vunpack.c.h.b16 %v582
    %v674 = vunpack.c.l.b16 %v583
    %v675 = vunpack.c.h.b16 %v583
    %v676 = vunpack.c.l.b16 %v584
    %v677 = vunpack.c.h.b16 %v584
    %v678 = vunpack.c.l.b16 %v585
    %v679 = vunpack.c.h.b16 %v585
    %v680 = vunpack.c.l.b16 %v586
    %v681 = vunpack.c.h.b16 %v586
    %v682 = vunpack.c.l.b16 %v587
    %v683 = vunpack.c.h.b16 %v587
    %v684 = vunpack.c.l.b16 %v588
    %v685 = vunpack.c.h.b16 %v588
    %v686 = vunpack.c.l.b16 %v589
    %v687 = vunpack.c.h.b16 %v589
    %v688 = vunpack.c.l.b16 %v590
    %v689 = vunpack.c.h.b16 %v590
    %v690 = vunpack.c.l.b16 %v591
    %v691 = vunpack.c.h.b16 %v591
    %v692 = vunpack.c.l.b16 %v592
    %v693 = vunpack.c.h.b16 %v592
    %v694 = vunpack.c.l.b16 %v593
    %v695 = vunpack.c.h.b16 %v593
    %v696 = vunpack.c.l.b16 %v594
    %v697 = vunpack.c.h.b16 %v594
    %v698 = vunpack.c.l.b16 %v595
    %v699 = vunpack.c.h.b16 %v595
    %v700 = vunpack.c.l.b16 %v596
    %v701 = vunpack.c.h.b16 %v596
    %v702 = vunpack.c.l.b16 %v597
    %v703 = vunpack.c.h.b16 %v597
    %v704 = vunpack.c.l.b16 %v598
    %v705 = vunpack.c.h.b16 %v598
    %v706 = vunpack.c.l.b16 %v599
    %v707 = vunpack.c.h.b16 %v599
    %v708 = vunpack.c.l.b16 %v600
    %v709 = vunpack.c.h.b16 %v600
    %v710 = vunpack.c.l.b16 %v601
    %v711 = vunpack.c.h.b16 %v601
    %v712 = vunpack.c.l.b16 %v602
    %v713 = vunpack.c.h.b16 %v602
    %v714 = vunpack.c.l.b16 %v603
    %v715 = vunpack.c.h.b16 %v603
    %v716 = vunpack.c.l.b16 %v604
    %v717 = vunpack.c.h.b16 %v604
    %v718 = vunpack.c.l.b16 %v605
    %v719 = vunpack.c.h.b16 %v605
    %v720 = vunpack.c.l.b16 %v606
    %v721 = vunpack.c.h.b16 %v606
    %v722 = vunpack.c.l.b16 %v607
    %v723 = vunpack.c.h.b16 %v607
    %v724 = vunpack.c.l.b16 %v608
    %v725 = vunpack.c.h.b16 %v608
    %v726 = vunpack.c.l.b16 %v609
    %v727 = vunpack.c.h.b16 %v609
    %v728 = vpack.c.b16 %v668, %v664
    %v729 = vpack.c.b16 %v669, %v665
    %v730 = vpack.c.b16 %v670, %v666
    %v731 = vpack.c.b16 %v671, %v667
    %v732 = vpack.c.b16 %v676, %v672
    %v733 = vpack.c.b16 %v677, %v673
    %v734 = vpack.c.b16 %v678, %v674
    %v735 = vpack.c.b16 %v679, %v675
    %v736 = vpack.c.b16 %v684, %v680
    %v737 = vpack.c.b16 %v685, %v681
    %v738 = vpack.c.b16 %v686, %v682
    %v739 = vpack.c.b16 %v687, %v683
    %v740 = vpack.c.b16 %v692, %v688
    %v741 = vpack.c.b16 %v693, %v689
    %v742 = vpack.c.b16 %v694, %v690
    %v743 = vpack.c.b16 %v695, %v691
    %v744 = vpack.c.b16 %v700, %v696
    %v745 = vpack.c.b16 %v701, %v697
    %v746 = vpack.c.b16 %v702, %v698
    %v747 = vpack.c.b16 %v703, %v699
    %v748 = vpack.c.b16 %v708, %v704
    %v749 = vpack.c.b16 %v709, %v705
    %v750 = vpack.c.b16 %v710, %v706
    %v751 = vpack.c.b16 %v711, %v707
    %v752 = vpack.c.b16 %v716, %v712
    %v753 = vpack.c.b16 %v717, %v713
    %v754 = vpack.c.b16 %v718, %v714
    %v755 = vpack.c.b16 %v719, %v715
    %v756 = vpack.c.b16 %v724, %v720
    %v757 = vpack.c.b16 %v725, %v721
    %v758 = vpack.c.b16 %v726, %v722
    %v759 = vpack.c.b16 %v727, %v723
    %792 = vmatprep.subr.bf16.mxu0 %v757
    %793 = vmatpush1.bf16.msra.mxu0 %v756
    %794 = vmatprep.subr.bf16.mxu0 %v753
    %795 = vmatpush1.bf16.msra.mxu0 %v752
    %796 = vmatprep.subr.bf16.mxu0 %v749
    %797 = vmatpush1.bf16.msra.mxu0 %v748
    %798 = vmatprep.subr.bf16.mxu0 %v745
    %799 = vmatpush1.bf16.msra.mxu0 %v744
    %800 = vmatprep.subr.bf16.mxu0 %v741
    %801 = vmatpush1.bf16.msra.mxu0 %v740
    %802 = vmatprep.subr.bf16.mxu0 %v737
    %803 = vmatpush1.bf16.msra.mxu0 %v736
    %804 = vmatprep.subr.bf16.mxu0 %v733
    %805 = vmatpush1.bf16.msra.mxu0 %v732
    %806 = vmatprep.subr.bf16.mxu0 %v729
    %807 = vmatpush1.bf16.msra.mxu0 %v728
    %808 = vmatprep.subr.bf16.mxu0 0
    %809 = vmatpush2.bf16.msra.mxu0 0
    %810 = vmatprep.subr.bf16.mxu0 0
    %811 = vmatpush2.bf16.msra.mxu0 0
    %812 = vmatprep.subr.bf16.mxu0 0
    %813 = vmatpush2.bf16.msra.mxu0 0
    %814 = vmatprep.subr.bf16.mxu0 0
    %815 = vmatpush2.bf16.msra.mxu0 0
    %816 = vmatprep.subr.bf16.mxu0 0
    %817 = vmatpush2.bf16.msra.mxu0 0
    %818 = vmatprep.subr.bf16.mxu0 0
    %819 = vmatpush2.bf16.msra.mxu0 0
    %820 = vmatprep.subr.bf16.mxu0 0
    %821 = vmatpush2.bf16.msra.mxu0 0
    %822 = vmatprep.subr.bf16.mxu0 0
    %823 = vmatpush2.bf16.msra.mxu0 0
    %824 = vmatprep.mubr.bf16.mxu0 0
    %825 = vmatmul.mubr.bf16.gmra.mxu0 %v574
    %v826 = vpop.f32.mrf.mxu0
    %v827 = vadd.f32 %v615, %v826
    %v828 = vpop.f32.mrf.mxu0
    %v829 = vadd.f32 %v619, %v828
    %v830 = vpop.f32.mrf.mxu0
    %v831 = vadd.f32 %v615, %v830
    %v832 = vpop.f32.mrf.mxu0
    %v833 = vadd.f32 %v619, %v832
    %834 = vmatprep.mubr.bf16.mxu0 0
    %835 = vmatmul.mubr.bf16.gmra.mxu0 %v575
    %v836 = vpop.f32.mrf.mxu0
    %v837 = vadd.f32 %v615, %v836
    %v838 = vpop.f32.mrf.mxu0
    %v839 = vadd.f32 %v619, %v838
    %v840 = vpop.f32.mrf.mxu0
    %v841 = vadd.f32 %v615, %v840
    %v842 = vpop.f32.mrf.mxu0
    %v843 = vadd.f32 %v619, %v842
    %844 = vmatprep.mubr.bf16.mxu0 0
    %845 = vmatmul.mubr.bf16.gmra.mxu0 %v576
    %v846 = vpop.f32.mrf.mxu0
    %v847 = vadd.f32 %v615, %v846
    %v848 = vpop.f32.mrf.mxu0
    %v849 = vadd.f32 %v619, %v848
    %v850 = vpop.f32.mrf.mxu0
    %v851 = vadd.f32 %v615, %v850
    %v852 = vpop.f32.mrf.mxu0
    %v853 = vadd.f32 %v619, %v852
    %854 = vmatprep.mubr.bf16.mxu0 0
    %855 = vmatmul.mubr.bf16.gmra.mxu0 %v577
    %v856 = vpop.f32.mrf.mxu0
    %v857 = vadd.f32 %v615, %v856
    %v858 = vpop.f32.mrf.mxu0
    %v859 = vadd.f32 %v619, %v858
    %v860 = vpop.f32.mrf.mxu0
    %v861 = vadd.f32 %v615, %v860
    %v862 = vpop.f32.mrf.mxu0
    %v863 = vadd.f32 %v619, %v862
    %864 = vdwg.mxu0
    %865 = vmatprep.subr.bf16.mxu0 %v759
    %866 = vmatpush1.bf16.msra.mxu0 %v758
    %867 = vmatprep.subr.bf16.mxu0 %v755
    %868 = vmatpush1.bf16.msra.mxu0 %v754
    %869 = vmatprep.subr.bf16.mxu0 %v751
    %870 = vmatpush1.bf16.msra.mxu0 %v750
    %871 = vmatprep.subr.bf16.mxu0 %v747
    %872 = vmatpush1.bf16.msra.mxu0 %v746
    %873 = vmatprep.subr.bf16.mxu0 %v743
    %874 = vmatpush1.bf16.msra.mxu0 %v742
    %875 = vmatprep.subr.bf16.mxu0 %v739
    %876 = vmatpush1.bf16.msra.mxu0 %v738
    %877 = vmatprep.subr.bf16.mxu0 %v735
    %878 = vmatpush1.bf16.msra.mxu0 %v734
    %879 = vmatprep.subr.bf16.mxu0 %v731
    %880 = vmatpush1.bf16.msra.mxu0 %v730
    %881 = vmatprep.subr.bf16.mxu0 0
    %882 = vmatpush2.bf16.msra.mxu0 0
    %883 = vmatprep.subr.bf16.mxu0 0
    %884 = vmatpush2.bf16.msra.mxu0 0
    %885 = vmatprep.subr.bf16.mxu0 0
    %886 = vmatpush2.bf16.msra.mxu0 0
    %887 = vmatprep.subr.bf16.mxu0 0
    %888 = vmatpush2.bf16.msra.mxu0 0
    %889 = vmatprep.subr.bf16.mxu0 0
    %890 = vmatpush2.bf16.msra.mxu0 0
    %891 = vmatprep.subr.bf16.mxu0 0
    %892 = vmatpush2.bf16.msra.mxu0 0
    %893 = vmatprep.subr.bf16.mxu0 0
    %894 = vmatpush2.bf16.msra.mxu0 0
    %895 = vmatprep.subr.bf16.mxu0 0
    %896 = vmatpush2.bf16.msra.mxu0 0
    %897 = vmatprep.mubr.bf16.mxu0 0
    %898 = vmatmul.mubr.bf16.gmra.mxu0 %v574
    %v899 = vpop.f32.mrf.mxu0
    %v900 = vadd.f32 %v623, %v899
    %v901 = vpop.f32.mrf.mxu0
    %v902 = vadd.f32 %v627, %v901
    %v903 = vpop.f32.mrf.mxu0
    %v904 = vadd.f32 %v623, %v903
    %v905 = vpop.f32.mrf.mxu0
    %v906 = vadd.f32 %v627, %v905
    %907 = vmatprep.mubr.bf16.mxu0 0
    %908 = vmatmul.mubr.bf16.gmra.mxu0 %v575
    %v909 = vpop.f32.mrf.mxu0
    %v910 = vadd.f32 %v623, %v909
    %v911 = vpop.f32.mrf.mxu0
    %v912 = vadd.f32 %v627, %v911
    %v913 = vpop.f32.mrf.mxu0
    %v914 = vadd.f32 %v623, %v913
    %v915 = vpop.f32.mrf.mxu0
    %v916 = vadd.f32 %v627, %v915
    %917 = vmatprep.mubr.bf16.mxu0 0
    %918 = vmatmul.mubr.bf16.gmra.mxu0 %v576
    %v919 = vpop.f32.mrf.mxu0
    %v920 = vadd.f32 %v623, %v919
    %v921 = vpop.f32.mrf.mxu0
    %v922 = vadd.f32 %v627, %v921
    %v923 = vpop.f32.mrf.mxu0
    %v924 = vadd.f32 %v623, %v923
    %v925 = vpop.f32.mrf.mxu0
    %v926 = vadd.f32 %v627, %v925
    %927 = vmatprep.mubr.bf16.mxu0 0
    %928 = vmatmul.mubr.bf16.gmra.mxu0 %v577
    %v929 = vpop.f32.mrf.mxu0
    %v930 = vadd.f32 %v623, %v929
    %v931 = vpop.f32.mrf.mxu0
    %v932 = vadd.f32 %v627, %v931
    %v933 = vpop.f32.mrf.mxu0
    %v934 = vadd.f32 %v623, %v933
    %v935 = vpop.f32.mrf.mxu0
    %v936 = vadd.f32 %v627, %v935
    %937 = vdwg.mxu0
    %938 = vst [vmem:[#allocation2] sm:$0xff] %v827
    %939 = vst [vmem:[#allocation2 + $0x8] sm:$0xff] %v829
    %940 = vst [vmem:[#allocation2 + $0x10] sm:$0xff] %v900
    %941 = vst [vmem:[#allocation2 + $0x18] sm:$0xff] %v902
    %942 = vst [vmem:[#allocation2 + $0x20] sm:$0xff] %v831
    %943 = vst [vmem:[#allocation2 + $0x28] sm:$0xff] %v833
    %944 = vst [vmem:[#allocation2 + $0x30] sm:$0xff] %v904
    %945 = vst [vmem:[#allocation2 + $0x38] sm:$0xff] %v906
    %946 = vst [vmem:[#allocation2 + $0x40] sm:$0xff] %v837
    %947 = vst [vmem:[#allocation2 + $0x48] sm:$0xff] %v839
    %948 = vst [vmem:[#allocation2 + $0x50] sm:$0xff] %v910
    %949 = vst [vmem:[#allocation2 + $0x58] sm:$0xff] %v912
    %950 = vst [vmem:[#allocation2 + $0x60] sm:$0xff] %v841
    %951 = vst [vmem:[#allocation2 + $0x68] sm:$0xff] %v843
    %952 = vst [vmem:[#allocation2 + $0x70] sm:$0xff] %v914
    %953 = vst [vmem:[#allocation2 + $0x78] sm:$0xff] %v916
    %954 = vst [vmem:[#allocation2 + $0x80] sm:$0xff] %v847
    %955 = vst [vmem:[#allocation2 + $0x88] sm:$0xff] %v849
    %956 = vst [vmem:[#allocation2 + $0x90] sm:$0xff] %v920
    %957 = vst [vmem:[#allocation2 + $0x98] sm:$0xff] %v922
    %958 = vst [vmem:[#allocation2 + $0xa0] sm:$0xff] %v851
    %959 = vst [vmem:[#allocation2 + $0xa8] sm:$0xff] %v853
    %960 = vst [vmem:[#allocation2 + $0xb0] sm:$0xff] %v924
    %961 = vst [vmem:[#allocation2 + $0xb8] sm:$0xff] %v926
    %962 = vst [vmem:[#allocation2 + $0xc0] sm:$0xff] %v857
    %963 = vst [vmem:[#allocation2 + $0xc8] sm:$0xff] %v859
    %964 = vst [vmem:[#allocation2 + $0xd0] sm:$0xff] %v930
    %965 = vst [vmem:[#allocation2 + $0xd8] sm:$0xff] %v932
    %966 = vst [vmem:[#allocation2 + $0xe0] sm:$0xff] %v861
    %967 = vst [vmem:[#allocation2 + $0xe8] sm:$0xff] %v863
    %968 = vst [vmem:[#allocation2 + $0xf0] sm:$0xff] %v934
    %969 = vst [vmem:[#allocation2 + $0xf8] sm:$0xff] %v936
    %v970 = vld [vmem:[#allocation2] sm:$0xff]
    %v971 = vld [vmem:[#allocation2 + $0x8] sm:$0xff]
    %v972 = vld [vmem:[#allocation2 + $0x10] sm:$0xff]
    %v973 = vld [vmem:[#allocation2 + $0x18] sm:$0xff]
    %v974 = vld [vmem:[#allocation10] sm:$0xff]
    %v975 = vld [vmem:[#allocation10 + $0x8] sm:$0xff]
    %v976 = vld [vmem:[#allocation10 + $0x10] sm:$0xff]
    %v977 = vld [vmem:[#allocation10 + $0x18] sm:$0xff]
    %v978 = vld [vmem:[#allocation10 + $0x20] sm:$0xff]
    %v979 = vld [vmem:[#allocation10 + $0x28] sm:$0xff]
    %v980 = vld [vmem:[#allocation10 + $0x30] sm:$0xff]
    %v981 = vld [vmem:[#allocation10 + $0x38] sm:$0xff]
    %v982 = vld [vmem:[#allocation10 + $0x40] sm:$0xff]
    %v983 = vld [vmem:[#allocation10 + $0x48] sm:$0xff]
    %v984 = vld [vmem:[#allocation10 + $0x50] sm:$0xff]
    %v985 = vld [vmem:[#allocation10 + $0x58] sm:$0xff]
    %v986 = vld [vmem:[#allocation10 + $0x60] sm:$0xff]
    %v987 = vld [vmem:[#allocation10 + $0x68] sm:$0xff]
    %v988 = vld [vmem:[#allocation10 + $0x70] sm:$0xff]
    %v989 = vld [vmem:[#allocation10 + $0x78] sm:$0xff]
    %v990 = vld [vmem:[#allocation10 + $0x80] sm:$0xff]
    %v991 = vld [vmem:[#allocation10 + $0x88] sm:$0xff]
    %v992 = vld [vmem:[#allocation10 + $0x90] sm:$0xff]
    %v993 = vld [vmem:[#allocation10 + $0x98] sm:$0xff]
    %v994 = vld [vmem:[#allocation10 + $0xa0] sm:$0xff]
    %v995 = vld [vmem:[#allocation10 + $0xa8] sm:$0xff]
    %v996 = vld [vmem:[#allocation10 + $0xb0] sm:$0xff]
    %v997 = vld [vmem:[#allocation10 + $0xb8] sm:$0xff]
    %v998 = vld [vmem:[#allocation10 + $0xc0] sm:$0xff]
    %v999 = vld [vmem:[#allocation10 + $0xc8] sm:$0xff]
    %v1000 = vld [vmem:[#allocation10 + $0xd0] sm:$0xff]
    %v1001 = vld [vmem:[#allocation10 + $0xd8] sm:$0xff]
    %v1002 = vld [vmem:[#allocation10 + $0xe0] sm:$0xff]
    %v1003 = vld [vmem:[#allocation10 + $0xe8] sm:$0xff]
    %v1004 = vld [vmem:[#allocation10 + $0xf0] sm:$0xff]
    %v1005 = vld [vmem:[#allocation10 + $0xf8] sm:$0xff]
    %v1038 = vunpack.c.l.b16 %v974
    %v1039 = vunpack.c.h.b16 %v974
    %v1040 = vunpack.c.l.b16 %v975
    %v1041 = vunpack.c.h.b16 %v975
    %v1042 = vunpack.c.l.b16 %v976
    %v1043 = vunpack.c.h.b16 %v976
    %v1044 = vunpack.c.l.b16 %v977
    %v1045 = vunpack.c.h.b16 %v977
    %v1046 = vunpack.c.l.b16 %v978
    %v1047 = vunpack.c.h.b16 %v978
    %v1048 = vunpack.c.l.b16 %v979
    %v1049 = vunpack.c.h.b16 %v979
    %v1050 = vunpack.c.l.b16 %v980
    %v1051 = vunpack.c.h.b16 %v980
    %v1052 = vunpack.c.l.b16 %v981
    %v1053 = vunpack.c.h.b16 %v981
    %v1054 = vunpack.c.l.b16 %v982
    %v1055 = vunpack.c.h.b16 %v982
    %v1056 = vunpack.c.l.b16 %v983
    %v1057 = vunpack.c.h.b16 %v983
    %v1058 = vunpack.c.l.b16 %v984
    %v1059 = vunpack.c.h.b16 %v984
    %v1060 = vunpack.c.l.b16 %v985
    %v1061 = vunpack.c.h.b16 %v985
    %v1062 = vunpack.c.l.b16 %v986
    %v1063 = vunpack.c.h.b16 %v986
    %v1064 = vunpack.c.l.b16 %v987
    %v1065 = vunpack.c.h.b16 %v987
    %v1066 = vunpack.c.l.b16 %v988
    %v1067 = vunpack.c.h.b16 %v988
    %v1068 = vunpack.c.l.b16 %v989
    %v1069 = vunpack.c.h.b16 %v989
    %v1070 = vunpack.c.l.b16 %v990
    %v1071 = vunpack.c.h.b16 %v990
    %v1072 = vunpack.c.l.b16 %v991
    %v1073 = vunpack.c.h.b16 %v991
    %v1074 = vunpack.c.l.b16 %v992
    %v1075 = vunpack.c.h.b16 %v992
    %v1076 = vunpack.c.l.b16 %v993
    %v1077 = vunpack.c.h.b16 %v993
    %v1078 = vunpack.c.l.b16 %v994
    %v1079 = vunpack.c.h.b16 %v994
    %v1080 = vunpack.c.l.b16 %v995
    %v1081 = vunpack.c.h.b16 %v995
    %v1082 = vunpack.c.l.b16 %v996
    %v1083 = vunpack.c.h.b16 %v996
    %v1084 = vunpack.c.l.b16 %v997
    %v1085 = vunpack.c.h.b16 %v997
    %v1086 = vunpack.c.l.b16 %v998
    %v1087 = vunpack.c.h.b16 %v998
    %v1088 = vunpack.c.l.b16 %v999
    %v1089 = vunpack.c.h.b16 %v999
    %v1090 = vunpack.c.l.b16 %v1000
    %v1091 = vunpack.c.h.b16 %v1000
    %v1092 = vunpack.c.l.b16 %v1001
    %v1093 = vunpack.c.h.b16 %v1001
    %v1094 = vunpack.c.l.b16 %v1002
    %v1095 = vunpack.c.h.b16 %v1002
    %v1096 = vunpack.c.l.b16 %v1003
    %v1097 = vunpack.c.h.b16 %v1003
    %v1098 = vunpack.c.l.b16 %v1004
    %v1099 = vunpack.c.h.b16 %v1004
    %v1100 = vunpack.c.l.b16 %v1005
    %v1101 = vunpack.c.h.b16 %v1005
    %v1102 = vpack.c.b16 %v1042, %v1038
    %v1103 = vpack.c.b16 %v1043, %v1039
    %v1104 = vpack.c.b16 %v1044, %v1040
    %v1105 = vpack.c.b16 %v1045, %v1041
    %v1106 = vpack.c.b16 %v1050, %v1046
    %v1107 = vpack.c.b16 %v1051, %v1047
    %v1108 = vpack.c.b16 %v1052, %v1048
    %v1109 = vpack.c.b16 %v1053, %v1049
    %v1110 = vpack.c.b16 %v1058, %v1054
    %v1111 = vpack.c.b16 %v1059, %v1055
    %v1112 = vpack.c.b16 %v1060, %v1056
    %v1113 = vpack.c.b16 %v1061, %v1057
    %v1114 = vpack.c.b16 %v1066, %v1062
    %v1115 = vpack.c.b16 %v1067, %v1063
    %v1116 = vpack.c.b16 %v1068, %v1064
    %v1117 = vpack.c.b16 %v1069, %v1065
    %v1118 = vpack.c.b16 %v1074, %v1070
    %v1119 = vpack.c.b16 %v1075, %v1071
    %v1120 = vpack.c.b16 %v1076, %v1072
    %v1121 = vpack.c.b16 %v1077, %v1073
    %v1122 = vpack.c.b16 %v1082, %v1078
    %v1123 = vpack.c.b16 %v1083, %v1079
    %v1124 = vpack.c.b16 %v1084, %v1080
    %v1125 = vpack.c.b16 %v1085, %v1081
    %v1126 = vpack.c.b16 %v1090, %v1086
    %v1127 = vpack.c.b16 %v1091, %v1087
    %v1128 = vpack.c.b16 %v1092, %v1088
    %v1129 = vpack.c.b16 %v1093, %v1089
    %v1130 = vpack.c.b16 %v1098, %v1094
    %v1131 = vpack.c.b16 %v1099, %v1095
    %v1132 = vpack.c.b16 %v1100, %v1096
    %v1133 = vpack.c.b16 %v1101, %v1097
    %1166 = vmatprep.subr.bf16.mxu0 %v1131
    %1167 = vmatpush1.bf16.msra.mxu0 %v1130
    %1168 = vmatprep.subr.bf16.mxu0 %v1127
    %1169 = vmatpush1.bf16.msra.mxu0 %v1126
    %1170 = vmatprep.subr.bf16.mxu0 %v1123
    %1171 = vmatpush1.bf16.msra.mxu0 %v1122
    %1172 = vmatprep.subr.bf16.mxu0 %v1119
    %1173 = vmatpush1.bf16.msra.mxu0 %v1118
    %1174 = vmatprep.subr.bf16.mxu0 %v1115
    %1175 = vmatpush1.bf16.msra.mxu0 %v1114
    %1176 = vmatprep.subr.bf16.mxu0 %v1111
    %1177 = vmatpush1.bf16.msra.mxu0 %v1110
    %1178 = vmatprep.subr.bf16.mxu0 %v1107
    %1179 = vmatpush1.bf16.msra.mxu0 %v1106
    %1180 = vmatprep.subr.bf16.mxu0 %v1103
    %1181 = vmatpush1.bf16.msra.mxu0 %v1102
    %1182 = vmatprep.subr.bf16.mxu0 0
    %1183 = vmatpush2.bf16.msra.mxu0 0
    %1184 = vmatprep.subr.bf16.mxu0 0
    %1185 = vmatpush2.bf16.msra.mxu0 0
    %1186 = vmatprep.subr.bf16.mxu0 0
    %1187 = vmatpush2.bf16.msra.mxu0 0
    %1188 = vmatprep.subr.bf16.mxu0 0
    %1189 = vmatpush2.bf16.msra.mxu0 0
    %1190 = vmatprep.subr.bf16.mxu0 0
    %1191 = vmatpush2.bf16.msra.mxu0 0
    %1192 = vmatprep.subr.bf16.mxu0 0
    %1193 = vmatpush2.bf16.msra.mxu0 0
    %1194 = vmatprep.subr.bf16.mxu0 0
    %1195 = vmatpush2.bf16.msra.mxu0 0
    %1196 = vmatprep.subr.bf16.mxu0 0
    %1197 = vmatpush2.bf16.msra.mxu0 0
    %1198 = vmatprep.mubr.bf16.mxu0 0
    %1199 = vmatmul.mubr.bf16.gmra.mxu0 0
    %v1200 = vpop.f32.mrf.mxu0
    %v1201 = vadd.f32 0.0, %v1200
    %v1202 = vpop.f32.mrf.mxu0
    %v1203 = vadd.f32 0.0, %v1202
    %v1204 = vpop.f32.mrf.mxu0
    %v1205 = vpop.f32.mrf.mxu0
    %1206 = vdwg.mxu0
    %1207 = vmatprep.subr.bf16.mxu0 %v1133
    %1208 = vmatpush1.bf16.msra.mxu0 %v1132
    %1209 = vmatprep.subr.bf16.mxu0 %v1129
    %1210 = vmatpush1.bf16.msra.mxu0 %v1128
    %1211 = vmatprep.subr.bf16.mxu0 %v1125
    %1212 = vmatpush1.bf16.msra.mxu0 %v1124
    %1213 = vmatprep.subr.bf16.mxu0 %v1121
    %1214 = vmatpush1.bf16.msra.mxu0 %v1120
    %1215 = vmatprep.subr.bf16.mxu0 %v1117
    %1216 = vmatpush1.bf16.msra.mxu0 %v1116
    %1217 = vmatprep.subr.bf16.mxu0 %v1113
    %1218 = vmatpush1.bf16.msra.mxu0 %v1112
    %1219 = vmatprep.subr.bf16.mxu0 %v1109
    %1220 = vmatpush1.bf16.msra.mxu0 %v1108
    %1221 = vmatprep.subr.bf16.mxu0 %v1105
    %1222 = vmatpush1.bf16.msra.mxu0 %v1104
    %1223 = vmatprep.subr.bf16.mxu0 0
    %1224 = vmatpush2.bf16.msra.mxu0 0
    %1225 = vmatprep.subr.bf16.mxu0 0
    %1226 = vmatpush2.bf16.msra.mxu0 0
    %1227 = vmatprep.subr.bf16.mxu0 0
    %1228 = vmatpush2.bf16.msra.mxu0 0
    %1229 = vmatprep.subr.bf16.mxu0 0
    %1230 = vmatpush2.bf16.msra.mxu0 0
    %1231 = vmatprep.subr.bf16.mxu0 0
    %1232 = vmatpush2.bf16.msra.mxu0 0
    %1233 = vmatprep.subr.bf16.mxu0 0
    %1234 = vmatpush2.bf16.msra.mxu0 0
    %1235 = vmatprep.subr.bf16.mxu0 0
    %1236 = vmatpush2.bf16.msra.mxu0 0
    %1237 = vmatprep.subr.bf16.mxu0 0
    %1238 = vmatpush2.bf16.msra.mxu0 0
    %1239 = vmatprep.mubr.bf16.mxu0 0
    %1240 = vmatmul.mubr.bf16.gmra.mxu0 0
    %v1241 = vpop.f32.mrf.mxu0
    %v1242 = vadd.f32 0.0, %v1241
    %v1243 = vpop.f32.mrf.mxu0
    %v1244 = vadd.f32 0.0, %v1243
    %v1245 = vpop.f32.mrf.mxu0
    %v1246 = vpop.f32.mrf.mxu0
    %1247 = vdwg.mxu0
    %v1248 = vadd.f32 %v970, %v1201
    %v1249 = vadd.f32 %v971, %v1203
    %v1250 = vadd.f32 %v972, %v1242
    %v1251 = vadd.f32 %v973, %v1244
    %v1252 = vxor.u32 %v1248, 2147483648
    %v1253 = vmul.f32 %v1252, 1.442695
    %v1254 = vpow.pop %v1253
    %v1255 = vadd.f32 %v1254, 1.0
    %v1256 = vrcp.pop %v1255
    %v1257 = vmul.f32 1.0, %v1256
    %v1258 = vxor.u32 %v1249, 2147483648
    %v1259 = vmul.f32 %v1258, 1.442695
    %v1260 = vpow.pop %v1259
    %v1261 = vadd.f32 %v1260, 1.0
    %v1262 = vrcp.pop %v1261
    %v1263 = vmul.f32 1.0, %v1262
    %v1264 = vtanh.pop %v1250
    %v1265 = vxor.u32 %v1251, 2147483648
    %v1266 = vmul.f32 %v1265, 1.442695
    %v1267 = vpow.pop %v1266
    %v1268 = vadd.f32 %v1267, 1.0
    %v1269 = vrcp.pop %v1268
    %v1270 = vmul.f32 1.0, %v1269
    %v1271 = vmul.f32 %v1263, 0.0
    %v1272 = vmul.f32 %v1257, %v1264
    %v1273 = vadd.f32 %v1271, %v1272
    %v1274 = vtanh.pop %v1273
    %v1275 = vmul.f32 %v1270, %v1274
    %1276 = vst [vmem:[#allocation3] sm:$0xff] %v1275
    %s1277 = scalar_lea.vmem [#allocation2], 32
    %v1278 = vld [vmem:[%s1277] sm:$0xff]
    %v1279 = vld [vmem:[%s1277 + $0x8] sm:$0xff]
    %v1280 = vld [vmem:[%s1277 + $0x10] sm:$0xff]
    %v1281 = vld [vmem:[%s1277 + $0x18] sm:$0xff]
    %v1282 = vpack.c.bf16 %v1275, %v1275
    %v1283 = vld [vmem:[#allocation10] sm:$0xff]
    %v1284 = vld [vmem:[#allocation10 + $0x8] sm:$0xff]
    %v1285 = vld [vmem:[#allocation10 + $0x10] sm:$0xff]
    %v1286 = vld [vmem:[#allocation10 + $0x18] sm:$0xff]
    %v1287 = vld [vmem:[#allocation10 + $0x20] sm:$0xff]
    %v1288 = vld [vmem:[#allocation10 + $0x28] sm:$0xff]
    %v1289 = vld [vmem:[#allocation10 + $0x30] sm:$0xff]
    %v1290 = vld [vmem:[#allocation10 + $0x38] sm:$0xff]
    %v1291 = vld [vmem:[#allocation10 + $0x40] sm:$0xff]
    %v1292 = vld [vmem:[#allocation10 + $0x48] sm:$0xff]
    %v1293 = vld [vmem:[#allocation10 + $0x50] sm:$0xff]
    %v1294 = vld [vmem:[#allocation10 + $0x58] sm:$0xff]
    %v1295 = vld [vmem:[#allocation10 + $0x60] sm:$0xff]
    %v1296 = vld [vmem:[#allocation10 + $0x68] sm:$0xff]
    %v1297 = vld [vmem:[#allocation10 + $0x70] sm:$0xff]
    %v1298 = vld [vmem:[#allocation10 + $0x78] sm:$0xff]
    %v1299 = vld [vmem:[#allocation10 + $0x80] sm:$0xff]
    %v1300 = vld [vmem:[#allocation10 + $0x88] sm:$0xff]
    %v1301 = vld [vmem:[#allocation10 + $0x90] sm:$0xff]
    %v1302 = vld [vmem:[#allocation10 + $0x98] sm:$0xff]
    %v1303 = vld [vmem:[#allocation10 + $0xa0] sm:$0xff]
    %v1304 = vld [vmem:[#allocation10 + $0xa8] sm:$0xff]
    %v1305 = vld [vmem:[#allocation10 + $0xb0] sm:$0xff]
    %v1306 = vld [vmem:[#allocation10 + $0xb8] sm:$0xff]
    %v1307 = vld [vmem:[#allocation10 + $0xc0] sm:$0xff]
    %v1308 = vld [vmem:[#allocation10 + $0xc8] sm:$0xff]
    %v1309 = vld [vmem:[#allocation10 + $0xd0] sm:$0xff]
    %v1310 = vld [vmem:[#allocation10 + $0xd8] sm:$0xff]
    %v1311 = vld [vmem:[#allocation10 + $0xe0] sm:$0xff]
    %v1312 = vld [vmem:[#allocation10 + $0xe8] sm:$0xff]
    %v1313 = vld [vmem:[#allocation10 + $0xf0] sm:$0xff]
    %v1314 = vld [vmem:[#allocation10 + $0xf8] sm:$0xff]
    %v1347 = vunpack.c.l.b16 %v1283
    %v1348 = vunpack.c.h.b16 %v1283
    %v1349 = vunpack.c.l.b16 %v1284
    %v1350 = vunpack.c.h.b16 %v1284
    %v1351 = vunpack.c.l.b16 %v1285
    %v1352 = vunpack.c.h.b16 %v1285
    %v1353 = vunpack.c.l.b16 %v1286
    %v1354 = vunpack.c.h.b16 %v1286
    %v1355 = vunpack.c.l.b16 %v1287
    %v1356 = vunpack.c.h.b16 %v1287
    %v1357 = vunpack.c.l.b16 %v1288
    %v1358 = vunpack.c.h.b16 %v1288
    %v1359 = vunpack.c.l.b16 %v1289
    %v1360 = vunpack.c.h.b16 %v1289
    %v1361 = vunpack.c.l.b16 %v1290
    %v1362 = vunpack.c.h.b16 %v1290
    %v1363 = vunpack.c.l.b16 %v1291
    %v1364 = vunpack.c.h.b16 %v1291
    %v1365 = vunpack.c.l.b16 %v1292
    %v1366 = vunpack.c.h.b16 %v1292
    %v1367 = vunpack.c.l.b16 %v1293
    %v1368 = vunpack.c.h.b16 %v1293
    %v1369 = vunpack.c.l.b16 %v1294
    %v1370 = vunpack.c.h.b16 %v1294
    %v1371 = vunpack.c.l.b16 %v1295
    %v1372 = vunpack.c.h.b16 %v1295
    %v1373 = vunpack.c.l.b16 %v1296
    %v1374 = vunpack.c.h.b16 %v1296
    %v1375 = vunpack.c.l.b16 %v1297
    %v1376 = vunpack.c.h.b16 %v1297
    %v1377 = vunpack.c.l.b16 %v1298
    %v1378 = vunpack.c.h.b16 %v1298
    %v1379 = vunpack.c.l.b16 %v1299
    %v1380 = vunpack.c.h.b16 %v1299
    %v1381 = vunpack.c.l.b16 %v1300
    %v1382 = vunpack.c.h.b16 %v1300
    %v1383 = vunpack.c.l.b16 %v1301
    %v1384 = vunpack.c.h.b16 %v1301
    %v1385 = vunpack.c.l.b16 %v1302
    %v1386 = vunpack.c.h.b16 %v1302
    %v1387 = vunpack.c.l.b16 %v1303
    %v1388 = vunpack.c.h.b16 %v1303
    %v1389 = vunpack.c.l.b16 %v1304
    %v1390 = vunpack.c.h.b16 %v1304
    %v1391 = vunpack.c.l.b16 %v1305
    %v1392 = vunpack.c.h.b16 %v1305
    %v1393 = vunpack.c.l.b16 %v1306
    %v1394 = vunpack.c.h.b16 %v1306
    %v1395 = vunpack.c.l.b16 %v1307
    %v1396 = vunpack.c.h.b16 %v1307
    %v1397 = vunpack.c.l.b16 %v1308
    %v1398 = vunpack.c.h.b16 %v1308
    %v1399 = vunpack.c.l.b16 %v1309
    %v1400 = vunpack.c.h.b16 %v1309
    %v1401 = vunpack.c.l.b16 %v1310
    %v1402 = vunpack.c.h.b16 %v1310
    %v1403 = vunpack.c.l.b16 %v1311
    %v1404 = vunpack.c.h.b16 %v1311
    %v1405 = vunpack.c.l.b16 %v1312
    %v1406 = vunpack.c.h.b16 %v1312
    %v1407 = vunpack.c.l.b16 %v1313
    %v1408 = vunpack.c.h.b16 %v1313
    %v1409 = vunpack.c.l.b16 %v1314
    %v1410 = vunpack.c.h.b16 %v1314
    %v1411 = vpack.c.b16 %v1351, %v1347
    %v1412 = vpack.c.b16 %v1352, %v1348
    %v1413 = vpack.c.b16 %v1353, %v1349
    %v1414 = vpack.c.b16 %v1354, %v1350
    %v1415 = vpack.c.b16 %v1359, %v1355
    %v1416 = vpack.c.b16 %v1360, %v1356
    %v1417 = vpack.c.b16 %v1361, %v1357
    %v1418 = vpack.c.b16 %v1362, %v1358
    %v1419 = vpack.c.b16 %v1367, %v1363
    %v1420 = vpack.c.b16 %v1368, %v1364
    %v1421 = vpack.c.b16 %v1369, %v1365
    %v1422 = vpack.c.b16 %v1370, %v1366
    %v1423 = vpack.c.b16 %v1375, %v1371
    %v1424 = vpack.c.b16 %v1376, %v1372
    %v1425 = vpack.c.b16 %v1377, %v1373
    %v1426 = vpack.c.b16 %v1378, %v1374
    %v1427 = vpack.c.b16 %v1383, %v1379
    %v1428 = vpack.c.b16 %v1384, %v1380
    %v1429 = vpack.c.b16 %v1385, %v1381
    %v1430 = vpack.c.b16 %v1386, %v1382
    %v1431 = vpack.c.b16 %v1391, %v1387
    %v1432 = vpack.c.b16 %v1392, %v1388
    %v1433 = vpack.c.b16 %v1393, %v1389
    %v1434 = vpack.c.b16 %v1394, %v1390
    %v1435 = vpack.c.b16 %v1399, %v1395
    %v1436 = vpack.c.b16 %v1400, %v1396
    %v1437 = vpack.c.b16 %v1401, %v1397
    %v1438 = vpack.c.b16 %v1402, %v1398
    %v1439 = vpack.c.b16 %v1407, %v1403
    %v1440 = vpack.c.b16 %v1408, %v1404
    %v1441 = vpack.c.b16 %v1409, %v1405
    %v1442 = vpack.c.b16 %v1410, %v1406
    %1475 = vmatprep.subr.bf16.mxu0 %v1440
    %1476 = vmatpush1.bf16.msra.mxu0 %v1439
    %1477 = vmatprep.subr.bf16.mxu0 %v1436
    %1478 = vmatpush1.bf16.msra.mxu0 %v1435
    %1479 = vmatprep.subr.bf16.mxu0 %v1432
    %1480 = vmatpush1.bf16.msra.mxu0 %v1431
    %1481 = vmatprep.subr.bf16.mxu0 %v1428
    %1482 = vmatpush1.bf16.msra.mxu0 %v1427
    %1483 = vmatprep.subr.bf16.mxu0 %v1424
    %1484 = vmatpush1.bf16.msra.mxu0 %v1423
    %1485 = vmatprep.subr.bf16.mxu0 %v1420
    %1486 = vmatpush1.bf16.msra.mxu0 %v1419
    %1487 = vmatprep.subr.bf16.mxu0 %v1416
    %1488 = vmatpush1.bf16.msra.mxu0 %v1415
    %1489 = vmatprep.subr.bf16.mxu0 %v1412
    %1490 = vmatpush1.bf16.msra.mxu0 %v1411
    %1491 = vmatprep.subr.bf16.mxu0 0
    %1492 = vmatpush2.bf16.msra.mxu0 0
    %1493 = vmatprep.subr.bf16.mxu0 0
    %1494 = vmatpush2.bf16.msra.mxu0 0
    %1495 = vmatprep.subr.bf16.mxu0 0
    %1496 = vmatpush2.bf16.msra.mxu0 0
    %1497 = vmatprep.subr.bf16.mxu0 0
    %1498 = vmatpush2.bf16.msra.mxu0 0
    %1499 = vmatprep.subr.bf16.mxu0 0
    %1500 = vmatpush2.bf16.msra.mxu0 0
    %1501 = vmatprep.subr.bf16.mxu0 0
    %1502 = vmatpush2.bf16.msra.mxu0 0
    %1503 = vmatprep.subr.bf16.mxu0 0
    %1504 = vmatpush2.bf16.msra.mxu0 0
    %1505 = vmatprep.subr.bf16.mxu0 0
    %1506 = vmatpush2.bf16.msra.mxu0 0
    %1507 = vmatprep.mubr.bf16.mxu0 0
    %1508 = vmatmul.mubr.bf16.gmra.mxu0 %v1282
    %v1509 = vpop.f32.mrf.mxu0
    %v1510 = vadd.f32 0.0, %v1509
    %v1511 = vpop.f32.mrf.mxu0
    %v1512 = vadd.f32 0.0, %v1511
    %v1513 = vpop.f32.mrf.mxu0
    %v1514 = vpop.f32.mrf.mxu0
    %1515 = vdwg.mxu0
    %1516 = vmatprep.subr.bf16.mxu0 %v1442
    %1517 = vmatpush1.bf16.msra.mxu0 %v1441
    %1518 = vmatprep.subr.bf16.mxu0 %v1438
    %1519 = vmatpush1.bf16.msra.mxu0 %v1437
    %1520 = vmatprep.subr.bf16.mxu0 %v1434
    %1521 = vmatpush1.bf16.msra.mxu0 %v1433
    %1522 = vmatprep.subr.bf16.mxu0 %v1430
    %1523 = vmatpush1.bf16.msra.mxu0 %v1429
    %1524 = vmatprep.subr.bf16.mxu0 %v1426
    %1525 = vmatpush1.bf16.msra.mxu0 %v1425
    %1526 = vmatprep.subr.bf16.mxu0 %v1422
    %1527 = vmatpush1.bf16.msra.mxu0 %v1421
    %1528 = vmatprep.subr.bf16.mxu0 %v1418
    %1529 = vmatpush1.bf16.msra.mxu0 %v1417
    %1530 = vmatprep.subr.bf16.mxu0 %v1414
    %1531 = vmatpush1.bf16.msra.mxu0 %v1413
    %1532 = vmatprep.subr.bf16.mxu0 0
    %1533 = vmatpush2.bf16.msra.mxu0 0
    %1534 = vmatprep.subr.bf16.mxu0 0
    %1535 = vmatpush2.bf16.msra.mxu0 0
    %1536 = vmatprep.subr.bf16.mxu0 0
    %1537 = vmatpush2.bf16.msra.mxu0 0
    %1538 = vmatprep.subr.bf16.mxu0 0
    %1539 = vmatpush2.bf16.msra.mxu0 0
    %1540 = vmatprep.subr.bf16.mxu0 0
    %1541 = vmatpush2.bf16.msra.mxu0 0
    %1542 = vmatprep.subr.bf16.mxu0 0
    %1543 = vmatpush2.bf16.msra.mxu0 0
    %1544 = vmatprep.subr.bf16.mxu0 0
    %1545 = vmatpush2.bf16.msra.mxu0 0
    %1546 = vmatprep.subr.bf16.mxu0 0
    %1547 = vmatpush2.bf16.msra.mxu0 0
    %1548 = vmatprep.mubr.bf16.mxu0 0
    %1549 = vmatmul.mubr.bf16.gmra.mxu0 %v1282
    %v1550 = vpop.f32.mrf.mxu0
    %v1551 = vadd.f32 0.0, %v1550
    %v1552 = vpop.f32.mrf.mxu0
    %v1553 = vadd.f32 0.0, %v1552
    %v1554 = vpop.f32.mrf.mxu0
    %v1555 = vpop.f32.mrf.mxu0
    %1556 = vdwg.mxu0
    %v1557 = vadd.f32 %v1278, %v1510
    %v1558 = vadd.f32 %v1279, %v1512
    %v1559 = vadd.f32 %v1280, %v1551
    %v1560 = vadd.f32 %v1281, %v1553
    %v1561 = vxor.u32 %v1557, 2147483648
    %v1562 = vmul.f32 %v1561, 1.442695
    %v1563 = vpow.pop %v1562
    %v1564 = vadd.f32 %v1563, 1.0
    %v1565 = vrcp.pop %v1564
    %v1566 = vmul.f32 1.0, %v1565
    %v1567 = vxor.u32 %v1558, 2147483648
    %v1568 = vmul.f32 %v1567, 1.442695
    %v1569 = vpow.pop %v1568
    %v1570 = vadd.f32 %v1569, 1.0
    %v1571 = vrcp.pop %v1570
    %v1572 = vmul.f32 1.0, %v1571
    %v1573 = vtanh.pop %v1559
    %v1574 = vxor.u32 %v1560, 2147483648
    %v1575 = vmul.f32 %v1574, 1.442695
    %v1576 = vpow.pop %v1575
    %v1577 = vadd.f32 %v1576, 1.0
    %v1578 = vrcp.pop %v1577
    %v1579 = vmul.f32 1.0, %v1578
    %v1580 = vmul.f32 %v1572, %v1273
    %v1581 = vmul.f32 %v1566, %v1573
    %v1582 = vadd.f32 %v1580, %v1581
    %v1583 = vtanh.pop %v1582
    %v1584 = vmul.f32 %v1579, %v1583
    %1585 = vst [vmem:[%s235] sm:$0xff] %v1584
    %s1586 = scalar_lea.vmem [#allocation2], 64
    %v1587 = vld [vmem:[%s1586] sm:$0xff]
    %v1588 = vld [vmem:[%s1586 + $0x8] sm:$0xff]
    %v1589 = vld [vmem:[%s1586 + $0x10] sm:$0xff]
    %v1590 = vld [vmem:[%s1586 + $0x18] sm:$0xff]
    %v1591 = vpack.c.bf16 %v1584, %v1584
    %v1592 = vld [vmem:[#allocation10] sm:$0xff]
    %v1593 = vld [vmem:[#allocation10 + $0x8] sm:$0xff]
    %v1594 = vld [vmem:[#allocation10 + $0x10] sm:$0xff]
    %v1595 = vld [vmem:[#allocation10 + $0x18] sm:$0xff]
    %v1596 = vld [vmem:[#allocation10 + $0x20] sm:$0xff]
    %v1597 = vld [vmem:[#allocation10 + $0x28] sm:$0xff]
    %v1598 = vld [vmem:[#allocation10 + $0x30] sm:$0xff]
    %v1599 = vld [vmem:[#allocation10 + $0x38] sm:$0xff]
    %v1600 = vld [vmem:[#allocation10 + $0x40] sm:$0xff]
    %v1601 = vld [vmem:[#allocation10 + $0x48] sm:$0xff]
    %v1602 = vld [vmem:[#allocation10 + $0x50] sm:$0xff]
    %v1603 = vld [vmem:[#allocation10 + $0x58] sm:$0xff]
    %v1604 = vld [vmem:[#allocation10 + $0x60] sm:$0xff]
    %v1605 = vld [vmem:[#allocation10 + $0x68] sm:$0xff]
    %v1606 = vld [vmem:[#allocation10 + $0x70] sm:$0xff]
    %v1607 = vld [vmem:[#allocation10 + $0x78] sm:$0xff]
    %v1608 = vld [vmem:[#allocation10 + $0x80] sm:$0xff]
    %v1609 = vld [vmem:[#allocation10 + $0x88] sm:$0xff]
    %v1610 = vld [vmem:[#allocation10 + $0x90] sm:$0xff]
    %v1611 = vld [vmem:[#allocation10 + $0x98] sm:$0xff]
    %v1612 = vld [vmem:[#allocation10 + $0xa0] sm:$0xff]
    %v1613 = vld [vmem:[#allocation10 + $0xa8] sm:$0xff]
    %v1614 = vld [vmem:[#allocation10 + $0xb0] sm:$0xff]
    %v1615 = vld [vmem:[#allocation10 + $0xb8] sm:$0xff]
    %v1616 = vld [vmem:[#allocation10 + $0xc0] sm:$0xff]
    %v1617 = vld [vmem:[#allocation10 + $0xc8] sm:$0xff]
    %v1618 = vld [vmem:[#allocation10 + $0xd0] sm:$0xff]
    %v1619 = vld [vmem:[#allocation10 + $0xd8] sm:$0xff]
    %v1620 = vld [vmem:[#allocation10 + $0xe0] sm:$0xff]
    %v1621 = vld [vmem:[#allocation10 + $0xe8] sm:$0xff]
    %v1622 = vld [vmem:[#allocation10 + $0xf0] sm:$0xff]
    %v1623 = vld [vmem:[#allocation10 + $0xf8] sm:$0xff]
    %v1656 = vunpack.c.l.b16 %v1592
    %v1657 = vunpack.c.h.b16 %v1592
    %v1658 = vunpack.c.l.b16 %v1593
    %v1659 = vunpack.c.h.b16 %v1593
    %v1660 = vunpack.c.l.b16 %v1594
    %v1661 = vunpack.c.h.b16 %v1594
    %v1662 = vunpack.c.l.b16 %v1595
    %v1663 = vunpack.c.h.b16 %v1595
    %v1664 = vunpack.c.l.b16 %v1596
    %v1665 = vunpack.c.h.b16 %v1596
    %v1666 = vunpack.c.l.b16 %v1597
    %v1667 = vunpack.c.h.b16 %v1597
    %v1668 = vunpack.c.l.b16 %v1598
    %v1669 = vunpack.c.h.b16 %v1598
    %v1670 = vunpack.c.l.b16 %v1599
    %v1671 = vunpack.c.h.b16 %v1599
    %v1672 = vunpack.c.l.b16 %v1600
    %v1673 = vunpack.c.h.b16 %v1600
    %v1674 = vunpack.c.l.b16 %v1601
    %v1675 = vunpack.c.h.b16 %v1601
    %v1676 = vunpack.c.l.b16 %v1602
    %v1677 = vunpack.c.h.b16 %v1602
    %v1678 = vunpack.c.l.b16 %v1603
    %v1679 = vunpack.c.h.b16 %v1603
    %v1680 = vunpack.c.l.b16 %v1604
    %v1681 = vunpack.c.h.b16 %v1604
    %v1682 = vunpack.c.l.b16 %v1605
    %v1683 = vunpack.c.h.b16 %v1605
    %v1684 = vunpack.c.l.b16 %v1606
    %v1685 = vunpack.c.h.b16 %v1606
    %v1686 = vunpack.c.l.b16 %v1607
    %v1687 = vunpack.c.h.b16 %v1607
    %v1688 = vunpack.c.l.b16 %v1608
    %v1689 = vunpack.c.h.b16 %v1608
    %v1690 = vunpack.c.l.b16 %v1609
    %v1691 = vunpack.c.h.b16 %v1609
    %v1692 = vunpack.c.l.b16 %v1610
    %v1693 = vunpack.c.h.b16 %v1610
    %v1694 = vunpack.c.l.b16 %v1611
    %v1695 = vunpack.c.h.b16 %v1611
    %v1696 = vunpack.c.l.b16 %v1612
    %v1697 = vunpack.c.h.b16 %v1612
    %v1698 = vunpack.c.l.b16 %v1613
    %v1699 = vunpack.c.h.b16 %v1613
    %v1700 = vunpack.c.l.b16 %v1614
    %v1701 = vunpack.c.h.b16 %v1614
    %v1702 = vunpack.c.l.b16 %v1615
    %v1703 = vunpack.c.h.b16 %v1615
    %v1704 = vunpack.c.l.b16 %v1616
    %v1705 = vunpack.c.h.b16 %v1616
    %v1706 = vunpack.c.l.b16 %v1617
    %v1707 = vunpack.c.h.b16 %v1617
    %v1708 = vunpack.c.l.b16 %v1618
    %v1709 = vunpack.c.h.b16 %v1618
    %v1710 = vunpack.c.l.b16 %v1619
    %v1711 = vunpack.c.h.b16 %v1619
    %v1712 = vunpack.c.l.b16 %v1620
    %v1713 = vunpack.c.h.b16 %v1620
    %v1714 = vunpack.c.l.b16 %v1621
    %v1715 = vunpack.c.h.b16 %v1621
    %v1716 = vunpack.c.l.b16 %v1622
    %v1717 = vunpack.c.h.b16 %v1622
    %v1718 = vunpack.c.l.b16 %v1623
    %v1719 = vunpack.c.h.b16 %v1623
    %v1720 = vpack.c.b16 %v1660, %v1656
    %v1721 = vpack.c.b16 %v1661, %v1657
    %v1722 = vpack.c.b16 %v1662, %v1658
    %v1723 = vpack.c.b16 %v1663, %v1659
    %v1724 = vpack.c.b16 %v1668, %v1664
    %v1725 = vpack.c.b16 %v1669, %v1665
    %v1726 = vpack.c.b16 %v1670, %v1666
    %v1727 = vpack.c.b16 %v1671, %v1667
    %v1728 = vpack.c.b16 %v1676, %v1672
    %v1729 = vpack.c.b16 %v1677, %v1673
    %v1730 = vpack.c.b16 %v1678, %v1674
    %v1731 = vpack.c.b16 %v1679, %v1675
    %v1732 = vpack.c.b16 %v1684, %v1680
    %v1733 = vpack.c.b16 %v1685, %v1681
    %v1734 = vpack.c.b16 %v1686, %v1682
    %v1735 = vpack.c.b16 %v1687, %v1683
    %v1736 = vpack.c.b16 %v1692, %v1688
    %v1737 = vpack.c.b16 %v1693, %v1689
    %v1738 = vpack.c.b16 %v1694, %v1690
    %v1739 = vpack.c.b16 %v1695, %v1691
    %v1740 = vpack.c.b16 %v1700, %v1696
    %v1741 = vpack.c.b16 %v1701, %v1697
    %v1742 = vpack.c.b16 %v1702, %v1698
    %v1743 = vpack.c.b16 %v1703, %v1699
    %v1744 = vpack.c.b16 %v1708, %v1704
    %v1745 = vpack.c.b16 %v1709, %v1705
    %v1746 = vpack.c.b16 %v1710, %v1706
    %v1747 = vpack.c.b16 %v1711, %v1707
    %v1748 = vpack.c.b16 %v1716, %v1712
    %v1749 = vpack.c.b16 %v1717, %v1713
    %v1750 = vpack.c.b16 %v1718, %v1714
    %v1751 = vpack.c.b16 %v1719, %v1715
    %1784 = vmatprep.subr.bf16.mxu0 %v1749
    %1785 = vmatpush1.bf16.msra.mxu0 %v1748
    %1786 = vmatprep.subr.bf16.mxu0 %v1745
    %1787 = vmatpush1.bf16.msra.mxu0 %v1744
    %1788 = vmatprep.subr.bf16.mxu0 %v1741
    %1789 = vmatpush1.bf16.msra.mxu0 %v1740
    %1790 = vmatprep.subr.bf16.mxu0 %v1737
    %1791 = vmatpush1.bf16.msra.mxu0 %v1736
    %1792 = vmatprep.subr.bf16.mxu0 %v1733
    %1793 = vmatpush1.bf16.msra.mxu0 %v1732
    %1794 = vmatprep.subr.bf16.mxu0 %v1729
    %1795 = vmatpush1.bf16.msra.mxu0 %v1728
    %1796 = vmatprep.subr.bf16.mxu0 %v1725
    %1797 = vmatpush1.bf16.msra.mxu0 %v1724
    %1798 = vmatprep.subr.bf16.mxu0 %v1721
    %1799 = vmatpush1.bf16.msra.mxu0 %v1720
    %1800 = vmatprep.subr.bf16.mxu0 0
    %1801 = vmatpush2.bf16.msra.mxu0 0
    %1802 = vmatprep.subr.bf16.mxu0 0
    %1803 = vmatpush2.bf16.msra.mxu0 0
    %1804 = vmatprep.subr.bf16.mxu0 0
    %1805 = vmatpush2.bf16.msra.mxu0 0
    %1806 = vmatprep.subr.bf16.mxu0 0
    %1807 = vmatpush2.bf16.msra.mxu0 0
    %1808 = vmatprep.subr.bf16.mxu0 0
    %1809 = vmatpush2.bf16.msra.mxu0 0
    %1810 = vmatprep.subr.bf16.mxu0 0
    %1811 = vmatpush2.bf16.msra.mxu0 0
    %1812 = vmatprep.subr.bf16.mxu0 0
    %1813 = vmatpush2.bf16.msra.mxu0 0
    %1814 = vmatprep.subr.bf16.mxu0 0
    %1815 = vmatpush2.bf16.msra.mxu0 0
    %1816 = vmatprep.mubr.bf16.mxu0 0
    %1817 = vmatmul.mubr.bf16.gmra.mxu0 %v1591
    %v1818 = vpop.f32.mrf.mxu0
    %v1819 = vadd.f32 0.0, %v1818
    %v1820 = vpop.f32.mrf.mxu0
    %v1821 = vadd.f32 0.0, %v1820
    %v1822 = vpop.f32.mrf.mxu0
    %v1823 = vpop.f32.mrf.mxu0
    %1824 = vdwg.mxu0
    %1825 = vmatprep.subr.bf16.mxu0 %v1751
    %1826 = vmatpush1.bf16.msra.mxu0 %v1750
    %1827 = vmatprep.subr.bf16.mxu0 %v1747
    %1828 = vmatpush1.bf16.msra.mxu0 %v1746
    %1829 = vmatprep.subr.bf16.mxu0 %v1743
    %1830 = vmatpush1.bf16.msra.mxu0 %v1742
    %1831 = vmatprep.subr.bf16.mxu0 %v1739
    %1832 = vmatpush1.bf16.msra.mxu0 %v1738
    %1833 = vmatprep.subr.bf16.mxu0 %v1735
    %1834 = vmatpush1.bf16.msra.mxu0 %v1734
    %1835 = vmatprep.subr.bf16.mxu0 %v1731
    %1836 = vmatpush1.bf16.msra.mxu0 %v1730
    %1837 = vmatprep.subr.bf16.mxu0 %v1727
    %1838 = vmatpush1.bf16.msra.mxu0 %v1726
    %1839 = vmatprep.subr.bf16.mxu0 %v1723
    %1840 = vmatpush1.bf16.msra.mxu0 %v1722
    %1841 = vmatprep.subr.bf16.mxu0 0
    %1842 = vmatpush2.bf16.msra.mxu0 0
    %1843 = vmatprep.subr.bf16.mxu0 0
    %1844 = vmatpush2.bf16.msra.mxu0 0
    %1845 = vmatprep.subr.bf16.mxu0 0
    %1846 = vmatpush2.bf16.msra.mxu0 0
    %1847 = vmatprep.subr.bf16.mxu0 0
    %1848 = vmatpush2.bf16.msra.mxu0 0
    %1849 = vmatprep.subr.bf16.mxu0 0
    %1850 = vmatpush2.bf16.msra.mxu0 0
    %1851 = vmatprep.subr.bf16.mxu0 0
    %1852 = vmatpush2.bf16.msra.mxu0 0
    %1853 = vmatprep.subr.bf16.mxu0 0
    %1854 = vmatpush2.bf16.msra.mxu0 0
    %1855 = vmatprep.subr.bf16.mxu0 0
    %1856 = vmatpush2.bf16.msra.mxu0 0
    %1857 = vmatprep.mubr.bf16.mxu0 0
    %1858 = vmatmul.mubr.bf16.gmra.mxu0 %v1591
    %v1859 = vpop.f32.mrf.mxu0
    %v1860 = vadd.f32 0.0, %v1859
    %v1861 = vpop.f32.mrf.mxu0
    %v1862 = vadd.f32 0.0, %v1861
    %v1863 = vpop.f32.mrf.mxu0
    %v1864 = vpop.f32.mrf.mxu0
    %1865 = vdwg.mxu0
    %v1866 = vadd.f32 %v1587, %v1819
    %v1867 = vadd.f32 %v1588, %v1821
    %v1868 = vadd.f32 %v1589, %v1860
    %v1869 = vadd.f32 %v1590, %v1862
    %v1870 = vxor.u32 %v1866, 2147483648
    %v1871 = vmul.f32 %v1870, 1.442695
    %v1872 = vpow.pop %v1871
    %v1873 = vadd.f32 %v1872, 1.0
    %v1874 = vrcp.pop %v1873
    %v1875 = vmul.f32 1.0, %v1874
    %v1876 = vxor.u32 %v1867, 2147483648
    %v1877 = vmul.f32 %v1876, 1.442695
    %v1878 = vpow.pop %v1877
    %v1879 = vadd.f32 %v1878, 1.0
    %v1880 = vrcp.pop %v1879
    %v1881 = vmul.f32 1.0, %v1880
    %v1882 = vtanh.pop %v1868
    %v1883 = vxor.u32 %v1869, 2147483648
    %v1884 = vmul.f32 %v1883, 1.442695
    %v1885 = vpow.pop %v1884
    %v1886 = vadd.f32 %v1885, 1.0
    %v1887 = vrcp.pop %v1886
    %v1888 = vmul.f32 1.0, %v1887
    %v1889 = vmul.f32 %v1881, %v1582
    %v1890 = vmul.f32 %v1875, %v1882
    %v1891 = vadd.f32 %v1889, %v1890
    %v1892 = vtanh.pop %v1891
    %v1893 = vmul.f32 %v1888, %v1892
    %1894 = vst [vmem:[%s289] sm:$0xff] %v1893
    %s1895 = scalar_lea.vmem [#allocation2], 96
    %v1896 = vld [vmem:[%s1895] sm:$0xff]
    %v1897 = vld [vmem:[%s1895 + $0x8] sm:$0xff]
    %v1898 = vld [vmem:[%s1895 + $0x10] sm:$0xff]
    %v1899 = vld [vmem:[%s1895 + $0x18] sm:$0xff]
    %v1900 = vpack.c.bf16 %v1893, %v1893
    %v1901 = vld [vmem:[#allocation10] sm:$0xff]
    %v1902 = vld [vmem:[#allocation10 + $0x8] sm:$0xff]
    %v1903 = vld [vmem:[#allocation10 + $0x10] sm:$0xff]
    %v1904 = vld [vmem:[#allocation10 + $0x18] sm:$0xff]
    %v1905 = vld [vmem:[#allocation10 + $0x20] sm:$0xff]
    %v1906 = vld [vmem:[#allocation10 + $0x28] sm:$0xff]
    %v1907 = vld [vmem:[#allocation10 + $0x30] sm:$0xff]
    %v1908 = vld [vmem:[#allocation10 + $0x38] sm:$0xff]
    %v1909 = vld [vmem:[#allocation10 + $0x40] sm:$0xff]
    %v1910 = vld [vmem:[#allocation10 + $0x48] sm:$0xff]
    %v1911 = vld [vmem:[#allocation10 + $0x50] sm:$0xff]
    %v1912 = vld [vmem:[#allocation10 + $0x58] sm:$0xff]
    %v1913 = vld [vmem:[#allocation10 + $0x60] sm:$0xff]
    %v1914 = vld [vmem:[#allocation10 + $0x68] sm:$0xff]
    %v1915 = vld [vmem:[#allocation10 + $0x70] sm:$0xff]
    %v1916 = vld [vmem:[#allocation10 + $0x78] sm:$0xff]
    %v1917 = vld [vmem:[#allocation10 + $0x80] sm:$0xff]
    %v1918 = vld [vmem:[#allocation10 + $0x88] sm:$0xff]
    %v1919 = vld [vmem:[#allocation10 + $0x90] sm:$0xff]
    %v1920 = vld [vmem:[#allocation10 + $0x98] sm:$0xff]
    %v1921 = vld [vmem:[#allocation10 + $0xa0] sm:$0xff]
    %v1922 = vld [vmem:[#allocation10 + $0xa8] sm:$0xff]
    %v1923 = vld [vmem:[#allocation10 + $0xb0] sm:$0xff]
    %v1924 = vld [vmem:[#allocation10 + $0xb8] sm:$0xff]
    %v1925 = vld [vmem:[#allocation10 + $0xc0] sm:$0xff]
    %v1926 = vld [vmem:[#allocation10 + $0xc8] sm:$0xff]
    %v1927 = vld [vmem:[#allocation10 + $0xd0] sm:$0xff]
    %v1928 = vld [vmem:[#allocation10 + $0xd8] sm:$0xff]
    %v1929 = vld [vmem:[#allocation10 + $0xe0] sm:$0xff]
    %v1930 = vld [vmem:[#allocation10 + $0xe8] sm:$0xff]
    %v1931 = vld [vmem:[#allocation10 + $0xf0] sm:$0xff]
    %v1932 = vld [vmem:[#allocation10 + $0xf8] sm:$0xff]
    %v1965 = vunpack.c.l.b16 %v1901
    %v1966 = vunpack.c.h.b16 %v1901
    %v1967 = vunpack.c.l.b16 %v1902
    %v1968 = vunpack.c.h.b16 %v1902
    %v1969 = vunpack.c.l.b16 %v1903
    %v1970 = vunpack.c.h.b16 %v1903
    %v1971 = vunpack.c.l.b16 %v1904
    %v1972 = vunpack.c.h.b16 %v1904
    %v1973 = vunpack.c.l.b16 %v1905
    %v1974 = vunpack.c.h.b16 %v1905
    %v1975 = vunpack.c.l.b16 %v1906
    %v1976 = vunpack.c.h.b16 %v1906
    %v1977 = vunpack.c.l.b16 %v1907
    %v1978 = vunpack.c.h.b16 %v1907
    %v1979 = vunpack.c.l.b16 %v1908
    %v1980 = vunpack.c.h.b16 %v1908
    %v1981 = vunpack.c.l.b16 %v1909
    %v1982 = vunpack.c.h.b16 %v1909
    %v1983 = vunpack.c.l.b16 %v1910
    %v1984 = vunpack.c.h.b16 %v1910
    %v1985 = vunpack.c.l.b16 %v1911
    %v1986 = vunpack.c.h.b16 %v1911
    %v1987 = vunpack.c.l.b16 %v1912
    %v1988 = vunpack.c.h.b16 %v1912
    %v1989 = vunpack.c.l.b16 %v1913
    %v1990 = vunpack.c.h.b16 %v1913
    %v1991 = vunpack.c.l.b16 %v1914
    %v1992 = vunpack.c.h.b16 %v1914
    %v1993 = vunpack.c.l.b16 %v1915
    %v1994 = vunpack.c.h.b16 %v1915
    %v1995 = vunpack.c.l.b16 %v1916
    %v1996 = vunpack.c.h.b16 %v1916
    %v1997 = vunpack.c.l.b16 %v1917
    %v1998 = vunpack.c.h.b16 %v1917
    %v1999 = vunpack.c.l.b16 %v1918
    %v2000 = vunpack.c.h.b16 %v1918
    %v2001 = vunpack.c.l.b16 %v1919
    %v2002 = vunpack.c.h.b16 %v1919
    %v2003 = vunpack.c.l.b16 %v1920
    %v2004 = vunpack.c.h.b16 %v1920
    %v2005 = vunpack.c.l.b16 %v1921
    %v2006 = vunpack.c.h.b16 %v1921
    %v2007 = vunpack.c.l.b16 %v1922
    %v2008 = vunpack.c.h.b16 %v1922
    %v2009 = vunpack.c.l.b16 %v1923
    %v2010 = vunpack.c.h.b16 %v1923
    %v2011 = vunpack.c.l.b16 %v1924
    %v2012 = vunpack.c.h.b16 %v1924
    %v2013 = vunpack.c.l.b16 %v1925
    %v2014 = vunpack.c.h.b16 %v1925
    %v2015 = vunpack.c.l.b16 %v1926
    %v2016 = vunpack.c.h.b16 %v1926
    %v2017 = vunpack.c.l.b16 %v1927
    %v2018 = vunpack.c.h.b16 %v1927
    %v2019 = vunpack.c.l.b16 %v1928
    %v2020 = vunpack.c.h.b16 %v1928
    %v2021 = vunpack.c.l.b16 %v1929
    %v2022 = vunpack.c.h.b16 %v1929
    %v2023 = vunpack.c.l.b16 %v1930
    %v2024 = vunpack.c.h.b16 %v1930
    %v2025 = vunpack.c.l.b16 %v1931
    %v2026 = vunpack.c.h.b16 %v1931
    %v2027 = vunpack.c.l.b16 %v1932
    %v2028 = vunpack.c.h.b16 %v1932
    %v2029 = vpack.c.b16 %v1969, %v1965
    %v2030 = vpack.c.b16 %v1970, %v1966
    %v2031 = vpack.c.b16 %v1971, %v1967
    %v2032 = vpack.c.b16 %v1972, %v1968
    %v2033 = vpack.c.b16 %v1977, %v1973
    %v2034 = vpack.c.b16 %v1978, %v1974
    %v2035 = vpack.c.b16 %v1979, %v1975
    %v2036 = vpack.c.b16 %v1980, %v1976
    %v2037 = vpack.c.b16 %v1985, %v1981
    %v2038 = vpack.c.b16 %v1986, %v1982
    %v2039 = vpack.c.b16 %v1987, %v1983
    %v2040 = vpack.c.b16 %v1988, %v1984
    %v2041 = vpack.c.b16 %v1993, %v1989
    %v2042 = vpack.c.b16 %v1994, %v1990
    %v2043 = vpack.c.b16 %v1995, %v1991
    %v2044 = vpack.c.b16 %v1996, %v1992
    %v2045 = vpack.c.b16 %v2001, %v1997
    %v2046 = vpack.c.b16 %v2002, %v1998
    %v2047 = vpack.c.b16 %v2003, %v1999
    %v2048 = vpack.c.b16 %v2004, %v2000
    %v2049 = vpack.c.b16 %v2009, %v2005
    %v2050 = vpack.c.b16 %v2010, %v2006
    %v2051 = vpack.c.b16 %v2011, %v2007
    %v2052 = vpack.c.b16 %v2012, %v2008
    %v2053 = vpack.c.b16 %v2017, %v2013
    %v2054 = vpack.c.b16 %v2018, %v2014
    %v2055 = vpack.c.b16 %v2019, %v2015
    %v2056 = vpack.c.b16 %v2020, %v2016
    %v2057 = vpack.c.b16 %v2025, %v2021
    %v2058 = vpack.c.b16 %v2026, %v2022
    %v2059 = vpack.c.b16 %v2027, %v2023
    %v2060 = vpack.c.b16 %v2028, %v2024
    %2093 = vmatprep.subr.bf16.mxu0 %v2058
    %2094 = vmatpush1.bf16.msra.mxu0 %v2057
    %2095 = vmatprep.subr.bf16.mxu0 %v2054
    %2096 = vmatpush1.bf16.msra.mxu0 %v2053
    %2097 = vmatprep.subr.bf16.mxu0 %v2050
    %2098 = vmatpush1.bf16.msra.mxu0 %v2049
    %2099 = vmatprep.subr.bf16.mxu0 %v2046
    %2100 = vmatpush1.bf16.msra.mxu0 %v2045
    %2101 = vmatprep.subr.bf16.mxu0 %v2042
    %2102 = vmatpush1.bf16.msra.mxu0 %v2041
    %2103 = vmatprep.subr.bf16.mxu0 %v2038
    %2104 = vmatpush1.bf16.msra.mxu0 %v2037
    %2105 = vmatprep.subr.bf16.mxu0 %v2034
    %2106 = vmatpush1.bf16.msra.mxu0 %v2033
    %2107 = vmatprep.subr.bf16.mxu0 %v2030
    %2108 = vmatpush1.bf16.msra.mxu0 %v2029
    %2109 = vmatprep.subr.bf16.mxu0 0
    %2110 = vmatpush2.bf16.msra.mxu0 0
    %2111 = vmatprep.subr.bf16.mxu0 0
    %2112 = vmatpush2.bf16.msra.mxu0 0
    %2113 = vmatprep.subr.bf16.mxu0 0
    %2114 = vmatpush2.bf16.msra.mxu0 0
    %2115 = vmatprep.subr.bf16.mxu0 0
    %2116 = vmatpush2.bf16.msra.mxu0 0
    %2117 = vmatprep.subr.bf16.mxu0 0
    %2118 = vmatpush2.bf16.msra.mxu0 0
    %2119 = vmatprep.subr.bf16.mxu0 0
    %2120 = vmatpush2.bf16.msra.mxu0 0
    %2121 = vmatprep.subr.bf16.mxu0 0
    %2122 = vmatpush2.bf16.msra.mxu0 0
    %2123 = vmatprep.subr.bf16.mxu0 0
    %2124 = vmatpush2.bf16.msra.mxu0 0
    %2125 = vmatprep.mubr.bf16.mxu0 0
    %2126 = vmatmul.mubr.bf16.gmra.mxu0 %v1900
    %v2127 = vpop.f32.mrf.mxu0
    %v2128 = vadd.f32 0.0, %v2127
    %v2129 = vpop.f32.mrf.mxu0
    %v2130 = vadd.f32 0.0, %v2129
    %v2131 = vpop.f32.mrf.mxu0
    %v2132 = vpop.f32.mrf.mxu0
    %2133 = vdwg.mxu0
    %2134 = vmatprep.subr.bf16.mxu0 %v2060
    %2135 = vmatpush1.bf16.msra.mxu0 %v2059
    %2136 = vmatprep.subr.bf16.mxu0 %v2056
    %2137 = vmatpush1.bf16.msra.mxu0 %v2055
    %2138 = vmatprep.subr.bf16.mxu0 %v2052
    %2139 = vmatpush1.bf16.msra.mxu0 %v2051
    %2140 = vmatprep.subr.bf16.mxu0 %v2048
    %2141 = vmatpush1.bf16.msra.mxu0 %v2047
    %2142 = vmatprep.subr.bf16.mxu0 %v2044
    %2143 = vmatpush1.bf16.msra.mxu0 %v2043
    %2144 = vmatprep.subr.bf16.mxu0 %v2040
    %2145 = vmatpush1.bf16.msra.mxu0 %v2039
    %2146 = vmatprep.subr.bf16.mxu0 %v2036
    %2147 = vmatpush1.bf16.msra.mxu0 %v2035
    %2148 = vmatprep.subr.bf16.mxu0 %v2032
    %2149 = vmatpush1.bf16.msra.mxu0 %v2031
    %2150 = vmatprep.subr.bf16.mxu0 0
    %2151 = vmatpush2.bf16.msra.mxu0 0
    %2152 = vmatprep.subr.bf16.mxu0 0
    %2153 = vmatpush2.bf16.msra.mxu0 0
    %2154 = vmatprep.subr.bf16.mxu0 0
    %2155 = vmatpush2.bf16.msra.mxu0 0
    %2156 = vmatprep.subr.bf16.mxu0 0
    %2157 = vmatpush2.bf16.msra.mxu0 0
    %2158 = vmatprep.subr.bf16.mxu0 0
    %2159 = vmatpush2.bf16.msra.mxu0 0
    %2160 = vmatprep.subr.bf16.mxu0 0
    %2161 = vmatpush2.bf16.msra.mxu0 0
    %2162 = vmatprep.subr.bf16.mxu0 0
    %2163 = vmatpush2.bf16.msra.mxu0 0
    %2164 = vmatprep.subr.bf16.mxu0 0
    %2165 = vmatpush2.bf16.msra.mxu0 0
    %2166 = vmatprep.mubr.bf16.mxu0 0
    %2167 = vmatmul.mubr.bf16.gmra.mxu0 %v1900
    %v2168 = vpop.f32.mrf.mxu0
    %v2169 = vadd.f32 0.0, %v2168
    %v2170 = vpop.f32.mrf.mxu0
    %v2171 = vadd.f32 0.0, %v2170
    %v2172 = vpop.f32.mrf.mxu0
    %v2173 = vpop.f32.mrf.mxu0
    %2174 = vdwg.mxu0
    %v2175 = vadd.f32 %v1896, %v2128
    %v2176 = vadd.f32 %v1897, %v2130
    %v2177 = vadd.f32 %v1898, %v2169
    %v2178 = vadd.f32 %v1899, %v2171
    %v2179 = vxor.u32 %v2175, 2147483648
    %v2180 = vmul.f32 %v2179, 1.442695
    %v2181 = vpow.pop %v2180
    %v2182 = vadd.f32 %v2181, 1.0
    %v2183 = vrcp.pop %v2182
    %v2184 = vmul.f32 1.0, %v2183
    %v2185 = vxor.u32 %v2176, 2147483648
    %v2186 = vmul.f32 %v2185, 1.442695
    %v2187 = vpow.pop %v2186
    %v2188 = vadd.f32 %v2187, 1.0
    %v2189 = vrcp.pop %v2188
    %v2190 = vmul.f32 1.0, %v2189
    %v2191 = vtanh.pop %v2177
    %v2192 = vxor.u32 %v2178, 2147483648
    %v2193 = vmul.f32 %v2192, 1.442695
    %v2194 = vpow.pop %v2193
    %v2195 = vadd.f32 %v2194, 1.0
    %v2196 = vrcp.pop %v2195
    %v2197 = vmul.f32 1.0, %v2196
    %v2198 = vmul.f32 %v2190, %v1891
    %v2199 = vmul.f32 %v2184, %v2191
    %v2200 = vadd.f32 %v2198, %v2199
    %v2201 = vtanh.pop %v2200
    %v2202 = vmul.f32 %v2197, %v2201
    %2203 = vst [vmem:[%s343] sm:$0xff] %v2202
    %s2204 = scalar_lea.vmem [#allocation2], 128
    %v2205 = vld [vmem:[%s2204] sm:$0xff]
    %v2206 = vld [vmem:[%s2204 + $0x8] sm:$0xff]
    %v2207 = vld [vmem:[%s2204 + $0x10] sm:$0xff]
    %v2208 = vld [vmem:[%s2204 + $0x18] sm:$0xff]
    %v2209 = vpack.c.bf16 %v2202, %v2202
    %v2210 = vld [vmem:[#allocation10] sm:$0xff]
    %v2211 = vld [vmem:[#allocation10 + $0x8] sm:$0xff]
    %v2212 = vld [vmem:[#allocation10 + $0x10] sm:$0xff]
    %v2213 = vld [vmem:[#allocation10 + $0x18] sm:$0xff]
    %v2214 = vld [vmem:[#allocation10 + $0x20] sm:$0xff]
    %v2215 = vld [vmem:[#allocation10 + $0x28] sm:$0xff]
    %v2216 = vld [vmem:[#allocation10 + $0x30] sm:$0xff]
    %v2217 = vld [vmem:[#allocation10 + $0x38] sm:$0xff]
    %v2218 = vld [vmem:[#allocation10 + $0x40] sm:$0xff]
    %v2219 = vld [vmem:[#allocation10 + $0x48] sm:$0xff]
    %v2220 = vld [vmem:[#allocation10 + $0x50] sm:$0xff]
    %v2221 = vld [vmem:[#allocation10 + $0x58] sm:$0xff]
    %v2222 = vld [vmem:[#allocation10 + $0x60] sm:$0xff]
    %v2223 = vld [vmem:[#allocation10 + $0x68] sm:$0xff]
    %v2224 = vld [vmem:[#allocation10 + $0x70] sm:$0xff]
    %v2225 = vld [vmem:[#allocation10 + $0x78] sm:$0xff]
    %v2226 = vld [vmem:[#allocation10 + $0x80] sm:$0xff]
    %v2227 = vld [vmem:[#allocation10 + $0x88] sm:$0xff]
    %v2228 = vld [vmem:[#allocation10 + $0x90] sm:$0xff]
    %v2229 = vld [vmem:[#allocation10 + $0x98] sm:$0xff]
    %v2230 = vld [vmem:[#allocation10 + $0xa0] sm:$0xff]
    %v2231 = vld [vmem:[#allocation10 + $0xa8] sm:$0xff]
    %v2232 = vld [vmem:[#allocation10 + $0xb0] sm:$0xff]
    %v2233 = vld [vmem:[#allocation10 + $0xb8] sm:$0xff]
    %v2234 = vld [vmem:[#allocation10 + $0xc0] sm:$0xff]
    %v2235 = vld [vmem:[#allocation10 + $0xc8] sm:$0xff]
    %v2236 = vld [vmem:[#allocation10 + $0xd0] sm:$0xff]
    %v2237 = vld [vmem:[#allocation10 + $0xd8] sm:$0xff]
    %v2238 = vld [vmem:[#allocation10 + $0xe0] sm:$0xff]
    %v2239 = vld [vmem:[#allocation10 + $0xe8] sm:$0xff]
    %v2240 = vld [vmem:[#allocation10 + $0xf0] sm:$0xff]
    %v2241 = vld [vmem:[#allocation10 + $0xf8] sm:$0xff]
    %v2274 = vunpack.c.l.b16 %v2210
    %v2275 = vunpack.c.h.b16 %v2210
    %v2276 = vunpack.c.l.b16 %v2211
    %v2277 = vunpack.c.h.b16 %v2211
    %v2278 = vunpack.c.l.b16 %v2212
    %v2279 = vunpack.c.h.b16 %v2212
    %v2280 = vunpack.c.l.b16 %v2213
    %v2281 = vunpack.c.h.b16 %v2213
    %v2282 = vunpack.c.l.b16 %v2214
    %v2283 = vunpack.c.h.b16 %v2214
    %v2284 = vunpack.c.l.b16 %v2215
    %v2285 = vunpack.c.h.b16 %v2215
    %v2286 = vunpack.c.l.b16 %v2216
    %v2287 = vunpack.c.h.b16 %v2216
    %v2288 = vunpack.c.l.b16 %v2217
    %v2289 = vunpack.c.h.b16 %v2217
    %v2290 = vunpack.c.l.b16 %v2218
    %v2291 = vunpack.c.h.b16 %v2218
    %v2292 = vunpack.c.l.b16 %v2219
    %v2293 = vunpack.c.h.b16 %v2219
    %v2294 = vunpack.c.l.b16 %v2220
    %v2295 = vunpack.c.h.b16 %v2220
    %v2296 = vunpack.c.l.b16 %v2221
    %v2297 = vunpack.c.h.b16 %v2221
    %v2298 = vunpack.c.l.b16 %v2222
    %v2299 = vunpack.c.h.b16 %v2222
    %v2300 = vunpack.c.l.b16 %v2223
    %v2301 = vunpack.c.h.b16 %v2223
    %v2302 = vunpack.c.l.b16 %v2224
    %v2303 = vunpack.c.h.b16 %v2224
    %v2304 = vunpack.c.l.b16 %v2225
    %v2305 = vunpack.c.h.b16 %v2225
    %v2306 = vunpack.c.l.b16 %v2226
    %v2307 = vunpack.c.h.b16 %v2226
    %v2308 = vunpack.c.l.b16 %v2227
    %v2309 = vunpack.c.h.b16 %v2227
    %v2310 = vunpack.c.l.b16 %v2228
    %v2311 = vunpack.c.h.b16 %v2228
    %v2312 = vunpack.c.l.b16 %v2229
    %v2313 = vunpack.c.h.b16 %v2229
    %v2314 = vunpack.c.l.b16 %v2230
    %v2315 = vunpack.c.h.b16 %v2230
    %v2316 = vunpack.c.l.b16 %v2231
    %v2317 = vunpack.c.h.b16 %v2231
    %v2318 = vunpack.c.l.b16 %v2232
    %v2319 = vunpack.c.h.b16 %v2232
    %v2320 = vunpack.c.l.b16 %v2233
    %v2321 = vunpack.c.h.b16 %v2233
    %v2322 = vunpack.c.l.b16 %v2234
    %v2323 = vunpack.c.h.b16 %v2234
    %v2324 = vunpack.c.l.b16 %v2235
    %v2325 = vunpack.c.h.b16 %v2235
    %v2326 = vunpack.c.l.b16 %v2236
    %v2327 = vunpack.c.h.b16 %v2236
    %v2328 = vunpack.c.l.b16 %v2237
    %v2329 = vunpack.c.h.b16 %v2237
    %v2330 = vunpack.c.l.b16 %v2238
    %v2331 = vunpack.c.h.b16 %v2238
    %v2332 = vunpack.c.l.b16 %v2239
    %v2333 = vunpack.c.h.b16 %v2239
    %v2334 = vunpack.c.l.b16 %v2240
    %v2335 = vunpack.c.h.b16 %v2240
    %v2336 = vunpack.c.l.b16 %v2241
    %v2337 = vunpack.c.h.b16 %v2241
    %v2338 = vpack.c.b16 %v2278, %v2274
    %v2339 = vpack.c.b16 %v2279, %v2275
    %v2340 = vpack.c.b16 %v2280, %v2276
    %v2341 = vpack.c.b16 %v2281, %v2277
    %v2342 = vpack.c.b16 %v2286, %v2282
    %v2343 = vpack.c.b16 %v2287, %v2283
    %v2344 = vpack.c.b16 %v2288, %v2284
    %v2345 = vpack.c.b16 %v2289, %v2285
    %v2346 = vpack.c.b16 %v2294, %v2290
    %v2347 = vpack.c.b16 %v2295, %v2291
    %v2348 = vpack.c.b16 %v2296, %v2292
    %v2349 = vpack.c.b16 %v2297, %v2293
    %v2350 = vpack.c.b16 %v2302, %v2298
    %v2351 = vpack.c.b16 %v2303, %v2299
    %v2352 = vpack.c.b16 %v2304, %v2300
    %v2353 = vpack.c.b16 %v2305, %v2301
    %v2354 = vpack.c.b16 %v2310, %v2306
    %v2355 = vpack.c.b16 %v2311, %v2307
    %v2356 = vpack.c.b16 %v2312, %v2308
    %v2357 = vpack.c.b16 %v2313, %v2309
    %v2358 = vpack.c.b16 %v2318, %v2314
    %v2359 = vpack.c.b16 %v2319, %v2315
    %v2360 = vpack.c.b16 %v2320, %v2316
    %v2361 = vpack.c.b16 %v2321, %v2317
    %v2362 = vpack.c.b16 %v2326, %v2322
    %v2363 = vpack.c.b16 %v2327, %v2323
    %v2364 = vpack.c.b16 %v2328, %v2324
    %v2365 = vpack.c.b16 %v2329, %v2325
    %v2366 = vpack.c.b16 %v2334, %v2330
    %v2367 = vpack.c.b16 %v2335, %v2331
    %v2368 = vpack.c.b16 %v2336, %v2332
    %v2369 = vpack.c.b16 %v2337, %v2333
    %2402 = vmatprep.subr.bf16.mxu0 %v2367
    %2403 = vmatpush1.bf16.msra.mxu0 %v2366
    %2404 = vmatprep.subr.bf16.mxu0 %v2363
    %2405 = vmatpush1.bf16.msra.mxu0 %v2362
    %2406 = vmatprep.subr.bf16.mxu0 %v2359
    %2407 = vmatpush1.bf16.msra.mxu0 %v2358
    %2408 = vmatprep.subr.bf16.mxu0 %v2355
    %2409 = vmatpush1.bf16.msra.mxu0 %v2354
    %2410 = vmatprep.subr.bf16.mxu0 %v2351
    %2411 = vmatpush1.bf16.msra.mxu0 %v2350
    %2412 = vmatprep.subr.bf16.mxu0 %v2347
    %2413 = vmatpush1.bf16.msra.mxu0 %v2346
    %2414 = vmatprep.subr.bf16.mxu0 %v2343
    %2415 = vmatpush1.bf16.msra.mxu0 %v2342
    %2416 = vmatprep.subr.bf16.mxu0 %v2339
    %2417 = vmatpush1.bf16.msra.mxu0 %v2338
    %2418 = vmatprep.subr.bf16.mxu0 0
    %2419 = vmatpush2.bf16.msra.mxu0 0
    %2420 = vmatprep.subr.bf16.mxu0 0
    %2421 = vmatpush2.bf16.msra.mxu0 0
    %2422 = vmatprep.subr.bf16.mxu0 0
    %2423 = vmatpush2.bf16.msra.mxu0 0
    %2424 = vmatprep.subr.bf16.mxu0 0
    %2425 = vmatpush2.bf16.msra.mxu0 0
    %2426 = vmatprep.subr.bf16.mxu0 0
    %2427 = vmatpush2.bf16.msra.mxu0 0
    %2428 = vmatprep.subr.bf16.mxu0 0
    %2429 = vmatpush2.bf16.msra.mxu0 0
    %2430 = vmatprep.subr.bf16.mxu0 0
    %2431 = vmatpush2.bf16.msra.mxu0 0
    %2432 = vmatprep.subr.bf16.mxu0 0
    %2433 = vmatpush2.bf16.msra.mxu0 0
    %2434 = vmatprep.mubr.bf16.mxu0 0
    %2435 = vmatmul.mubr.bf16.gmra.mxu0 %v2209
    %v2436 = vpop.f32.mrf.mxu0
    %v2437 = vadd.f32 0.0, %v2436
    %v2438 = vpop.f32.mrf.mxu0
    %v2439 = vadd.f32 0.0, %v2438
    %v2440 = vpop.f32.mrf.mxu0
    %v2441 = vpop.f32.mrf.mxu0
    %2442 = vdwg.mxu0
    %2443 = vmatprep.subr.bf16.mxu0 %v2369
    %2444 = vmatpush1.bf16.msra.mxu0 %v2368
    %2445 = vmatprep.subr.bf16.mxu0 %v2365
    %2446 = vmatpush1.bf16.msra.mxu0 %v2364
    %2447 = vmatprep.subr.bf16.mxu0 %v2361
    %2448 = vmatpush1.bf16.msra.mxu0 %v2360
    %2449 = vmatprep.subr.bf16.mxu0 %v2357
    %2450 = vmatpush1.bf16.msra.mxu0 %v2356
    %2451 = vmatprep.subr.bf16.mxu0 %v2353
    %2452 = vmatpush1.bf16.msra.mxu0 %v2352
    %2453 = vmatprep.subr.bf16.mxu0 %v2349
    %2454 = vmatpush1.bf16.msra.mxu0 %v2348
    %2455 = vmatprep.subr.bf16.mxu0 %v2345
    %2456 = vmatpush1.bf16.msra.mxu0 %v2344
    %2457 = vmatprep.subr.bf16.mxu0 %v2341
    %2458 = vmatpush1.bf16.msra.mxu0 %v2340
    %2459 = vmatprep.subr.bf16.mxu0 0
    %2460 = vmatpush2.bf16.msra.mxu0 0
    %2461 = vmatprep.subr.bf16.mxu0 0
    %2462 = vmatpush2.bf16.msra.mxu0 0
    %2463 = vmatprep.subr.bf16.mxu0 0
    %2464 = vmatpush2.bf16.msra.mxu0 0
    %2465 = vmatprep.subr.bf16.mxu0 0
    %2466 = vmatpush2.bf16.msra.mxu0 0
    %2467 = vmatprep.subr.bf16.mxu0 0
    %2468 = vmatpush2.bf16.msra.mxu0 0
    %2469 = vmatprep.subr.bf16.mxu0 0
    %2470 = vmatpush2.bf16.msra.mxu0 0
    %2471 = vmatprep.subr.bf16.mxu0 0
    %2472 = vmatpush2.bf16.msra.mxu0 0
    %2473 = vmatprep.subr.bf16.mxu0 0
    %2474 = vmatpush2.bf16.msra.mxu0 0
    %2475 = vmatprep.mubr.bf16.mxu0 0
    %2476 = vmatmul.mubr.bf16.gmra.mxu0 %v2209
    %v2477 = vpop.f32.mrf.mxu0
    %v2478 = vadd.f32 0.0, %v2477
    %v2479 = vpop.f32.mrf.mxu0
    %v2480 = vadd.f32 0.0, %v2479
    %v2481 = vpop.f32.mrf.mxu0
    %v2482 = vpop.f32.mrf.mxu0
    %2483 = vdwg.mxu0
    %v2484 = vadd.f32 %v2205, %v2437
    %v2485 = vadd.f32 %v2206, %v2439
    %v2486 = vadd.f32 %v2207, %v2478
    %v2487 = vadd.f32 %v2208, %v2480
    %v2488 = vxor.u32 %v2484, 2147483648
    %v2489 = vmul.f32 %v2488, 1.442695
    %v2490 = vpow.pop %v2489
    %v2491 = vadd.f32 %v2490, 1.0
    %v2492 = vrcp.pop %v2491
    %v2493 = vmul.f32 1.0, %v2492
    %v2494 = vxor.u32 %v2485, 2147483648
    %v2495 = vmul.f32 %v2494, 1.442695
    %v2496 = vpow.pop %v2495
    %v2497 = vadd.f32 %v2496, 1.0
    %v2498 = vrcp.pop %v2497
    %v2499 = vmul.f32 1.0, %v2498
    %v2500 = vtanh.pop %v2486
    %v2501 = vxor.u32 %v2487, 2147483648
    %v2502 = vmul.f32 %v2501, 1.442695
    %v2503 = vpow.pop %v2502
    %v2504 = vadd.f32 %v2503, 1.0
    %v2505 = vrcp.pop %v2504
    %v2506 = vmul.f32 1.0, %v2505
    %v2507 = vmul.f32 %v2499, %v2200
    %v2508 = vmul.f32 %v2493, %v2500
    %v2509 = vadd.f32 %v2507, %v2508
    %v2510 = vtanh.pop %v2509
    %v2511 = vmul.f32 %v2506, %v2510
    %2512 = vst [vmem:[%s397] sm:$0xff] %v2511
    %s2513 = scalar_lea.vmem [#allocation2], 160
    %v2514 = vld [vmem:[%s2513] sm:$0xff]
    %v2515 = vld [vmem:[%s2513 + $0x8] sm:$0xff]
    %v2516 = vld [vmem:[%s2513 + $0x10] sm:$0xff]
    %v2517 = vld [vmem:[%s2513 + $0x18] sm:$0xff]
    %v2518 = vpack.c.bf16 %v2511, %v2511
    %v2519 = vld [vmem:[#allocation10] sm:$0xff]
    %v2520 = vld [vmem:[#allocation10 + $0x8] sm:$0xff]
    %v2521 = vld [vmem:[#allocation10 + $0x10] sm:$0xff]
    %v2522 = vld [vmem:[#allocation10 + $0x18] sm:$0xff]
    %v2523 = vld [vmem:[#allocation10 + $0x20] sm:$0xff]
    %v2524 = vld [vmem:[#allocation10 + $0x28] sm:$0xff]
    %v2525 = vld [vmem:[#allocation10 + $0x30] sm:$0xff]
    %v2526 = vld [vmem:[#allocation10 + $0x38] sm:$0xff]
    %v2527 = vld [vmem:[#allocation10 + $0x40] sm:$0xff]
    %v2528 = vld [vmem:[#allocation10 + $0x48] sm:$0xff]
    %v2529 = vld [vmem:[#allocation10 + $0x50] sm:$0xff]
    %v2530 = vld [vmem:[#allocation10 + $0x58] sm:$0xff]
    %v2531 = vld [vmem:[#allocation10 + $0x60] sm:$0xff]
    %v2532 = vld [vmem:[#allocation10 + $0x68] sm:$0xff]
    %v2533 = vld [vmem:[#allocation10 + $0x70] sm:$0xff]
    %v2534 = vld [vmem:[#allocation10 + $0x78] sm:$0xff]
    %v2535 = vld [vmem:[#allocation10 + $0x80] sm:$0xff]
    %v2536 = vld [vmem:[#allocation10 + $0x88] sm:$0xff]
    %v2537 = vld [vmem:[#allocation10 + $0x90] sm:$0xff]
    %v2538 = vld [vmem:[#allocation10 + $0x98] sm:$0xff]
    %v2539 = vld [vmem:[#allocation10 + $0xa0] sm:$0xff]
    %v2540 = vld [vmem:[#allocation10 + $0xa8] sm:$0xff]
    %v2541 = vld [vmem:[#allocation10 + $0xb0] sm:$0xff]
    %v2542 = vld [vmem:[#allocation10 + $0xb8] sm:$0xff]
    %v2543 = vld [vmem:[#allocation10 + $0xc0] sm:$0xff]
    %v2544 = vld [vmem:[#allocation10 + $0xc8] sm:$0xff]
    %v2545 = vld [vmem:[#allocation10 + $0xd0] sm:$0xff]
    %v2546 = vld [vmem:[#allocation10 + $0xd8] sm:$0xff]
    %v2547 = vld [vmem:[#allocation10 + $0xe0] sm:$0xff]
    %v2548 = vld [vmem:[#allocation10 + $0xe8] sm:$0xff]
    %v2549 = vld [vmem:[#allocation10 + $0xf0] sm:$0xff]
    %v2550 = vld [vmem:[#allocation10 + $0xf8] sm:$0xff]
    %v2583 = vunpack.c.l.b16 %v2519
    %v2584 = vunpack.c.h.b16 %v2519
    %v2585 = vunpack.c.l.b16 %v2520
    %v2586 = vunpack.c.h.b16 %v2520
    %v2587 = vunpack.c.l.b16 %v2521
    %v2588 = vunpack.c.h.b16 %v2521
    %v2589 = vunpack.c.l.b16 %v2522
    %v2590 = vunpack.c.h.b16 %v2522
    %v2591 = vunpack.c.l.b16 %v2523
    %v2592 = vunpack.c.h.b16 %v2523
    %v2593 = vunpack.c.l.b16 %v2524
    %v2594 = vunpack.c.h.b16 %v2524
    %v2595 = vunpack.c.l.b16 %v2525
    %v2596 = vunpack.c.h.b16 %v2525
    %v2597 = vunpack.c.l.b16 %v2526
    %v2598 = vunpack.c.h.b16 %v2526
    %v2599 = vunpack.c.l.b16 %v2527
    %v2600 = vunpack.c.h.b16 %v2527
    %v2601 = vunpack.c.l.b16 %v2528
    %v2602 = vunpack.c.h.b16 %v2528
    %v2603 = vunpack.c.l.b16 %v2529
    %v2604 = vunpack.c.h.b16 %v2529
    %v2605 = vunpack.c.l.b16 %v2530
    %v2606 = vunpack.c.h.b16 %v2530
    %v2607 = vunpack.c.l.b16 %v2531
    %v2608 = vunpack.c.h.b16 %v2531
    %v2609 = vunpack.c.l.b16 %v2532
    %v2610 = vunpack.c.h.b16 %v2532
    %v2611 = vunpack.c.l.b16 %v2533
    %v2612 = vunpack.c.h.b16 %v2533
    %v2613 = vunpack.c.l.b16 %v2534
    %v2614 = vunpack.c.h.b16 %v2534
    %v2615 = vunpack.c.l.b16 %v2535
    %v2616 = vunpack.c.h.b16 %v2535
    %v2617 = vunpack.c.l.b16 %v2536
    %v2618 = vunpack.c.h.b16 %v2536
    %v2619 = vunpack.c.l.b16 %v2537
    %v2620 = vunpack.c.h.b16 %v2537
    %v2621 = vunpack.c.l.b16 %v2538
    %v2622 = vunpack.c.h.b16 %v2538
    %v2623 = vunpack.c.l.b16 %v2539
    %v2624 = vunpack.c.h.b16 %v2539
    %v2625 = vunpack.c.l.b16 %v2540
    %v2626 = vunpack.c.h.b16 %v2540
    %v2627 = vunpack.c.l.b16 %v2541
    %v2628 = vunpack.c.h.b16 %v2541
    %v2629 = vunpack.c.l.b16 %v2542
    %v2630 = vunpack.c.h.b16 %v2542
    %v2631 = vunpack.c.l.b16 %v2543
    %v2632 = vunpack.c.h.b16 %v2543
    %v2633 = vunpack.c.l.b16 %v2544
    %v2634 = vunpack.c.h.b16 %v2544
    %v2635 = vunpack.c.l.b16 %v2545
    %v2636 = vunpack.c.h.b16 %v2545
    %v2637 = vunpack.c.l.b16 %v2546
    %v2638 = vunpack.c.h.b16 %v2546
    %v2639 = vunpack.c.l.b16 %v2547
    %v2640 = vunpack.c.h.b16 %v2547
    %v2641 = vunpack.c.l.b16 %v2548
    %v2642 = vunpack.c.h.b16 %v2548
    %v2643 = vunpack.c.l.b16 %v2549
    %v2644 = vunpack.c.h.b16 %v2549
    %v2645 = vunpack.c.l.b16 %v2550
    %v2646 = vunpack.c.h.b16 %v2550
    %v2647 = vpack.c.b16 %v2587, %v2583
    %v2648 = vpack.c.b16 %v2588, %v2584
    %v2649 = vpack.c.b16 %v2589, %v2585
    %v2650 = vpack.c.b16 %v2590, %v2586
    %v2651 = vpack.c.b16 %v2595, %v2591
    %v2652 = vpack.c.b16 %v2596, %v2592
    %v2653 = vpack.c.b16 %v2597, %v2593
    %v2654 = vpack.c.b16 %v2598, %v2594
    %v2655 = vpack.c.b16 %v2603, %v2599
    %v2656 = vpack.c.b16 %v2604, %v2600
    %v2657 = vpack.c.b16 %v2605, %v2601
    %v2658 = vpack.c.b16 %v2606, %v2602
    %v2659 = vpack.c.b16 %v2611, %v2607
    %v2660 = vpack.c.b16 %v2612, %v2608
    %v2661 = vpack.c.b16 %v2613, %v2609
    %v2662 = vpack.c.b16 %v2614, %v2610
    %v2663 = vpack.c.b16 %v2619, %v2615
    %v2664 = vpack.c.b16 %v2620, %v2616
    %v2665 = vpack.c.b16 %v2621, %v2617
    %v2666 = vpack.c.b16 %v2622, %v2618
    %v2667 = vpack.c.b16 %v2627, %v2623
    %v2668 = vpack.c.b16 %v2628, %v2624
    %v2669 = vpack.c.b16 %v2629, %v2625
    %v2670 = vpack.c.b16 %v2630, %v2626
    %v2671 = vpack.c.b16 %v2635, %v2631
    %v2672 = vpack.c.b16 %v2636, %v2632
    %v2673 = vpack.c.b16 %v2637, %v2633
    %v2674 = vpack.c.b16 %v2638, %v2634
    %v2675 = vpack.c.b16 %v2643, %v2639
    %v2676 = vpack.c.b16 %v2644, %v2640
    %v2677 = vpack.c.b16 %v2645, %v2641
    %v2678 = vpack.c.b16 %v2646, %v2642
    %2711 = vmatprep.subr.bf16.mxu0 %v2676
    %2712 = vmatpush1.bf16.msra.mxu0 %v2675
    %2713 = vmatprep.subr.bf16.mxu0 %v2672
    %2714 = vmatpush1.bf16.msra.mxu0 %v2671
    %2715 = vmatprep.subr.bf16.mxu0 %v2668
    %2716 = vmatpush1.bf16.msra.mxu0 %v2667
    %2717 = vmatprep.subr.bf16.mxu0 %v2664
    %2718 = vmatpush1.bf16.msra.mxu0 %v2663
    %2719 = vmatprep.subr.bf16.mxu0 %v2660
    %2720 = vmatpush1.bf16.msra.mxu0 %v2659
    %2721 = vmatprep.subr.bf16.mxu0 %v2656
    %2722 = vmatpush1.bf16.msra.mxu0 %v2655
    %2723 = vmatprep.subr.bf16.mxu0 %v2652
    %2724 = vmatpush1.bf16.msra.mxu0 %v2651
    %2725 = vmatprep.subr.bf16.mxu0 %v2648
    %2726 = vmatpush1.bf16.msra.mxu0 %v2647
    %2727 = vmatprep.subr.bf16.mxu0 0
    %2728 = vmatpush2.bf16.msra.mxu0 0
    %2729 = vmatprep.subr.bf16.mxu0 0
    %2730 = vmatpush2.bf16.msra.mxu0 0
    %2731 = vmatprep.subr.bf16.mxu0 0
    %2732 = vmatpush2.bf16.msra.mxu0 0
    %2733 = vmatprep.subr.bf16.mxu0 0
    %2734 = vmatpush2.bf16.msra.mxu0 0
    %2735 = vmatprep.subr.bf16.mxu0 0
    %2736 = vmatpush2.bf16.msra.mxu0 0
    %2737 = vmatprep.subr.bf16.mxu0 0
    %2738 = vmatpush2.bf16.msra.mxu0 0
    %2739 = vmatprep.subr.bf16.mxu0 0
    %2740 = vmatpush2.bf16.msra.mxu0 0
    %2741 = vmatprep.subr.bf16.mxu0 0
    %2742 = vmatpush2.bf16.msra.mxu0 0
    %2743 = vmatprep.mubr.bf16.mxu0 0
    %2744 = vmatmul.mubr.bf16.gmra.mxu0 %v2518
    %v2745 = vpop.f32.mrf.mxu0
    %v2746 = vadd.f32 0.0, %v2745
    %v2747 = vpop.f32.mrf.mxu0
    %v2748 = vadd.f32 0.0, %v2747
    %v2749 = vpop.f32.mrf.mxu0
    %v2750 = vpop.f32.mrf.mxu0
    %2751 = vdwg.mxu0
    %2752 = vmatprep.subr.bf16.mxu0 %v2678
    %2753 = vmatpush1.bf16.msra.mxu0 %v2677
    %2754 = vmatprep.subr.bf16.mxu0 %v2674
    %2755 = vmatpush1.bf16.msra.mxu0 %v2673
    %2756 = vmatprep.subr.bf16.mxu0 %v2670
    %2757 = vmatpush1.bf16.msra.mxu0 %v2669
    %2758 = vmatprep.subr.bf16.mxu0 %v2666
    %2759 = vmatpush1.bf16.msra.mxu0 %v2665
    %2760 = vmatprep.subr.bf16.mxu0 %v2662
    %2761 = vmatpush1.bf16.msra.mxu0 %v2661
    %2762 = vmatprep.subr.bf16.mxu0 %v2658
    %2763 = vmatpush1.bf16.msra.mxu0 %v2657
    %2764 = vmatprep.subr.bf16.mxu0 %v2654
    %2765 = vmatpush1.bf16.msra.mxu0 %v2653
    %2766 = vmatprep.subr.bf16.mxu0 %v2650
    %2767 = vmatpush1.bf16.msra.mxu0 %v2649
    %2768 = vmatprep.subr.bf16.mxu0 0
    %2769 = vmatpush2.bf16.msra.mxu0 0
    %2770 = vmatprep.subr.bf16.mxu0 0
    %2771 = vmatpush2.bf16.msra.mxu0 0
    %2772 = vmatprep.subr.bf16.mxu0 0
    %2773 = vmatpush2.bf16.msra.mxu0 0
    %2774 = vmatprep.subr.bf16.mxu0 0
    %2775 = vmatpush2.bf16.msra.mxu0 0
    %2776 = vmatprep.subr.bf16.mxu0 0
    %2777 = vmatpush2.bf16.msra.mxu0 0
    %2778 = vmatprep.subr.bf16.mxu0 0
    %2779 = vmatpush2.bf16.msra.mxu0 0
    %2780 = vmatprep.subr.bf16.mxu0 0
    %2781 = vmatpush2.bf16.msra.mxu0 0
    %2782 = vmatprep.subr.bf16.mxu0 0
    %2783 = vmatpush2.bf16.msra.mxu0 0
    %2784 = vmatprep.mubr.bf16.mxu0 0
    %2785 = vmatmul.mubr.bf16.gmra.mxu0 %v2518
    %v2786 = vpop.f32.mrf.mxu0
    %v2787 = vadd.f32 0.0, %v2786
    %v2788 = vpop.f32.mrf.mxu0
    %v2789 = vadd.f32 0.0, %v2788
    %v2790 = vpop.f32.mrf.mxu0
    %v2791 = vpop.f32.mrf.mxu0
    %2792 = vdwg.mxu0
    %v2793 = vadd.f32 %v2514, %v2746
    %v2794 = vadd.f32 %v2515, %v2748
    %v2795 = vadd.f32 %v2516, %v2787
    %v2796 = vadd.f32 %v2517, %v2789
    %v2797 = vxor.u32 %v2793, 2147483648
    %v2798 = vmul.f32 %v2797, 1.442695
    %v2799 = vpow.pop %v2798
    %v2800 = vadd.f32 %v2799, 1.0
    %v2801 = vrcp.pop %v2800
    %v2802 = vmul.f32 1.0, %v2801
    %v2803 = vxor.u32 %v2794, 2147483648
    %v2804 = vmul.f32 %v2803, 1.442695
    %v2805 = vpow.pop %v2804
    %v2806 = vadd.f32 %v2805, 1.0
    %v2807 = vrcp.pop %v2806
    %v2808 = vmul.f32 1.0, %v2807
    %v2809 = vtanh.pop %v2795
    %v2810 = vxor.u32 %v2796, 2147483648
    %v2811 = vmul.f32 %v2810, 1.442695
    %v2812 = vpow.pop %v2811
    %v2813 = vadd.f32 %v2812, 1.0
    %v2814 = vrcp.pop %v2813
    %v2815 = vmul.f32 1.0, %v2814
    %v2816 = vmul.f32 %v2808, %v2509
    %v2817 = vmul.f32 %v2802, %v2809
    %v2818 = vadd.f32 %v2816, %v2817
    %v2819 = vtanh.pop %v2818
    %v2820 = vmul.f32 %v2815, %v2819
    %2821 = vst [vmem:[%s451] sm:$0xff] %v2820
    %s2822 = scalar_lea.vmem [#allocation2], 192
    %v2823 = vld [vmem:[%s2822] sm:$0xff]
    %v2824 = vld [vmem:[%s2822 + $0x8] sm:$0xff]
    %v2825 = vld [vmem:[%s2822 + $0x10] sm:$0xff]
    %v2826 = vld [vmem:[%s2822 + $0x18] sm:$0xff]
    %v2827 = vpack.c.bf16 %v2820, %v2820
    %v2828 = vld [vmem:[#allocation10] sm:$0xff]
    %v2829 = vld [vmem:[#allocation10 + $0x8] sm:$0xff]
    %v2830 = vld [vmem:[#allocation10 + $0x10] sm:$0xff]
    %v2831 = vld [vmem:[#allocation10 + $0x18] sm:$0xff]
    %v2832 = vld [vmem:[#allocation10 + $0x20] sm:$0xff]
    %v2833 = vld [vmem:[#allocation10 + $0x28] sm:$0xff]
    %v2834 = vld [vmem:[#allocation10 + $0x30] sm:$0xff]
    %v2835 = vld [vmem:[#allocation10 + $0x38] sm:$0xff]
    %v2836 = vld [vmem:[#allocation10 + $0x40] sm:$0xff]
    %v2837 = vld [vmem:[#allocation10 + $0x48] sm:$0xff]
    %v2838 = vld [vmem:[#allocation10 + $0x50] sm:$0xff]
    %v2839 = vld [vmem:[#allocation10 + $0x58] sm:$0xff]
    %v2840 = vld [vmem:[#allocation10 + $0x60] sm:$0xff]
    %v2841 = vld [vmem:[#allocation10 + $0x68] sm:$0xff]
    %v2842 = vld [vmem:[#allocation10 + $0x70] sm:$0xff]
    %v2843 = vld [vmem:[#allocation10 + $0x78] sm:$0xff]
    %v2844 = vld [vmem:[#allocation10 + $0x80] sm:$0xff]
    %v2845 = vld [vmem:[#allocation10 + $0x88] sm:$0xff]
    %v2846 = vld [vmem:[#allocation10 + $0x90] sm:$0xff]
    %v2847 = vld [vmem:[#allocation10 + $0x98] sm:$0xff]
    %v2848 = vld [vmem:[#allocation10 + $0xa0] sm:$0xff]
    %v2849 = vld [vmem:[#allocation10 + $0xa8] sm:$0xff]
    %v2850 = vld [vmem:[#allocation10 + $0xb0] sm:$0xff]
    %v2851 = vld [vmem:[#allocation10 + $0xb8] sm:$0xff]
    %v2852 = vld [vmem:[#allocation10 + $0xc0] sm:$0xff]
    %v2853 = vld [vmem:[#allocation10 + $0xc8] sm:$0xff]
    %v2854 = vld [vmem:[#allocation10 + $0xd0] sm:$0xff]
    %v2855 = vld [vmem:[#allocation10 + $0xd8] sm:$0xff]
    %v2856 = vld [vmem:[#allocation10 + $0xe0] sm:$0xff]
    %v2857 = vld [vmem:[#allocation10 + $0xe8] sm:$0xff]
    %v2858 = vld [vmem:[#allocation10 + $0xf0] sm:$0xff]
    %v2859 = vld [vmem:[#allocation10 + $0xf8] sm:$0xff]
    %v2892 = vunpack.c.l.b16 %v2828
    %v2893 = vunpack.c.h.b16 %v2828
    %v2894 = vunpack.c.l.b16 %v2829
    %v2895 = vunpack.c.h.b16 %v2829
    %v2896 = vunpack.c.l.b16 %v2830
    %v2897 = vunpack.c.h.b16 %v2830
    %v2898 = vunpack.c.l.b16 %v2831
    %v2899 = vunpack.c.h.b16 %v2831
    %v2900 = vunpack.c.l.b16 %v2832
    %v2901 = vunpack.c.h.b16 %v2832
    %v2902 = vunpack.c.l.b16 %v2833
    %v2903 = vunpack.c.h.b16 %v2833
    %v2904 = vunpack.c.l.b16 %v2834
    %v2905 = vunpack.c.h.b16 %v2834
    %v2906 = vunpack.c.l.b16 %v2835
    %v2907 = vunpack.c.h.b16 %v2835
    %v2908 = vunpack.c.l.b16 %v2836
    %v2909 = vunpack.c.h.b16 %v2836
    %v2910 = vunpack.c.l.b16 %v2837
    %v2911 = vunpack.c.h.b16 %v2837
    %v2912 = vunpack.c.l.b16 %v2838
    %v2913 = vunpack.c.h.b16 %v2838
    %v2914 = vunpack.c.l.b16 %v2839
    %v2915 = vunpack.c.h.b16 %v2839
    %v2916 = vunpack.c.l.b16 %v2840
    %v2917 = vunpack.c.h.b16 %v2840
    %v2918 = vunpack.c.l.b16 %v2841
    %v2919 = vunpack.c.h.b16 %v2841
    %v2920 = vunpack.c.l.b16 %v2842
    %v2921 = vunpack.c.h.b16 %v2842
    %v2922 = vunpack.c.l.b16 %v2843
    %v2923 = vunpack.c.h.b16 %v2843
    %v2924 = vunpack.c.l.b16 %v2844
    %v2925 = vunpack.c.h.b16 %v2844
    %v2926 = vunpack.c.l.b16 %v2845
    %v2927 = vunpack.c.h.b16 %v2845
    %v2928 = vunpack.c.l.b16 %v2846
    %v2929 = vunpack.c.h.b16 %v2846
    %v2930 = vunpack.c.l.b16 %v2847
    %v2931 = vunpack.c.h.b16 %v2847
    %v2932 = vunpack.c.l.b16 %v2848
    %v2933 = vunpack.c.h.b16 %v2848
    %v2934 = vunpack.c.l.b16 %v2849
    %v2935 = vunpack.c.h.b16 %v2849
    %v2936 = vunpack.c.l.b16 %v2850
    %v2937 = vunpack.c.h.b16 %v2850
    %v2938 = vunpack.c.l.b16 %v2851
    %v2939 = vunpack.c.h.b16 %v2851
    %v2940 = vunpack.c.l.b16 %v2852
    %v2941 = vunpack.c.h.b16 %v2852
    %v2942 = vunpack.c.l.b16 %v2853
    %v2943 = vunpack.c.h.b16 %v2853
    %v2944 = vunpack.c.l.b16 %v2854
    %v2945 = vunpack.c.h.b16 %v2854
    %v2946 = vunpack.c.l.b16 %v2855
    %v2947 = vunpack.c.h.b16 %v2855
    %v2948 = vunpack.c.l.b16 %v2856
    %v2949 = vunpack.c.h.b16 %v2856
    %v2950 = vunpack.c.l.b16 %v2857
    %v2951 = vunpack.c.h.b16 %v2857
    %v2952 = vunpack.c.l.b16 %v2858
    %v2953 = vunpack.c.h.b16 %v2858
    %v2954 = vunpack.c.l.b16 %v2859
    %v2955 = vunpack.c.h.b16 %v2859
    %v2956 = vpack.c.b16 %v2896, %v2892
    %v2957 = vpack.c.b16 %v2897, %v2893
    %v2958 = vpack.c.b16 %v2898, %v2894
    %v2959 = vpack.c.b16 %v2899, %v2895
    %v2960 = vpack.c.b16 %v2904, %v2900
    %v2961 = vpack.c.b16 %v2905, %v2901
    %v2962 = vpack.c.b16 %v2906, %v2902
    %v2963 = vpack.c.b16 %v2907, %v2903
    %v2964 = vpack.c.b16 %v2912, %v2908
    %v2965 = vpack.c.b16 %v2913, %v2909
    %v2966 = vpack.c.b16 %v2914, %v2910
    %v2967 = vpack.c.b16 %v2915, %v2911
    %v2968 = vpack.c.b16 %v2920, %v2916
    %v2969 = vpack.c.b16 %v2921, %v2917
    %v2970 = vpack.c.b16 %v2922, %v2918
    %v2971 = vpack.c.b16 %v2923, %v2919
    %v2972 = vpack.c.b16 %v2928, %v2924
    %v2973 = vpack.c.b16 %v2929, %v2925
    %v2974 = vpack.c.b16 %v2930, %v2926
    %v2975 = vpack.c.b16 %v2931, %v2927
    %v2976 = vpack.c.b16 %v2936, %v2932
    %v2977 = vpack.c.b16 %v2937, %v2933
    %v2978 = vpack.c.b16 %v2938, %v2934
    %v2979 = vpack.c.b16 %v2939, %v2935
    %v2980 = vpack.c.b16 %v2944, %v2940
    %v2981 = vpack.c.b16 %v2945, %v2941
    %v2982 = vpack.c.b16 %v2946, %v2942
    %v2983 = vpack.c.b16 %v2947, %v2943
    %v2984 = vpack.c.b16 %v2952, %v2948
    %v2985 = vpack.c.b16 %v2953, %v2949
    %v2986 = vpack.c.b16 %v2954, %v2950
    %v2987 = vpack.c.b16 %v2955, %v2951
    %3020 = vmatprep.subr.bf16.mxu0 %v2985
    %3021 = vmatpush1.bf16.msra.mxu0 %v2984
    %3022 = vmatprep.subr.bf16.mxu0 %v2981
    %3023 = vmatpush1.bf16.msra.mxu0 %v2980
    %3024 = vmatprep.subr.bf16.mxu0 %v2977
    %3025 = vmatpush1.bf16.msra.mxu0 %v2976
    %3026 = vmatprep.subr.bf16.mxu0 %v2973
    %3027 = vmatpush1.bf16.msra.mxu0 %v2972
    %3028 = vmatprep.subr.bf16.mxu0 %v2969
    %3029 = vmatpush1.bf16.msra.mxu0 %v2968
    %3030 = vmatprep.subr.bf16.mxu0 %v2965
    %3031 = vmatpush1.bf16.msra.mxu0 %v2964
    %3032 = vmatprep.subr.bf16.mxu0 %v2961
    %3033 = vmatpush1.bf16.msra.mxu0 %v2960
    %3034 = vmatprep.subr.bf16.mxu0 %v2957
    %3035 = vmatpush1.bf16.msra.mxu0 %v2956
    %3036 = vmatprep.subr.bf16.mxu0 0
    %3037 = vmatpush2.bf16.msra.mxu0 0
    %3038 = vmatprep.subr.bf16.mxu0 0
    %3039 = vmatpush2.bf16.msra.mxu0 0
    %3040 = vmatprep.subr.bf16.mxu0 0
    %3041 = vmatpush2.bf16.msra.mxu0 0
    %3042 = vmatprep.subr.bf16.mxu0 0
    %3043 = vmatpush2.bf16.msra.mxu0 0
    %3044 = vmatprep.subr.bf16.mxu0 0
    %3045 = vmatpush2.bf16.msra.mxu0 0
    %3046 = vmatprep.subr.bf16.mxu0 0
    %3047 = vmatpush2.bf16.msra.mxu0 0
    %3048 = vmatprep.subr.bf16.mxu0 0
    %3049 = vmatpush2.bf16.msra.mxu0 0
    %3050 = vmatprep.subr.bf16.mxu0 0
    %3051 = vmatpush2.bf16.msra.mxu0 0
    %3052 = vmatprep.mubr.bf16.mxu0 0
    %3053 = vmatmul.mubr.bf16.gmra.mxu0 %v2827
    %v3054 = vpop.f32.mrf.mxu0
    %v3055 = vadd.f32 0.0, %v3054
    %v3056 = vpop.f32.mrf.mxu0
    %v3057 = vadd.f32 0.0, %v3056
    %v3058 = vpop.f32.mrf.mxu0
    %v3059 = vpop.f32.mrf.mxu0
    %3060 = vdwg.mxu0
    %3061 = vmatprep.subr.bf16.mxu0 %v2987
    %3062 = vmatpush1.bf16.msra.mxu0 %v2986
    %3063 = vmatprep.subr.bf16.mxu0 %v2983
    %3064 = vmatpush1.bf16.msra.mxu0 %v2982
    %3065 = vmatprep.subr.bf16.mxu0 %v2979
    %3066 = vmatpush1.bf16.msra.mxu0 %v2978
    %3067 = vmatprep.subr.bf16.mxu0 %v2975
    %3068 = vmatpush1.bf16.msra.mxu0 %v2974
    %3069 = vmatprep.subr.bf16.mxu0 %v2971
    %3070 = vmatpush1.bf16.msra.mxu0 %v2970
    %3071 = vmatprep.subr.bf16.mxu0 %v2967
    %3072 = vmatpush1.bf16.msra.mxu0 %v2966
    %3073 = vmatprep.subr.bf16.mxu0 %v2963
    %3074 = vmatpush1.bf16.msra.mxu0 %v2962
    %3075 = vmatprep.subr.bf16.mxu0 %v2959
    %3076 = vmatpush1.bf16.msra.mxu0 %v2958
    %3077 = vmatprep.subr.bf16.mxu0 0
    %3078 = vmatpush2.bf16.msra.mxu0 0
    %3079 = vmatprep.subr.bf16.mxu0 0
    %3080 = vmatpush2.bf16.msra.mxu0 0
    %3081 = vmatprep.subr.bf16.mxu0 0
    %3082 = vmatpush2.bf16.msra.mxu0 0
    %3083 = vmatprep.subr.bf16.mxu0 0
    %3084 = vmatpush2.bf16.msra.mxu0 0
    %3085 = vmatprep.subr.bf16.mxu0 0
    %3086 = vmatpush2.bf16.msra.mxu0 0
    %3087 = vmatprep.subr.bf16.mxu0 0
    %3088 = vmatpush2.bf16.msra.mxu0 0
    %3089 = vmatprep.subr.bf16.mxu0 0
    %3090 = vmatpush2.bf16.msra.mxu0 0
    %3091 = vmatprep.subr.bf16.mxu0 0
    %3092 = vmatpush2.bf16.msra.mxu0 0
    %3093 = vmatprep.mubr.bf16.mxu0 0
    %3094 = vmatmul.mubr.bf16.gmra.mxu0 %v2827
    %v3095 = vpop.f32.mrf.mxu0
    %v3096 = vadd.f32 0.0, %v3095
    %v3097 = vpop.f32.mrf.mxu0
    %v3098 = vadd.f32 0.0, %v3097
    %v3099 = vpop.f32.mrf.mxu0
    %v3100 = vpop.f32.mrf.mxu0
    %3101 = vdwg.mxu0
    %v3102 = vadd.f32 %v2823, %v3055
    %v3103 = vadd.f32 %v2824, %v3057
    %v3104 = vadd.f32 %v2825, %v3096
    %v3105 = vadd.f32 %v2826, %v3098
    %v3106 = vxor.u32 %v3102, 2147483648
    %v3107 = vmul.f32 %v3106, 1.442695
    %v3108 = vpow.pop %v3107
    %v3109 = vadd.f32 %v3108, 1.0
    %v3110 = vrcp.pop %v3109
    %v3111 = vmul.f32 1.0, %v3110
    %v3112 = vxor.u32 %v3103, 2147483648
    %v3113 = vmul.f32 %v3112, 1.442695
    %v3114 = vpow.pop %v3113
    %v3115 = vadd.f32 %v3114, 1.0
    %v3116 = vrcp.pop %v3115
    %v3117 = vmul.f32 1.0, %v3116
    %v3118 = vtanh.pop %v3104
    %v3119 = vxor.u32 %v3105, 2147483648
    %v3120 = vmul.f32 %v3119, 1.442695
    %v3121 = vpow.pop %v3120
    %v3122 = vadd.f32 %v3121, 1.0
    %v3123 = vrcp.pop %v3122
    %v3124 = vmul.f32 1.0, %v3123
    %v3125 = vmul.f32 %v3117, %v2818
    %v3126 = vmul.f32 %v3111, %v3118
    %v3127 = vadd.f32 %v3125, %v3126
    %v3128 = vtanh.pop %v3127
    %v3129 = vmul.f32 %v3124, %v3128
    %3130 = vst [vmem:[%s505] sm:$0xff] %v3129
    %s3131 = scalar_lea.vmem [#allocation2], 224
    %v3132 = vld [vmem:[%s3131] sm:$0xff]
    %v3133 = vld [vmem:[%s3131 + $0x8] sm:$0xff]
    %v3134 = vld [vmem:[%s3131 + $0x10] sm:$0xff]
    %v3135 = vld [vmem:[%s3131 + $0x18] sm:$0xff]
    %v3136 = vpack.c.bf16 %v3129, %v3129
    %v3137 = vld [vmem:[#allocation10] sm:$0xff]
    %v3138 = vld [vmem:[#allocation10 + $0x8] sm:$0xff]
    %v3139 = vld [vmem:[#allocation10 + $0x10] sm:$0xff]
    %v3140 = vld [vmem:[#allocation10 + $0x18] sm:$0xff]
    %v3141 = vld [vmem:[#allocation10 + $0x20] sm:$0xff]
    %v3142 = vld [vmem:[#allocation10 + $0x28] sm:$0xff]
    %v3143 = vld [vmem:[#allocation10 + $0x30] sm:$0xff]
    %v3144 = vld [vmem:[#allocation10 + $0x38] sm:$0xff]
    %v3145 = vld [vmem:[#allocation10 + $0x40] sm:$0xff]
    %v3146 = vld [vmem:[#allocation10 + $0x48] sm:$0xff]
    %v3147 = vld [vmem:[#allocation10 + $0x50] sm:$0xff]
    %v3148 = vld [vmem:[#allocation10 + $0x58] sm:$0xff]
    %v3149 = vld [vmem:[#allocation10 + $0x60] sm:$0xff]
    %v3150 = vld [vmem:[#allocation10 + $0x68] sm:$0xff]
    %v3151 = vld [vmem:[#allocation10 + $0x70] sm:$0xff]
    %v3152 = vld [vmem:[#allocation10 + $0x78] sm:$0xff]
    %v3153 = vld [vmem:[#allocation10 + $0x80] sm:$0xff]
    %v3154 = vld [vmem:[#allocation10 + $0x88] sm:$0xff]
    %v3155 = vld [vmem:[#allocation10 + $0x90] sm:$0xff]
    %v3156 = vld [vmem:[#allocation10 + $0x98] sm:$0xff]
    %v3157 = vld [vmem:[#allocation10 + $0xa0] sm:$0xff]
    %v3158 = vld [vmem:[#allocation10 + $0xa8] sm:$0xff]
    %v3159 = vld [vmem:[#allocation10 + $0xb0] sm:$0xff]
    %v3160 = vld [vmem:[#allocation10 + $0xb8] sm:$0xff]
    %v3161 = vld [vmem:[#allocation10 + $0xc0] sm:$0xff]
    %v3162 = vld [vmem:[#allocation10 + $0xc8] sm:$0xff]
    %v3163 = vld [vmem:[#allocation10 + $0xd0] sm:$0xff]
    %v3164 = vld [vmem:[#allocation10 + $0xd8] sm:$0xff]
    %v3165 = vld [vmem:[#allocation10 + $0xe0] sm:$0xff]
    %v3166 = vld [vmem:[#allocation10 + $0xe8] sm:$0xff]
    %v3167 = vld [vmem:[#allocation10 + $0xf0] sm:$0xff]
    %v3168 = vld [vmem:[#allocation10 + $0xf8] sm:$0xff]
    %v3201 = vunpack.c.l.b16 %v3137
    %v3202 = vunpack.c.h.b16 %v3137
    %v3203 = vunpack.c.l.b16 %v3138
    %v3204 = vunpack.c.h.b16 %v3138
    %v3205 = vunpack.c.l.b16 %v3139
    %v3206 = vunpack.c.h.b16 %v3139
    %v3207 = vunpack.c.l.b16 %v3140
    %v3208 = vunpack.c.h.b16 %v3140
    %v3209 = vunpack.c.l.b16 %v3141
    %v3210 = vunpack.c.h.b16 %v3141
    %v3211 = vunpack.c.l.b16 %v3142
    %v3212 = vunpack.c.h.b16 %v3142
    %v3213 = vunpack.c.l.b16 %v3143
    %v3214 = vunpack.c.h.b16 %v3143
    %v3215 = vunpack.c.l.b16 %v3144
    %v3216 = vunpack.c.h.b16 %v3144
    %v3217 = vunpack.c.l.b16 %v3145
    %v3218 = vunpack.c.h.b16 %v3145
    %v3219 = vunpack.c.l.b16 %v3146
    %v3220 = vunpack.c.h.b16 %v3146
    %v3221 = vunpack.c.l.b16 %v3147
    %v3222 = vunpack.c.h.b16 %v3147
    %v3223 = vunpack.c.l.b16 %v3148
    %v3224 = vunpack.c.h.b16 %v3148
    %v3225 = vunpack.c.l.b16 %v3149
    %v3226 = vunpack.c.h.b16 %v3149
    %v3227 = vunpack.c.l.b16 %v3150
    %v3228 = vunpack.c.h.b16 %v3150
    %v3229 = vunpack.c.l.b16 %v3151
    %v3230 = vunpack.c.h.b16 %v3151
    %v3231 = vunpack.c.l.b16 %v3152
    %v3232 = vunpack.c.h.b16 %v3152
    %v3233 = vunpack.c.l.b16 %v3153
    %v3234 = vunpack.c.h.b16 %v3153
    %v3235 = vunpack.c.l.b16 %v3154
    %v3236 = vunpack.c.h.b16 %v3154
    %v3237 = vunpack.c.l.b16 %v3155
    %v3238 = vunpack.c.h.b16 %v3155
    %v3239 = vunpack.c.l.b16 %v3156
    %v3240 = vunpack.c.h.b16 %v3156
    %v3241 = vunpack.c.l.b16 %v3157
    %v3242 = vunpack.c.h.b16 %v3157
    %v3243 = vunpack.c.l.b16 %v3158
    %v3244 = vunpack.c.h.b16 %v3158
    %v3245 = vunpack.c.l.b16 %v3159
    %v3246 = vunpack.c.h.b16 %v3159
    %v3247 = vunpack.c.l.b16 %v3160
    %v3248 = vunpack.c.h.b16 %v3160
    %v3249 = vunpack.c.l.b16 %v3161
    %v3250 = vunpack.c.h.b16 %v3161
    %v3251 = vunpack.c.l.b16 %v3162
    %v3252 = vunpack.c.h.b16 %v3162
    %v3253 = vunpack.c.l.b16 %v3163
    %v3254 = vunpack.c.h.b16 %v3163
    %v3255 = vunpack.c.l.b16 %v3164
    %v3256 = vunpack.c.h.b16 %v3164
    %v3257 = vunpack.c.l.b16 %v3165
    %v3258 = vunpack.c.h.b16 %v3165
    %v3259 = vunpack.c.l.b16 %v3166
    %v3260 = vunpack.c.h.b16 %v3166
    %v3261 = vunpack.c.l.b16 %v3167
    %v3262 = vunpack.c.h.b16 %v3167
    %v3263 = vunpack.c.l.b16 %v3168
    %v3264 = vunpack.c.h.b16 %v3168
    %v3265 = vpack.c.b16 %v3205, %v3201
    %v3266 = vpack.c.b16 %v3206, %v3202
    %v3267 = vpack.c.b16 %v3207, %v3203
    %v3268 = vpack.c.b16 %v3208, %v3204
    %v3269 = vpack.c.b16 %v3213, %v3209
    %v3270 = vpack.c.b16 %v3214, %v3210
    %v3271 = vpack.c.b16 %v3215, %v3211
    %v3272 = vpack.c.b16 %v3216, %v3212
    %v3273 = vpack.c.b16 %v3221, %v3217
    %v3274 = vpack.c.b16 %v3222, %v3218
    %v3275 = vpack.c.b16 %v3223, %v3219
    %v3276 = vpack.c.b16 %v3224, %v3220
    %v3277 = vpack.c.b16 %v3229, %v3225
    %v3278 = vpack.c.b16 %v3230, %v3226
    %v3279 = vpack.c.b16 %v3231, %v3227
    %v3280 = vpack.c.b16 %v3232, %v3228
    %v3281 = vpack.c.b16 %v3237, %v3233
    %v3282 = vpack.c.b16 %v3238, %v3234
    %v3283 = vpack.c.b16 %v3239, %v3235
    %v3284 = vpack.c.b16 %v3240, %v3236
    %v3285 = vpack.c.b16 %v3245, %v3241
    %v3286 = vpack.c.b16 %v3246, %v3242
    %v3287 = vpack.c.b16 %v3247, %v3243
    %v3288 = vpack.c.b16 %v3248, %v3244
    %v3289 = vpack.c.b16 %v3253, %v3249
    %v3290 = vpack.c.b16 %v3254, %v3250
    %v3291 = vpack.c.b16 %v3255, %v3251
    %v3292 = vpack.c.b16 %v3256, %v3252
    %v3293 = vpack.c.b16 %v3261, %v3257
    %v3294 = vpack.c.b16 %v3262, %v3258
    %v3295 = vpack.c.b16 %v3263, %v3259
    %v3296 = vpack.c.b16 %v3264, %v3260
    %3329 = vmatprep.subr.bf16.mxu0 %v3294
    %3330 = vmatpush1.bf16.msra.mxu0 %v3293
    %3331 = vmatprep.subr.bf16.mxu0 %v3290
    %3332 = vmatpush1.bf16.msra.mxu0 %v3289
    %3333 = vmatprep.subr.bf16.mxu0 %v3286
    %3334 = vmatpush1.bf16.msra.mxu0 %v3285
    %3335 = vmatprep.subr.bf16.mxu0 %v3282
    %3336 = vmatpush1.bf16.msra.mxu0 %v3281
    %3337 = vmatprep.subr.bf16.mxu0 %v3278
    %3338 = vmatpush1.bf16.msra.mxu0 %v3277
    %3339 = vmatprep.subr.bf16.mxu0 %v3274
    %3340 = vmatpush1.bf16.msra.mxu0 %v3273
    %3341 = vmatprep.subr.bf16.mxu0 %v3270
    %3342 = vmatpush1.bf16.msra.mxu0 %v3269
    %3343 = vmatprep.subr.bf16.mxu0 %v3266
    %3344 = vmatpush1.bf16.msra.mxu0 %v3265
    %3345 = vmatprep.subr.bf16.mxu0 0
    %3346 = vmatpush2.bf16.msra.mxu0 0
    %3347 = vmatprep.subr.bf16.mxu0 0
    %3348 = vmatpush2.bf16.msra.mxu0 0
    %3349 = vmatprep.subr.bf16.mxu0 0
    %3350 = vmatpush2.bf16.msra.mxu0 0
    %3351 = vmatprep.subr.bf16.mxu0 0
    %3352 = vmatpush2.bf16.msra.mxu0 0
    %3353 = vmatprep.subr.bf16.mxu0 0
    %3354 = vmatpush2.bf16.msra.mxu0 0
    %3355 = vmatprep.subr.bf16.mxu0 0
    %3356 = vmatpush2.bf16.msra.mxu0 0
    %3357 = vmatprep.subr.bf16.mxu0 0
    %3358 = vmatpush2.bf16.msra.mxu0 0
    %3359 = vmatprep.subr.bf16.mxu0 0
    %3360 = vmatpush2.bf16.msra.mxu0 0
    %3361 = vmatprep.mubr.bf16.mxu0 0
    %3362 = vmatmul.mubr.bf16.gmra.mxu0 %v3136
    %v3363 = vpop.f32.mrf.mxu0
    %v3364 = vadd.f32 0.0, %v3363
    %v3365 = vpop.f32.mrf.mxu0
    %v3366 = vadd.f32 0.0, %v3365
    %v3367 = vpop.f32.mrf.mxu0
    %v3368 = vpop.f32.mrf.mxu0
    %3369 = vdwg.mxu0
    %3370 = vmatprep.subr.bf16.mxu0 %v3296
    %3371 = vmatpush1.bf16.msra.mxu0 %v3295
    %3372 = vmatprep.subr.bf16.mxu0 %v3292
    %3373 = vmatpush1.bf16.msra.mxu0 %v3291
    %3374 = vmatprep.subr.bf16.mxu0 %v3288
    %3375 = vmatpush1.bf16.msra.mxu0 %v3287
    %3376 = vmatprep.subr.bf16.mxu0 %v3284
    %3377 = vmatpush1.bf16.msra.mxu0 %v3283
    %3378 = vmatprep.subr.bf16.mxu0 %v3280
    %3379 = vmatpush1.bf16.msra.mxu0 %v3279
    %3380 = vmatprep.subr.bf16.mxu0 %v3276
    %3381 = vmatpush1.bf16.msra.mxu0 %v3275
    %3382 = vmatprep.subr.bf16.mxu0 %v3272
    %3383 = vmatpush1.bf16.msra.mxu0 %v3271
    %3384 = vmatprep.subr.bf16.mxu0 %v3268
    %3385 = vmatpush1.bf16.msra.mxu0 %v3267
    %3386 = vmatprep.subr.bf16.mxu0 0
    %3387 = vmatpush2.bf16.msra.mxu0 0
    %3388 = vmatprep.subr.bf16.mxu0 0
    %3389 = vmatpush2.bf16.msra.mxu0 0
    %3390 = vmatprep.subr.bf16.mxu0 0
    %3391 = vmatpush2.bf16.msra.mxu0 0
    %3392 = vmatprep.subr.bf16.mxu0 0
    %3393 = vmatpush2.bf16.msra.mxu0 0
    %3394 = vmatprep.subr.bf16.mxu0 0
    %3395 = vmatpush2.bf16.msra.mxu0 0
    %3396 = vmatprep.subr.bf16.mxu0 0
    %3397 = vmatpush2.bf16.msra.mxu0 0
    %3398 = vmatprep.subr.bf16.mxu0 0
    %3399 = vmatpush2.bf16.msra.mxu0 0
    %3400 = vmatprep.subr.bf16.mxu0 0
    %3401 = vmatpush2.bf16.msra.mxu0 0
    %3402 = vmatprep.mubr.bf16.mxu0 0
    %3403 = vmatmul.mubr.bf16.gmra.mxu0 %v3136
    %v3404 = vpop.f32.mrf.mxu0
    %v3405 = vadd.f32 0.0, %v3404
    %v3406 = vpop.f32.mrf.mxu0
    %v3407 = vadd.f32 0.0, %v3406
    %v3408 = vpop.f32.mrf.mxu0
    %v3409 = vpop.f32.mrf.mxu0
    %3410 = vdwg.mxu0
    %v3411 = vadd.f32 %v3132, %v3364
    %v3412 = vadd.f32 %v3133, %v3366
    %v3413 = vadd.f32 %v3134, %v3405
    %v3414 = vadd.f32 %v3135, %v3407
    %v3415 = vxor.u32 %v3411, 2147483648
    %v3416 = vmul.f32 %v3415, 1.442695
    %v3417 = vpow.pop %v3416
    %v3418 = vadd.f32 %v3417, 1.0
    %v3419 = vrcp.pop %v3418
    %v3420 = vmul.f32 1.0, %v3419
    %v3421 = vxor.u32 %v3412, 2147483648
    %v3422 = vmul.f32 %v3421, 1.442695
    %v3423 = vpow.pop %v3422
    %v3424 = vadd.f32 %v3423, 1.0
    %v3425 = vrcp.pop %v3424
    %v3426 = vmul.f32 1.0, %v3425
    %v3427 = vtanh.pop %v3413
    %v3428 = vxor.u32 %v3414, 2147483648
    %v3429 = vmul.f32 %v3428, 1.442695
    %v3430 = vpow.pop %v3429
    %v3431 = vadd.f32 %v3430, 1.0
    %v3432 = vrcp.pop %v3431
    %v3433 = vmul.f32 1.0, %v3432
    %v3434 = vmul.f32 %v3426, %v3127
    %v3435 = vmul.f32 %v3420, %v3427
    %v3436 = vadd.f32 %v3434, %v3435
    %v3437 = vtanh.pop %v3436
    %v3438 = vmul.f32 %v3433, %v3437
    %3439 = vst [vmem:[%s559] sm:$0xff] %v3438
    %v3440 = vld [vmem:[#allocation3] sm:$0xff]
    %v3441 = vld [vmem:[#allocation3 + $0x8] sm:$0xff]
    %v3442 = vld [vmem:[#allocation3 + $0x10] sm:$0xff]
    %v3443 = vld [vmem:[#allocation3 + $0x18] sm:$0xff]
    %v3444 = vld [vmem:[#allocation3 + $0x20] sm:$0xff]
    %v3445 = vld [vmem:[#allocation3 + $0x28] sm:$0xff]
    %v3446 = vld [vmem:[#allocation3 + $0x30] sm:$0xff]
    %v3447 = vld [vmem:[#allocation3 + $0x38] sm:$0xff]
    %v3448 = vpack.c.bf16 %v3441, %v3440
    %v3449 = vpack.c.bf16 %v3443, %v3442
    %v3450 = vpack.c.bf16 %v3445, %v3444
    %v3451 = vpack.c.bf16 %v3447, %v3446
    %s3452 = scalar_lea.vmem [#allocation8], 256
    %v3453 = vld [vmem:[%s3452] sm:$0xff]
    %v3454 = vld [vmem:[%s3452 + $0x8] sm:$0xff]
    %v3455 = vld [vmem:[%s3452 + $0x10] sm:$0xff]
    %v3456 = vld [vmem:[%s3452 + $0x18] sm:$0xff]
    %v3457 = vld [vmem:[%s3452 + $0x20] sm:$0xff]
    %v3458 = vld [vmem:[%s3452 + $0x28] sm:$0xff]
    %v3459 = vld [vmem:[%s3452 + $0x30] sm:$0xff]
    %v3460 = vld [vmem:[%s3452 + $0x38] sm:$0xff]
    %v3461 = vld [vmem:[%s3452 + $0x40] sm:$0xff]
    %v3462 = vld [vmem:[%s3452 + $0x48] sm:$0xff]
    %v3463 = vld [vmem:[%s3452 + $0x50] sm:$0xff]
    %v3464 = vld [vmem:[%s3452 + $0x58] sm:$0xff]
    %v3465 = vld [vmem:[%s3452 + $0x60] sm:$0xff]
    %v3466 = vld [vmem:[%s3452 + $0x68] sm:$0xff]
    %v3467 = vld [vmem:[%s3452 + $0x70] sm:$0xff]
    %v3468 = vld [vmem:[%s3452 + $0x78] sm:$0xff]
    %v3469 = vld [vmem:[%s3452 + $0x80] sm:$0xff]
    %v3470 = vld [vmem:[%s3452 + $0x88] sm:$0xff]
    %v3471 = vld [vmem:[%s3452 + $0x90] sm:$0xff]
    %v3472 = vld [vmem:[%s3452 + $0x98] sm:$0xff]
    %v3473 = vld [vmem:[%s3452 + $0xa0] sm:$0xff]
    %v3474 = vld [vmem:[%s3452 + $0xa8] sm:$0xff]
    %v3475 = vld [vmem:[%s3452 + $0xb0] sm:$0xff]
    %v3476 = vld [vmem:[%s3452 + $0xb8] sm:$0xff]
    %v3477 = vld [vmem:[%s3452 + $0xc0] sm:$0xff]
    %v3478 = vld [vmem:[%s3452 + $0xc8] sm:$0xff]
    %v3479 = vld [vmem:[%s3452 + $0xd0] sm:$0xff]
    %v3480 = vld [vmem:[%s3452 + $0xd8] sm:$0xff]
    %v3481 = vld [vmem:[%s3452 + $0xe0] sm:$0xff]
    %v3482 = vld [vmem:[%s3452 + $0xe8] sm:$0xff]
    %v3483 = vld [vmem:[%s3452 + $0xf0] sm:$0xff]
    %v3484 = vld [vmem:[%s3452 + $0xf8] sm:$0xff]
    %s3485 = scalar_lea.vmem %s6, 4
    %v3486 = vld [vmem:[%s3485] sm:$0xf]
    %v3488 = vlaneseq
    %v3489 = vshrl.u32 %v3488, 7
    %v3490 = vsub.s32 0, %v3489
    %v3491 = vrot.slane %v3486, %v3490
    %v3492 = vlaneseq
    %v3493 = vshrl.u32 %v3492, 7
    %v3494 = vsub.s32 1, %v3493
    %v3495 = vrot.slane %v3486, %v3494
    %v3496 = vlaneseq
    %v3497 = vshrl.u32 %v3496, 7
    %v3498 = vsub.s32 2, %v3497
    %v3499 = vrot.slane %v3486, %v3498
    %v3500 = vlaneseq
    %v3501 = vshrl.u32 %v3500, 7
    %v3502 = vsub.s32 3, %v3501
    %v3503 = vrot.slane %v3486, %v3502
    %v3540 = vunpack.c.l.b16 %v3453
    %v3541 = vunpack.c.h.b16 %v3453
    %v3542 = vunpack.c.l.b16 %v3454
    %v3543 = vunpack.c.h.b16 %v3454
    %v3544 = vunpack.c.l.b16 %v3455
    %v3545 = vunpack.c.h.b16 %v3455
    %v3546 = vunpack.c.l.b16 %v3456
    %v3547 = vunpack.c.h.b16 %v3456
    %v3548 = vunpack.c.l.b16 %v3457
    %v3549 = vunpack.c.h.b16 %v3457
    %v3550 = vunpack.c.l.b16 %v3458
    %v3551 = vunpack.c.h.b16 %v3458
    %v3552 = vunpack.c.l.b16 %v3459
    %v3553 = vunpack.c.h.b16 %v3459
    %v3554 = vunpack.c.l.b16 %v3460
    %v3555 = vunpack.c.h.b16 %v3460
    %v3556 = vunpack.c.l.b16 %v3461
    %v3557 = vunpack.c.h.b16 %v3461
    %v3558 = vunpack.c.l.b16 %v3462
    %v3559 = vunpack.c.h.b16 %v3462
    %v3560 = vunpack.c.l.b16 %v3463
    %v3561 = vunpack.c.h.b16 %v3463
    %v3562 = vunpack.c.l.b16 %v3464
    %v3563 = vunpack.c.h.b16 %v3464
    %v3564 = vunpack.c.l.b16 %v3465
    %v3565 = vunpack.c.h.b16 %v3465
    %v3566 = vunpack.c.l.b16 %v3466
    %v3567 = vunpack.c.h.b16 %v3466
    %v3568 = vunpack.c.l.b16 %v3467
    %v3569 = vunpack.c.h.b16 %v3467
    %v3570 = vunpack.c.l.b16 %v3468
    %v3571 = vunpack.c.h.b16 %v3468
    %v3572 = vunpack.c.l.b16 %v3469
    %v3573 = vunpack.c.h.b16 %v3469
    %v3574 = vunpack.c.l.b16 %v3470
    %v3575 = vunpack.c.h.b16 %v3470
    %v3576 = vunpack.c.l.b16 %v3471
    %v3577 = vunpack.c.h.b16 %v3471
    %v3578 = vunpack.c.l.b16 %v3472
    %v3579 = vunpack.c.h.b16 %v3472
    %v3580 = vunpack.c.l.b16 %v3473
    %v3581 = vunpack.c.h.b16 %v3473
    %v3582 = vunpack.c.l.b16 %v3474
    %v3583 = vunpack.c.h.b16 %v3474
    %v3584 = vunpack.c.l.b16 %v3475
    %v3585 = vunpack.c.h.b16 %v3475
    %v3586 = vunpack.c.l.b16 %v3476
    %v3587 = vunpack.c.h.b16 %v3476
    %v3588 = vunpack.c.l.b16 %v3477
    %v3589 = vunpack.c.h.b16 %v3477
    %v3590 = vunpack.c.l.b16 %v3478
    %v3591 = vunpack.c.h.b16 %v3478
    %v3592 = vunpack.c.l.b16 %v3479
    %v3593 = vunpack.c.h.b16 %v3479
    %v3594 = vunpack.c.l.b16 %v3480
    %v3595 = vunpack.c.h.b16 %v3480
    %v3596 = vunpack.c.l.b16 %v3481
    %v3597 = vunpack.c.h.b16 %v3481
    %v3598 = vunpack.c.l.b16 %v3482
    %v3599 = vunpack.c.h.b16 %v3482
    %v3600 = vunpack.c.l.b16 %v3483
    %v3601 = vunpack.c.h.b16 %v3483
    %v3602 = vunpack.c.l.b16 %v3484
    %v3603 = vunpack.c.h.b16 %v3484
    %v3604 = vpack.c.b16 %v3544, %v3540
    %v3605 = vpack.c.b16 %v3545, %v3541
    %v3606 = vpack.c.b16 %v3546, %v3542
    %v3607 = vpack.c.b16 %v3547, %v3543
    %v3608 = vpack.c.b16 %v3552, %v3548
    %v3609 = vpack.c.b16 %v3553, %v3549
    %v3610 = vpack.c.b16 %v3554, %v3550
    %v3611 = vpack.c.b16 %v3555, %v3551
    %v3612 = vpack.c.b16 %v3560, %v3556
    %v3613 = vpack.c.b16 %v3561, %v3557
    %v3614 = vpack.c.b16 %v3562, %v3558
    %v3615 = vpack.c.b16 %v3563, %v3559
    %v3616 = vpack.c.b16 %v3568, %v3564
    %v3617 = vpack.c.b16 %v3569, %v3565
    %v3618 = vpack.c.b16 %v3570, %v3566
    %v3619 = vpack.c.b16 %v3571, %v3567
    %v3620 = vpack.c.b16 %v3576, %v3572
    %v3621 = vpack.c.b16 %v3577, %v3573
    %v3622 = vpack.c.b16 %v3578, %v3574
    %v3623 = vpack.c.b16 %v3579, %v3575
    %v3624 = vpack.c.b16 %v3584, %v3580
    %v3625 = vpack.c.b16 %v3585, %v3581
    %v3626 = vpack.c.b16 %v3586, %v3582
    %v3627 = vpack.c.b16 %v3587, %v3583
    %v3628 = vpack.c.b16 %v3592, %v3588
    %v3629 = vpack.c.b16 %v3593, %v3589
    %v3630 = vpack.c.b16 %v3594, %v3590
    %v3631 = vpack.c.b16 %v3595, %v3591
    %v3632 = vpack.c.b16 %v3600, %v3596
    %v3633 = vpack.c.b16 %v3601, %v3597
    %v3634 = vpack.c.b16 %v3602, %v3598
    %v3635 = vpack.c.b16 %v3603, %v3599
    %3668 = vmatprep.subr.bf16.mxu0 %v3633
    %3669 = vmatpush1.bf16.msra.mxu0 %v3632
    %3670 = vmatprep.subr.bf16.mxu0 %v3629
    %3671 = vmatpush1.bf16.msra.mxu0 %v3628
    %3672 = vmatprep.subr.bf16.mxu0 %v3625
    %3673 = vmatpush1.bf16.msra.mxu0 %v3624
    %3674 = vmatprep.subr.bf16.mxu0 %v3621
    %3675 = vmatpush1.bf16.msra.mxu0 %v3620
    %3676 = vmatprep.subr.bf16.mxu0 %v3617
    %3677 = vmatpush1.bf16.msra.mxu0 %v3616
    %3678 = vmatprep.subr.bf16.mxu0 %v3613
    %3679 = vmatpush1.bf16.msra.mxu0 %v3612
    %3680 = vmatprep.subr.bf16.mxu0 %v3609
    %3681 = vmatpush1.bf16.msra.mxu0 %v3608
    %3682 = vmatprep.subr.bf16.mxu0 %v3605
    %3683 = vmatpush1.bf16.msra.mxu0 %v3604
    %3684 = vmatprep.subr.bf16.mxu0 0
    %3685 = vmatpush2.bf16.msra.mxu0 0
    %3686 = vmatprep.subr.bf16.mxu0 0
    %3687 = vmatpush2.bf16.msra.mxu0 0
    %3688 = vmatprep.subr.bf16.mxu0 0
    %3689 = vmatpush2.bf16.msra.mxu0 0
    %3690 = vmatprep.subr.bf16.mxu0 0
    %3691 = vmatpush2.bf16.msra.mxu0 0
    %3692 = vmatprep.subr.bf16.mxu0 0
    %3693 = vmatpush2.bf16.msra.mxu0 0
    %3694 = vmatprep.subr.bf16.mxu0 0
    %3695 = vmatpush2.bf16.msra.mxu0 0
    %3696 = vmatprep.subr.bf16.mxu0 0
    %3697 = vmatpush2.bf16.msra.mxu0 0
    %3698 = vmatprep.subr.bf16.mxu0 0
    %3699 = vmatpush2.bf16.msra.mxu0 0
    %3700 = vmatprep.mubr.bf16.mxu0 0
    %3701 = vmatmul.mubr.bf16.gmra.mxu0 %v3448
    %v3702 = vpop.f32.mrf.mxu0
    %v3703 = vadd.f32 %v3491, %v3702
    %v3704 = vpop.f32.mrf.mxu0
    %v3705 = vadd.f32 %v3495, %v3704
    %v3706 = vpop.f32.mrf.mxu0
    %v3707 = vadd.f32 %v3491, %v3706
    %v3708 = vpop.f32.mrf.mxu0
    %v3709 = vadd.f32 %v3495, %v3708
    %3710 = vmatprep.mubr.bf16.mxu0 0
    %3711 = vmatmul.mubr.bf16.gmra.mxu0 %v3449
    %v3712 = vpop.f32.mrf.mxu0
    %v3713 = vadd.f32 %v3491, %v3712
    %v3714 = vpop.f32.mrf.mxu0
    %v3715 = vadd.f32 %v3495, %v3714
    %v3716 = vpop.f32.mrf.mxu0
    %v3717 = vadd.f32 %v3491, %v3716
    %v3718 = vpop.f32.mrf.mxu0
    %v3719 = vadd.f32 %v3495, %v3718
    %3720 = vmatprep.mubr.bf16.mxu0 0
    %3721 = vmatmul.mubr.bf16.gmra.mxu0 %v3450
    %v3722 = vpop.f32.mrf.mxu0
    %v3723 = vadd.f32 %v3491, %v3722
    %v3724 = vpop.f32.mrf.mxu0
    %v3725 = vadd.f32 %v3495, %v3724
    %v3726 = vpop.f32.mrf.mxu0
    %v3727 = vadd.f32 %v3491, %v3726
    %v3728 = vpop.f32.mrf.mxu0
    %v3729 = vadd.f32 %v3495, %v3728
    %3730 = vmatprep.mubr.bf16.mxu0 0
    %3731 = vmatmul.mubr.bf16.gmra.mxu0 %v3451
    %v3732 = vpop.f32.mrf.mxu0
    %v3733 = vadd.f32 %v3491, %v3732
    %v3734 = vpop.f32.mrf.mxu0
    %v3735 = vadd.f32 %v3495, %v3734
    %v3736 = vpop.f32.mrf.mxu0
    %v3737 = vadd.f32 %v3491, %v3736
    %v3738 = vpop.f32.mrf.mxu0
    %v3739 = vadd.f32 %v3495, %v3738
    %3740 = vdwg.mxu0
    %3741 = vmatprep.subr.bf16.mxu0 %v3635
    %3742 = vmatpush1.bf16.msra.mxu0 %v3634
    %3743 = vmatprep.subr.bf16.mxu0 %v3631
    %3744 = vmatpush1.bf16.msra.mxu0 %v3630
    %3745 = vmatprep.subr.bf16.mxu0 %v3627
    %3746 = vmatpush1.bf16.msra.mxu0 %v3626
    %3747 = vmatprep.subr.bf16.mxu0 %v3623
    %3748 = vmatpush1.bf16.msra.mxu0 %v3622
    %3749 = vmatprep.subr.bf16.mxu0 %v3619
    %3750 = vmatpush1.bf16.msra.mxu0 %v3618
    %3751 = vmatprep.subr.bf16.mxu0 %v3615
    %3752 = vmatpush1.bf16.msra.mxu0 %v3614
    %3753 = vmatprep.subr.bf16.mxu0 %v3611
    %3754 = vmatpush1.bf16.msra.mxu0 %v3610
    %3755 = vmatprep.subr.bf16.mxu0 %v3607
    %3756 = vmatpush1.bf16.msra.mxu0 %v3606
    %3757 = vmatprep.subr.bf16.mxu0 0
    %3758 = vmatpush2.bf16.msra.mxu0 0
    %3759 = vmatprep.subr.bf16.mxu0 0
    %3760 = vmatpush2.bf16.msra.mxu0 0
    %3761 = vmatprep.subr.bf16.mxu0 0
    %3762 = vmatpush2.bf16.msra.mxu0 0
    %3763 = vmatprep.subr.bf16.mxu0 0
    %3764 = vmatpush2.bf16.msra.mxu0 0
    %3765 = vmatprep.subr.bf16.mxu0 0
    %3766 = vmatpush2.bf16.msra.mxu0 0
    %3767 = vmatprep.subr.bf16.mxu0 0
    %3768 = vmatpush2.bf16.msra.mxu0 0
    %3769 = vmatprep.subr.bf16.mxu0 0
    %3770 = vmatpush2.bf16.msra.mxu0 0
    %3771 = vmatprep.subr.bf16.mxu0 0
    %3772 = vmatpush2.bf16.msra.mxu0 0
    %3773 = vmatprep.mubr.bf16.mxu0 0
    %3774 = vmatmul.mubr.bf16.gmra.mxu0 %v3448
    %v3775 = vpop.f32.mrf.mxu0
    %v3776 = vadd.f32 %v3499, %v3775
    %v3777 = vpop.f32.mrf.mxu0
    %v3778 = vadd.f32 %v3503, %v3777
    %v3779 = vpop.f32.mrf.mxu0
    %v3780 = vadd.f32 %v3499, %v3779
    %v3781 = vpop.f32.mrf.mxu0
    %v3782 = vadd.f32 %v3503, %v3781
    %3783 = vmatprep.mubr.bf16.mxu0 0
    %3784 = vmatmul.mubr.bf16.gmra.mxu0 %v3449
    %v3785 = vpop.f32.mrf.mxu0
    %v3786 = vadd.f32 %v3499, %v3785
    %v3787 = vpop.f32.mrf.mxu0
    %v3788 = vadd.f32 %v3503, %v3787
    %v3789 = vpop.f32.mrf.mxu0
    %v3790 = vadd.f32 %v3499, %v3789
    %v3791 = vpop.f32.mrf.mxu0
    %v3792 = vadd.f32 %v3503, %v3791
    %3793 = vmatprep.mubr.bf16.mxu0 0
    %3794 = vmatmul.mubr.bf16.gmra.mxu0 %v3450
    %v3795 = vpop.f32.mrf.mxu0
    %v3796 = vadd.f32 %v3499, %v3795
    %v3797 = vpop.f32.mrf.mxu0
    %v3798 = vadd.f32 %v3503, %v3797
    %v3799 = vpop.f32.mrf.mxu0
    %v3800 = vadd.f32 %v3499, %v3799
    %v3801 = vpop.f32.mrf.mxu0
    %v3802 = vadd.f32 %v3503, %v3801
    %3803 = vmatprep.mubr.bf16.mxu0 0
    %3804 = vmatmul.mubr.bf16.gmra.mxu0 %v3451
    %v3805 = vpop.f32.mrf.mxu0
    %v3806 = vadd.f32 %v3499, %v3805
    %v3807 = vpop.f32.mrf.mxu0
    %v3808 = vadd.f32 %v3503, %v3807
    %v3809 = vpop.f32.mrf.mxu0
    %v3810 = vadd.f32 %v3499, %v3809
    %v3811 = vpop.f32.mrf.mxu0
    %v3812 = vadd.f32 %v3503, %v3811
    %3813 = vdwg.mxu0
    %3814 = vst [vmem:[#allocation2] sm:$0xff] %v3703
    %3815 = vst [vmem:[#allocation2 + $0x8] sm:$0xff] %v3705
    %3816 = vst [vmem:[#allocation2 + $0x10] sm:$0xff] %v3776
    %3817 = vst [vmem:[#allocation2 + $0x18] sm:$0xff] %v3778
    %3818 = vst [vmem:[#allocation2 + $0x20] sm:$0xff] %v3707
    %3819 = vst [vmem:[#allocation2 + $0x28] sm:$0xff] %v3709
    %3820 = vst [vmem:[#allocation2 + $0x30] sm:$0xff] %v3780
    %3821 = vst [vmem:[#allocation2 + $0x38] sm:$0xff] %v3782
    %3822 = vst [vmem:[#allocation2 + $0x40] sm:$0xff] %v3713
    %3823 = vst [vmem:[#allocation2 + $0x48] sm:$0xff] %v3715
    %3824 = vst [vmem:[#allocation2 + $0x50] sm:$0xff] %v3786
    %3825 = vst [vmem:[#allocation2 + $0x58] sm:$0xff] %v3788
    %3826 = vst [vmem:[#allocation2 + $0x60] sm:$0xff] %v3717
    %3827 = vst [vmem:[#allocation2 + $0x68] sm:$0xff] %v3719
    %3828 = vst [vmem:[#allocation2 + $0x70] sm:$0xff] %v3790
    %3829 = vst [vmem:[#allocation2 + $0x78] sm:$0xff] %v3792
    %3830 = vst [vmem:[#allocation2 + $0x80] sm:$0xff] %v3723
    %3831 = vst [vmem:[#allocation2 + $0x88] sm:$0xff] %v3725
    %3832 = vst [vmem:[#allocation2 + $0x90] sm:$0xff] %v3796
    %3833 = vst [vmem:[#allocation2 + $0x98] sm:$0xff] %v3798
    %3834 = vst [vmem:[#allocation2 + $0xa0] sm:$0xff] %v3727
    %3835 = vst [vmem:[#allocation2 + $0xa8] sm:$0xff] %v3729
    %3836 = vst [vmem:[#allocation2 + $0xb0] sm:$0xff] %v3800
    %3837 = vst [vmem:[#allocation2 + $0xb8] sm:$0xff] %v3802
    %3838 = vst [vmem:[#allocation2 + $0xc0] sm:$0xff] %v3733
    %3839 = vst [vmem:[#allocation2 + $0xc8] sm:$0xff] %v3735
    %3840 = vst [vmem:[#allocation2 + $0xd0] sm:$0xff] %v3806
    %3841 = vst [vmem:[#allocation2 + $0xd8] sm:$0xff] %v3808
    %3842 = vst [vmem:[#allocation2 + $0xe0] sm:$0xff] %v3737
    %3843 = vst [vmem:[#allocation2 + $0xe8] sm:$0xff] %v3739
    %3844 = vst [vmem:[#allocation2 + $0xf0] sm:$0xff] %v3810
    %3845 = vst [vmem:[#allocation2 + $0xf8] sm:$0xff] %v3812
    %v3846 = vld [vmem:[#allocation2] sm:$0xff]
    %v3847 = vld [vmem:[#allocation2 + $0x8] sm:$0xff]
    %v3848 = vld [vmem:[#allocation2 + $0x10] sm:$0xff]
    %v3849 = vld [vmem:[#allocation2 + $0x18] sm:$0xff]
    %s3850 = scalar_lea.vmem [#allocation10], 256
    %v3851 = vld [vmem:[%s3850] sm:$0xff]
    %v3852 = vld [vmem:[%s3850 + $0x8] sm:$0xff]
    %v3853 = vld [vmem:[%s3850 + $0x10] sm:$0xff]
    %v3854 = vld [vmem:[%s3850 + $0x18] sm:$0xff]
    %v3855 = vld [vmem:[%s3850 + $0x20] sm:$0xff]
    %v3856 = vld [vmem:[%s3850 + $0x28] sm:$0xff]
    %v3857 = vld [vmem:[%s3850 + $0x30] sm:$0xff]
    %v3858 = vld [vmem:[%s3850 + $0x38] sm:$0xff]
    %v3859 = vld [vmem:[%s3850 + $0x40] sm:$0xff]
    %v3860 = vld [vmem:[%s3850 + $0x48] sm:$0xff]
    %v3861 = vld [vmem:[%s3850 + $0x50] sm:$0xff]
    %v3862 = vld [vmem:[%s3850 + $0x58] sm:$0xff]
    %v3863 = vld [vmem:[%s3850 + $0x60] sm:$0xff]
    %v3864 = vld [vmem:[%s3850 + $0x68] sm:$0xff]
    %v3865 = vld [vmem:[%s3850 + $0x70] sm:$0xff]
    %v3866 = vld [vmem:[%s3850 + $0x78] sm:$0xff]
    %v3867 = vld [vmem:[%s3850 + $0x80] sm:$0xff]
    %v3868 = vld [vmem:[%s3850 + $0x88] sm:$0xff]
    %v3869 = vld [vmem:[%s3850 + $0x90] sm:$0xff]
    %v3870 = vld [vmem:[%s3850 + $0x98] sm:$0xff]
    %v3871 = vld [vmem:[%s3850 + $0xa0] sm:$0xff]
    %v3872 = vld [vmem:[%s3850 + $0xa8] sm:$0xff]
    %v3873 = vld [vmem:[%s3850 + $0xb0] sm:$0xff]
    %v3874 = vld [vmem:[%s3850 + $0xb8] sm:$0xff]
    %v3875 = vld [vmem:[%s3850 + $0xc0] sm:$0xff]
    %v3876 = vld [vmem:[%s3850 + $0xc8] sm:$0xff]
    %v3877 = vld [vmem:[%s3850 + $0xd0] sm:$0xff]
    %v3878 = vld [vmem:[%s3850 + $0xd8] sm:$0xff]
    %v3879 = vld [vmem:[%s3850 + $0xe0] sm:$0xff]
    %v3880 = vld [vmem:[%s3850 + $0xe8] sm:$0xff]
    %v3881 = vld [vmem:[%s3850 + $0xf0] sm:$0xff]
    %v3882 = vld [vmem:[%s3850 + $0xf8] sm:$0xff]
    %v3915 = vunpack.c.l.b16 %v3851
    %v3916 = vunpack.c.h.b16 %v3851
    %v3917 = vunpack.c.l.b16 %v3852
    %v3918 = vunpack.c.h.b16 %v3852
    %v3919 = vunpack.c.l.b16 %v3853
    %v3920 = vunpack.c.h.b16 %v3853
    %v3921 = vunpack.c.l.b16 %v3854
    %v3922 = vunpack.c.h.b16 %v3854
    %v3923 = vunpack.c.l.b16 %v3855
    %v3924 = vunpack.c.h.b16 %v3855
    %v3925 = vunpack.c.l.b16 %v3856
    %v3926 = vunpack.c.h.b16 %v3856
    %v3927 = vunpack.c.l.b16 %v3857
    %v3928 = vunpack.c.h.b16 %v3857
    %v3929 = vunpack.c.l.b16 %v3858
    %v3930 = vunpack.c.h.b16 %v3858
    %v3931 = vunpack.c.l.b16 %v3859
    %v3932 = vunpack.c.h.b16 %v3859
    %v3933 = vunpack.c.l.b16 %v3860
    %v3934 = vunpack.c.h.b16 %v3860
    %v3935 = vunpack.c.l.b16 %v3861
    %v3936 = vunpack.c.h.b16 %v3861
    %v3937 = vunpack.c.l.b16 %v3862
    %v3938 = vunpack.c.h.b16 %v3862
    %v3939 = vunpack.c.l.b16 %v3863
    %v3940 = vunpack.c.h.b16 %v3863
    %v3941 = vunpack.c.l.b16 %v3864
    %v3942 = vunpack.c.h.b16 %v3864
    %v3943 = vunpack.c.l.b16 %v3865
    %v3944 = vunpack.c.h.b16 %v3865
    %v3945 = vunpack.c.l.b16 %v3866
    %v3946 = vunpack.c.h.b16 %v3866
    %v3947 = vunpack.c.l.b16 %v3867
    %v3948 = vunpack.c.h.b16 %v3867
    %v3949 = vunpack.c.l.b16 %v3868
    %v3950 = vunpack.c.h.b16 %v3868
    %v3951 = vunpack.c.l.b16 %v3869
    %v3952 = vunpack.c.h.b16 %v3869
    %v3953 = vunpack.c.l.b16 %v3870
    %v3954 = vunpack.c.h.b16 %v3870
    %v3955 = vunpack.c.l.b16 %v3871
    %v3956 = vunpack.c.h.b16 %v3871
    %v3957 = vunpack.c.l.b16 %v3872
    %v3958 = vunpack.c.h.b16 %v3872
    %v3959 = vunpack.c.l.b16 %v3873
    %v3960 = vunpack.c.h.b16 %v3873
    %v3961 = vunpack.c.l.b16 %v3874
    %v3962 = vunpack.c.h.b16 %v3874
    %v3963 = vunpack.c.l.b16 %v3875
    %v3964 = vunpack.c.h.b16 %v3875
    %v3965 = vunpack.c.l.b16 %v3876
    %v3966 = vunpack.c.h.b16 %v3876
    %v3967 = vunpack.c.l.b16 %v3877
    %v3968 = vunpack.c.h.b16 %v3877
    %v3969 = vunpack.c.l.b16 %v3878
    %v3970 = vunpack.c.h.b16 %v3878
    %v3971 = vunpack.c.l.b16 %v3879
    %v3972 = vunpack.c.h.b16 %v3879
    %v3973 = vunpack.c.l.b16 %v3880
    %v3974 = vunpack.c.h.b16 %v3880
    %v3975 = vunpack.c.l.b16 %v3881
    %v3976 = vunpack.c.h.b16 %v3881
    %v3977 = vunpack.c.l.b16 %v3882
    %v3978 = vunpack.c.h.b16 %v3882
    %v3979 = vpack.c.b16 %v3919, %v3915
    %v3980 = vpack.c.b16 %v3920, %v3916
    %v3981 = vpack.c.b16 %v3921, %v3917
    %v3982 = vpack.c.b16 %v3922, %v3918
    %v3983 = vpack.c.b16 %v3927, %v3923
    %v3984 = vpack.c.b16 %v3928, %v3924
    %v3985 = vpack.c.b16 %v3929, %v3925
    %v3986 = vpack.c.b16 %v3930, %v3926
    %v3987 = vpack.c.b16 %v3935, %v3931
    %v3988 = vpack.c.b16 %v3936, %v3932
    %v3989 = vpack.c.b16 %v3937, %v3933
    %v3990 = vpack.c.b16 %v3938, %v3934
    %v3991 = vpack.c.b16 %v3943, %v3939
    %v3992 = vpack.c.b16 %v3944, %v3940
    %v3993 = vpack.c.b16 %v3945, %v3941
    %v3994 = vpack.c.b16 %v3946, %v3942
    %v3995 = vpack.c.b16 %v3951, %v3947
    %v3996 = vpack.c.b16 %v3952, %v3948
    %v3997 = vpack.c.b16 %v3953, %v3949
    %v3998 = vpack.c.b16 %v3954, %v3950
    %v3999 = vpack.c.b16 %v3959, %v3955
    %v4000 = vpack.c.b16 %v3960, %v3956
    %v4001 = vpack.c.b16 %v3961, %v3957
    %v4002 = vpack.c.b16 %v3962, %v3958
    %v4003 = vpack.c.b16 %v3967, %v3963
    %v4004 = vpack.c.b16 %v3968, %v3964
    %v4005 = vpack.c.b16 %v3969, %v3965
    %v4006 = vpack.c.b16 %v3970, %v3966
    %v4007 = vpack.c.b16 %v3975, %v3971
    %v4008 = vpack.c.b16 %v3976, %v3972
    %v4009 = vpack.c.b16 %v3977, %v3973
    %v4010 = vpack.c.b16 %v3978, %v3974
    %4043 = vmatprep.subr.bf16.mxu0 %v4008
    %4044 = vmatpush1.bf16.msra.mxu0 %v4007
    %4045 = vmatprep.subr.bf16.mxu0 %v4004
    %4046 = vmatpush1.bf16.msra.mxu0 %v4003
    %4047 = vmatprep.subr.bf16.mxu0 %v4000
    %4048 = vmatpush1.bf16.msra.mxu0 %v3999
    %4049 = vmatprep.subr.bf16.mxu0 %v3996
    %4050 = vmatpush1.bf16.msra.mxu0 %v3995
    %4051 = vmatprep.subr.bf16.mxu0 %v3992
    %4052 = vmatpush1.bf16.msra.mxu0 %v3991
    %4053 = vmatprep.subr.bf16.mxu0 %v3988
    %4054 = vmatpush1.bf16.msra.mxu0 %v3987
    %4055 = vmatprep.subr.bf16.mxu0 %v3984
    %4056 = vmatpush1.bf16.msra.mxu0 %v3983
    %4057 = vmatprep.subr.bf16.mxu0 %v3980
    %4058 = vmatpush1.bf16.msra.mxu0 %v3979
    %4059 = vmatprep.subr.bf16.mxu0 0
    %4060 = vmatpush2.bf16.msra.mxu0 0
    %4061 = vmatprep.subr.bf16.mxu0 0
    %4062 = vmatpush2.bf16.msra.mxu0 0
    %4063 = vmatprep.subr.bf16.mxu0 0
    %4064 = vmatpush2.bf16.msra.mxu0 0
    %4065 = vmatprep.subr.bf16.mxu0 0
    %4066 = vmatpush2.bf16.msra.mxu0 0
    %4067 = vmatprep.subr.bf16.mxu0 0
    %4068 = vmatpush2.bf16.msra.mxu0 0
    %4069 = vmatprep.subr.bf16.mxu0 0
    %4070 = vmatpush2.bf16.msra.mxu0 0
    %4071 = vmatprep.subr.bf16.mxu0 0
    %4072 = vmatpush2.bf16.msra.mxu0 0
    %4073 = vmatprep.subr.bf16.mxu0 0
    %4074 = vmatpush2.bf16.msra.mxu0 0
    %4075 = vmatprep.mubr.bf16.mxu0 0
    %4076 = vmatmul.mubr.bf16.gmra.mxu0 0
    %v4077 = vpop.f32.mrf.mxu0
    %v4078 = vadd.f32 0.0, %v4077
    %v4079 = vpop.f32.mrf.mxu0
    %v4080 = vadd.f32 0.0, %v4079
    %v4081 = vpop.f32.mrf.mxu0
    %v4082 = vpop.f32.mrf.mxu0
    %4083 = vdwg.mxu0
    %4084 = vmatprep.subr.bf16.mxu0 %v4010
    %4085 = vmatpush1.bf16.msra.mxu0 %v4009
    %4086 = vmatprep.subr.bf16.mxu0 %v4006
    %4087 = vmatpush1.bf16.msra.mxu0 %v4005
    %4088 = vmatprep.subr.bf16.mxu0 %v4002
    %4089 = vmatpush1.bf16.msra.mxu0 %v4001
    %4090 = vmatprep.subr.bf16.mxu0 %v3998
    %4091 = vmatpush1.bf16.msra.mxu0 %v3997
    %4092 = vmatprep.subr.bf16.mxu0 %v3994
    %4093 = vmatpush1.bf16.msra.mxu0 %v3993
    %4094 = vmatprep.subr.bf16.mxu0 %v3990
    %4095 = vmatpush1.bf16.msra.mxu0 %v3989
    %4096 = vmatprep.subr.bf16.mxu0 %v3986
    %4097 = vmatpush1.bf16.msra.mxu0 %v3985
    %4098 = vmatprep.subr.bf16.mxu0 %v3982
    %4099 = vmatpush1.bf16.msra.mxu0 %v3981
    %4100 = vmatprep.subr.bf16.mxu0 0
    %4101 = vmatpush2.bf16.msra.mxu0 0
    %4102 = vmatprep.subr.bf16.mxu0 0
    %4103 = vmatpush2.bf16.msra.mxu0 0
    %4104 = vmatprep.subr.bf16.mxu0 0
    %4105 = vmatpush2.bf16.msra.mxu0 0
    %4106 = vmatprep.subr.bf16.mxu0 0
    %4107 = vmatpush2.bf16.msra.mxu0 0
    %4108 = vmatprep.subr.bf16.mxu0 0
    %4109 = vmatpush2.bf16.msra.mxu0 0
    %4110 = vmatprep.subr.bf16.mxu0 0
    %4111 = vmatpush2.bf16.msra.mxu0 0
    %4112 = vmatprep.subr.bf16.mxu0 0
    %4113 = vmatpush2.bf16.msra.mxu0 0
    %4114 = vmatprep.subr.bf16.mxu0 0
    %4115 = vmatpush2.bf16.msra.mxu0 0
    %4116 = vmatprep.mubr.bf16.mxu0 0
    %4117 = vmatmul.mubr.bf16.gmra.mxu0 0
    %v4118 = vpop.f32.mrf.mxu0
    %v4119 = vadd.f32 0.0, %v4118
    %v4120 = vpop.f32.mrf.mxu0
    %v4121 = vadd.f32 0.0, %v4120
    %v4122 = vpop.f32.mrf.mxu0
    %v4123 = vpop.f32.mrf.mxu0
    %4124 = vdwg.mxu0
    %v4125 = vadd.f32 %v3846, %v4078
    %v4126 = vadd.f32 %v3847, %v4080
    %v4127 = vadd.f32 %v3848, %v4119
    %v4128 = vadd.f32 %v3849, %v4121
    %v4129 = vxor.u32 %v4125, 2147483648
    %v4130 = vmul.f32 %v4129, 1.442695
    %v4131 = vpow.pop %v4130
    %v4132 = vadd.f32 %v4131, 1.0
    %v4133 = vrcp.pop %v4132
    %v4134 = vmul.f32 1.0, %v4133
    %v4135 = vxor.u32 %v4126, 2147483648
    %v4136 = vmul.f32 %v4135, 1.442695
    %v4137 = vpow.pop %v4136
    %v4138 = vadd.f32 %v4137, 1.0
    %v4139 = vrcp.pop %v4138
    %v4140 = vmul.f32 1.0, %v4139
    %v4141 = vtanh.pop %v4127
    %v4142 = vxor.u32 %v4128, 2147483648
    %v4143 = vmul.f32 %v4142, 1.442695
    %v4144 = vpow.pop %v4143
    %v4145 = vadd.f32 %v4144, 1.0
    %v4146 = vrcp.pop %v4145
    %v4147 = vmul.f32 1.0, %v4146
    %v4148 = vmul.f32 %v4140, 0.0
    %v4149 = vmul.f32 %v4134, %v4141
    %v4150 = vadd.f32 %v4148, %v4149
    %v4151 = vtanh.pop %v4150
    %v4152 = vmul.f32 %v4147, %v4151
    %vm4153 = vcmp.eq.s32.totalorder %v565, 0
    %v4154 = vsel %vm4153, 1, 0
    %4155 = vset.pattern.permute.xlu0 0
    %4156 = vperm.xlu0 %4155, %v4154
    %v4157 = vpop.permute.xlu0 %4156
    %vm4158 = vcmp.eq.s32.totalorder %v4157, 1
    %v4159 = vsel %vm4158, %v4152, 0.0
    %v4160 = vld [vmem:[%s1277] sm:$0xff]
    %v4161 = vld [vmem:[%s1277 + $0x8] sm:$0xff]
    %v4162 = vld [vmem:[%s1277 + $0x10] sm:$0xff]
    %v4163 = vld [vmem:[%s1277 + $0x18] sm:$0xff]
    %v4164 = vpack.c.bf16 %v4152, %v4152
    %4165 = vmatprep.subr.bf16.mxu0 %v4008
    %4166 = vmatpush1.bf16.msra.mxu0 %v4007
    %4167 = vmatprep.subr.bf16.mxu0 %v4004
    %4168 = vmatpush1.bf16.msra.mxu0 %v4003
    %4169 = vmatprep.subr.bf16.mxu0 %v4000
    %4170 = vmatpush1.bf16.msra.mxu0 %v3999
    %4171 = vmatprep.subr.bf16.mxu0 %v3996
    %4172 = vmatpush1.bf16.msra.mxu0 %v3995
    %4173 = vmatprep.subr.bf16.mxu0 %v3992
    %4174 = vmatpush1.bf16.msra.mxu0 %v3991
    %4175 = vmatprep.subr.bf16.mxu0 %v3988
    %4176 = vmatpush1.bf16.msra.mxu0 %v3987
    %4177 = vmatprep.subr.bf16.mxu0 %v3984
    %4178 = vmatpush1.bf16.msra.mxu0 %v3983
    %4179 = vmatprep.subr.bf16.mxu0 %v3980
    %4180 = vmatpush1.bf16.msra.mxu0 %v3979
    %4181 = vmatprep.subr.bf16.mxu0 0
    %4182 = vmatpush2.bf16.msra.mxu0 0
    %4183 = vmatprep.subr.bf16.mxu0 0
    %4184 = vmatpush2.bf16.msra.mxu0 0
    %4185 = vmatprep.subr.bf16.mxu0 0
    %4186 = vmatpush2.bf16.msra.mxu0 0
    %4187 = vmatprep.subr.bf16.mxu0 0
    %4188 = vmatpush2.bf16.msra.mxu0 0
    %4189 = vmatprep.subr.bf16.mxu0 0
    %4190 = vmatpush2.bf16.msra.mxu0 0
    %4191 = vmatprep.subr.bf16.mxu0 0
    %4192 = vmatpush2.bf16.msra.mxu0 0
    %4193 = vmatprep.subr.bf16.mxu0 0
    %4194 = vmatpush2.bf16.msra.mxu0 0
    %4195 = vmatprep.subr.bf16.mxu0 0
    %4196 = vmatpush2.bf16.msra.mxu0 0
    %4197 = vmatprep.mubr.bf16.mxu0 0
    %4198 = vmatmul.mubr.bf16.gmra.mxu0 %v4164
    %v4199 = vpop.f32.mrf.mxu0
    %v4200 = vadd.f32 0.0, %v4199
    %v4201 = vpop.f32.mrf.mxu0
    %v4202 = vadd.f32 0.0, %v4201
    %v4203 = vpop.f32.mrf.mxu0
    %v4204 = vpop.f32.mrf.mxu0
    %4205 = vdwg.mxu0
    %4206 = vmatprep.subr.bf16.mxu0 %v4010
    %4207 = vmatpush1.bf16.msra.mxu0 %v4009
    %4208 = vmatprep.subr.bf16.mxu0 %v4006
    %4209 = vmatpush1.bf16.msra.mxu0 %v4005
    %4210 = vmatprep.subr.bf16.mxu0 %v4002
    %4211 = vmatpush1.bf16.msra.mxu0 %v4001
    %4212 = vmatprep.subr.bf16.mxu0 %v3998
    %4213 = vmatpush1.bf16.msra.mxu0 %v3997
    %4214 = vmatprep.subr.bf16.mxu0 %v3994
    %4215 = vmatpush1.bf16.msra.mxu0 %v3993
    %4216 = vmatprep.subr.bf16.mxu0 %v3990
    %4217 = vmatpush1.bf16.msra.mxu0 %v3989
    %4218 = vmatprep.subr.bf16.mxu0 %v3986
    %4219 = vmatpush1.bf16.msra.mxu0 %v3985
    %4220 = vmatprep.subr.bf16.mxu0 %v3982
    %4221 = vmatpush1.bf16.msra.mxu0 %v3981
    %4222 = vmatprep.subr.bf16.mxu0 0
    %4223 = vmatpush2.bf16.msra.mxu0 0
    %4224 = vmatprep.subr.bf16.mxu0 0
    %4225 = vmatpush2.bf16.msra.mxu0 0
    %4226 = vmatprep.subr.bf16.mxu0 0
    %4227 = vmatpush2.bf16.msra.mxu0 0
    %4228 = vmatprep.subr.bf16.mxu0 0
    %4229 = vmatpush2.bf16.msra.mxu0 0
    %4230 = vmatprep.subr.bf16.mxu0 0
    %4231 = vmatpush2.bf16.msra.mxu0 0
    %4232 = vmatprep.subr.bf16.mxu0 0
    %4233 = vmatpush2.bf16.msra.mxu0 0
    %4234 = vmatprep.subr.bf16.mxu0 0
    %4235 = vmatpush2.bf16.msra.mxu0 0
    %4236 = vmatprep.subr.bf16.mxu0 0
    %4237 = vmatpush2.bf16.msra.mxu0 0
    %4238 = vmatprep.mubr.bf16.mxu0 0
    %4239 = vmatmul.mubr.bf16.gmra.mxu0 %v4164
    %v4240 = vpop.f32.mrf.mxu0
    %v4241 = vadd.f32 0.0, %v4240
    %v4242 = vpop.f32.mrf.mxu0
    %v4243 = vadd.f32 0.0, %v4242
    %v4244 = vpop.f32.mrf.mxu0
    %v4245 = vpop.f32.mrf.mxu0
    %4246 = vdwg.mxu0
    %v4247 = vadd.f32 %v4160, %v4200
    %v4248 = vadd.f32 %v4161, %v4202
    %v4249 = vadd.f32 %v4162, %v4241
    %v4250 = vadd.f32 %v4163, %v4243
    %v4251 = vxor.u32 %v4247, 2147483648
    %v4252 = vmul.f32 %v4251, 1.442695
    %v4253 = vpow.pop %v4252
    %v4254 = vadd.f32 %v4253, 1.0
    %v4255 = vrcp.pop %v4254
    %v4256 = vmul.f32 1.0, %v4255
    %v4257 = vxor.u32 %v4248, 2147483648
    %v4258 = vmul.f32 %v4257, 1.442695
    %v4259 = vpow.pop %v4258
    %v4260 = vadd.f32 %v4259, 1.0
    %v4261 = vrcp.pop %v4260
    %v4262 = vmul.f32 1.0, %v4261
    %v4263 = vtanh.pop %v4249
    %v4264 = vxor.u32 %v4250, 2147483648
    %v4265 = vmul.f32 %v4264, 1.442695
    %v4266 = vpow.pop %v4265
    %v4267 = vadd.f32 %v4266, 1.0
    %v4268 = vrcp.pop %v4267
    %v4269 = vmul.f32 1.0, %v4268
    %v4270 = vmul.f32 %v4262, %v4150
    %v4271 = vmul.f32 %v4256, %v4263
    %v4272 = vadd.f32 %v4270, %v4271
    %v4273 = vtanh.pop %v4272
    %v4274 = vmul.f32 %v4269, %v4273
    %vm4275 = vcmp.eq.s32.totalorder %v565, 1
    %v4276 = vsel %vm4275, 1, 0
    %4277 = vset.pattern.permute.xlu0 0
    %4278 = vperm.xlu0 %4277, %v4276
    %v4279 = vpop.permute.xlu0 %4278
    %vm4280 = vcmp.eq.s32.totalorder %v4279, 1
    %v4281 = vsel %vm4280, %v4274, %v4159
    %v4282 = vld [vmem:[%s1586] sm:$0xff]
    %v4283 = vld [vmem:[%s1586 + $0x8] sm:$0xff]
    %v4284 = vld [vmem:[%s1586 + $0x10] sm:$0xff]
    %v4285 = vld [vmem:[%s1586 + $0x18] sm:$0xff]
    %v4286 = vpack.c.bf16 %v4274, %v4274
    %4287 = vmatprep.subr.bf16.mxu0 %v4008
    %4288 = vmatpush1.bf16.msra.mxu0 %v4007
    %4289 = vmatprep.subr.bf16.mxu0 %v4004
    %4290 = vmatpush1.bf16.msra.mxu0 %v4003
    %4291 = vmatprep.subr.bf16.mxu0 %v4000
    %4292 = vmatpush1.bf16.msra.mxu0 %v3999
    %4293 = vmatprep.subr.bf16.mxu0 %v3996
    %4294 = vmatpush1.bf16.msra.mxu0 %v3995
    %4295 = vmatprep.subr.bf16.mxu0 %v3992
    %4296 = vmatpush1.bf16.msra.mxu0 %v3991
    %4297 = vmatprep.subr.bf16.mxu0 %v3988
    %4298 = vmatpush1.bf16.msra.mxu0 %v3987
    %4299 = vmatprep.subr.bf16.mxu0 %v3984
    %4300 = vmatpush1.bf16.msra.mxu0 %v3983
    %4301 = vmatprep.subr.bf16.mxu0 %v3980
    %4302 = vmatpush1.bf16.msra.mxu0 %v3979
    %4303 = vmatprep.subr.bf16.mxu0 0
    %4304 = vmatpush2.bf16.msra.mxu0 0
    %4305 = vmatprep.subr.bf16.mxu0 0
    %4306 = vmatpush2.bf16.msra.mxu0 0
    %4307 = vmatprep.subr.bf16.mxu0 0
    %4308 = vmatpush2.bf16.msra.mxu0 0
    %4309 = vmatprep.subr.bf16.mxu0 0
    %4310 = vmatpush2.bf16.msra.mxu0 0
    %4311 = vmatprep.subr.bf16.mxu0 0
    %4312 = vmatpush2.bf16.msra.mxu0 0
    %4313 = vmatprep.subr.bf16.mxu0 0
    %4314 = vmatpush2.bf16.msra.mxu0 0
    %4315 = vmatprep.subr.bf16.mxu0 0
    %4316 = vmatpush2.bf16.msra.mxu0 0
    %4317 = vmatprep.subr.bf16.mxu0 0
    %4318 = vmatpush2.bf16.msra.mxu0 0
    %4319 = vmatprep.mubr.bf16.mxu0 0
    %4320 = vmatmul.mubr.bf16.gmra.mxu0 %v4286
    %v4321 = vpop.f32.mrf.mxu0
    %v4322 = vadd.f32 0.0, %v4321
    %v4323 = vpop.f32.mrf.mxu0
    %v4324 = vadd.f32 0.0, %v4323
    %v4325 = vpop.f32.mrf.mxu0
    %v4326 = vpop.f32.mrf.mxu0
    %4327 = vdwg.mxu0
    %4328 = vmatprep.subr.bf16.mxu0 %v4010
    %4329 = vmatpush1.bf16.msra.mxu0 %v4009
    %4330 = vmatprep.subr.bf16.mxu0 %v4006
    %4331 = vmatpush1.bf16.msra.mxu0 %v4005
    %4332 = vmatprep.subr.bf16.mxu0 %v4002
    %4333 = vmatpush1.bf16.msra.mxu0 %v4001
    %4334 = vmatprep.subr.bf16.mxu0 %v3998
    %4335 = vmatpush1.bf16.msra.mxu0 %v3997
    %4336 = vmatprep.subr.bf16.mxu0 %v3994
    %4337 = vmatpush1.bf16.msra.mxu0 %v3993
    %4338 = vmatprep.subr.bf16.mxu0 %v3990
    %4339 = vmatpush1.bf16.msra.mxu0 %v3989
    %4340 = vmatprep.subr.bf16.mxu0 %v3986
    %4341 = vmatpush1.bf16.msra.mxu0 %v3985
    %4342 = vmatprep.subr.bf16.mxu0 %v3982
    %4343 = vmatpush1.bf16.msra.mxu0 %v3981
    %4344 = vmatprep.subr.bf16.mxu0 0
    %4345 = vmatpush2.bf16.msra.mxu0 0
    %4346 = vmatprep.subr.bf16.mxu0 0
    %4347 = vmatpush2.bf16.msra.mxu0 0
    %4348 = vmatprep.subr.bf16.mxu0 0
    %4349 = vmatpush2.bf16.msra.mxu0 0
    %4350 = vmatprep.subr.bf16.mxu0 0
    %4351 = vmatpush2.bf16.msra.mxu0 0
    %4352 = vmatprep.subr.bf16.mxu0 0
    %4353 = vmatpush2.bf16.msra.mxu0 0
    %4354 = vmatprep.subr.bf16.mxu0 0
    %4355 = vmatpush2.bf16.msra.mxu0 0
    %4356 = vmatprep.subr.bf16.mxu0 0
    %4357 = vmatpush2.bf16.msra.mxu0 0
    %4358 = vmatprep.subr.bf16.mxu0 0
    %4359 = vmatpush2.bf16.msra.mxu0 0
    %4360 = vmatprep.mubr.bf16.mxu0 0
    %4361 = vmatmul.mubr.bf16.gmra.mxu0 %v4286
    %v4362 = vpop.f32.mrf.mxu0
    %v4363 = vadd.f32 0.0, %v4362
    %v4364 = vpop.f32.mrf.mxu0
    %v4365 = vadd.f32 0.0, %v4364
    %v4366 = vpop.f32.mrf.mxu0
    %v4367 = vpop.f32.mrf.mxu0
    %4368 = vdwg.mxu0
    %v4369 = vadd.f32 %v4282, %v4322
    %v4370 = vadd.f32 %v4283, %v4324
    %v4371 = vadd.f32 %v4284, %v4363
    %v4372 = vadd.f32 %v4285, %v4365
    %v4373 = vxor.u32 %v4369, 2147483648
    %v4374 = vmul.f32 %v4373, 1.442695
    %v4375 = vpow.pop %v4374
    %v4376 = vadd.f32 %v4375, 1.0
    %v4377 = vrcp.pop %v4376
    %v4378 = vmul.f32 1.0, %v4377
    %v4379 = vxor.u32 %v4370, 2147483648
    %v4380 = vmul.f32 %v4379, 1.442695
    %v4381 = vpow.pop %v4380
    %v4382 = vadd.f32 %v4381, 1.0
    %v4383 = vrcp.pop %v4382
    %v4384 = vmul.f32 1.0, %v4383
    %v4385 = vtanh.pop %v4371
    %v4386 = vxor.u32 %v4372, 2147483648
    %v4387 = vmul.f32 %v4386, 1.442695
    %v4388 = vpow.pop %v4387
    %v4389 = vadd.f32 %v4388, 1.0
    %v4390 = vrcp.pop %v4389
    %v4391 = vmul.f32 1.0, %v4390
    %v4392 = vmul.f32 %v4384, %v4272
    %v4393 = vmul.f32 %v4378, %v4385
    %v4394 = vadd.f32 %v4392, %v4393
    %v4395 = vtanh.pop %v4394
    %v4396 = vmul.f32 %v4391, %v4395
    %vm4397 = vcmp.eq.s32.totalorder %v565, 2
    %v4398 = vsel %vm4397, 1, 0
    %4399 = vset.pattern.permute.xlu0 0
    %4400 = vperm.xlu0 %4399, %v4398
    %v4401 = vpop.permute.xlu0 %4400
    %vm4402 = vcmp.eq.s32.totalorder %v4401, 1
    %v4403 = vsel %vm4402, %v4396, %v4281
    %v4404 = vld [vmem:[%s1895] sm:$0xff]
    %v4405 = vld [vmem:[%s1895 + $0x8] sm:$0xff]
    %v4406 = vld [vmem:[%s1895 + $0x10] sm:$0xff]
    %v4407 = vld [vmem:[%s1895 + $0x18] sm:$0xff]
    %v4408 = vpack.c.bf16 %v4396, %v4396
    %4409 = vmatprep.subr.bf16.mxu0 %v4008
    %4410 = vmatpush1.bf16.msra.mxu0 %v4007
    %4411 = vmatprep.subr.bf16.mxu0 %v4004
    %4412 = vmatpush1.bf16.msra.mxu0 %v4003
    %4413 = vmatprep.subr.bf16.mxu0 %v4000
    %4414 = vmatpush1.bf16.msra.mxu0 %v3999
    %4415 = vmatprep.subr.bf16.mxu0 %v3996
    %4416 = vmatpush1.bf16.msra.mxu0 %v3995
    %4417 = vmatprep.subr.bf16.mxu0 %v3992
    %4418 = vmatpush1.bf16.msra.mxu0 %v3991
    %4419 = vmatprep.subr.bf16.mxu0 %v3988
    %4420 = vmatpush1.bf16.msra.mxu0 %v3987
    %4421 = vmatprep.subr.bf16.mxu0 %v3984
    %4422 = vmatpush1.bf16.msra.mxu0 %v3983
    %4423 = vmatprep.subr.bf16.mxu0 %v3980
    %4424 = vmatpush1.bf16.msra.mxu0 %v3979
    %4425 = vmatprep.subr.bf16.mxu0 0
    %4426 = vmatpush2.bf16.msra.mxu0 0
    %4427 = vmatprep.subr.bf16.mxu0 0
    %4428 = vmatpush2.bf16.msra.mxu0 0
    %4429 = vmatprep.subr.bf16.mxu0 0
    %4430 = vmatpush2.bf16.msra.mxu0 0
    %4431 = vmatprep.subr.bf16.mxu0 0
    %4432 = vmatpush2.bf16.msra.mxu0 0
    %4433 = vmatprep.subr.bf16.mxu0 0
    %4434 = vmatpush2.bf16.msra.mxu0 0
    %4435 = vmatprep.subr.bf16.mxu0 0
    %4436 = vmatpush2.bf16.msra.mxu0 0
    %4437 = vmatprep.subr.bf16.mxu0 0
    %4438 = vmatpush2.bf16.msra.mxu0 0
    %4439 = vmatprep.subr.bf16.mxu0 0
    %4440 = vmatpush2.bf16.msra.mxu0 0
    %4441 = vmatprep.mubr.bf16.mxu0 0
    %4442 = vmatmul.mubr.bf16.gmra.mxu0 %v4408
    %v4443 = vpop.f32.mrf.mxu0
    %v4444 = vadd.f32 0.0, %v4443
    %v4445 = vpop.f32.mrf.mxu0
    %v4446 = vadd.f32 0.0, %v4445
    %v4447 = vpop.f32.mrf.mxu0
    %v4448 = vpop.f32.mrf.mxu0
    %4449 = vdwg.mxu0
    %4450 = vmatprep.subr.bf16.mxu0 %v4010
    %4451 = vmatpush1.bf16.msra.mxu0 %v4009
    %4452 = vmatprep.subr.bf16.mxu0 %v4006
    %4453 = vmatpush1.bf16.msra.mxu0 %v4005
    %4454 = vmatprep.subr.bf16.mxu0 %v4002
    %4455 = vmatpush1.bf16.msra.mxu0 %v4001
    %4456 = vmatprep.subr.bf16.mxu0 %v3998
    %4457 = vmatpush1.bf16.msra.mxu0 %v3997
    %4458 = vmatprep.subr.bf16.mxu0 %v3994
    %4459 = vmatpush1.bf16.msra.mxu0 %v3993
    %4460 = vmatprep.subr.bf16.mxu0 %v3990
    %4461 = vmatpush1.bf16.msra.mxu0 %v3989
    %4462 = vmatprep.subr.bf16.mxu0 %v3986
    %4463 = vmatpush1.bf16.msra.mxu0 %v3985
    %4464 = vmatprep.subr.bf16.mxu0 %v3982
    %4465 = vmatpush1.bf16.msra.mxu0 %v3981
    %4466 = vmatprep.subr.bf16.mxu0 0
    %4467 = vmatpush2.bf16.msra.mxu0 0
    %4468 = vmatprep.subr.bf16.mxu0 0
    %4469 = vmatpush2.bf16.msra.mxu0 0
    %4470 = vmatprep.subr.bf16.mxu0 0
    %4471 = vmatpush2.bf16.msra.mxu0 0
    %4472 = vmatprep.subr.bf16.mxu0 0
    %4473 = vmatpush2.bf16.msra.mxu0 0
    %4474 = vmatprep.subr.bf16.mxu0 0
    %4475 = vmatpush2.bf16.msra.mxu0 0
    %4476 = vmatprep.subr.bf16.mxu0 0
    %4477 = vmatpush2.bf16.msra.mxu0 0
    %4478 = vmatprep.subr.bf16.mxu0 0
    %4479 = vmatpush2.bf16.msra.mxu0 0
    %4480 = vmatprep.subr.bf16.mxu0 0
    %4481 = vmatpush2.bf16.msra.mxu0 0
    %4482 = vmatprep.mubr.bf16.mxu0 0
    %4483 = vmatmul.mubr.bf16.gmra.mxu0 %v4408
    %v4484 = vpop.f32.mrf.mxu0
    %v4485 = vadd.f32 0.0, %v4484
    %v4486 = vpop.f32.mrf.mxu0
    %v4487 = vadd.f32 0.0, %v4486
    %v4488 = vpop.f32.mrf.mxu0
    %v4489 = vpop.f32.mrf.mxu0
    %4490 = vdwg.mxu0
    %v4491 = vadd.f32 %v4404, %v4444
    %v4492 = vadd.f32 %v4405, %v4446
    %v4493 = vadd.f32 %v4406, %v4485
    %v4494 = vadd.f32 %v4407, %v4487
    %v4495 = vxor.u32 %v4491, 2147483648
    %v4496 = vmul.f32 %v4495, 1.442695
    %v4497 = vpow.pop %v4496
    %v4498 = vadd.f32 %v4497, 1.0
    %v4499 = vrcp.pop %v4498
    %v4500 = vmul.f32 1.0, %v4499
    %v4501 = vxor.u32 %v4492, 2147483648
    %v4502 = vmul.f32 %v4501, 1.442695
    %v4503 = vpow.pop %v4502
    %v4504 = vadd.f32 %v4503, 1.0
    %v4505 = vrcp.pop %v4504
    %v4506 = vmul.f32 1.0, %v4505
    %v4507 = vtanh.pop %v4493
    %v4508 = vxor.u32 %v4494, 2147483648
    %v4509 = vmul.f32 %v4508, 1.442695
    %v4510 = vpow.pop %v4509
    %v4511 = vadd.f32 %v4510, 1.0
    %v4512 = vrcp.pop %v4511
    %v4513 = vmul.f32 1.0, %v4512
    %v4514 = vmul.f32 %v4506, %v4394
    %v4515 = vmul.f32 %v4500, %v4507
    %v4516 = vadd.f32 %v4514, %v4515
    %v4517 = vtanh.pop %v4516
    %v4518 = vmul.f32 %v4513, %v4517
    %vm4519 = vcmp.eq.s32.totalorder %v565, 3
    %v4520 = vsel %vm4519, 1, 0
    %4521 = vset.pattern.permute.xlu0 0
    %4522 = vperm.xlu0 %4521, %v4520
    %v4523 = vpop.permute.xlu0 %4522
    %vm4524 = vcmp.eq.s32.totalorder %v4523, 1
    %v4525 = vsel %vm4524, %v4518, %v4403
    %v4526 = vld [vmem:[%s2204] sm:$0xff]
    %v4527 = vld [vmem:[%s2204 + $0x8] sm:$0xff]
    %v4528 = vld [vmem:[%s2204 + $0x10] sm:$0xff]
    %v4529 = vld [vmem:[%s2204 + $0x18] sm:$0xff]
    %v4530 = vpack.c.bf16 %v4518, %v4518
    %4531 = vmatprep.subr.bf16.mxu0 %v4008
    %4532 = vmatpush1.bf16.msra.mxu0 %v4007
    %4533 = vmatprep.subr.bf16.mxu0 %v4004
    %4534 = vmatpush1.bf16.msra.mxu0 %v4003
    %4535 = vmatprep.subr.bf16.mxu0 %v4000
    %4536 = vmatpush1.bf16.msra.mxu0 %v3999
    %4537 = vmatprep.subr.bf16.mxu0 %v3996
    %4538 = vmatpush1.bf16.msra.mxu0 %v3995
    %4539 = vmatprep.subr.bf16.mxu0 %v3992
    %4540 = vmatpush1.bf16.msra.mxu0 %v3991
    %4541 = vmatprep.subr.bf16.mxu0 %v3988
    %4542 = vmatpush1.bf16.msra.mxu0 %v3987
    %4543 = vmatprep.subr.bf16.mxu0 %v3984
    %4544 = vmatpush1.bf16.msra.mxu0 %v3983
    %4545 = vmatprep.subr.bf16.mxu0 %v3980
    %4546 = vmatpush1.bf16.msra.mxu0 %v3979
    %4547 = vmatprep.subr.bf16.mxu0 0
    %4548 = vmatpush2.bf16.msra.mxu0 0
    %4549 = vmatprep.subr.bf16.mxu0 0
    %4550 = vmatpush2.bf16.msra.mxu0 0
    %4551 = vmatprep.subr.bf16.mxu0 0
    %4552 = vmatpush2.bf16.msra.mxu0 0
    %4553 = vmatprep.subr.bf16.mxu0 0
    %4554 = vmatpush2.bf16.msra.mxu0 0
    %4555 = vmatprep.subr.bf16.mxu0 0
    %4556 = vmatpush2.bf16.msra.mxu0 0
    %4557 = vmatprep.subr.bf16.mxu0 0
    %4558 = vmatpush2.bf16.msra.mxu0 0
    %4559 = vmatprep.subr.bf16.mxu0 0
    %4560 = vmatpush2.bf16.msra.mxu0 0
    %4561 = vmatprep.subr.bf16.mxu0 0
    %4562 = vmatpush2.bf16.msra.mxu0 0
    %4563 = vmatprep.mubr.bf16.mxu0 0
    %4564 = vmatmul.mubr.bf16.gmra.mxu0 %v4530
    %v4565 = vpop.f32.mrf.mxu0
    %v4566 = vadd.f32 0.0, %v4565
    %v4567 = vpop.f32.mrf.mxu0
    %v4568 = vadd.f32 0.0, %v4567
    %v4569 = vpop.f32.mrf.mxu0
    %v4570 = vpop.f32.mrf.mxu0
    %4571 = vdwg.mxu0
    %4572 = vmatprep.subr.bf16.mxu0 %v4010
    %4573 = vmatpush1.bf16.msra.mxu0 %v4009
    %4574 = vmatprep.subr.bf16.mxu0 %v4006
    %4575 = vmatpush1.bf16.msra.mxu0 %v4005
    %4576 = vmatprep.subr.bf16.mxu0 %v4002
    %4577 = vmatpush1.bf16.msra.mxu0 %v4001
    %4578 = vmatprep.subr.bf16.mxu0 %v3998
    %4579 = vmatpush1.bf16.msra.mxu0 %v3997
    %4580 = vmatprep.subr.bf16.mxu0 %v3994
    %4581 = vmatpush1.bf16.msra.mxu0 %v3993
    %4582 = vmatprep.subr.bf16.mxu0 %v3990
    %4583 = vmatpush1.bf16.msra.mxu0 %v3989
    %4584 = vmatprep.subr.bf16.mxu0 %v3986
    %4585 = vmatpush1.bf16.msra.mxu0 %v3985
    %4586 = vmatprep.subr.bf16.mxu0 %v3982
    %4587 = vmatpush1.bf16.msra.mxu0 %v3981
    %4588 = vmatprep.subr.bf16.mxu0 0
    %4589 = vmatpush2.bf16.msra.mxu0 0
    %4590 = vmatprep.subr.bf16.mxu0 0
    %4591 = vmatpush2.bf16.msra.mxu0 0
    %4592 = vmatprep.subr.bf16.mxu0 0
    %4593 = vmatpush2.bf16.msra.mxu0 0
    %4594 = vmatprep.subr.bf16.mxu0 0
    %4595 = vmatpush2.bf16.msra.mxu0 0
    %4596 = vmatprep.subr.bf16.mxu0 0
    %4597 = vmatpush2.bf16.msra.mxu0 0
    %4598 = vmatprep.subr.bf16.mxu0 0
    %4599 = vmatpush2.bf16.msra.mxu0 0
    %4600 = vmatprep.subr.bf16.mxu0 0
    %4601 = vmatpush2.bf16.msra.mxu0 0
    %4602 = vmatprep.subr.bf16.mxu0 0
    %4603 = vmatpush2.bf16.msra.mxu0 0
    %4604 = vmatprep.mubr.bf16.mxu0 0
    %4605 = vmatmul.mubr.bf16.gmra.mxu0 %v4530
    %v4606 = vpop.f32.mrf.mxu0
    %v4607 = vadd.f32 0.0, %v4606
    %v4608 = vpop.f32.mrf.mxu0
    %v4609 = vadd.f32 0.0, %v4608
    %v4610 = vpop.f32.mrf.mxu0
    %v4611 = vpop.f32.mrf.mxu0
    %4612 = vdwg.mxu0
    %v4613 = vadd.f32 %v4526, %v4566
    %v4614 = vadd.f32 %v4527, %v4568
    %v4615 = vadd.f32 %v4528, %v4607
    %v4616 = vadd.f32 %v4529, %v4609
    %v4617 = vxor.u32 %v4613, 2147483648
    %v4618 = vmul.f32 %v4617, 1.442695
    %v4619 = vpow.pop %v4618
    %v4620 = vadd.f32 %v4619, 1.0
    %v4621 = vrcp.pop %v4620
    %v4622 = vmul.f32 1.0, %v4621
    %v4623 = vxor.u32 %v4614, 2147483648
    %v4624 = vmul.f32 %v4623, 1.442695
    %v4625 = vpow.pop %v4624
    %v4626 = vadd.f32 %v4625, 1.0
    %v4627 = vrcp.pop %v4626
    %v4628 = vmul.f32 1.0, %v4627
    %v4629 = vtanh.pop %v4615
    %v4630 = vxor.u32 %v4616, 2147483648
    %v4631 = vmul.f32 %v4630, 1.442695
    %v4632 = vpow.pop %v4631
    %v4633 = vadd.f32 %v4632, 1.0
    %v4634 = vrcp.pop %v4633
    %v4635 = vmul.f32 1.0, %v4634
    %v4636 = vmul.f32 %v4628, %v4516
    %v4637 = vmul.f32 %v4622, %v4629
    %v4638 = vadd.f32 %v4636, %v4637
    %v4639 = vtanh.pop %v4638
    %v4640 = vmul.f32 %v4635, %v4639
    %vm4641 = vcmp.eq.s32.totalorder %v565, 4
    %v4642 = vsel %vm4641, 1, 0
    %4643 = vset.pattern.permute.xlu0 0
    %4644 = vperm.xlu0 %4643, %v4642
    %v4645 = vpop.permute.xlu0 %4644
    %vm4646 = vcmp.eq.s32.totalorder %v4645, 1
    %v4647 = vsel %vm4646, %v4640, %v4525
    %v4648 = vld [vmem:[%s2513] sm:$0xff]
    %v4649 = vld [vmem:[%s2513 + $0x8] sm:$0xff]
    %v4650 = vld [vmem:[%s2513 + $0x10] sm:$0xff]
    %v4651 = vld [vmem:[%s2513 + $0x18] sm:$0xff]
    %v4652 = vpack.c.bf16 %v4640, %v4640
    %4653 = vmatprep.subr.bf16.mxu0 %v4008
    %4654 = vmatpush1.bf16.msra.mxu0 %v4007
    %4655 = vmatprep.subr.bf16.mxu0 %v4004
    %4656 = vmatpush1.bf16.msra.mxu0 %v4003
    %4657 = vmatprep.subr.bf16.mxu0 %v4000
    %4658 = vmatpush1.bf16.msra.mxu0 %v3999
    %4659 = vmatprep.subr.bf16.mxu0 %v3996
    %4660 = vmatpush1.bf16.msra.mxu0 %v3995
    %4661 = vmatprep.subr.bf16.mxu0 %v3992
    %4662 = vmatpush1.bf16.msra.mxu0 %v3991
    %4663 = vmatprep.subr.bf16.mxu0 %v3988
    %4664 = vmatpush1.bf16.msra.mxu0 %v3987
    %4665 = vmatprep.subr.bf16.mxu0 %v3984
    %4666 = vmatpush1.bf16.msra.mxu0 %v3983
    %4667 = vmatprep.subr.bf16.mxu0 %v3980
    %4668 = vmatpush1.bf16.msra.mxu0 %v3979
    %4669 = vmatprep.subr.bf16.mxu0 0
    %4670 = vmatpush2.bf16.msra.mxu0 0
    %4671 = vmatprep.subr.bf16.mxu0 0
    %4672 = vmatpush2.bf16.msra.mxu0 0
    %4673 = vmatprep.subr.bf16.mxu0 0
    %4674 = vmatpush2.bf16.msra.mxu0 0
    %4675 = vmatprep.subr.bf16.mxu0 0
    %4676 = vmatpush2.bf16.msra.mxu0 0
    %4677 = vmatprep.subr.bf16.mxu0 0
    %4678 = vmatpush2.bf16.msra.mxu0 0
    %4679 = vmatprep.subr.bf16.mxu0 0
    %4680 = vmatpush2.bf16.msra.mxu0 0
    %4681 = vmatprep.subr.bf16.mxu0 0
    %4682 = vmatpush2.bf16.msra.mxu0 0
    %4683 = vmatprep.subr.bf16.mxu0 0
    %4684 = vmatpush2.bf16.msra.mxu0 0
    %4685 = vmatprep.mubr.bf16.mxu0 0
    %4686 = vmatmul.mubr.bf16.gmra.mxu0 %v4652
    %v4687 = vpop.f32.mrf.mxu0
    %v4688 = vadd.f32 0.0, %v4687
    %v4689 = vpop.f32.mrf.mxu0
    %v4690 = vadd.f32 0.0, %v4689
    %v4691 = vpop.f32.mrf.mxu0
    %v4692 = vpop.f32.mrf.mxu0
    %4693 = vdwg.mxu0
    %4694 = vmatprep.subr.bf16.mxu0 %v4010
    %4695 = vmatpush1.bf16.msra.mxu0 %v4009
    %4696 = vmatprep.subr.bf16.mxu0 %v4006
    %4697 = vmatpush1.bf16.msra.mxu0 %v4005
    %4698 = vmatprep.subr.bf16.mxu0 %v4002
    %4699 = vmatpush1.bf16.msra.mxu0 %v4001
    %4700 = vmatprep.subr.bf16.mxu0 %v3998
    %4701 = vmatpush1.bf16.msra.mxu0 %v3997
    %4702 = vmatprep.subr.bf16.mxu0 %v3994
    %4703 = vmatpush1.bf16.msra.mxu0 %v3993
    %4704 = vmatprep.subr.bf16.mxu0 %v3990
    %4705 = vmatpush1.bf16.msra.mxu0 %v3989
    %4706 = vmatprep.subr.bf16.mxu0 %v3986
    %4707 = vmatpush1.bf16.msra.mxu0 %v3985
    %4708 = vmatprep.subr.bf16.mxu0 %v3982
    %4709 = vmatpush1.bf16.msra.mxu0 %v3981
    %4710 = vmatprep.subr.bf16.mxu0 0
    %4711 = vmatpush2.bf16.msra.mxu0 0
    %4712 = vmatprep.subr.bf16.mxu0 0
    %4713 = vmatpush2.bf16.msra.mxu0 0
    %4714 = vmatprep.subr.bf16.mxu0 0
    %4715 = vmatpush2.bf16.msra.mxu0 0
    %4716 = vmatprep.subr.bf16.mxu0 0
    %4717 = vmatpush2.bf16.msra.mxu0 0
    %4718 = vmatprep.subr.bf16.mxu0 0
    %4719 = vmatpush2.bf16.msra.mxu0 0
    %4720 = vmatprep.subr.bf16.mxu0 0
    %4721 = vmatpush2.bf16.msra.mxu0 0
    %4722 = vmatprep.subr.bf16.mxu0 0
    %4723 = vmatpush2.bf16.msra.mxu0 0
    %4724 = vmatprep.subr.bf16.mxu0 0
    %4725 = vmatpush2.bf16.msra.mxu0 0
    %4726 = vmatprep.mubr.bf16.mxu0 0
    %4727 = vmatmul.mubr.bf16.gmra.mxu0 %v4652
    %v4728 = vpop.f32.mrf.mxu0
    %v4729 = vadd.f32 0.0, %v4728
    %v4730 = vpop.f32.mrf.mxu0
    %v4731 = vadd.f32 0.0, %v4730
    %v4732 = vpop.f32.mrf.mxu0
    %v4733 = vpop.f32.mrf.mxu0
    %4734 = vdwg.mxu0
    %v4735 = vadd.f32 %v4648, %v4688
    %v4736 = vadd.f32 %v4649, %v4690
    %v4737 = vadd.f32 %v4650, %v4729
    %v4738 = vadd.f32 %v4651, %v4731
    %v4739 = vxor.u32 %v4735, 2147483648
    %v4740 = vmul.f32 %v4739, 1.442695
    %v4741 = vpow.pop %v4740
    %v4742 = vadd.f32 %v4741, 1.0
    %v4743 = vrcp.pop %v4742
    %v4744 = vmul.f32 1.0, %v4743
    %v4745 = vxor.u32 %v4736, 2147483648
    %v4746 = vmul.f32 %v4745, 1.442695
    %v4747 = vpow.pop %v4746
    %v4748 = vadd.f32 %v4747, 1.0
    %v4749 = vrcp.pop %v4748
    %v4750 = vmul.f32 1.0, %v4749
    %v4751 = vtanh.pop %v4737
    %v4752 = vxor.u32 %v4738, 2147483648
    %v4753 = vmul.f32 %v4752, 1.442695
    %v4754 = vpow.pop %v4753
    %v4755 = vadd.f32 %v4754, 1.0
    %v4756 = vrcp.pop %v4755
    %v4757 = vmul.f32 1.0, %v4756
    %v4758 = vmul.f32 %v4750, %v4638
    %v4759 = vmul.f32 %v4744, %v4751
    %v4760 = vadd.f32 %v4758, %v4759
    %v4761 = vtanh.pop %v4760
    %v4762 = vmul.f32 %v4757, %v4761
    %vm4763 = vcmp.eq.s32.totalorder %v565, 5
    %v4764 = vsel %vm4763, 1, 0
    %4765 = vset.pattern.permute.xlu0 0
    %4766 = vperm.xlu0 %4765, %v4764
    %v4767 = vpop.permute.xlu0 %4766
    %vm4768 = vcmp.eq.s32.totalorder %v4767, 1
    %v4769 = vsel %vm4768, %v4762, %v4647
    %v4770 = vld [vmem:[%s2822] sm:$0xff]
    %v4771 = vld [vmem:[%s2822 + $0x8] sm:$0xff]
    %v4772 = vld [vmem:[%s2822 + $0x10] sm:$0xff]
    %v4773 = vld [vmem:[%s2822 + $0x18] sm:$0xff]
    %v4774 = vpack.c.bf16 %v4762, %v4762
    %4775 = vmatprep.subr.bf16.mxu0 %v4008
    %4776 = vmatpush1.bf16.msra.mxu0 %v4007
    %4777 = vmatprep.subr.bf16.mxu0 %v4004
    %4778 = vmatpush1.bf16.msra.mxu0 %v4003
    %4779 = vmatprep.subr.bf16.mxu0 %v4000
    %4780 = vmatpush1.bf16.msra.mxu0 %v3999
    %4781 = vmatprep.subr.bf16.mxu0 %v3996
    %4782 = vmatpush1.bf16.msra.mxu0 %v3995
    %4783 = vmatprep.subr.bf16.mxu0 %v3992
    %4784 = vmatpush1.bf16.msra.mxu0 %v3991
    %4785 = vmatprep.subr.bf16.mxu0 %v3988
    %4786 = vmatpush1.bf16.msra.mxu0 %v3987
    %4787 = vmatprep.subr.bf16.mxu0 %v3984
    %4788 = vmatpush1.bf16.msra.mxu0 %v3983
    %4789 = vmatprep.subr.bf16.mxu0 %v3980
    %4790 = vmatpush1.bf16.msra.mxu0 %v3979
    %4791 = vmatprep.subr.bf16.mxu0 0
    %4792 = vmatpush2.bf16.msra.mxu0 0
    %4793 = vmatprep.subr.bf16.mxu0 0
    %4794 = vmatpush2.bf16.msra.mxu0 0
    %4795 = vmatprep.subr.bf16.mxu0 0
    %4796 = vmatpush2.bf16.msra.mxu0 0
    %4797 = vmatprep.subr.bf16.mxu0 0
    %4798 = vmatpush2.bf16.msra.mxu0 0
    %4799 = vmatprep.subr.bf16.mxu0 0
    %4800 = vmatpush2.bf16.msra.mxu0 0
    %4801 = vmatprep.subr.bf16.mxu0 0
    %4802 = vmatpush2.bf16.msra.mxu0 0
    %4803 = vmatprep.subr.bf16.mxu0 0
    %4804 = vmatpush2.bf16.msra.mxu0 0
    %4805 = vmatprep.subr.bf16.mxu0 0
    %4806 = vmatpush2.bf16.msra.mxu0 0
    %4807 = vmatprep.mubr.bf16.mxu0 0
    %4808 = vmatmul.mubr.bf16.gmra.mxu0 %v4774
    %v4809 = vpop.f32.mrf.mxu0
    %v4810 = vadd.f32 0.0, %v4809
    %v4811 = vpop.f32.mrf.mxu0
    %v4812 = vadd.f32 0.0, %v4811
    %v4813 = vpop.f32.mrf.mxu0
    %v4814 = vpop.f32.mrf.mxu0
    %4815 = vdwg.mxu0
    %4816 = vmatprep.subr.bf16.mxu0 %v4010
    %4817 = vmatpush1.bf16.msra.mxu0 %v4009
    %4818 = vmatprep.subr.bf16.mxu0 %v4006
    %4819 = vmatpush1.bf16.msra.mxu0 %v4005
    %4820 = vmatprep.subr.bf16.mxu0 %v4002
    %4821 = vmatpush1.bf16.msra.mxu0 %v4001
    %4822 = vmatprep.subr.bf16.mxu0 %v3998
    %4823 = vmatpush1.bf16.msra.mxu0 %v3997
    %4824 = vmatprep.subr.bf16.mxu0 %v3994
    %4825 = vmatpush1.bf16.msra.mxu0 %v3993
    %4826 = vmatprep.subr.bf16.mxu0 %v3990
    %4827 = vmatpush1.bf16.msra.mxu0 %v3989
    %4828 = vmatprep.subr.bf16.mxu0 %v3986
    %4829 = vmatpush1.bf16.msra.mxu0 %v3985
    %4830 = vmatprep.subr.bf16.mxu0 %v3982
    %4831 = vmatpush1.bf16.msra.mxu0 %v3981
    %4832 = vmatprep.subr.bf16.mxu0 0
    %4833 = vmatpush2.bf16.msra.mxu0 0
    %4834 = vmatprep.subr.bf16.mxu0 0
    %4835 = vmatpush2.bf16.msra.mxu0 0
    %4836 = vmatprep.subr.bf16.mxu0 0
    %4837 = vmatpush2.bf16.msra.mxu0 0
    %4838 = vmatprep.subr.bf16.mxu0 0
    %4839 = vmatpush2.bf16.msra.mxu0 0
    %4840 = vmatprep.subr.bf16.mxu0 0
    %4841 = vmatpush2.bf16.msra.mxu0 0
    %4842 = vmatprep.subr.bf16.mxu0 0
    %4843 = vmatpush2.bf16.msra.mxu0 0
    %4844 = vmatprep.subr.bf16.mxu0 0
    %4845 = vmatpush2.bf16.msra.mxu0 0
    %4846 = vmatprep.subr.bf16.mxu0 0
    %4847 = vmatpush2.bf16.msra.mxu0 0
    %4848 = vmatprep.mubr.bf16.mxu0 0
    %4849 = vmatmul.mubr.bf16.gmra.mxu0 %v4774
    %v4850 = vpop.f32.mrf.mxu0
    %v4851 = vadd.f32 0.0, %v4850
    %v4852 = vpop.f32.mrf.mxu0
    %v4853 = vadd.f32 0.0, %v4852
    %v4854 = vpop.f32.mrf.mxu0
    %v4855 = vpop.f32.mrf.mxu0
    %4856 = vdwg.mxu0
    %v4857 = vadd.f32 %v4770, %v4810
    %v4858 = vadd.f32 %v4771, %v4812
    %v4859 = vadd.f32 %v4772, %v4851
    %v4860 = vadd.f32 %v4773, %v4853
    %v4861 = vxor.u32 %v4857, 2147483648
    %v4862 = vmul.f32 %v4861, 1.442695
    %v4863 = vpow.pop %v4862
    %v4864 = vadd.f32 %v4863, 1.0
    %v4865 = vrcp.pop %v4864
    %v4866 = vmul.f32 1.0, %v4865
    %v4867 = vxor.u32 %v4858, 2147483648
    %v4868 = vmul.f32 %v4867, 1.442695
    %v4869 = vpow.pop %v4868
    %v4870 = vadd.f32 %v4869, 1.0
    %v4871 = vrcp.pop %v4870
    %v4872 = vmul.f32 1.0, %v4871
    %v4873 = vtanh.pop %v4859
    %v4874 = vxor.u32 %v4860, 2147483648
    %v4875 = vmul.f32 %v4874, 1.442695
    %v4876 = vpow.pop %v4875
    %v4877 = vadd.f32 %v4876, 1.0
    %v4878 = vrcp.pop %v4877
    %v4879 = vmul.f32 1.0, %v4878
    %v4880 = vmul.f32 %v4872, %v4760
    %v4881 = vmul.f32 %v4866, %v4873
    %v4882 = vadd.f32 %v4880, %v4881
    %v4883 = vtanh.pop %v4882
    %v4884 = vmul.f32 %v4879, %v4883
    %vm4885 = vcmp.eq.s32.totalorder %v565, 6
    %v4886 = vsel %vm4885, 1, 0
    %4887 = vset.pattern.permute.xlu0 0
    %4888 = vperm.xlu0 %4887, %v4886
    %v4889 = vpop.permute.xlu0 %4888
    %vm4890 = vcmp.eq.s32.totalorder %v4889, 1
    %v4891 = vsel %vm4890, %v4884, %v4769
    %v4892 = vld [vmem:[%s3131] sm:$0xff]
    %v4893 = vld [vmem:[%s3131 + $0x8] sm:$0xff]
    %v4894 = vld [vmem:[%s3131 + $0x10] sm:$0xff]
    %v4895 = vld [vmem:[%s3131 + $0x18] sm:$0xff]
    %v4896 = vpack.c.bf16 %v4884, %v4884
    %4897 = vmatprep.subr.bf16.mxu0 %v4008
    %4898 = vmatpush1.bf16.msra.mxu0 %v4007
    %4899 = vmatprep.subr.bf16.mxu0 %v4004
    %4900 = vmatpush1.bf16.msra.mxu0 %v4003
    %4901 = vmatprep.subr.bf16.mxu0 %v4000
    %4902 = vmatpush1.bf16.msra.mxu0 %v3999
    %4903 = vmatprep.subr.bf16.mxu0 %v3996
    %4904 = vmatpush1.bf16.msra.mxu0 %v3995
    %4905 = vmatprep.subr.bf16.mxu0 %v3992
    %4906 = vmatpush1.bf16.msra.mxu0 %v3991
    %4907 = vmatprep.subr.bf16.mxu0 %v3988
    %4908 = vmatpush1.bf16.msra.mxu0 %v3987
    %4909 = vmatprep.subr.bf16.mxu0 %v3984
    %4910 = vmatpush1.bf16.msra.mxu0 %v3983
    %4911 = vmatprep.subr.bf16.mxu0 %v3980
    %4912 = vmatpush1.bf16.msra.mxu0 %v3979
    %4913 = vmatprep.subr.bf16.mxu0 0
    %4914 = vmatpush2.bf16.msra.mxu0 0
    %4915 = vmatprep.subr.bf16.mxu0 0
    %4916 = vmatpush2.bf16.msra.mxu0 0
    %4917 = vmatprep.subr.bf16.mxu0 0
    %4918 = vmatpush2.bf16.msra.mxu0 0
    %4919 = vmatprep.subr.bf16.mxu0 0
    %4920 = vmatpush2.bf16.msra.mxu0 0
    %4921 = vmatprep.subr.bf16.mxu0 0
    %4922 = vmatpush2.bf16.msra.mxu0 0
    %4923 = vmatprep.subr.bf16.mxu0 0
    %4924 = vmatpush2.bf16.msra.mxu0 0
    %4925 = vmatprep.subr.bf16.mxu0 0
    %4926 = vmatpush2.bf16.msra.mxu0 0
    %4927 = vmatprep.subr.bf16.mxu0 0
    %4928 = vmatpush2.bf16.msra.mxu0 0
    %4929 = vmatprep.mubr.bf16.mxu0 0
    %4930 = vmatmul.mubr.bf16.gmra.mxu0 %v4896
    %v4931 = vpop.f32.mrf.mxu0
    %v4932 = vadd.f32 0.0, %v4931
    %v4933 = vpop.f32.mrf.mxu0
    %v4934 = vadd.f32 0.0, %v4933
    %v4935 = vpop.f32.mrf.mxu0
    %v4936 = vpop.f32.mrf.mxu0
    %4937 = vdwg.mxu0
    %4938 = vmatprep.subr.bf16.mxu0 %v4010
    %4939 = vmatpush1.bf16.msra.mxu0 %v4009
    %4940 = vmatprep.subr.bf16.mxu0 %v4006
    %4941 = vmatpush1.bf16.msra.mxu0 %v4005
    %4942 = vmatprep.subr.bf16.mxu0 %v4002
    %4943 = vmatpush1.bf16.msra.mxu0 %v4001
    %4944 = vmatprep.subr.bf16.mxu0 %v3998
    %4945 = vmatpush1.bf16.msra.mxu0 %v3997
    %4946 = vmatprep.subr.bf16.mxu0 %v3994
    %4947 = vmatpush1.bf16.msra.mxu0 %v3993
    %4948 = vmatprep.subr.bf16.mxu0 %v3990
    %4949 = vmatpush1.bf16.msra.mxu0 %v3989
    %4950 = vmatprep.subr.bf16.mxu0 %v3986
    %4951 = vmatpush1.bf16.msra.mxu0 %v3985
    %4952 = vmatprep.subr.bf16.mxu0 %v3982
    %4953 = vmatpush1.bf16.msra.mxu0 %v3981
    %4954 = vmatprep.subr.bf16.mxu0 0
    %4955 = vmatpush2.bf16.msra.mxu0 0
    %4956 = vmatprep.subr.bf16.mxu0 0
    %4957 = vmatpush2.bf16.msra.mxu0 0
    %4958 = vmatprep.subr.bf16.mxu0 0
    %4959 = vmatpush2.bf16.msra.mxu0 0
    %4960 = vmatprep.subr.bf16.mxu0 0
    %4961 = vmatpush2.bf16.msra.mxu0 0
    %4962 = vmatprep.subr.bf16.mxu0 0
    %4963 = vmatpush2.bf16.msra.mxu0 0
    %4964 = vmatprep.subr.bf16.mxu0 0
    %4965 = vmatpush2.bf16.msra.mxu0 0
    %4966 = vmatprep.subr.bf16.mxu0 0
    %4967 = vmatpush2.bf16.msra.mxu0 0
    %4968 = vmatprep.subr.bf16.mxu0 0
    %4969 = vmatpush2.bf16.msra.mxu0 0
    %4970 = vmatprep.mubr.bf16.mxu0 0
    %4971 = vmatmul.mubr.bf16.gmra.mxu0 %v4896
    %v4972 = vpop.f32.mrf.mxu0
    %v4973 = vadd.f32 0.0, %v4972
    %v4974 = vpop.f32.mrf.mxu0
    %v4975 = vadd.f32 0.0, %v4974
    %v4976 = vpop.f32.mrf.mxu0
    %v4977 = vpop.f32.mrf.mxu0
    %4978 = vdwg.mxu0
    %v4979 = vadd.f32 %v4892, %v4932
    %v4980 = vadd.f32 %v4893, %v4934
    %v4981 = vadd.f32 %v4894, %v4973
    %v4982 = vadd.f32 %v4895, %v4975
    %v4983 = vxor.u32 %v4979, 2147483648
    %v4984 = vmul.f32 %v4983, 1.442695
    %v4985 = vpow.pop %v4984
    %v4986 = vadd.f32 %v4985, 1.0
    %v4987 = vrcp.pop %v4986
    %v4988 = vmul.f32 1.0, %v4987
    %v4989 = vxor.u32 %v4980, 2147483648
    %v4990 = vmul.f32 %v4989, 1.442695
    %v4991 = vpow.pop %v4990
    %v4992 = vadd.f32 %v4991, 1.0
    %v4993 = vrcp.pop %v4992
    %v4994 = vmul.f32 1.0, %v4993
    %v4995 = vtanh.pop %v4981
    %v4996 = vxor.u32 %v4982, 2147483648
    %v4997 = vmul.f32 %v4996, 1.442695
    %v4998 = vpow.pop %v4997
    %v4999 = vadd.f32 %v4998, 1.0
    %v5000 = vrcp.pop %v4999
    %v5001 = vmul.f32 1.0, %v5000
    %v5002 = vmul.f32 %v4994, %v4882
    %v5003 = vmul.f32 %v4988, %v4995
    %v5004 = vadd.f32 %v5002, %v5003
    %v5005 = vtanh.pop %v5004
    %v5006 = vmul.f32 %v5001, %v5005
    %vm5007 = vcmp.eq.s32.totalorder %v565, 7
    %v5008 = vsel %vm5007, 1, 0
    %5009 = vset.pattern.permute.xlu0 0
    %5010 = vperm.xlu0 %5009, %v5008
    %v5011 = vpop.permute.xlu0 %5010
    %vm5012 = vcmp.eq.s32.totalorder %v5011, 1
    %v5013 = vsel %vm5012, %v5006, %v4891
    %v5014 = vld [vmem:[%s2] sm:$0xff]
    %v5015 = vpack.c.bf16 %v5014, %v5014
    %v5016 = vld [vmem:[%s7] sm:$0xf]
    %v5017 = vld [vmem:[%s7 + $0x4] sm:$0xf]
    %v5018 = vld [vmem:[%s7 + $0x8] sm:$0xf]
    %v5019 = vld [vmem:[%s7 + $0xc] sm:$0xf]
    %v5020 = vld [vmem:[%s7 + $0x10] sm:$0xf]
    %v5021 = vld [vmem:[%s7 + $0x14] sm:$0xf]
    %v5022 = vld [vmem:[%s7 + $0x18] sm:$0xf]
    %v5023 = vld [vmem:[%s7 + $0x1c] sm:$0xf]
    %v5024 = vpack.c.bf16 %v5013, %v5013
    %v5025 = vld [vmem:[#allocation11] sm:$0xf]
    %v5026 = vld [vmem:[#allocation11 + $0x4] sm:$0xf]
    %v5027 = vld [vmem:[#allocation11 + $0x8] sm:$0xf]
    %v5028 = vld [vmem:[#allocation11 + $0xc] sm:$0xf]
    %v5029 = vld [vmem:[#allocation11 + $0x10] sm:$0xf]
    %v5030 = vld [vmem:[#allocation11 + $0x14] sm:$0xf]
    %v5031 = vld [vmem:[#allocation11 + $0x18] sm:$0xf]
    %v5032 = vld [vmem:[#allocation11 + $0x1c] sm:$0xf]
    %v5033 = vld [vmem:[#allocation11 + $0x20] sm:$0xf]
    %v5034 = vld [vmem:[#allocation11 + $0x24] sm:$0xf]
    %v5035 = vld [vmem:[#allocation11 + $0x28] sm:$0xf]
    %v5036 = vld [vmem:[#allocation11 + $0x2c] sm:$0xf]
    %v5037 = vld [vmem:[#allocation11 + $0x30] sm:$0xf]
    %v5038 = vld [vmem:[#allocation11 + $0x34] sm:$0xf]
    %v5039 = vld [vmem:[#allocation11 + $0x38] sm:$0xf]
    %v5040 = vld [vmem:[#allocation11 + $0x3c] sm:$0xf]
    %v5057 = vunpack.c.l.b16 %v5025
    %v5058 = vunpack.c.l.b16 %v5026
    %v5059 = vunpack.c.l.b16 %v5027
    %v5060 = vunpack.c.l.b16 %v5028
    %v5061 = vunpack.c.l.b16 %v5029
    %v5062 = vunpack.c.l.b16 %v5030
    %v5063 = vunpack.c.l.b16 %v5031
    %v5064 = vunpack.c.l.b16 %v5032
    %v5065 = vunpack.c.l.b16 %v5033
    %v5066 = vunpack.c.l.b16 %v5034
    %v5067 = vunpack.c.l.b16 %v5035
    %v5068 = vunpack.c.l.b16 %v5036
    %v5069 = vunpack.c.l.b16 %v5037
    %v5070 = vunpack.c.l.b16 %v5038
    %v5071 = vunpack.c.l.b16 %v5039
    %v5072 = vunpack.c.l.b16 %v5040
    %v5073 = vpack.c.b16 %v5058, %v5057
    %v5074 = vpack.c.b16 %v5060, %v5059
    %v5075 = vpack.c.b16 %v5062, %v5061
    %v5076 = vpack.c.b16 %v5064, %v5063
    %v5077 = vpack.c.b16 %v5066, %v5065
    %v5078 = vpack.c.b16 %v5068, %v5067
    %v5079 = vpack.c.b16 %v5070, %v5069
    %v5080 = vpack.c.b16 %v5072, %v5071
    %5089 = vmatprep.subr.bf16.mxu0 0
    %5090 = vmatpush1.bf16.msra.mxu0 %v5080
    %5091 = vmatprep.subr.bf16.mxu0 0
    %5092 = vmatpush1.bf16.msra.mxu0 %v5079
    %5093 = vmatprep.subr.bf16.mxu0 0
    %5094 = vmatpush1.bf16.msra.mxu0 %v5078
    %5095 = vmatprep.subr.bf16.mxu0 0
    %5096 = vmatpush1.bf16.msra.mxu0 %v5077
    %5097 = vmatprep.subr.bf16.mxu0 0
    %5098 = vmatpush1.bf16.msra.mxu0 %v5076
    %5099 = vmatprep.subr.bf16.mxu0 0
    %5100 = vmatpush1.bf16.msra.mxu0 %v5075
    %5101 = vmatprep.subr.bf16.mxu0 0
    %5102 = vmatpush1.bf16.msra.mxu0 %v5074
    %5103 = vmatprep.subr.bf16.mxu0 0
    %5104 = vmatpush1.bf16.msra.mxu0 %v5073
    %5105 = vmatprep.subr.bf16.mxu0 0
    %5106 = vmatpush2.bf16.msra.mxu0 0
    %5107 = vmatprep.subr.bf16.mxu0 0
    %5108 = vmatpush2.bf16.msra.mxu0 0
    %5109 = vmatprep.subr.bf16.mxu0 0
    %5110 = vmatpush2.bf16.msra.mxu0 0
    %5111 = vmatprep.subr.bf16.mxu0 0
    %5112 = vmatpush2.bf16.msra.mxu0 0
    %5113 = vmatprep.subr.bf16.mxu0 0
    %5114 = vmatpush2.bf16.msra.mxu0 0
    %5115 = vmatprep.subr.bf16.mxu0 0
    %5116 = vmatpush2.bf16.msra.mxu0 0
    %5117 = vmatprep.subr.bf16.mxu0 0
    %5118 = vmatpush2.bf16.msra.mxu0 0
    %5119 = vmatprep.subr.bf16.mxu0 0
    %5120 = vmatpush2.bf16.msra.mxu0 0
    %5121 = vmatprep.mubr.bf16.mxu0 0
    %5122 = vmatmul.mubr.bf16.gmra.mxu0 %v5024
    %v5123 = vpop.f32.mrf.mxu0
    %v5124 = vadd.f32 0.0, %v5123
    %v5125 = vpop.f32.mrf.mxu0
    %v5126 = vpop.f32.mrf.mxu0
    %v5127 = vpop.f32.mrf.mxu0
    %5128 = vdwg.mxu0
    %v5137 = vunpack.c.l.b16 %v5016
    %v5138 = vunpack.c.l.b16 %v5017
    %v5139 = vunpack.c.l.b16 %v5018
    %v5140 = vunpack.c.l.b16 %v5019
    %v5141 = vunpack.c.l.b16 %v5020
    %v5142 = vunpack.c.l.b16 %v5021
    %v5143 = vunpack.c.l.b16 %v5022
    %v5144 = vunpack.c.l.b16 %v5023
    %v5145 = vpack.c.b16 %v5138, %v5137
    %v5146 = vpack.c.b16 %v5140, %v5139
    %v5147 = vpack.c.b16 %v5142, %v5141
    %v5148 = vpack.c.b16 %v5144, %v5143
    %vm5153 = vcmask 523264
    %v5155 = vsel %vm5153, %v5015, 0
    %5157 = vmatprep.subr.bf16.mxu0 0
    %5158 = vmatpush1.bf16.msra.mxu0 0
    %5159 = vmatprep.subr.bf16.mxu0 0
    %5160 = vmatpush1.bf16.msra.mxu0 0
    %5161 = vmatprep.subr.bf16.mxu0 0
    %5162 = vmatpush1.bf16.msra.mxu0 0
    %5163 = vmatprep.subr.bf16.mxu0 0
    %5164 = vmatpush1.bf16.msra.mxu0 0
    %5165 = vmatprep.subr.bf16.mxu0 0
    %5166 = vmatpush1.bf16.msra.mxu0 %v5148
    %5167 = vmatprep.subr.bf16.mxu0 0
    %5168 = vmatpush1.bf16.msra.mxu0 %v5147
    %5169 = vmatprep.subr.bf16.mxu0 0
    %5170 = vmatpush1.bf16.msra.mxu0 %v5146
    %5171 = vmatprep.subr.bf16.mxu0 0
    %5172 = vmatpush1.bf16.msra.mxu0 %v5145
    %5173 = vmatprep.subr.bf16.mxu0 0
    %5174 = vmatpush2.bf16.msra.mxu0 0
    %5175 = vmatprep.subr.bf16.mxu0 0
    %5176 = vmatpush2.bf16.msra.mxu0 0
    %5177 = vmatprep.subr.bf16.mxu0 0
    %5178 = vmatpush2.bf16.msra.mxu0 0
    %5179 = vmatprep.subr.bf16.mxu0 0
    %5180 = vmatpush2.bf16.msra.mxu0 0
    %5181 = vmatprep.subr.bf16.mxu0 0
    %5182 = vmatpush2.bf16.msra.mxu0 0
    %5183 = vmatprep.subr.bf16.mxu0 0
    %5184 = vmatpush2.bf16.msra.mxu0 0
    %5185 = vmatprep.subr.bf16.mxu0 0
    %5186 = vmatpush2.bf16.msra.mxu0 0
    %5187 = vmatprep.subr.bf16.mxu0 0
    %5188 = vmatpush2.bf16.msra.mxu0 0
    %5189 = vmatprep.mubr.bf16.mxu0 0
    %5190 = vmatmul.mubr.bf16.gmra.mxu0 %v5155
    %v5191 = vpop.f32.mrf.mxu0
    %v5192 = vadd.f32 %v5124, %v5191
    %v5193 = vpop.f32.mrf.mxu0
    %v5194 = vpop.f32.mrf.mxu0
    %v5195 = vpop.f32.mrf.mxu0
    %5196 = vdwg.mxu0
    %v5197 = vld [vmem:[%s9] sm:$0x1]
    %v5199 = vlaneseq
    %v5200 = vshrl.u32 %v5199, 7
    %v5201 = vsub.s32 0, %v5200
    %v5202 = vrot.slane %v5197, %v5201
    %v5204 = vadd.f32 %v5192, %v5202
    %v5205 = vmax.f32 %v5204, 0.0
    %v5206 = vpack.c.bf16 %v5205, %v5205
    %v5207 = vld [vmem:[#allocation13] sm:$0xf]
    %v5208 = vld [vmem:[#allocation13 + $0x4] sm:$0xf]
    %v5209 = vld [vmem:[#allocation13 + $0x8] sm:$0xf]
    %v5210 = vld [vmem:[#allocation13 + $0xc] sm:$0xf]
    %v5211 = vld [vmem:[#allocation13 + $0x10] sm:$0xf]
    %v5212 = vld [vmem:[#allocation13 + $0x14] sm:$0xf]
    %v5213 = vld [vmem:[#allocation13 + $0x18] sm:$0xf]
    %v5214 = vld [vmem:[#allocation13 + $0x1c] sm:$0xf]
    %v5215 = vld [vmem:[#allocation13 + $0x20] sm:$0xf]
    %v5216 = vld [vmem:[#allocation13 + $0x24] sm:$0xf]
    %v5217 = vld [vmem:[#allocation13 + $0x28] sm:$0xf]
    %v5218 = vld [vmem:[#allocation13 + $0x2c] sm:$0xf]
    %v5219 = vld [vmem:[#allocation13 + $0x30] sm:$0xf]
    %v5220 = vld [vmem:[#allocation13 + $0x34] sm:$0xf]
    %v5221 = vld [vmem:[#allocation13 + $0x38] sm:$0xf]
    %v5222 = vld [vmem:[#allocation13 + $0x3c] sm:$0xf]
    %v5223 = vld [vmem:[%s11] sm:$0x1]
    %v5225 = vlaneseq
    %v5226 = vshrl.u32 %v5225, 7
    %v5227 = vsub.s32 0, %v5226
    %v5228 = vrot.slane %v5223, %v5227
    %v5246 = vunpack.c.l.b16 %v5207
    %v5247 = vunpack.c.l.b16 %v5208
    %v5248 = vunpack.c.l.b16 %v5209
    %v5249 = vunpack.c.l.b16 %v5210
    %v5250 = vunpack.c.l.b16 %v5211
    %v5251 = vunpack.c.l.b16 %v5212
    %v5252 = vunpack.c.l.b16 %v5213
    %v5253 = vunpack.c.l.b16 %v5214
    %v5254 = vunpack.c.l.b16 %v5215
    %v5255 = vunpack.c.l.b16 %v5216
    %v5256 = vunpack.c.l.b16 %v5217
    %v5257 = vunpack.c.l.b16 %v5218
    %v5258 = vunpack.c.l.b16 %v5219
    %v5259 = vunpack.c.l.b16 %v5220
    %v5260 = vunpack.c.l.b16 %v5221
    %v5261 = vunpack.c.l.b16 %v5222
    %v5262 = vpack.c.b16 %v5247, %v5246
    %v5263 = vpack.c.b16 %v5249, %v5248
    %v5264 = vpack.c.b16 %v5251, %v5250
    %v5265 = vpack.c.b16 %v5253, %v5252
    %v5266 = vpack.c.b16 %v5255, %v5254
    %v5267 = vpack.c.b16 %v5257, %v5256
    %v5268 = vpack.c.b16 %v5259, %v5258
    %v5269 = vpack.c.b16 %v5261, %v5260
    %5278 = vmatprep.subr.bf16.mxu0 0
    %5279 = vmatpush1.bf16.msra.mxu0 %v5269
    %5280 = vmatprep.subr.bf16.mxu0 0
    %5281 = vmatpush1.bf16.msra.mxu0 %v5268
    %5282 = vmatprep.subr.bf16.mxu0 0
    %5283 = vmatpush1.bf16.msra.mxu0 %v5267
    %5284 = vmatprep.subr.bf16.mxu0 0
    %5285 = vmatpush1.bf16.msra.mxu0 %v5266
    %5286 = vmatprep.subr.bf16.mxu0 0
    %5287 = vmatpush1.bf16.msra.mxu0 %v5265
    %5288 = vmatprep.subr.bf16.mxu0 0
    %5289 = vmatpush1.bf16.msra.mxu0 %v5264
    %5290 = vmatprep.subr.bf16.mxu0 0
    %5291 = vmatpush1.bf16.msra.mxu0 %v5263
    %5292 = vmatprep.subr.bf16.mxu0 0
    %5293 = vmatpush1.bf16.msra.mxu0 %v5262
    %5294 = vmatprep.subr.bf16.mxu0 0
    %5295 = vmatpush2.bf16.msra.mxu0 0
    %5296 = vmatprep.subr.bf16.mxu0 0
    %5297 = vmatpush2.bf16.msra.mxu0 0
    %5298 = vmatprep.subr.bf16.mxu0 0
    %5299 = vmatpush2.bf16.msra.mxu0 0
    %5300 = vmatprep.subr.bf16.mxu0 0
    %5301 = vmatpush2.bf16.msra.mxu0 0
    %5302 = vmatprep.subr.bf16.mxu0 0
    %5303 = vmatpush2.bf16.msra.mxu0 0
    %5304 = vmatprep.subr.bf16.mxu0 0
    %5305 = vmatpush2.bf16.msra.mxu0 0
    %5306 = vmatprep.subr.bf16.mxu0 0
    %5307 = vmatpush2.bf16.msra.mxu0 0
    %5308 = vmatprep.subr.bf16.mxu0 0
    %5309 = vmatpush2.bf16.msra.mxu0 0
    %5310 = vmatprep.mubr.bf16.mxu0 0
    %5311 = vmatmul.mubr.bf16.gmra.mxu0 %v5206
    %v5312 = vpop.f32.mrf.mxu0
    %v5313 = vadd.f32 %v5228, %v5312
    %v5314 = vpop.f32.mrf.mxu0
    %v5315 = vpop.f32.mrf.mxu0
    %v5316 = vpop.f32.mrf.mxu0
    %5317 = vdwg.mxu0
    %5318 = vst [vmem:[%s12] sm:$0xff] %v5313
    // Predicated region
    $region74: #{rnn_forward.1} parent=1 // pred_check
      _
    $region75: #{rnn_forward.1} parent=1 // pred_check_branch
      %5320 = sbr.rel (0) target = $region77
    $region76: #{rnn_forward.1} parent=1 // pred_region
      _
    $region77: #{rnn_forward.1} parent=1 // pred_fallthru
      _
    // Predicated region
    $region78: #{rnn_forward.1} parent=1 // pred_check
      _
    $region79: #{rnn_forward.1} parent=1 // pred_check_branch
      %5322 = sbr.rel (0) target = $region81
    $region80: #{rnn_forward.1} parent=1 // pred_region
      _
    $region81: #{rnn_forward.1} parent=1 // pred_fallthru
      _
    %5323 = vsyncpa [#allocation5], 1
    %5324 = vsyncpa [#allocation9], 1
    %5325 = vsyncpa [#allocation12], 1
    %5326 = vsyncpa [#allocation6], 1

</llo_original>
